<compile_context>
chip_gen: v7x
topology: tpu7x:2x2x1
jax: 0.10.0
libtpu: 0.0.40
codegen_flags: <defaults>
</compile_context>

<pallas_src>
import functools

import jax
import jax.numpy as jnp
from jax.experimental import pallas as pl
from jax.experimental.pallas import tpu as pltpu


def conv_conv_stats_kernel(x_ref, mask_ref, w1_ref, b1_ref, w2_ref, b2_ref,
                           h2_ref, s1_ref, s2_ref, p1_ref, p2_ref):
    """Conv3x3+bias+ReLU -> Conv3x3+bias+ReLU + BN partial sums, one image.

    x_ref   : (1, H+4, W+4, Cin)   input, zero-padded by 2 (NHWC)
    mask_ref: ((H+2)*(W+2), Cout)  1.0 inside / 0.0 on the 1-px border
    w1_ref  : (9*Cin, Cout)        conv1 weights, 3x3 taps folded into K
    b1_ref  : (1, Cout)
    w2_ref  : (9*Cout, Cout)       conv2 weights, 3x3 taps folded into K
    b2_ref  : (1, Cout)
    h2_ref  : (1, H*W, Cout)       post-ReLU conv2 activations (pre-BN)
    s1_ref  : (1, 1, Cout)         per-image   sum(h2)   (BN partial)
    s2_ref  : (1, 1, Cout)         per-image sum(h2*h2)  (BN partial)
    p1_ref  : ((H+2)*(W+2), 9*Cin) VMEM scratch: conv1 im2col buffer
    p2_ref  : (H*W, 9*Cout)        VMEM scratch: conv2 im2col buffer
    """
    _, Hp2, Wp2, Cin = x_ref.shape
    Hp, Wp = Hp2 - 2, Wp2 - 2          # conv1 output grid (= padded conv2 input)
    H, W = Hp - 2, Wp - 2              # final spatial size
    C = w1_ref.shape[-1]
    mxu_dtype = w1_ref.dtype           # bf16 on v6e/v7x path, f32 otherwise

    x = x_ref[0]                                            # (Hp2, Wp2, Cin)

    # ---- conv1: build the im2col buffer once, ONE wide-K matmul (K=9*Cin) --
    # Evaluated on the padded (Hp, Wp) grid so that, after masking the 1-px
    # border to zero, its output is exactly the pad=1 input of conv2 (no
    # zero-fill / interior-store / reload of a padded scratch).
    for k in range(9):
        ky, kx = k // 3, k % 3
        p1_ref[:, k * Cin:(k + 1) * Cin] = (
            x[ky:ky + Hp, kx:kx + Wp, :].reshape(Hp * Wp, Cin))
    acc1 = jnp.dot(p1_ref[...].astype(mxu_dtype), w1_ref[...],
                   preferred_element_type=jnp.float32)       # (Hp*Wp, C)
    h1 = jnp.maximum(acc1 + b1_ref[...], 0.0)                # bias + ReLU (f32)
    h1p = (h1 * mask_ref[...]).reshape(Hp, Wp, C)            # zero-padded conv1 out

    # ---- conv2: im2col once, ONE wide-K matmul (K = 9*Cout) ----------------
    for k in range(9):
        ky, kx = k // 3, k % 3
        p2_ref[:, k * C:(k + 1) * C] = (
            h1p[ky:ky + H, kx:kx + W, :].reshape(H * W, C))
    acc2 = jnp.dot(p2_ref[...].astype(mxu_dtype), w2_ref[...],
                   preferred_element_type=jnp.float32)       # (H*W, C)
    h2 = jnp.maximum(acc2 + b2_ref[...], 0.0)                # bias + ReLU (f32)

    # ---- outputs: activations + fused one-pass BN partial sums -------------
    h2_ref[0] = h2.astype(h2_ref.dtype)
    s1_ref[0] = jnp.sum(h2, axis=0, keepdims=True)
    s2_ref[0] = jnp.sum(h2 * h2, axis=0, keepdims=True)


def bn_apply_kernel(h2_ref, scale_ref, shift_ref, out_ref):
    """y = h2 * (gamma*rsqrt(var+eps)) + (beta - mu*gamma*rsqrt(var+eps)).

    Operates on the lane-dense (H, W*Cout) view so every VPU op and the final
    store use full 128-lane vregs (unmasked vst).
    """
    out_ref[0] = (h2_ref[0] * scale_ref[...]
                  + shift_ref[...]).astype(out_ref.dtype)


def conv_block_forward(x_nchw, params, *, mxu_dtype=jnp.float32):
    """conv_block forward (NCHW in / NCHW out) as two Pallas TPU kernels."""
    N, Cin, H, W = x_nchw.shape
    C = params["w1"].shape[-1]
    Hp, Wp = H + 2, W + 2
    Hp2, Wp2 = H + 4, W + 4
    WC = W * C

    # NCHW -> NHWC, zero-pad by 2 (conv1 is evaluated on the (H+2, W+2) grid).
    x = jnp.transpose(x_nchw, (0, 2, 3, 1)).astype(jnp.float32)
    xp2 = jnp.pad(x, ((0, 0), (2, 2), (2, 2), (0, 0)))

    # Fold the 3x3 taps into the contraction dim (im2col weight layout).
    w1f = params["w1"].reshape(9 * Cin, C).astype(mxu_dtype)
    w2f = params["w2"].reshape(9 * C, C).astype(mxu_dtype)
    b1 = params["b1"].astype(jnp.float32)
    b2 = params["b2"].astype(jnp.float32)

    # Border mask: zeroes conv1's 1-px ring so it doubles as conv2's padding.
    ii = jnp.arange(Hp)[:, None]
    jj = jnp.arange(Wp)[None, :]
    m2d = ((ii >= 1) & (ii <= H) & (jj >= 1) & (jj <= W)).astype(jnp.float32)
    mask = jnp.broadcast_to(m2d[:, :, None], (Hp, Wp, C)).reshape(Hp * Wp, C)

    flops = (2 * N * Hp * Wp * (9 * Cin) * C
             + 2 * N * H * W * (9 * C) * C
             + 8 * N * H * W * C)
    bytes_accessed = (xp2.size * 4 + mask.size * 4
                      + w1f.size * w1f.dtype.itemsize
                      + w2f.size * w2f.dtype.itemsize
                      + N * H * W * C * 4 + 2 * N * C * 4)

    # ---- kernel 1: conv+relu+conv+relu + BN partial sums, one image/step ---
    h2, s1, s2 = pl.pallas_call(
        conv_conv_stats_kernel,
        out_shape=(jax.ShapeDtypeStruct((N, H * W, C), jnp.float32),
                   jax.ShapeDtypeStruct((N, 1, C), jnp.float32),
                   jax.ShapeDtypeStruct((N, 1, C), jnp.float32)),
        grid=(N,),
        in_specs=[pl.BlockSpec((1, Hp2, Wp2, Cin), lambda n: (n, 0, 0, 0)),
                  pl.BlockSpec((Hp * Wp, C), lambda n: (0, 0)),
                  pl.BlockSpec((9 * Cin, C), lambda n: (0, 0)),
                  pl.BlockSpec((1, C), lambda n: (0, 0)),
                  pl.BlockSpec((9 * C, C), lambda n: (0, 0)),
                  pl.BlockSpec((1, C), lambda n: (0, 0))],
        out_specs=(pl.BlockSpec((1, H * W, C), lambda n: (n, 0, 0)),
                   pl.BlockSpec((1, 1, C), lambda n: (n, 0, 0)),
                   pl.BlockSpec((1, 1, C), lambda n: (n, 0, 0))),
        scratch_shapes=[pltpu.VMEM((Hp * Wp, 9 * Cin), jnp.float32),
                        pltpu.VMEM((H * W, 9 * C), jnp.float32)],
        compiler_params=pltpu.CompilerParams(
            dimension_semantics=("parallel",),
            vmem_limit_bytes=32 * 1024 * 1024),
        cost_estimate=pl.CostEstimate(flops=flops, transcendentals=0,
                                      bytes_accessed=bytes_accessed),
    )(xp2, mask, w1f, b1, w2f, b2)

    # ---- BN finalize: tiny per-channel math on (C,) arrays ------------------
    cnt = jnp.float32(N * H * W)
    mu = jnp.sum(s1[:, 0, :], axis=0) / cnt                  # (C,)
    ex2 = jnp.sum(s2[:, 0, :], axis=0) / cnt
    var = ex2 - mu * mu                                      # biased (training)
    inv = jax.lax.rsqrt(var + jnp.float32(1e-5))
    scale = params["gamma"].reshape(-1) * inv
    shift = params["beta"].reshape(-1) - mu * scale
    scale_t = jnp.tile(scale.reshape(1, C), (1, W))          # (1, W*C)
    shift_t = jnp.tile(shift.reshape(1, C), (1, W))

    # Lane-dense view of the activations (free row-major reshape in XLA).
    h2_dense = h2.reshape(N, H, WC)

    # ---- kernel 2: apply BN affine transform, lane-dense loads/stores -------
    out = pl.pallas_call(
        bn_apply_kernel,
        out_shape=jax.ShapeDtypeStruct((N, H, WC), x_nchw.dtype),
        grid=(N,),
        in_specs=[pl.BlockSpec((1, H, WC), lambda n: (n, 0, 0)),
                  pl.BlockSpec((1, WC), lambda n: (0, 0)),
                  pl.BlockSpec((1, WC), lambda n: (0, 0))],
        out_specs=pl.BlockSpec((1, H, WC), lambda n: (n, 0, 0)),
        compiler_params=pltpu.CompilerParams(
            dimension_semantics=("parallel",),
            vmem_limit_bytes=32 * 1024 * 1024),
    )(h2_dense, scale_t, shift_t)

    out = out.reshape(N, H, W, C)
    return jnp.transpose(out, (0, 3, 1, 2))                  # back to NCHW


conv_block_forward_jit = jax.jit(conv_block_forward,
                                 static_argnames=("mxu_dtype",))


def init_params(key, ch_in, ch_out):
    k1, k2, k3, k4 = jax.random.split(key, 4)
    # Deterministic synthetic init (shapes match nn.Conv2d / nn.BatchNorm2d).
    w1 = jax.random.normal(k1, (3, 3, ch_in, ch_out), jnp.float32) * 0.1
    b1 = jax.random.normal(k2, (1, ch_out), jnp.float32) * 0.05
    w2 = jax.random.normal(k3, (3, 3, ch_out, ch_out), jnp.float32) * 0.1
    b2 = jax.random.normal(k4, (1, ch_out), jnp.float32) * 0.05
    gamma = jnp.ones((1, ch_out), jnp.float32)               # BN default init
    beta = jnp.zeros((1, ch_out), jnp.float32)
    return {"w1": w1, "b1": b1, "w2": w2, "b2": b2,
            "gamma": gamma, "beta": beta}


def conv_block_reference(x_nchw, params):
    """Pure-JAX (f32) reference for correctness checking."""
    def conv(x, w, b):  # x: NCHW, w: (kh,kw,Cin,Cout)
        y = jax.lax.conv_general_dilated(
            x, w, window_strides=(1, 1), padding=((1, 1), (1, 1)),
            dimension_numbers=("NCHW", "HWIO", "NCHW"))
        return y + b.reshape(1, -1, 1, 1)

    h = jnp.maximum(conv(x_nchw, params["w1"], params["b1"]), 0.0)
    h = jnp.maximum(conv(h, params["w2"], params["b2"]), 0.0)
    mu = jnp.mean(h, axis=(0, 2, 3), keepdims=True)
    var = jnp.mean((h - mu) ** 2, axis=(0, 2, 3), keepdims=True)
    return ((h - mu) * jax.lax.rsqrt(var + 1e-5)
            * params["gamma"].reshape(1, -1, 1, 1)
            + params["beta"].reshape(1, -1, 1, 1))


if __name__ == "__main__":
    key = jax.random.PRNGKey(0)
    kx_, kp_ = jax.random.split(key)

    N, CH_IN, CH_OUT, HW = 2, 4, 8, 16
    x = jax.random.normal(kx_, (N, CH_IN, HW, HW), jnp.float32)
    params = init_params(kp_, CH_IN, CH_OUT)

    ref = jax.block_until_ready(conv_block_reference(x, params))

    # Full-precision (f32 MXU operand) path: tight check vs. f32 reference.
    out = jax.block_until_ready(conv_block_forward_jit(x, params))
    assert out.shape == (N, CH_OUT, HW, HW)
    assert jnp.allclose(out, ref, atol=5e-4, rtol=5e-4), (
        float(jnp.max(jnp.abs(out - ref))))

    # Reduced-precision MXU-operand path (bf16 operands, f32 accumulation):
    # the recommended production setting on v6e/v7x.  Loose smoke-test
    # tolerance since the reference is full f32.
    out_bf16 = jax.block_until_ready(
        conv_block_forward_jit(x, params, mxu_dtype=jnp.bfloat16))
    assert jnp.allclose(out_bf16, ref, atol=1e-1, rtol=1e-1), (
        float(jnp.max(jnp.abs(out_bf16 - ref))))

    print("KERNEL_OK")
</pallas_src>

<mosaic_0001>
module attributes {stable_mosaic.version = 11 : i64} {
  func.func @conv_conv_stats_kernel(%arg0: i32, %arg1: memref<1x20x20x4xf32, #tpu.memory_space<vmem>>, %arg2: memref<324x8xf32, #tpu.memory_space<vmem>>, %arg3: memref<36x8xf32, #tpu.memory_space<vmem>>, %arg4: memref<1x8xf32, #tpu.memory_space<vmem>>, %arg5: memref<72x8xf32, #tpu.memory_space<vmem>>, %arg6: memref<1x8xf32, #tpu.memory_space<vmem>>, %arg7: memref<1x256x8xf32, #tpu.memory_space<vmem>>, %arg8: memref<1x1x8xf32, #tpu.memory_space<vmem>>, %arg9: memref<1x1x8xf32, #tpu.memory_space<vmem>>, %arg10: memref<324x36xf32, #tpu.memory_space<vmem>>, %arg11: memref<256x72xf32, #tpu.memory_space<vmem>>) attributes {dimension_semantics = [#tpu.dimension_semantics<parallel>], iteration_bounds = array<i64: 2>, scalar_prefetch = 0 : i64, scratch_operands = 2 : i64, tpu.core_type = #tpu.core_type<tc>, window_params = [{transform_indices = @transform_0, window_bounds = array<i64: 1, 20, 20, 4>}, {pipeline_mode = #tpu.pipeline_mode<synchronous>, transform_indices = @transform_1, window_bounds = array<i64: 324, 8>}, {pipeline_mode = #tpu.pipeline_mode<synchronous>, transform_indices = @transform_2, window_bounds = array<i64: 36, 8>}, {pipeline_mode = #tpu.pipeline_mode<synchronous>, transform_indices = @transform_3, window_bounds = array<i64: 1, 8>}, {pipeline_mode = #tpu.pipeline_mode<synchronous>, transform_indices = @transform_4, window_bounds = array<i64: 72, 8>}, {pipeline_mode = #tpu.pipeline_mode<synchronous>, transform_indices = @transform_5, window_bounds = array<i64: 1, 8>}, {transform_indices = @transform_6, window_bounds = array<i64: 1, 256, 8>}, {transform_indices = @transform_7, window_bounds = array<i64: 1, 1, 8>}, {transform_indices = @transform_8, window_bounds = array<i64: 1, 1, 8>}]} {
    %c0 = arith.constant 0 : index
    %c0_0 = arith.constant 0 : index
    %c0_1 = arith.constant 0 : index
    %c0_2 = arith.constant 0 : index
    %0 = vector.load %arg1[%c0, %c0_0, %c0_1, %c0_2] : memref<1x20x20x4xf32, #tpu.memory_space<vmem>>, vector<1x20x20x4xf32>
    %1 = vector.shape_cast %0 : vector<1x20x20x4xf32> to vector<20x20x4xf32>
    %2 = vector.extract_strided_slice %1 {offsets = [0, 0, 0], sizes = [18, 18, 4], strides = [1, 1, 1]} : vector<20x20x4xf32> to vector<18x18x4xf32>
    %3 = vector.shape_cast %2 : vector<18x18x4xf32> to vector<324x4xf32>
    %c0_3 = arith.constant 0 : index
    %c0_4 = arith.constant 0 : index
    %4 = vector.load %arg10[%c0_3, %c0_4] : memref<324x36xf32, #tpu.memory_space<vmem>>, vector<324x4xf32>
    tpu.vector_store %arg10[%c0_3, %c0_4], %3 {strides = array<i32>} : memref<324x36xf32, #tpu.memory_space<vmem>>, vector<324x4xf32>,
    %5 = vector.extract_strided_slice %1 {offsets = [0, 1, 0], sizes = [18, 18, 4], strides = [1, 1, 1]} : vector<20x20x4xf32> to vector<18x18x4xf32>
    %6 = vector.shape_cast %5 : vector<18x18x4xf32> to vector<324x4xf32>
    %c0_5 = arith.constant 0 : index
    %c4 = arith.constant 4 : index
    %7 = vector.load %arg10[%c0_5, %c4] : memref<324x36xf32, #tpu.memory_space<vmem>>, vector<324x4xf32>
    tpu.vector_store %arg10[%c0_5, %c4], %6 {strides = array<i32>} : memref<324x36xf32, #tpu.memory_space<vmem>>, vector<324x4xf32>,
    %8 = vector.extract_strided_slice %1 {offsets = [0, 2, 0], sizes = [18, 18, 4], strides = [1, 1, 1]} : vector<20x20x4xf32> to vector<18x18x4xf32>
    %9 = vector.shape_cast %8 : vector<18x18x4xf32> to vector<324x4xf32>
    %c0_6 = arith.constant 0 : index
    %c8 = arith.constant 8 : index
    %10 = vector.load %arg10[%c0_6, %c8] : memref<324x36xf32, #tpu.memory_space<vmem>>, vector<324x4xf32>
    tpu.vector_store %arg10[%c0_6, %c8], %9 {strides = array<i32>} : memref<324x36xf32, #tpu.memory_space<vmem>>, vector<324x4xf32>,
    %11 = vector.extract_strided_slice %1 {offsets = [1, 0, 0], sizes = [18, 18, 4], strides = [1, 1, 1]} : vector<20x20x4xf32> to vector<18x18x4xf32>
    %12 = vector.shape_cast %11 : vector<18x18x4xf32> to vector<324x4xf32>
    %c0_7 = arith.constant 0 : index
    %c12 = arith.constant 12 : index
    %13 = vector.load %arg10[%c0_7, %c12] : memref<324x36xf32, #tpu.memory_space<vmem>>, vector<324x4xf32>
    tpu.vector_store %arg10[%c0_7, %c12], %12 {strides = array<i32>} : memref<324x36xf32, #tpu.memory_space<vmem>>, vector<324x4xf32>,
    %14 = vector.extract_strided_slice %1 {offsets = [1, 1, 0], sizes = [18, 18, 4], strides = [1, 1, 1]} : vector<20x20x4xf32> to vector<18x18x4xf32>
    %15 = vector.shape_cast %14 : vector<18x18x4xf32> to vector<324x4xf32>
    %c0_8 = arith.constant 0 : index
    %c16 = arith.constant 16 : index
    %16 = vector.load %arg10[%c0_8, %c16] : memref<324x36xf32, #tpu.memory_space<vmem>>, vector<324x4xf32>
    tpu.vector_store %arg10[%c0_8, %c16], %15 {strides = array<i32>} : memref<324x36xf32, #tpu.memory_space<vmem>>, vector<324x4xf32>,
    %17 = vector.extract_strided_slice %1 {offsets = [1, 2, 0], sizes = [18, 18, 4], strides = [1, 1, 1]} : vector<20x20x4xf32> to vector<18x18x4xf32>
    %18 = vector.shape_cast %17 : vector<18x18x4xf32> to vector<324x4xf32>
    %c0_9 = arith.constant 0 : index
    %c20 = arith.constant 20 : index
    %19 = vector.load %arg10[%c0_9, %c20] : memref<324x36xf32, #tpu.memory_space<vmem>>, vector<324x4xf32>
    tpu.vector_store %arg10[%c0_9, %c20], %18 {strides = array<i32>} : memref<324x36xf32, #tpu.memory_space<vmem>>, vector<324x4xf32>,
    %20 = vector.extract_strided_slice %1 {offsets = [2, 0, 0], sizes = [18, 18, 4], strides = [1, 1, 1]} : vector<20x20x4xf32> to vector<18x18x4xf32>
    %21 = vector.shape_cast %20 : vector<18x18x4xf32> to vector<324x4xf32>
    %c0_10 = arith.constant 0 : index
    %c24 = arith.constant 24 : index
    %22 = vector.load %arg10[%c0_10, %c24] : memref<324x36xf32, #tpu.memory_space<vmem>>, vector<324x4xf32>
    tpu.vector_store %arg10[%c0_10, %c24], %21 {strides = array<i32>} : memref<324x36xf32, #tpu.memory_space<vmem>>, vector<324x4xf32>,
    %23 = vector.extract_strided_slice %1 {offsets = [2, 1, 0], sizes = [18, 18, 4], strides = [1, 1, 1]} : vector<20x20x4xf32> to vector<18x18x4xf32>
    %24 = vector.shape_cast %23 : vector<18x18x4xf32> to vector<324x4xf32>
    %c0_11 = arith.constant 0 : index
    %c28 = arith.constant 28 : index
    %25 = vector.load %arg10[%c0_11, %c28] : memref<324x36xf32, #tpu.memory_space<vmem>>, vector<324x4xf32>
    tpu.vector_store %arg10[%c0_11, %c28], %24 {strides = array<i32>} : memref<324x36xf32, #tpu.memory_space<vmem>>, vector<324x4xf32>,
    %26 = vector.extract_strided_slice %1 {offsets = [2, 2, 0], sizes = [18, 18, 4], strides = [1, 1, 1]} : vector<20x20x4xf32> to vector<18x18x4xf32>
    %27 = vector.shape_cast %26 : vector<18x18x4xf32> to vector<324x4xf32>
    %c0_12 = arith.constant 0 : index
    %c32 = arith.constant 32 : index
    %28 = vector.load %arg10[%c0_12, %c32] : memref<324x36xf32, #tpu.memory_space<vmem>>, vector<324x4xf32>
    tpu.vector_store %arg10[%c0_12, %c32], %27 {strides = array<i32>} : memref<324x36xf32, #tpu.memory_space<vmem>>, vector<324x4xf32>,
    %c0_13 = arith.constant 0 : index
    %c0_14 = arith.constant 0 : index
    %29 = vector.load %arg10[%c0_13, %c0_14] : memref<324x36xf32, #tpu.memory_space<vmem>>, vector<324x36xf32>
    %c0_15 = arith.constant 0 : index
    %c0_16 = arith.constant 0 : index
    %30 = vector.load %arg3[%c0_15, %c0_16] : memref<36x8xf32, #tpu.memory_space<vmem>>, vector<36x8xf32>
    %cst = arith.constant dense<0.000000e+00> : vector<324x8xf32>
    %31 = tpu.matmul %29, %30, %cst {dimension_numbers = #tpu.dot_dimension_numbers<[1], [0], [0], [1], [0, 0, 1, 1], [], []>} : vector<324x36xf32>, vector<36x8xf32>, vector<324x8xf32> -> vector<324x8xf32>
    %c0_17 = arith.constant 0 : index
    %c0_18 = arith.constant 0 : index
    %32 = vector.load %arg4[%c0_17, %c0_18] : memref<1x8xf32, #tpu.memory_space<vmem>>, vector<1x8xf32>
    %33 = vector.broadcast %32 : vector<1x8xf32> to vector<324x8xf32>
    %34 = arith.addf %31, %33 : vector<324x8xf32>
    %cst_19 = arith.constant 0.000000e+00 : f32
    %35 = vector.broadcast %cst_19 : f32 to vector<324x8xf32>
    %36 = arith.maximumf %34, %35 : vector<324x8xf32>
    %c0_20 = arith.constant 0 : index
    %c0_21 = arith.constant 0 : index
    %37 = vector.load %arg2[%c0_20, %c0_21] : memref<324x8xf32, #tpu.memory_space<vmem>>, vector<324x8xf32>
    %38 = arith.mulf %36, %37 : vector<324x8xf32>
    %39 = vector.shape_cast %38 : vector<324x8xf32> to vector<18x18x8xf32>
    %40 = vector.extract_strided_slice %39 {offsets = [0, 0, 0], sizes = [16, 16, 8], strides = [1, 1, 1]} : vector<18x18x8xf32> to vector<16x16x8xf32>
    %41 = vector.shape_cast %40 : vector<16x16x8xf32> to vector<256x8xf32>
    %c0_22 = arith.constant 0 : index
    %c0_23 = arith.constant 0 : index
    %42 = vector.load %arg11[%c0_22, %c0_23] : memref<256x72xf32, #tpu.memory_space<vmem>>, vector<256x8xf32>
    tpu.vector_store %arg11[%c0_22, %c0_23], %41 {strides = array<i32>} : memref<256x72xf32, #tpu.memory_space<vmem>>, vector<256x8xf32>,
    %43 = vector.extract_strided_slice %39 {offsets = [0, 1, 0], sizes = [16, 16, 8], strides = [1, 1, 1]} : vector<18x18x8xf32> to vector<16x16x8xf32>
    %44 = vector.shape_cast %43 : vector<16x16x8xf32> to vector<256x8xf32>
    %c0_24 = arith.constant 0 : index
    %c8_25 = arith.constant 8 : index
    %45 = vector.load %arg11[%c0_24, %c8_25] : memref<256x72xf32, #tpu.memory_space<vmem>>, vector<256x8xf32>
    tpu.vector_store %arg11[%c0_24, %c8_25], %44 {strides = array<i32>} : memref<256x72xf32, #tpu.memory_space<vmem>>, vector<256x8xf32>,
    %46 = vector.extract_strided_slice %39 {offsets = [0, 2, 0], sizes = [16, 16, 8], strides = [1, 1, 1]} : vector<18x18x8xf32> to vector<16x16x8xf32>
    %47 = vector.shape_cast %46 : vector<16x16x8xf32> to vector<256x8xf32>
    %c0_26 = arith.constant 0 : index
    %c16_27 = arith.constant 16 : index
    %48 = vector.load %arg11[%c0_26, %c16_27] : memref<256x72xf32, #tpu.memory_space<vmem>>, vector<256x8xf32>
    tpu.vector_store %arg11[%c0_26, %c16_27], %47 {strides = array<i32>} : memref<256x72xf32, #tpu.memory_space<vmem>>, vector<256x8xf32>,
    %49 = vector.extract_strided_slice %39 {offsets = [1, 0, 0], sizes = [16, 16, 8], strides = [1, 1, 1]} : vector<18x18x8xf32> to vector<16x16x8xf32>
    %50 = vector.shape_cast %49 : vector<16x16x8xf32> to vector<256x8xf32>
    %c0_28 = arith.constant 0 : index
    %c24_29 = arith.constant 24 : index
    %51 = vector.load %arg11[%c0_28, %c24_29] : memref<256x72xf32, #tpu.memory_space<vmem>>, vector<256x8xf32>
    tpu.vector_store %arg11[%c0_28, %c24_29], %50 {strides = array<i32>} : memref<256x72xf32, #tpu.memory_space<vmem>>, vector<256x8xf32>,
    %52 = vector.extract_strided_slice %39 {offsets = [1, 1, 0], sizes = [16, 16, 8], strides = [1, 1, 1]} : vector<18x18x8xf32> to vector<16x16x8xf32>
    %53 = vector.shape_cast %52 : vector<16x16x8xf32> to vector<256x8xf32>
    %c0_30 = arith.constant 0 : index
    %c32_31 = arith.constant 32 : index
    %54 = vector.load %arg11[%c0_30, %c32_31] : memref<256x72xf32, #tpu.memory_space<vmem>>, vector<256x8xf32>
    tpu.vector_store %arg11[%c0_30, %c32_31], %53 {strides = array<i32>} : memref<256x72xf32, #tpu.memory_space<vmem>>, vector<256x8xf32>,
    %55 = vector.extract_strided_slice %39 {offsets = [1, 2, 0], sizes = [16, 16, 8], strides = [1, 1, 1]} : vector<18x18x8xf32> to vector<16x16x8xf32>
    %56 = vector.shape_cast %55 : vector<16x16x8xf32> to vector<256x8xf32>
    %c0_32 = arith.constant 0 : index
    %c40 = arith.constant 40 : index
    %57 = vector.load %arg11[%c0_32, %c40] : memref<256x72xf32, #tpu.memory_space<vmem>>, vector<256x8xf32>
    tpu.vector_store %arg11[%c0_32, %c40], %56 {strides = array<i32>} : memref<256x72xf32, #tpu.memory_space<vmem>>, vector<256x8xf32>,
    %58 = vector.extract_strided_slice %39 {offsets = [2, 0, 0], sizes = [16, 16, 8], strides = [1, 1, 1]} : vector<18x18x8xf32> to vector<16x16x8xf32>
    %59 = vector.shape_cast %58 : vector<16x16x8xf32> to vector<256x8xf32>
    %c0_33 = arith.constant 0 : index
    %c48 = arith.constant 48 : index
    %60 = vector.load %arg11[%c0_33, %c48] : memref<256x72xf32, #tpu.memory_space<vmem>>, vector<256x8xf32>
    tpu.vector_store %arg11[%c0_33, %c48], %59 {strides = array<i32>} : memref<256x72xf32, #tpu.memory_space<vmem>>, vector<256x8xf32>,
    %61 = vector.extract_strided_slice %39 {offsets = [2, 1, 0], sizes = [16, 16, 8], strides = [1, 1, 1]} : vector<18x18x8xf32> to vector<16x16x8xf32>
    %62 = vector.shape_cast %61 : vector<16x16x8xf32> to vector<256x8xf32>
    %c0_34 = arith.constant 0 : index
    %c56 = arith.constant 56 : index
    %63 = vector.load %arg11[%c0_34, %c56] : memref<256x72xf32, #tpu.memory_space<vmem>>, vector<256x8xf32>
    tpu.vector_store %arg11[%c0_34, %c56], %62 {strides = array<i32>} : memref<256x72xf32, #tpu.memory_space<vmem>>, vector<256x8xf32>,
    %64 = vector.extract_strided_slice %39 {offsets = [2, 2, 0], sizes = [16, 16, 8], strides = [1, 1, 1]} : vector<18x18x8xf32> to vector<16x16x8xf32>
    %65 = vector.shape_cast %64 : vector<16x16x8xf32> to vector<256x8xf32>
    %c0_35 = arith.constant 0 : index
    %c64 = arith.constant 64 : index
    %66 = vector.load %arg11[%c0_35, %c64] : memref<256x72xf32, #tpu.memory_space<vmem>>, vector<256x8xf32>
    tpu.vector_store %arg11[%c0_35, %c64], %65 {strides = array<i32>} : memref<256x72xf32, #tpu.memory_space<vmem>>, vector<256x8xf32>,
    %c0_36 = arith.constant 0 : index
    %c0_37 = arith.constant 0 : index
    %67 = vector.load %arg11[%c0_36, %c0_37] : memref<256x72xf32, #tpu.memory_space<vmem>>, vector<256x72xf32>
    %c0_38 = arith.constant 0 : index
    %c0_39 = arith.constant 0 : index
    %68 = vector.load %arg5[%c0_38, %c0_39] : memref<72x8xf32, #tpu.memory_space<vmem>>, vector<72x8xf32>
    %cst_40 = arith.constant dense<0.000000e+00> : vector<256x8xf32>
    %69 = tpu.matmul %67, %68, %cst_40 {dimension_numbers = #tpu.dot_dimension_numbers<[1], [0], [0], [1], [0, 0, 1, 1], [], []>} : vector<256x72xf32>, vector<72x8xf32>, vector<256x8xf32> -> vector<256x8xf32>
    %c0_41 = arith.constant 0 : index
    %c0_42 = arith.constant 0 : index
    %70 = vector.load %arg6[%c0_41, %c0_42] : memref<1x8xf32, #tpu.memory_space<vmem>>, vector<1x8xf32>
    %71 = vector.broadcast %70 : vector<1x8xf32> to vector<256x8xf32>
    %72 = arith.addf %69, %71 : vector<256x8xf32>
    %cst_43 = arith.constant 0.000000e+00 : f32
    %73 = vector.broadcast %cst_43 : f32 to vector<256x8xf32>
    %74 = arith.maximumf %72, %73 : vector<256x8xf32>
    %c0_44 = arith.constant 0 : index
    %c0_45 = arith.constant 0 : index
    %c0_46 = arith.constant 0 : index
    %75 = vector.load %arg7[%c0_44, %c0_45, %c0_46] : memref<1x256x8xf32, #tpu.memory_space<vmem>>, vector<1x256x8xf32>
    %76 = vector.shape_cast %75 : vector<1x256x8xf32> to vector<256x8xf32>
    %77 = vector.shape_cast %74 : vector<256x8xf32> to vector<1x256x8xf32>
    tpu.vector_store %arg7[%c0_44, %c0_45, %c0_46], %77 {strides = array<i32>} : memref<1x256x8xf32, #tpu.memory_space<vmem>>, vector<1x256x8xf32>,
    %cst_47 = arith.constant dense<0.000000e+00> : vector<8xf32>
    %78 = vector.multi_reduction <add>, %74, %cst_47 [0] : vector<256x8xf32> to vector<8xf32>
    %79 = vector.shape_cast %78 : vector<8xf32> to vector<1x8xf32>
    %c0_48 = arith.constant 0 : index
    %c0_49 = arith.constant 0 : index
    %c0_50 = arith.constant 0 : index
    %80 = vector.load %arg8[%c0_48, %c0_49, %c0_50] : memref<1x1x8xf32, #tpu.memory_space<vmem>>, vector<1x1x8xf32>
    %81 = vector.shape_cast %80 : vector<1x1x8xf32> to vector<1x8xf32>
    %82 = vector.shape_cast %79 : vector<1x8xf32> to vector<1x1x8xf32>
    tpu.vector_store %arg8[%c0_48, %c0_49, %c0_50], %82 {strides = array<i32>} : memref<1x1x8xf32, #tpu.memory_space<vmem>>, vector<1x1x8xf32>,
    %83 = arith.mulf %74, %74 : vector<256x8xf32>
    %cst_51 = arith.constant dense<0.000000e+00> : vector<8xf32>
    %84 = vector.multi_reduction <add>, %83, %cst_51 [0] : vector<256x8xf32> to vector<8xf32>
    %85 = vector.shape_cast %84 : vector<8xf32> to vector<1x8xf32>
    %c0_52 = arith.constant 0 : index
    %c0_53 = arith.constant 0 : index
    %c0_54 = arith.constant 0 : index
    %86 = vector.load %arg9[%c0_52, %c0_53, %c0_54] : memref<1x1x8xf32, #tpu.memory_space<vmem>>, vector<1x1x8xf32>
    %87 = vector.shape_cast %86 : vector<1x1x8xf32> to vector<1x8xf32>
    %88 = vector.shape_cast %85 : vector<1x8xf32> to vector<1x1x8xf32>
    tpu.vector_store %arg9[%c0_52, %c0_53, %c0_54], %88 {strides = array<i32>} : memref<1x1x8xf32, #tpu.memory_space<vmem>>, vector<1x1x8xf32>,
    return
  }
  func.func @transform_0(%arg0: i32) -> (i32, i32, i32, i32) {
    %c0_i32 = arith.constant 0 : i32
    %c0_i32_0 = arith.constant 0 : i32
    %c0_i32_1 = arith.constant 0 : i32
    %c0_i32_2 = arith.constant 0 : i32
    return %arg0, %c0_i32, %c0_i32_0, %c0_i32_1 : i32, i32, i32, i32
  }
  func.func @transform_1(%arg0: i32) -> (i32, i32) {
    %c0_i32 = arith.constant 0 : i32
    %c0_i32_0 = arith.constant 0 : i32
    %c0_i32_1 = arith.constant 0 : i32
    return %c0_i32, %c0_i32_0 : i32, i32
  }
  func.func @transform_2(%arg0: i32) -> (i32, i32) {
    %c0_i32 = arith.constant 0 : i32
    %c0_i32_0 = arith.constant 0 : i32
    %c0_i32_1 = arith.constant 0 : i32
    return %c0_i32, %c0_i32_0 : i32, i32
  }
  func.func @transform_3(%arg0: i32) -> (i32, i32) {
    %c0_i32 = arith.constant 0 : i32
    %c0_i32_0 = arith.constant 0 : i32
    %c0_i32_1 = arith.constant 0 : i32
    return %c0_i32, %c0_i32_0 : i32, i32
  }
  func.func @transform_4(%arg0: i32) -> (i32, i32) {
    %c0_i32 = arith.constant 0 : i32
    %c0_i32_0 = arith.constant 0 : i32
    %c0_i32_1 = arith.constant 0 : i32
    return %c0_i32, %c0_i32_0 : i32, i32
  }
  func.func @transform_5(%arg0: i32) -> (i32, i32) {
    %c0_i32 = arith.constant 0 : i32
    %c0_i32_0 = arith.constant 0 : i32
    %c0_i32_1 = arith.constant 0 : i32
    return %c0_i32, %c0_i32_0 : i32, i32
  }
  func.func @transform_6(%arg0: i32) -> (i32, i32, i32) {
    %c0_i32 = arith.constant 0 : i32
    %c0_i32_0 = arith.constant 0 : i32
    %c0_i32_1 = arith.constant 0 : i32
    return %arg0, %c0_i32, %c0_i32_0 : i32, i32, i32
  }
  func.func @transform_7(%arg0: i32) -> (i32, i32, i32) {
    %c0_i32 = arith.constant 0 : i32
    %c0_i32_0 = arith.constant 0 : i32
    %c0_i32_1 = arith.constant 0 : i32
    return %arg0, %c0_i32, %c0_i32_0 : i32, i32, i32
  }
  func.func @transform_8(%arg0: i32) -> (i32, i32, i32) {
    %c0_i32 = arith.constant 0 : i32
    %c0_i32_0 = arith.constant 0 : i32
    %c0_i32_1 = arith.constant 0 : i32
    return %arg0, %c0_i32, %c0_i32_0 : i32, i32, i32
  }
}

module attributes {stable_mosaic.version = 11 : i64} {
  func.func @bn_apply_kernel(%arg0: i32, %arg1: memref<1x16x128xf32, #tpu.memory_space<vmem>>, %arg2: memref<1x128xf32, #tpu.memory_space<vmem>>, %arg3: memref<1x128xf32, #tpu.memory_space<vmem>>, %arg4: memref<1x16x128xf32, #tpu.memory_space<vmem>>) attributes {dimension_semantics = [#tpu.dimension_semantics<parallel>], iteration_bounds = array<i64: 2>, scalar_prefetch = 0 : i64, scratch_operands = 0 : i64, tpu.core_type = #tpu.core_type<tc>, window_params = [{transform_indices = @transform_0, window_bounds = array<i64: 1, 16, 128>}, {pipeline_mode = #tpu.pipeline_mode<synchronous>, transform_indices = @transform_1, window_bounds = array<i64: 1, 128>}, {pipeline_mode = #tpu.pipeline_mode<synchronous>, transform_indices = @transform_2, window_bounds = array<i64: 1, 128>}, {transform_indices = @transform_3, window_bounds = array<i64: 1, 16, 128>}]} {
    %c0 = arith.constant 0 : index
    %c0_0 = arith.constant 0 : index
    %c0_1 = arith.constant 0 : index
    %0 = vector.load %arg1[%c0, %c0_0, %c0_1] : memref<1x16x128xf32, #tpu.memory_space<vmem>>, vector<1x16x128xf32>
    %1 = vector.shape_cast %0 : vector<1x16x128xf32> to vector<16x128xf32>
    %c0_2 = arith.constant 0 : index
    %c0_3 = arith.constant 0 : index
    %2 = vector.load %arg2[%c0_2, %c0_3] : memref<1x128xf32, #tpu.memory_space<vmem>>, vector<1x128xf32>
    %3 = vector.broadcast %2 : vector<1x128xf32> to vector<16x128xf32>
    %4 = arith.mulf %1, %3 : vector<16x128xf32>
    %c0_4 = arith.constant 0 : index
    %c0_5 = arith.constant 0 : index
    %5 = vector.load %arg3[%c0_4, %c0_5] : memref<1x128xf32, #tpu.memory_space<vmem>>, vector<1x128xf32>
    %6 = vector.broadcast %5 : vector<1x128xf32> to vector<16x128xf32>
    %7 = arith.addf %4, %6 : vector<16x128xf32>
    %c0_6 = arith.constant 0 : index
    %c0_7 = arith.constant 0 : index
    %c0_8 = arith.constant 0 : index
    %8 = vector.load %arg4[%c0_6, %c0_7, %c0_8] : memref<1x16x128xf32, #tpu.memory_space<vmem>>, vector<1x16x128xf32>
    %9 = vector.shape_cast %8 : vector<1x16x128xf32> to vector<16x128xf32>
    %10 = vector.shape_cast %7 : vector<16x128xf32> to vector<1x16x128xf32>
    tpu.vector_store %arg4[%c0_6, %c0_7, %c0_8], %10 {strides = array<i32>} : memref<1x16x128xf32, #tpu.memory_space<vmem>>, vector<1x16x128xf32>,
    return
  }
  func.func @transform_0(%arg0: i32) -> (i32, i32, i32) {
    %c0_i32 = arith.constant 0 : i32
    %c0_i32_0 = arith.constant 0 : i32
    %c0_i32_1 = arith.constant 0 : i32
    return %arg0, %c0_i32, %c0_i32_0 : i32, i32, i32
  }
  func.func @transform_1(%arg0: i32) -> (i32, i32) {
    %c0_i32 = arith.constant 0 : i32
    %c0_i32_0 = arith.constant 0 : i32
    %c0_i32_1 = arith.constant 0 : i32
    return %c0_i32, %c0_i32_0 : i32, i32
  }
  func.func @transform_2(%arg0: i32) -> (i32, i32) {
    %c0_i32 = arith.constant 0 : i32
    %c0_i32_0 = arith.constant 0 : i32
    %c0_i32_1 = arith.constant 0 : i32
    return %c0_i32, %c0_i32_0 : i32, i32
  }
  func.func @transform_3(%arg0: i32) -> (i32, i32, i32) {
    %c0_i32 = arith.constant 0 : i32
    %c0_i32_0 = arith.constant 0 : i32
    %c0_i32_1 = arith.constant 0 : i32
    return %arg0, %c0_i32, %c0_i32_0 : i32, i32, i32
  }
}

</mosaic_0001>

<llo_original>
// kernel: conv_block_forward.3
$region0: #{conv_block_forward.3}
  #allocation0 [shape = 'u32[]', space=smem, size = 0x4, offset = 0x4, fixed_abs, tag = 'smem constant byte address 0x4 - core index']
  #allocation1 [shape = 'u32[144,128]{1,0:T(1,128)}', space=vmem, size = 0x12000, scoped, tag = 'internal scratch']
  %s0 = inlined_call_operand.vmem [shape: f32[2,16,128], index: 0, kind: input, shape index: {}]
  %s1 = inlined_call_operand.vmem [shape: f32[1,128], index: 1, kind: input, shape index: {}]
  %s2 = inlined_call_operand.vmem [shape: f32[1,128], index: 2, kind: input, shape index: {}]
  %s3 = inlined_call_operand.vmem [shape: f32[2,16,128], index: 3, kind: output, shape index: {}]
  %s4 = sld [smem:[#allocation0]]
  $region45: #{conv_block_forward.3} parent=0
    _
  %s6 = ssub.s32 1, %s4
  %s7 = scalar_select 0, %s6, %s4
  loop: start=0, step=1, limit=4
  $region2: #{conv_block_forward.3} parent=0 // loop_pre_header
    _
  $region3: #{conv_block_forward.3} parent=0 // loop_header
    %s9 = sphi 0, %s13
    %p10 = scmp.ge.s32.totalorder %s9, 4
    %s19 = sphi 0, %s21
    %s22 = sphi 0, %s19
    %s23 = sphi 0, %s22
    %s39 = sphi 0, %s23
    %s43 = sphi 0, %s43
    %s45 = sphi 0, %s43
    %s46 = sphi 0, %s45
    %s60 = sphi 0, %s46
    %s64 = sphi 0, %s64
    %s66 = sphi 0, %s64
    %s67 = sphi 0, %s66
    %s81 = sphi 0, %s67
    %s87 = sphi 0, %s89
    %s90 = sphi 0, %s87
    %s91 = sphi 0, %s90
    %s107 = sphi 0, %s91
  $region4: #{conv_block_forward.3} parent=0 // loop_header_branch
    %12 = sbr.rel (%p10) target = $region8
  $region5: #{conv_block_forward.3} parent=0 // loop_body
    %s14 = ssub.s32 %s9, 1
    %s15 = ssub.s32 %s9, 2
    %s16 = sadd.s32 %s9, 1
    %s17 = ssub.s32 %s9, %s16
    %p18 = scmp.eq.s32.totalorder %s17, 0
    %s20 = sadd.s32 %s19, 1
    %s21 = scalar_select %p18, %s19, %s20
    %p24 = pneg %p18
    %p25 = scmp.eq.s32.totalorder %s9, 1
    %p26 = por %p24, %p25
    %p27 = scmp.ne.s32.totalorder %s19, %s22
    %p28 = scmp.eq.s32.totalorder %s9, 0
    %p29 = por %p27, %p28
    %p30 = scmp.ne.s32.totalorder %s19, %s22
    %p31 = scmp.eq.s32.totalorder %s14, 1
    %p32 = por %p30, %p31
    %p33 = scmp.ne.s32.totalorder %s22, %s23
    %p34 = scmp.eq.s32.totalorder %s14, 0
    %p35 = por %p33, %p34
    %p36 = scmp.ne.s32.totalorder %s22, %s23
    %p37 = scmp.eq.s32.totalorder %s15, 1
    %p38 = por %p36, %p37
    %p40 = scmp.ne.s32.totalorder %s23, %s39
    %p41 = scmp.eq.s32.totalorder %s15, 0
    %p42 = por %p40, %p41
    %s44 = sadd.s32 %s43, 1
    %p47 = scmp.eq.s32.totalorder %s9, 1
    %p48 = scmp.ne.s32.totalorder %s43, %s45
    %p49 = scmp.eq.s32.totalorder %s9, 0
    %p50 = por %p48, %p49
    %p51 = scmp.ne.s32.totalorder %s43, %s45
    %p52 = scmp.eq.s32.totalorder %s14, 1
    %p53 = por %p51, %p52
    %p54 = scmp.ne.s32.totalorder %s45, %s46
    %p55 = scmp.eq.s32.totalorder %s14, 0
    %p56 = por %p54, %p55
    %p57 = scmp.ne.s32.totalorder %s45, %s46
    %p58 = scmp.eq.s32.totalorder %s15, 1
    %p59 = por %p57, %p58
    %p61 = scmp.ne.s32.totalorder %s46, %s60
    %p62 = scmp.eq.s32.totalorder %s15, 0
    %p63 = por %p61, %p62
    %s65 = sadd.s32 %s64, 1
    %p68 = scmp.eq.s32.totalorder %s9, 1
    %p69 = scmp.ne.s32.totalorder %s64, %s66
    %p70 = scmp.eq.s32.totalorder %s9, 0
    %p71 = por %p69, %p70
    %p72 = scmp.ne.s32.totalorder %s64, %s66
    %p73 = scmp.eq.s32.totalorder %s14, 1
    %p74 = por %p72, %p73
    %p75 = scmp.ne.s32.totalorder %s66, %s67
    %p76 = scmp.eq.s32.totalorder %s14, 0
    %p77 = por %p75, %p76
    %p78 = scmp.ne.s32.totalorder %s66, %s67
    %p79 = scmp.eq.s32.totalorder %s15, 1
    %p80 = por %p78, %p79
    %p82 = scmp.ne.s32.totalorder %s67, %s81
    %p83 = scmp.eq.s32.totalorder %s15, 0
    %p84 = por %p82, %p83
    %s85 = ssub.s32 %s9, %s16
    %p86 = scmp.eq.s32.totalorder %s85, 0
    %s88 = sadd.s32 %s87, 1
    %s89 = scalar_select %p86, %s87, %s88
    %p92 = pneg %p86
    %p93 = scmp.eq.s32.totalorder %s9, 1
    %p94 = por %p92, %p93
    %p95 = scmp.ne.s32.totalorder %s87, %s90
    %p96 = scmp.eq.s32.totalorder %s9, 0
    %p97 = por %p95, %p96
    %p98 = scmp.ne.s32.totalorder %s87, %s90
    %p99 = scmp.eq.s32.totalorder %s14, 1
    %p100 = por %p98, %p99
    %p101 = scmp.ne.s32.totalorder %s90, %s91
    %p102 = scmp.eq.s32.totalorder %s14, 0
    %p103 = por %p101, %p102
    %p104 = scmp.ne.s32.totalorder %s90, %s91
    %p105 = scmp.eq.s32.totalorder %s15, 1
    %p106 = por %p104, %p105
    %p108 = scmp.ne.s32.totalorder %s91, %s107
    %p109 = scmp.eq.s32.totalorder %s15, 0
    %p110 = por %p108, %p109
    %p111 = scmp.le.s32.totalorder 1, %s9
    %p112 = scmp.lt.s32.totalorder %s9, 3
    %p113 = pnand %p111, %p112
    %p114 = pneg %p113
    // Predicated region
    $region9: #{conv_block_forward.3} parent=5 // pred_check
      _
    $region10: #{conv_block_forward.3} parent=5 // pred_check_branch
      %116 = sbr.rel (%p113) target = $region12
    $region11: #{conv_block_forward.3} parent=5 // pred_region
      %s117 = ssub.s32 %s9, 1
      // Predicated region
      $region13: #{conv_block_forward.3} parent=11 // pred_check
        %p118 = pneg %p56
      $region14: #{conv_block_forward.3} parent=11 // pred_check_branch
        %120 = sbr.rel (%p118) target = $region16
      $region15: #{conv_block_forward.3} parent=11 // pred_region
        _
      $region16: #{conv_block_forward.3} parent=11 // pred_fallthru
        _
      // Predicated region
      $region17: #{conv_block_forward.3} parent=11 // pred_check
        %p121 = pneg %p77
      $region18: #{conv_block_forward.3} parent=11 // pred_check_branch
        %123 = sbr.rel (%p121) target = $region20
      $region19: #{conv_block_forward.3} parent=11 // pred_region
        _
      $region20: #{conv_block_forward.3} parent=11 // pred_fallthru
        _
    $region12: #{conv_block_forward.3} parent=5 // pred_fallthru
      _
    %p124 = scmp.lt.s32.totalorder %s9, 2
    // Predicated region
    $region21: #{conv_block_forward.3} parent=5 // pred_check
      %p125 = pneg %p124
    $region22: #{conv_block_forward.3} parent=5 // pred_check_branch
      %127 = sbr.rel (%p125) target = $region24
    $region23: #{conv_block_forward.3} parent=5 // pred_region
      // Predicated region
      $region25: #{conv_block_forward.3} parent=23 // pred_check
        %p128 = pneg %p29
      $region26: #{conv_block_forward.3} parent=23 // pred_check_branch
        %130 = sbr.rel (%p128) target = $region28
      $region27: #{conv_block_forward.3} parent=23 // pred_region
        %p131 = scmp.lt.s32.totalorder %s9, 1
        %s132 = scalar_select %p131, %s9, 1
        %s133 = smul.addr %s132, 2
        %s134 = smul.addr %s133, 8
        %s135 = scalar_lea.vmem %s0, %s134
      $region28: #{conv_block_forward.3} parent=23 // pred_fallthru
        _
    $region24: #{conv_block_forward.3} parent=5 // pred_fallthru
      _
    %p136 = scmp.le.s32.totalorder 1, %s9
    %p137 = scmp.lt.s32.totalorder %s9, 3
    %p138 = pnand %p136, %p137
    %p139 = pneg %p138
    // Predicated region
    $region29: #{conv_block_forward.3} parent=5 // pred_check
      _
    $region30: #{conv_block_forward.3} parent=5 // pred_check_branch
      %141 = sbr.rel (%p138) target = $region32
    $region31: #{conv_block_forward.3} parent=5 // pred_region
      %s142 = ssub.s32 %s9, 1
      %p143 = scmp.lt.s32.totalorder %s14, 1
      %s144 = scalar_select %p143, %s14, 1
      %s145 = smul.addr %s144, 2
      %s146 = smul.addr %s145, 8
      %s147 = scalar_lea.vmem %s0, %s146
      %p148 = pneg %p35
      %p149 = pneg %p32
      %p150 = pneg %p56
      %p151 = pneg %p53
      %p152 = pneg %p77
      %p153 = pneg %p74
      %p154 = pneg %p103
      %p155 = pneg %p100
      %p156 = scmp.lt.s32.totalorder %s14, 1
      %s157 = scalar_select %p156, %s14, 1
      %s158 = smul.addr %s157, 2
      %s159 = smul.addr %s158, 8
      %s160 = scalar_lea.vmem %s3, %s159
      %p161 = scmp.lt.s32.totalorder %s14, 1
      %s162 = scalar_select %p161, %s14, 1
      %s163 = smul.addr %s162, 2
      %s164 = smul.addr %s163, 8
      %s165 = scalar_lea.vmem %s0, %s164
      %p166 = scmp.lt.s32.totalorder %s14, 1
      %s167 = scalar_select %p166, %s14, 1
      %s168 = smul.addr %s167, 2
      %s169 = smul.addr %s168, 8
      %s170 = scalar_lea.vmem %s3, %s169
      %v171 = vld [vmem:[%s165] sm:$0xff]
      %v172 = vld [vmem:[%s165 + $0x8] sm:$0xff]
      %v173 = vld [vmem:[%s1] sm:$0x1]
      %v175 = vlaneseq
      %v176 = vshrl.u32 %v175, 7
      %v177 = vsub.s32 0, %v176
      %v178 = vrot.slane %v173, %v177
      %v180 = vmul.f32 %v171, %v178
      %v181 = vmul.f32 %v172, %v178
      %v182 = vld [vmem:[%s2] sm:$0x1]
      %v184 = vlaneseq
      %v185 = vshrl.u32 %v184, 7
      %v186 = vsub.s32 0, %v185
      %v187 = vrot.slane %v182, %v186
      %v189 = vadd.f32 %v180, %v187
      %v190 = vadd.f32 %v181, %v187
      %191 = vst [vmem:[%s170] sm:$0xff] %v189
      %192 = vst [vmem:[%s170 + $0x8] sm:$0xff] %v190
      %p193 = scmp.lt.s32.totalorder %s14, 1
      %s194 = scalar_select %p193, %s14, 1
      %s195 = smul.addr %s194, 2
      %s196 = smul.addr %s195, 8
      %s197 = scalar_lea.vmem %s3, %s196
      // Predicated region
      $region33: #{conv_block_forward.3} parent=31 // pred_check
        %p198 = pneg %p100
      $region34: #{conv_block_forward.3} parent=31 // pred_check_branch
        %200 = sbr.rel (%p198) target = $region36
      $region35: #{conv_block_forward.3} parent=31 // pred_region
        _
      $region36: #{conv_block_forward.3} parent=31 // pred_fallthru
        _
    $region32: #{conv_block_forward.3} parent=5 // pred_fallthru
      _
    %p201 = scmp.le.s32.totalorder 2, %s9
    // Predicated region
    $region37: #{conv_block_forward.3} parent=5 // pred_check
      %p202 = pneg %p201
    $region38: #{conv_block_forward.3} parent=5 // pred_check_branch
      %204 = sbr.rel (%p202) target = $region40
    $region39: #{conv_block_forward.3} parent=5 // pred_region
      %s205 = ssub.s32 %s9, 2
      // Predicated region
      $region41: #{conv_block_forward.3} parent=39 // pred_check
        %p206 = pneg %p106
      $region42: #{conv_block_forward.3} parent=39 // pred_check_branch
        %208 = sbr.rel (%p206) target = $region44
      $region43: #{conv_block_forward.3} parent=39 // pred_region
        %p209 = scmp.lt.s32.totalorder %s15, 1
        %s210 = scalar_select %p209, %s15, 1
        %s211 = smul.addr %s210, 2
        %s212 = smul.addr %s211, 8
        %s213 = scalar_lea.vmem %s3, %s212
      $region44: #{conv_block_forward.3} parent=39 // pred_fallthru
        _
    $region40: #{conv_block_forward.3} parent=5 // pred_fallthru
      _
  $region6: #{conv_block_forward.3} parent=0 // loop_footer
    %s13 = sadd.s32 1, %s9
  $region7: #{conv_block_forward.3} parent=0 // loop_footer_branch
    %8 = sbr.rel target = $region3
  $region8: #{conv_block_forward.3} parent=0 // loop_exit
    _

// kernel: conv_block_forward.2
$region0: #{conv_block_forward.2}
  #allocation0 [shape = 'u32[]', space=smem, size = 0x4, offset = 0x4, fixed_abs, tag = 'smem constant byte address 0x4 - core index']
  #allocation1 [shape = 'u32[144,128]{1,0:T(1,128)}', space=vmem, size = 0x12000, scoped, tag = 'internal scratch']
  #allocation2 [shape = 'f32[324,36]{1,0:T(8,128)}', space=vmem, size = 0x29000, scoped, tag = 'scratch operand']
  #allocation3 [shape = 'f32[256,72]{1,0:T(8,128)}', space=vmem, size = 0x20000, scoped, tag = 'scratch operand']
  %s0 = inlined_call_operand.vmem [shape: f32[2,20,20,4], index: 0, kind: input, shape index: {}]
  %s1 = inlined_call_operand.vmem [shape: f32[324,8], index: 1, kind: input, shape index: {}]
  %s2 = inlined_call_operand.vmem [shape: f32[36,8], index: 2, kind: input, shape index: {}]
  %s3 = inlined_call_operand.vmem [shape: f32[1,8], index: 3, kind: input, shape index: {}]
  %s4 = inlined_call_operand.vmem [shape: f32[72,8], index: 4, kind: input, shape index: {}]
  %s5 = inlined_call_operand.vmem [shape: f32[1,8], index: 5, kind: input, shape index: {}]
  %s6 = inlined_call_operand.vmem [shape: f32[2,256,8], index: 6, kind: output, shape index: {0}]
  %s7 = inlined_call_operand.vmem [shape: f32[2,1,8], index: 7, kind: output, shape index: {1}]
  %s8 = inlined_call_operand.vmem [shape: f32[2,1,8], index: 8, kind: output, shape index: {2}]
  %9 = xla_tuple %s6, %s7, %s8
  %s10 = sld [smem:[#allocation0]]
  $region73: #{conv_block_forward.2} parent=0
    _
  %s12 = ssub.s32 1, %s10
  %s13 = scalar_select 0, %s12, %s10
  loop: start=0, step=1, limit=4
  $region2: #{conv_block_forward.2} parent=0 // loop_pre_header
    _
  $region3: #{conv_block_forward.2} parent=0 // loop_header
    %s15 = sphi 0, %s19
    %p16 = scmp.ge.s32.totalorder %s15, 4
    %s25 = sphi 0, %s27
    %s28 = sphi 0, %s25
    %s29 = sphi 0, %s28
    %s45 = sphi 0, %s29
    %s49 = sphi 0, %s49
    %s51 = sphi 0, %s49
    %s52 = sphi 0, %s51
    %s66 = sphi 0, %s52
    %s70 = sphi 0, %s70
    %s72 = sphi 0, %s70
    %s73 = sphi 0, %s72
    %s87 = sphi 0, %s73
    %s91 = sphi 0, %s91
    %s93 = sphi 0, %s91
    %s94 = sphi 0, %s93
    %s108 = sphi 0, %s94
    %s112 = sphi 0, %s112
    %s114 = sphi 0, %s112
    %s115 = sphi 0, %s114
    %s129 = sphi 0, %s115
    %s133 = sphi 0, %s133
    %s135 = sphi 0, %s133
    %s136 = sphi 0, %s135
    %s150 = sphi 0, %s136
    %s156 = sphi 0, %s158
    %s159 = sphi 0, %s156
    %s160 = sphi 0, %s159
    %s176 = sphi 0, %s160
    %s182 = sphi 0, %s184
    %s185 = sphi 0, %s182
    %s186 = sphi 0, %s185
    %s202 = sphi 0, %s186
    %s208 = sphi 0, %s210
    %s211 = sphi 0, %s208
    %s212 = sphi 0, %s211
    %s228 = sphi 0, %s212
  $region4: #{conv_block_forward.2} parent=0 // loop_header_branch
    %18 = sbr.rel (%p16) target = $region8
  $region5: #{conv_block_forward.2} parent=0 // loop_body
    %s20 = ssub.s32 %s15, 1
    %s21 = ssub.s32 %s15, 2
    %s22 = sadd.s32 %s15, 1
    %s23 = ssub.s32 %s15, %s22
    %p24 = scmp.eq.s32.totalorder %s23, 0
    %s26 = sadd.s32 %s25, 1
    %s27 = scalar_select %p24, %s25, %s26
    %p30 = pneg %p24
    %p31 = scmp.eq.s32.totalorder %s15, 1
    %p32 = por %p30, %p31
    %p33 = scmp.ne.s32.totalorder %s25, %s28
    %p34 = scmp.eq.s32.totalorder %s15, 0
    %p35 = por %p33, %p34
    %p36 = scmp.ne.s32.totalorder %s25, %s28
    %p37 = scmp.eq.s32.totalorder %s20, 1
    %p38 = por %p36, %p37
    %p39 = scmp.ne.s32.totalorder %s28, %s29
    %p40 = scmp.eq.s32.totalorder %s20, 0
    %p41 = por %p39, %p40
    %p42 = scmp.ne.s32.totalorder %s28, %s29
    %p43 = scmp.eq.s32.totalorder %s21, 1
    %p44 = por %p42, %p43
    %p46 = scmp.ne.s32.totalorder %s29, %s45
    %p47 = scmp.eq.s32.totalorder %s21, 0
    %p48 = por %p46, %p47
    %s50 = sadd.s32 %s49, 1
    %p53 = scmp.eq.s32.totalorder %s15, 1
    %p54 = scmp.ne.s32.totalorder %s49, %s51
    %p55 = scmp.eq.s32.totalorder %s15, 0
    %p56 = por %p54, %p55
    %p57 = scmp.ne.s32.totalorder %s49, %s51
    %p58 = scmp.eq.s32.totalorder %s20, 1
    %p59 = por %p57, %p58
    %p60 = scmp.ne.s32.totalorder %s51, %s52
    %p61 = scmp.eq.s32.totalorder %s20, 0
    %p62 = por %p60, %p61
    %p63 = scmp.ne.s32.totalorder %s51, %s52
    %p64 = scmp.eq.s32.totalorder %s21, 1
    %p65 = por %p63, %p64
    %p67 = scmp.ne.s32.totalorder %s52, %s66
    %p68 = scmp.eq.s32.totalorder %s21, 0
    %p69 = por %p67, %p68
    %s71 = sadd.s32 %s70, 1
    %p74 = scmp.eq.s32.totalorder %s15, 1
    %p75 = scmp.ne.s32.totalorder %s70, %s72
    %p76 = scmp.eq.s32.totalorder %s15, 0
    %p77 = por %p75, %p76
    %p78 = scmp.ne.s32.totalorder %s70, %s72
    %p79 = scmp.eq.s32.totalorder %s20, 1
    %p80 = por %p78, %p79
    %p81 = scmp.ne.s32.totalorder %s72, %s73
    %p82 = scmp.eq.s32.totalorder %s20, 0
    %p83 = por %p81, %p82
    %p84 = scmp.ne.s32.totalorder %s72, %s73
    %p85 = scmp.eq.s32.totalorder %s21, 1
    %p86 = por %p84, %p85
    %p88 = scmp.ne.s32.totalorder %s73, %s87
    %p89 = scmp.eq.s32.totalorder %s21, 0
    %p90 = por %p88, %p89
    %s92 = sadd.s32 %s91, 1
    %p95 = scmp.eq.s32.totalorder %s15, 1
    %p96 = scmp.ne.s32.totalorder %s91, %s93
    %p97 = scmp.eq.s32.totalorder %s15, 0
    %p98 = por %p96, %p97
    %p99 = scmp.ne.s32.totalorder %s91, %s93
    %p100 = scmp.eq.s32.totalorder %s20, 1
    %p101 = por %p99, %p100
    %p102 = scmp.ne.s32.totalorder %s93, %s94
    %p103 = scmp.eq.s32.totalorder %s20, 0
    %p104 = por %p102, %p103
    %p105 = scmp.ne.s32.totalorder %s93, %s94
    %p106 = scmp.eq.s32.totalorder %s21, 1
    %p107 = por %p105, %p106
    %p109 = scmp.ne.s32.totalorder %s94, %s108
    %p110 = scmp.eq.s32.totalorder %s21, 0
    %p111 = por %p109, %p110
    %s113 = sadd.s32 %s112, 1
    %p116 = scmp.eq.s32.totalorder %s15, 1
    %p117 = scmp.ne.s32.totalorder %s112, %s114
    %p118 = scmp.eq.s32.totalorder %s15, 0
    %p119 = por %p117, %p118
    %p120 = scmp.ne.s32.totalorder %s112, %s114
    %p121 = scmp.eq.s32.totalorder %s20, 1
    %p122 = por %p120, %p121
    %p123 = scmp.ne.s32.totalorder %s114, %s115
    %p124 = scmp.eq.s32.totalorder %s20, 0
    %p125 = por %p123, %p124
    %p126 = scmp.ne.s32.totalorder %s114, %s115
    %p127 = scmp.eq.s32.totalorder %s21, 1
    %p128 = por %p126, %p127
    %p130 = scmp.ne.s32.totalorder %s115, %s129
    %p131 = scmp.eq.s32.totalorder %s21, 0
    %p132 = por %p130, %p131
    %s134 = sadd.s32 %s133, 1
    %p137 = scmp.eq.s32.totalorder %s15, 1
    %p138 = scmp.ne.s32.totalorder %s133, %s135
    %p139 = scmp.eq.s32.totalorder %s15, 0
    %p140 = por %p138, %p139
    %p141 = scmp.ne.s32.totalorder %s133, %s135
    %p142 = scmp.eq.s32.totalorder %s20, 1
    %p143 = por %p141, %p142
    %p144 = scmp.ne.s32.totalorder %s135, %s136
    %p145 = scmp.eq.s32.totalorder %s20, 0
    %p146 = por %p144, %p145
    %p147 = scmp.ne.s32.totalorder %s135, %s136
    %p148 = scmp.eq.s32.totalorder %s21, 1
    %p149 = por %p147, %p148
    %p151 = scmp.ne.s32.totalorder %s136, %s150
    %p152 = scmp.eq.s32.totalorder %s21, 0
    %p153 = por %p151, %p152
    %s154 = ssub.s32 %s15, %s22
    %p155 = scmp.eq.s32.totalorder %s154, 0
    %s157 = sadd.s32 %s156, 1
    %s158 = scalar_select %p155, %s156, %s157
    %p161 = pneg %p155
    %p162 = scmp.eq.s32.totalorder %s15, 1
    %p163 = por %p161, %p162
    %p164 = scmp.ne.s32.totalorder %s156, %s159
    %p165 = scmp.eq.s32.totalorder %s15, 0
    %p166 = por %p164, %p165
    %p167 = scmp.ne.s32.totalorder %s156, %s159
    %p168 = scmp.eq.s32.totalorder %s20, 1
    %p169 = por %p167, %p168
    %p170 = scmp.ne.s32.totalorder %s159, %s160
    %p171 = scmp.eq.s32.totalorder %s20, 0
    %p172 = por %p170, %p171
    %p173 = scmp.ne.s32.totalorder %s159, %s160
    %p174 = scmp.eq.s32.totalorder %s21, 1
    %p175 = por %p173, %p174
    %p177 = scmp.ne.s32.totalorder %s160, %s176
    %p178 = scmp.eq.s32.totalorder %s21, 0
    %p179 = por %p177, %p178
    %s180 = ssub.s32 %s15, %s22
    %p181 = scmp.eq.s32.totalorder %s180, 0
    %s183 = sadd.s32 %s182, 1
    %s184 = scalar_select %p181, %s182, %s183
    %p187 = pneg %p181
    %p188 = scmp.eq.s32.totalorder %s15, 1
    %p189 = por %p187, %p188
    %p190 = scmp.ne.s32.totalorder %s182, %s185
    %p191 = scmp.eq.s32.totalorder %s15, 0
    %p192 = por %p190, %p191
    %p193 = scmp.ne.s32.totalorder %s182, %s185
    %p194 = scmp.eq.s32.totalorder %s20, 1
    %p195 = por %p193, %p194
    %p196 = scmp.ne.s32.totalorder %s185, %s186
    %p197 = scmp.eq.s32.totalorder %s20, 0
    %p198 = por %p196, %p197
    %p199 = scmp.ne.s32.totalorder %s185, %s186
    %p200 = scmp.eq.s32.totalorder %s21, 1
    %p201 = por %p199, %p200
    %p203 = scmp.ne.s32.totalorder %s186, %s202
    %p204 = scmp.eq.s32.totalorder %s21, 0
    %p205 = por %p203, %p204
    %s206 = ssub.s32 %s15, %s22
    %p207 = scmp.eq.s32.totalorder %s206, 0
    %s209 = sadd.s32 %s208, 1
    %s210 = scalar_select %p207, %s208, %s209
    %p213 = pneg %p207
    %p214 = scmp.eq.s32.totalorder %s15, 1
    %p215 = por %p213, %p214
    %p216 = scmp.ne.s32.totalorder %s208, %s211
    %p217 = scmp.eq.s32.totalorder %s15, 0
    %p218 = por %p216, %p217
    %p219 = scmp.ne.s32.totalorder %s208, %s211
    %p220 = scmp.eq.s32.totalorder %s20, 1
    %p221 = por %p219, %p220
    %p222 = scmp.ne.s32.totalorder %s211, %s212
    %p223 = scmp.eq.s32.totalorder %s20, 0
    %p224 = por %p222, %p223
    %p225 = scmp.ne.s32.totalorder %s211, %s212
    %p226 = scmp.eq.s32.totalorder %s21, 1
    %p227 = por %p225, %p226
    %p229 = scmp.ne.s32.totalorder %s212, %s228
    %p230 = scmp.eq.s32.totalorder %s21, 0
    %p231 = por %p229, %p230
    %p232 = scmp.le.s32.totalorder 1, %s15
    %p233 = scmp.lt.s32.totalorder %s15, 3
    %p234 = pnand %p232, %p233
    %p235 = pneg %p234
    // Predicated region
    $region9: #{conv_block_forward.2} parent=5 // pred_check
      _
    $region10: #{conv_block_forward.2} parent=5 // pred_check_branch
      %237 = sbr.rel (%p234) target = $region12
    $region11: #{conv_block_forward.2} parent=5 // pred_region
      %s238 = ssub.s32 %s15, 1
      // Predicated region
      $region13: #{conv_block_forward.2} parent=11 // pred_check
        %p239 = pneg %p62
      $region14: #{conv_block_forward.2} parent=11 // pred_check_branch
        %241 = sbr.rel (%p239) target = $region16
      $region15: #{conv_block_forward.2} parent=11 // pred_region
        _
      $region16: #{conv_block_forward.2} parent=11 // pred_fallthru
        _
      // Predicated region
      $region17: #{conv_block_forward.2} parent=11 // pred_check
        %p242 = pneg %p83
      $region18: #{conv_block_forward.2} parent=11 // pred_check_branch
        %244 = sbr.rel (%p242) target = $region20
      $region19: #{conv_block_forward.2} parent=11 // pred_region
        _
      $region20: #{conv_block_forward.2} parent=11 // pred_fallthru
        _
      // Predicated region
      $region21: #{conv_block_forward.2} parent=11 // pred_check
        %p245 = pneg %p104
      $region22: #{conv_block_forward.2} parent=11 // pred_check_branch
        %247 = sbr.rel (%p245) target = $region24
      $region23: #{conv_block_forward.2} parent=11 // pred_region
        _
      $region24: #{conv_block_forward.2} parent=11 // pred_fallthru
        _
      // Predicated region
      $region25: #{conv_block_forward.2} parent=11 // pred_check
        %p248 = pneg %p125
      $region26: #{conv_block_forward.2} parent=11 // pred_check_branch
        %250 = sbr.rel (%p248) target = $region28
      $region27: #{conv_block_forward.2} parent=11 // pred_region
        _
      $region28: #{conv_block_forward.2} parent=11 // pred_fallthru
        _
      // Predicated region
      $region29: #{conv_block_forward.2} parent=11 // pred_check
        %p251 = pneg %p146
      $region30: #{conv_block_forward.2} parent=11 // pred_check_branch
        %253 = sbr.rel (%p251) target = $region32
      $region31: #{conv_block_forward.2} parent=11 // pred_region
        _
      $region32: #{conv_block_forward.2} parent=11 // pred_fallthru
        _
    $region12: #{conv_block_forward.2} parent=5 // pred_fallthru
      _
    %p254 = scmp.lt.s32.totalorder %s15, 2
    // Predicated region
    $region33: #{conv_block_forward.2} parent=5 // pred_check
      %p255 = pneg %p254
    $region34: #{conv_block_forward.2} parent=5 // pred_check_branch
      %257 = sbr.rel (%p255) target = $region36
    $region35: #{conv_block_forward.2} parent=5 // pred_region
      // Predicated region
      $region37: #{conv_block_forward.2} parent=35 // pred_check
        %p258 = pneg %p35
      $region38: #{conv_block_forward.2} parent=35 // pred_check_branch
        %260 = sbr.rel (%p258) target = $region40
      $region39: #{conv_block_forward.2} parent=35 // pred_region
        %p261 = scmp.lt.s32.totalorder %s15, 1
        %s262 = scalar_select %p261, %s15, 1
        %s263 = smul.addr %s262, 60
        %s264 = smul.addr %s263, 8
        %s265 = scalar_lea.vmem %s0, %s264
      $region40: #{conv_block_forward.2} parent=35 // pred_fallthru
        _
    $region36: #{conv_block_forward.2} parent=5 // pred_fallthru
      _
    %p266 = scmp.le.s32.totalorder 1, %s15
    %p267 = scmp.lt.s32.totalorder %s15, 3
    %p268 = pnand %p266, %p267
    %p269 = pneg %p268
    // Predicated region
    $region41: #{conv_block_forward.2} parent=5 // pred_check
      _
    $region42: #{conv_block_forward.2} parent=5 // pred_check_branch
      %271 = sbr.rel (%p268) target = $region44
    $region43: #{conv_block_forward.2} parent=5 // pred_region
      %s272 = ssub.s32 %s15, 1
      %p273 = scmp.lt.s32.totalorder %s20, 1
      %s274 = scalar_select %p273, %s20, 1
      %s275 = smul.addr %s274, 60
      %s276 = smul.addr %s275, 8
      %s277 = scalar_lea.vmem %s0, %s276
      %p278 = pneg %p41
      %p279 = pneg %p38
      %p280 = pneg %p62
      %p281 = pneg %p59
      %p282 = pneg %p83
      %p283 = pneg %p80
      %p284 = pneg %p104
      %p285 = pneg %p101
      %p286 = pneg %p125
      %p287 = pneg %p122
      %p288 = pneg %p146
      %p289 = pneg %p143
      %p290 = pneg %p172
      %p291 = pneg %p169
      %p292 = scmp.lt.s32.totalorder %s20, 1
      %s293 = scalar_select %p292, %s20, 1
      %s294 = smul.addr %s293, 32
      %s295 = smul.addr %s294, 8
      %s296 = scalar_lea.vmem %s6, %s295
      %p297 = pneg %p198
      %p298 = pneg %p195
      %p299 = scmp.lt.s32.totalorder %s20, 1
      %s300 = scalar_select %p299, %s20, 1
      %s301 = scalar_lea.vmem %s7, %s300
      %p302 = pneg %p224
      %p303 = pneg %p221
      %p304 = scmp.lt.s32.totalorder %s20, 1
      %s305 = scalar_select %p304, %s20, 1
      %s306 = scalar_lea.vmem %s8, %s305
      %p307 = scmp.lt.s32.totalorder %s20, 1
      %s308 = scalar_select %p307, %s20, 1
      %s309 = smul.addr %s308, 60
      %s310 = smul.addr %s309, 8
      %s311 = scalar_lea.vmem %s0, %s310
      %p312 = scmp.lt.s32.totalorder %s20, 1
      %s313 = scalar_select %p312, %s20, 1
      %s314 = smul.addr %s313, 32
      %s315 = smul.addr %s314, 8
      %s316 = scalar_lea.vmem %s6, %s315
      %p317 = scmp.lt.s32.totalorder %s20, 1
      %s318 = scalar_select %p317, %s20, 1
      %s319 = scalar_lea.vmem %s7, %s318
      %p320 = scmp.lt.s32.totalorder %s20, 1
      %s321 = scalar_select %p320, %s20, 1
      %s322 = scalar_lea.vmem %s8, %s321
      %v323 = vld [vmem:[%s311] sm:$0xff]
      %v324 = vld [vmem:[%s311 + $0x8] sm:$0xff]
      %v325 = vld [vmem:[%s311 + $0x10] sm:$0xf]
      %v326 = vld [vmem:[%s311 + $0x18] sm:$0xff]
      %v327 = vld [vmem:[%s311 + $0x20] sm:$0xff]
      %v328 = vld [vmem:[%s311 + $0x28] sm:$0xf]
      %v329 = vld [vmem:[%s311 + $0x30] sm:$0xff]
      %v330 = vld [vmem:[%s311 + $0x38] sm:$0xff]
      %v331 = vld [vmem:[%s311 + $0x40] sm:$0xf]
      %v332 = vld [vmem:[%s311 + $0x48] sm:$0xff]
      %v333 = vld [vmem:[%s311 + $0x50] sm:$0xff]
      %v334 = vld [vmem:[%s311 + $0x58] sm:$0xf]
      %v335 = vld [vmem:[%s311 + $0x60] sm:$0xff]
      %v336 = vld [vmem:[%s311 + $0x68] sm:$0xff]
      %v337 = vld [vmem:[%s311 + $0x70] sm:$0xf]
      %v338 = vld [vmem:[%s311 + $0x78] sm:$0xff]
      %v339 = vld [vmem:[%s311 + $0x80] sm:$0xff]
      %v340 = vld [vmem:[%s311 + $0x88] sm:$0xf]
      %v341 = vld [vmem:[%s311 + $0x90] sm:$0xff]
      %v342 = vld [vmem:[%s311 + $0x98] sm:$0xff]
      %v343 = vld [vmem:[%s311 + $0xa0] sm:$0xf]
      %v344 = vld [vmem:[%s311 + $0xa8] sm:$0xff]
      %v345 = vld [vmem:[%s311 + $0xb0] sm:$0xff]
      %v346 = vld [vmem:[%s311 + $0xb8] sm:$0xf]
      %v347 = vld [vmem:[%s311 + $0xc0] sm:$0xff]
      %v348 = vld [vmem:[%s311 + $0xc8] sm:$0xff]
      %v349 = vld [vmem:[%s311 + $0xd0] sm:$0xf]
      %v350 = vld [vmem:[%s311 + $0xd8] sm:$0xff]
      %v351 = vld [vmem:[%s311 + $0xe0] sm:$0xff]
      %v352 = vld [vmem:[%s311 + $0xe8] sm:$0xf]
      %v353 = vld [vmem:[%s311 + $0xf0] sm:$0xff]
      %v354 = vld [vmem:[%s311 + $0xf8] sm:$0xff]
      %v355 = vld [vmem:[%s311 + $0x100] sm:$0xf]
      %v356 = vld [vmem:[%s311 + $0x108] sm:$0xff]
      %v357 = vld [vmem:[%s311 + $0x110] sm:$0xff]
      %v358 = vld [vmem:[%s311 + $0x118] sm:$0xf]
      %v359 = vld [vmem:[%s311 + $0x120] sm:$0xff]
      %v360 = vld [vmem:[%s311 + $0x128] sm:$0xff]
      %v361 = vld [vmem:[%s311 + $0x130] sm:$0xf]
      %v362 = vld [vmem:[%s311 + $0x138] sm:$0xff]
      %v363 = vld [vmem:[%s311 + $0x140] sm:$0xff]
      %v364 = vld [vmem:[%s311 + $0x148] sm:$0xf]
      %v365 = vld [vmem:[%s311 + $0x150] sm:$0xff]
      %v366 = vld [vmem:[%s311 + $0x158] sm:$0xff]
      %v367 = vld [vmem:[%s311 + $0x160] sm:$0xf]
      %v368 = vld [vmem:[%s311 + $0x168] sm:$0xff]
      %v369 = vld [vmem:[%s311 + $0x170] sm:$0xff]
      %v370 = vld [vmem:[%s311 + $0x178] sm:$0xf]
      %v371 = vld [vmem:[%s311 + $0x180] sm:$0xff]
      %v372 = vld [vmem:[%s311 + $0x188] sm:$0xff]
      %v373 = vld [vmem:[%s311 + $0x190] sm:$0xf]
      %v374 = vld [vmem:[%s311 + $0x198] sm:$0xff]
      %v375 = vld [vmem:[%s311 + $0x1a0] sm:$0xff]
      %v376 = vld [vmem:[%s311 + $0x1a8] sm:$0xf]
      %v377 = vld [vmem:[%s311 + $0x1b0] sm:$0xff]
      %v378 = vld [vmem:[%s311 + $0x1b8] sm:$0xff]
      %v379 = vld [vmem:[%s311 + $0x1c0] sm:$0xf]
      %v380 = vld [vmem:[%s311 + $0x1c8] sm:$0xff]
      %v381 = vld [vmem:[%s311 + $0x1d0] sm:$0xff]
      %v382 = vld [vmem:[%s311 + $0x1d8] sm:$0xf]
      %v437 = vcombine.high %v323, %v323
      %v439 = vunpack.c.l.s4 1983009808
      %v440 = vunpack.c.0.s8 %v439
      %v441 = vlaneseq
      %v442 = vshrl.u32 %v441, 7
      %v443 = vsub.s32 %v440, %v442
      %v444 = vrot.slane %v323, %v443
      %v446 = vunpack.c.l.s4 1983009808
      %v447 = vunpack.c.0.s8 %v446
      %v448 = vlaneseq
      %v449 = vshrl.u32 %v448, 7
      %v450 = vsub.s32 %v447, %v449
      %v451 = vrot.slane %v437, %v450
      %v452 = vcombine.high %v444, %v444
      %v453 = vcombine.high %v451, %v451
      %v454 = vcombine.high %v324, %v324
      %v456 = vunpack.c.l.s4 1983009808
      %v457 = vunpack.c.0.s8 %v456
      %v458 = vlaneseq
      %v459 = vshrl.u32 %v458, 7
      %v460 = vsub.s32 %v457, %v459
      %v461 = vrot.slane %v324, %v460
      %v463 = vunpack.c.l.s4 1983009808
      %v464 = vunpack.c.0.s8 %v463
      %v465 = vlaneseq
      %v466 = vshrl.u32 %v465, 7
      %v467 = vsub.s32 %v464, %v466
      %v468 = vrot.slane %v454, %v467
      %v469 = vcombine.high %v461, %v461
      %v470 = vcombine.high %v468, %v468
      %v472 = vunpack.c.l.s4 1983009808
      %v473 = vunpack.c.0.s8 %v472
      %v474 = vlaneseq
      %v475 = vshrl.u32 %v474, 7
      %v476 = vsub.s32 %v473, %v475
      %v477 = vrot.slane %v325, %v476
      %v478 = vcombine.high %v326, %v326
      %v480 = vunpack.c.l.s4 1983009808
      %v481 = vunpack.c.0.s8 %v480
      %v482 = vlaneseq
      %v483 = vshrl.u32 %v482, 7
      %v484 = vsub.s32 %v481, %v483
      %v485 = vrot.slane %v326, %v484
      %v487 = vunpack.c.l.s4 1983009808
      %v488 = vunpack.c.0.s8 %v487
      %v489 = vlaneseq
      %v490 = vshrl.u32 %v489, 7
      %v491 = vsub.s32 %v488, %v490
      %v492 = vrot.slane %v478, %v491
      %v493 = vcombine.high %v485, %v485
      %v494 = vcombine.high %v492, %v492
      %v495 = vcombine.high %v327, %v327
      %v497 = vunpack.c.l.s4 1983009808
      %v498 = vunpack.c.0.s8 %v497
      %v499 = vlaneseq
      %v500 = vshrl.u32 %v499, 7
      %v501 = vsub.s32 %v498, %v500
      %v502 = vrot.slane %v327, %v501
      %v504 = vunpack.c.l.s4 1983009808
      %v505 = vunpack.c.0.s8 %v504
      %v506 = vlaneseq
      %v507 = vshrl.u32 %v506, 7
      %v508 = vsub.s32 %v505, %v507
      %v509 = vrot.slane %v495, %v508
      %v510 = vcombine.high %v502, %v502
      %v511 = vcombine.high %v509, %v509
      %v513 = vunpack.c.l.s4 1983009808
      %v514 = vunpack.c.0.s8 %v513
      %v515 = vlaneseq
      %v516 = vshrl.u32 %v515, 7
      %v517 = vsub.s32 %v514, %v516
      %v518 = vrot.slane %v328, %v517
      %v519 = vcombine.high %v329, %v329
      %v521 = vunpack.c.l.s4 1983009808
      %v522 = vunpack.c.0.s8 %v521
      %v523 = vlaneseq
      %v524 = vshrl.u32 %v523, 7
      %v525 = vsub.s32 %v522, %v524
      %v526 = vrot.slane %v329, %v525
      %v528 = vunpack.c.l.s4 1983009808
      %v529 = vunpack.c.0.s8 %v528
      %v530 = vlaneseq
      %v531 = vshrl.u32 %v530, 7
      %v532 = vsub.s32 %v529, %v531
      %v533 = vrot.slane %v519, %v532
      %v534 = vcombine.high %v526, %v526
      %v535 = vcombine.high %v533, %v533
      %v536 = vcombine.high %v330, %v330
      %v538 = vunpack.c.l.s4 1983009808
      %v539 = vunpack.c.0.s8 %v538
      %v540 = vlaneseq
      %v541 = vshrl.u32 %v540, 7
      %v542 = vsub.s32 %v539, %v541
      %v543 = vrot.slane %v330, %v542
      %v545 = vunpack.c.l.s4 1983009808
      %v546 = vunpack.c.0.s8 %v545
      %v547 = vlaneseq
      %v548 = vshrl.u32 %v547, 7
      %v549 = vsub.s32 %v546, %v548
      %v550 = vrot.slane %v536, %v549
      %v551 = vcombine.high %v543, %v543
      %v552 = vcombine.high %v550, %v550
      %v554 = vunpack.c.l.s4 1983009808
      %v555 = vunpack.c.0.s8 %v554
      %v556 = vlaneseq
      %v557 = vshrl.u32 %v556, 7
      %v558 = vsub.s32 %v555, %v557
      %v559 = vrot.slane %v331, %v558
      %v560 = vcombine.high %v332, %v332
      %v562 = vunpack.c.l.s4 1983009808
      %v563 = vunpack.c.0.s8 %v562
      %v564 = vlaneseq
      %v565 = vshrl.u32 %v564, 7
      %v566 = vsub.s32 %v563, %v565
      %v567 = vrot.slane %v332, %v566
      %v569 = vunpack.c.l.s4 1983009808
      %v570 = vunpack.c.0.s8 %v569
      %v571 = vlaneseq
      %v572 = vshrl.u32 %v571, 7
      %v573 = vsub.s32 %v570, %v572
      %v574 = vrot.slane %v560, %v573
      %v575 = vcombine.high %v567, %v567
      %v576 = vcombine.high %v574, %v574
      %v577 = vcombine.high %v333, %v333
      %v579 = vunpack.c.l.s4 1983009808
      %v580 = vunpack.c.0.s8 %v579
      %v581 = vlaneseq
      %v582 = vshrl.u32 %v581, 7
      %v583 = vsub.s32 %v580, %v582
      %v584 = vrot.slane %v333, %v583
      %v586 = vunpack.c.l.s4 1983009808
      %v587 = vunpack.c.0.s8 %v586
      %v588 = vlaneseq
      %v589 = vshrl.u32 %v588, 7
      %v590 = vsub.s32 %v587, %v589
      %v591 = vrot.slane %v577, %v590
      %v592 = vcombine.high %v584, %v584
      %v593 = vcombine.high %v591, %v591
      %v595 = vunpack.c.l.s4 1983009808
      %v596 = vunpack.c.0.s8 %v595
      %v597 = vlaneseq
      %v598 = vshrl.u32 %v597, 7
      %v599 = vsub.s32 %v596, %v598
      %v600 = vrot.slane %v334, %v599
      %v601 = vcombine.high %v335, %v335
      %v603 = vunpack.c.l.s4 1983009808
      %v604 = vunpack.c.0.s8 %v603
      %v605 = vlaneseq
      %v606 = vshrl.u32 %v605, 7
      %v607 = vsub.s32 %v604, %v606
      %v608 = vrot.slane %v335, %v607
      %v610 = vunpack.c.l.s4 1983009808
      %v611 = vunpack.c.0.s8 %v610
      %v612 = vlaneseq
      %v613 = vshrl.u32 %v612, 7
      %v614 = vsub.s32 %v611, %v613
      %v615 = vrot.slane %v601, %v614
      %v616 = vcombine.high %v608, %v608
      %v617 = vcombine.high %v615, %v615
      %v618 = vcombine.high %v336, %v336
      %v620 = vunpack.c.l.s4 1983009808
      %v621 = vunpack.c.0.s8 %v620
      %v622 = vlaneseq
      %v623 = vshrl.u32 %v622, 7
      %v624 = vsub.s32 %v621, %v623
      %v625 = vrot.slane %v336, %v624
      %v627 = vunpack.c.l.s4 1983009808
      %v628 = vunpack.c.0.s8 %v627
      %v629 = vlaneseq
      %v630 = vshrl.u32 %v629, 7
      %v631 = vsub.s32 %v628, %v630
      %v632 = vrot.slane %v618, %v631
      %v633 = vcombine.high %v625, %v625
      %v634 = vcombine.high %v632, %v632
      %v636 = vunpack.c.l.s4 1983009808
      %v637 = vunpack.c.0.s8 %v636
      %v638 = vlaneseq
      %v639 = vshrl.u32 %v638, 7
      %v640 = vsub.s32 %v637, %v639
      %v641 = vrot.slane %v337, %v640
      %v642 = vcombine.high %v338, %v338
      %v644 = vunpack.c.l.s4 1983009808
      %v645 = vunpack.c.0.s8 %v644
      %v646 = vlaneseq
      %v647 = vshrl.u32 %v646, 7
      %v648 = vsub.s32 %v645, %v647
      %v649 = vrot.slane %v338, %v648
      %v651 = vunpack.c.l.s4 1983009808
      %v652 = vunpack.c.0.s8 %v651
      %v653 = vlaneseq
      %v654 = vshrl.u32 %v653, 7
      %v655 = vsub.s32 %v652, %v654
      %v656 = vrot.slane %v642, %v655
      %v657 = vcombine.high %v649, %v649
      %v658 = vcombine.high %v656, %v656
      %v659 = vcombine.high %v339, %v339
      %v661 = vunpack.c.l.s4 1983009808
      %v662 = vunpack.c.0.s8 %v661
      %v663 = vlaneseq
      %v664 = vshrl.u32 %v663, 7
      %v665 = vsub.s32 %v662, %v664
      %v666 = vrot.slane %v339, %v665
      %v668 = vunpack.c.l.s4 1983009808
      %v669 = vunpack.c.0.s8 %v668
      %v670 = vlaneseq
      %v671 = vshrl.u32 %v670, 7
      %v672 = vsub.s32 %v669, %v671
      %v673 = vrot.slane %v659, %v672
      %v674 = vcombine.high %v666, %v666
      %v675 = vcombine.high %v673, %v673
      %v677 = vunpack.c.l.s4 1983009808
      %v678 = vunpack.c.0.s8 %v677
      %v679 = vlaneseq
      %v680 = vshrl.u32 %v679, 7
      %v681 = vsub.s32 %v678, %v680
      %v682 = vrot.slane %v340, %v681
      %v683 = vcombine.high %v341, %v341
      %v685 = vunpack.c.l.s4 1983009808
      %v686 = vunpack.c.0.s8 %v685
      %v687 = vlaneseq
      %v688 = vshrl.u32 %v687, 7
      %v689 = vsub.s32 %v686, %v688
      %v690 = vrot.slane %v341, %v689
      %v692 = vunpack.c.l.s4 1983009808
      %v693 = vunpack.c.0.s8 %v692
      %v694 = vlaneseq
      %v695 = vshrl.u32 %v694, 7
      %v696 = vsub.s32 %v693, %v695
      %v697 = vrot.slane %v683, %v696
      %v698 = vcombine.high %v690, %v690
      %v699 = vcombine.high %v697, %v697
      %v700 = vcombine.high %v342, %v342
      %v702 = vunpack.c.l.s4 1983009808
      %v703 = vunpack.c.0.s8 %v702
      %v704 = vlaneseq
      %v705 = vshrl.u32 %v704, 7
      %v706 = vsub.s32 %v703, %v705
      %v707 = vrot.slane %v342, %v706
      %v709 = vunpack.c.l.s4 1983009808
      %v710 = vunpack.c.0.s8 %v709
      %v711 = vlaneseq
      %v712 = vshrl.u32 %v711, 7
      %v713 = vsub.s32 %v710, %v712
      %v714 = vrot.slane %v700, %v713
      %v715 = vcombine.high %v707, %v707
      %v716 = vcombine.high %v714, %v714
      %v718 = vunpack.c.l.s4 1983009808
      %v719 = vunpack.c.0.s8 %v718
      %v720 = vlaneseq
      %v721 = vshrl.u32 %v720, 7
      %v722 = vsub.s32 %v719, %v721
      %v723 = vrot.slane %v343, %v722
      %v724 = vcombine.high %v344, %v344
      %v726 = vunpack.c.l.s4 1983009808
      %v727 = vunpack.c.0.s8 %v726
      %v728 = vlaneseq
      %v729 = vshrl.u32 %v728, 7
      %v730 = vsub.s32 %v727, %v729
      %v731 = vrot.slane %v344, %v730
      %v733 = vunpack.c.l.s4 1983009808
      %v734 = vunpack.c.0.s8 %v733
      %v735 = vlaneseq
      %v736 = vshrl.u32 %v735, 7
      %v737 = vsub.s32 %v734, %v736
      %v738 = vrot.slane %v724, %v737
      %v739 = vcombine.high %v731, %v731
      %v740 = vcombine.high %v738, %v738
      %v741 = vcombine.high %v345, %v345
      %v743 = vunpack.c.l.s4 1983009808
      %v744 = vunpack.c.0.s8 %v743
      %v745 = vlaneseq
      %v746 = vshrl.u32 %v745, 7
      %v747 = vsub.s32 %v744, %v746
      %v748 = vrot.slane %v345, %v747
      %v750 = vunpack.c.l.s4 1983009808
      %v751 = vunpack.c.0.s8 %v750
      %v752 = vlaneseq
      %v753 = vshrl.u32 %v752, 7
      %v754 = vsub.s32 %v751, %v753
      %v755 = vrot.slane %v741, %v754
      %v756 = vcombine.high %v748, %v748
      %v757 = vcombine.high %v755, %v755
      %v759 = vunpack.c.l.s4 1983009808
      %v760 = vunpack.c.0.s8 %v759
      %v761 = vlaneseq
      %v762 = vshrl.u32 %v761, 7
      %v763 = vsub.s32 %v760, %v762
      %v764 = vrot.slane %v346, %v763
      %v765 = vcombine.high %v347, %v347
      %v767 = vunpack.c.l.s4 1983009808
      %v768 = vunpack.c.0.s8 %v767
      %v769 = vlaneseq
      %v770 = vshrl.u32 %v769, 7
      %v771 = vsub.s32 %v768, %v770
      %v772 = vrot.slane %v347, %v771
      %v774 = vunpack.c.l.s4 1983009808
      %v775 = vunpack.c.0.s8 %v774
      %v776 = vlaneseq
      %v777 = vshrl.u32 %v776, 7
      %v778 = vsub.s32 %v775, %v777
      %v779 = vrot.slane %v765, %v778
      %v780 = vcombine.high %v772, %v772
      %v781 = vcombine.high %v779, %v779
      %v782 = vcombine.high %v348, %v348
      %v784 = vunpack.c.l.s4 1983009808
      %v785 = vunpack.c.0.s8 %v784
      %v786 = vlaneseq
      %v787 = vshrl.u32 %v786, 7
      %v788 = vsub.s32 %v785, %v787
      %v789 = vrot.slane %v348, %v788
      %v791 = vunpack.c.l.s4 1983009808
      %v792 = vunpack.c.0.s8 %v791
      %v793 = vlaneseq
      %v794 = vshrl.u32 %v793, 7
      %v795 = vsub.s32 %v792, %v794
      %v796 = vrot.slane %v782, %v795
      %v797 = vcombine.high %v789, %v789
      %v798 = vcombine.high %v796, %v796
      %v800 = vunpack.c.l.s4 1983009808
      %v801 = vunpack.c.0.s8 %v800
      %v802 = vlaneseq
      %v803 = vshrl.u32 %v802, 7
      %v804 = vsub.s32 %v801, %v803
      %v805 = vrot.slane %v349, %v804
      %v806 = vcombine.high %v350, %v350
      %v808 = vunpack.c.l.s4 1983009808
      %v809 = vunpack.c.0.s8 %v808
      %v810 = vlaneseq
      %v811 = vshrl.u32 %v810, 7
      %v812 = vsub.s32 %v809, %v811
      %v813 = vrot.slane %v350, %v812
      %v815 = vunpack.c.l.s4 1983009808
      %v816 = vunpack.c.0.s8 %v815
      %v817 = vlaneseq
      %v818 = vshrl.u32 %v817, 7
      %v819 = vsub.s32 %v816, %v818
      %v820 = vrot.slane %v806, %v819
      %v821 = vcombine.high %v813, %v813
      %v822 = vcombine.high %v820, %v820
      %v823 = vcombine.high %v351, %v351
      %v825 = vunpack.c.l.s4 1983009808
      %v826 = vunpack.c.0.s8 %v825
      %v827 = vlaneseq
      %v828 = vshrl.u32 %v827, 7
      %v829 = vsub.s32 %v826, %v828
      %v830 = vrot.slane %v351, %v829
      %v832 = vunpack.c.l.s4 1983009808
      %v833 = vunpack.c.0.s8 %v832
      %v834 = vlaneseq
      %v835 = vshrl.u32 %v834, 7
      %v836 = vsub.s32 %v833, %v835
      %v837 = vrot.slane %v823, %v836
      %v838 = vcombine.high %v830, %v830
      %v839 = vcombine.high %v837, %v837
      %v841 = vunpack.c.l.s4 1983009808
      %v842 = vunpack.c.0.s8 %v841
      %v843 = vlaneseq
      %v844 = vshrl.u32 %v843, 7
      %v845 = vsub.s32 %v842, %v844
      %v846 = vrot.slane %v352, %v845
      %v847 = vcombine.high %v353, %v353
      %v849 = vunpack.c.l.s4 1983009808
      %v850 = vunpack.c.0.s8 %v849
      %v851 = vlaneseq
      %v852 = vshrl.u32 %v851, 7
      %v853 = vsub.s32 %v850, %v852
      %v854 = vrot.slane %v353, %v853
      %v856 = vunpack.c.l.s4 1983009808
      %v857 = vunpack.c.0.s8 %v856
      %v858 = vlaneseq
      %v859 = vshrl.u32 %v858, 7
      %v860 = vsub.s32 %v857, %v859
      %v861 = vrot.slane %v847, %v860
      %v862 = vcombine.high %v854, %v854
      %v863 = vcombine.high %v861, %v861
      %v864 = vcombine.high %v354, %v354
      %v866 = vunpack.c.l.s4 1983009808
      %v867 = vunpack.c.0.s8 %v866
      %v868 = vlaneseq
      %v869 = vshrl.u32 %v868, 7
      %v870 = vsub.s32 %v867, %v869
      %v871 = vrot.slane %v354, %v870
      %v873 = vunpack.c.l.s4 1983009808
      %v874 = vunpack.c.0.s8 %v873
      %v875 = vlaneseq
      %v876 = vshrl.u32 %v875, 7
      %v877 = vsub.s32 %v874, %v876
      %v878 = vrot.slane %v864, %v877
      %v879 = vcombine.high %v871, %v871
      %v880 = vcombine.high %v878, %v878
      %v882 = vunpack.c.l.s4 1983009808
      %v883 = vunpack.c.0.s8 %v882
      %v884 = vlaneseq
      %v885 = vshrl.u32 %v884, 7
      %v886 = vsub.s32 %v883, %v885
      %v887 = vrot.slane %v355, %v886
      %v888 = vcombine.high %v356, %v356
      %v890 = vunpack.c.l.s4 1983009808
      %v891 = vunpack.c.0.s8 %v890
      %v892 = vlaneseq
      %v893 = vshrl.u32 %v892, 7
      %v894 = vsub.s32 %v891, %v893
      %v895 = vrot.slane %v356, %v894
      %v897 = vunpack.c.l.s4 1983009808
      %v898 = vunpack.c.0.s8 %v897
      %v899 = vlaneseq
      %v900 = vshrl.u32 %v899, 7
      %v901 = vsub.s32 %v898, %v900
      %v902 = vrot.slane %v888, %v901
      %v903 = vcombine.high %v895, %v895
      %v904 = vcombine.high %v902, %v902
      %v905 = vcombine.high %v357, %v357
      %v907 = vunpack.c.l.s4 1983009808
      %v908 = vunpack.c.0.s8 %v907
      %v909 = vlaneseq
      %v910 = vshrl.u32 %v909, 7
      %v911 = vsub.s32 %v908, %v910
      %v912 = vrot.slane %v357, %v911
      %v914 = vunpack.c.l.s4 1983009808
      %v915 = vunpack.c.0.s8 %v914
      %v916 = vlaneseq
      %v917 = vshrl.u32 %v916, 7
      %v918 = vsub.s32 %v915, %v917
      %v919 = vrot.slane %v905, %v918
      %v920 = vcombine.high %v912, %v912
      %v921 = vcombine.high %v919, %v919
      %v923 = vunpack.c.l.s4 1983009808
      %v924 = vunpack.c.0.s8 %v923
      %v925 = vlaneseq
      %v926 = vshrl.u32 %v925, 7
      %v927 = vsub.s32 %v924, %v926
      %v928 = vrot.slane %v358, %v927
      %v929 = vcombine.high %v359, %v359
      %v931 = vunpack.c.l.s4 1983009808
      %v932 = vunpack.c.0.s8 %v931
      %v933 = vlaneseq
      %v934 = vshrl.u32 %v933, 7
      %v935 = vsub.s32 %v932, %v934
      %v936 = vrot.slane %v359, %v935
      %v938 = vunpack.c.l.s4 1983009808
      %v939 = vunpack.c.0.s8 %v938
      %v940 = vlaneseq
      %v941 = vshrl.u32 %v940, 7
      %v942 = vsub.s32 %v939, %v941
      %v943 = vrot.slane %v929, %v942
      %v944 = vcombine.high %v936, %v936
      %v945 = vcombine.high %v943, %v943
      %v946 = vcombine.high %v360, %v360
      %v948 = vunpack.c.l.s4 1983009808
      %v949 = vunpack.c.0.s8 %v948
      %v950 = vlaneseq
      %v951 = vshrl.u32 %v950, 7
      %v952 = vsub.s32 %v949, %v951
      %v953 = vrot.slane %v360, %v952
      %v955 = vunpack.c.l.s4 1983009808
      %v956 = vunpack.c.0.s8 %v955
      %v957 = vlaneseq
      %v958 = vshrl.u32 %v957, 7
      %v959 = vsub.s32 %v956, %v958
      %v960 = vrot.slane %v946, %v959
      %v961 = vcombine.high %v953, %v953
      %v962 = vcombine.high %v960, %v960
      %v964 = vunpack.c.l.s4 1983009808
      %v965 = vunpack.c.0.s8 %v964
      %v966 = vlaneseq
      %v967 = vshrl.u32 %v966, 7
      %v968 = vsub.s32 %v965, %v967
      %v969 = vrot.slane %v361, %v968
      %v970 = vcombine.high %v362, %v362
      %v972 = vunpack.c.l.s4 1983009808
      %v973 = vunpack.c.0.s8 %v972
      %v974 = vlaneseq
      %v975 = vshrl.u32 %v974, 7
      %v976 = vsub.s32 %v973, %v975
      %v977 = vrot.slane %v362, %v976
      %v979 = vunpack.c.l.s4 1983009808
      %v980 = vunpack.c.0.s8 %v979
      %v981 = vlaneseq
      %v982 = vshrl.u32 %v981, 7
      %v983 = vsub.s32 %v980, %v982
      %v984 = vrot.slane %v970, %v983
      %v985 = vcombine.high %v977, %v977
      %v986 = vcombine.high %v984, %v984
      %v987 = vcombine.high %v363, %v363
      %v989 = vunpack.c.l.s4 1983009808
      %v990 = vunpack.c.0.s8 %v989
      %v991 = vlaneseq
      %v992 = vshrl.u32 %v991, 7
      %v993 = vsub.s32 %v990, %v992
      %v994 = vrot.slane %v363, %v993
      %v996 = vunpack.c.l.s4 1983009808
      %v997 = vunpack.c.0.s8 %v996
      %v998 = vlaneseq
      %v999 = vshrl.u32 %v998, 7
      %v1000 = vsub.s32 %v997, %v999
      %v1001 = vrot.slane %v987, %v1000
      %v1002 = vcombine.high %v994, %v994
      %v1003 = vcombine.high %v1001, %v1001
      %v1005 = vunpack.c.l.s4 1983009808
      %v1006 = vunpack.c.0.s8 %v1005
      %v1007 = vlaneseq
      %v1008 = vshrl.u32 %v1007, 7
      %v1009 = vsub.s32 %v1006, %v1008
      %v1010 = vrot.slane %v364, %v1009
      %v1011 = vcombine.high %v365, %v365
      %v1013 = vunpack.c.l.s4 1983009808
      %v1014 = vunpack.c.0.s8 %v1013
      %v1015 = vlaneseq
      %v1016 = vshrl.u32 %v1015, 7
      %v1017 = vsub.s32 %v1014, %v1016
      %v1018 = vrot.slane %v365, %v1017
      %v1020 = vunpack.c.l.s4 1983009808
      %v1021 = vunpack.c.0.s8 %v1020
      %v1022 = vlaneseq
      %v1023 = vshrl.u32 %v1022, 7
      %v1024 = vsub.s32 %v1021, %v1023
      %v1025 = vrot.slane %v1011, %v1024
      %v1026 = vcombine.high %v1018, %v1018
      %v1027 = vcombine.high %v1025, %v1025
      %v1028 = vcombine.high %v366, %v366
      %v1030 = vunpack.c.l.s4 1983009808
      %v1031 = vunpack.c.0.s8 %v1030
      %v1032 = vlaneseq
      %v1033 = vshrl.u32 %v1032, 7
      %v1034 = vsub.s32 %v1031, %v1033
      %v1035 = vrot.slane %v366, %v1034
      %v1037 = vunpack.c.l.s4 1983009808
      %v1038 = vunpack.c.0.s8 %v1037
      %v1039 = vlaneseq
      %v1040 = vshrl.u32 %v1039, 7
      %v1041 = vsub.s32 %v1038, %v1040
      %v1042 = vrot.slane %v1028, %v1041
      %v1043 = vcombine.high %v1035, %v1035
      %v1044 = vcombine.high %v1042, %v1042
      %v1046 = vunpack.c.l.s4 1983009808
      %v1047 = vunpack.c.0.s8 %v1046
      %v1048 = vlaneseq
      %v1049 = vshrl.u32 %v1048, 7
      %v1050 = vsub.s32 %v1047, %v1049
      %v1051 = vrot.slane %v367, %v1050
      %v1052 = vcombine.high %v368, %v368
      %v1054 = vunpack.c.l.s4 1983009808
      %v1055 = vunpack.c.0.s8 %v1054
      %v1056 = vlaneseq
      %v1057 = vshrl.u32 %v1056, 7
      %v1058 = vsub.s32 %v1055, %v1057
      %v1059 = vrot.slane %v368, %v1058
      %v1061 = vunpack.c.l.s4 1983009808
      %v1062 = vunpack.c.0.s8 %v1061
      %v1063 = vlaneseq
      %v1064 = vshrl.u32 %v1063, 7
      %v1065 = vsub.s32 %v1062, %v1064
      %v1066 = vrot.slane %v1052, %v1065
      %v1067 = vcombine.high %v1059, %v1059
      %v1068 = vcombine.high %v1066, %v1066
      %v1069 = vcombine.high %v369, %v369
      %v1071 = vunpack.c.l.s4 1983009808
      %v1072 = vunpack.c.0.s8 %v1071
      %v1073 = vlaneseq
      %v1074 = vshrl.u32 %v1073, 7
      %v1075 = vsub.s32 %v1072, %v1074
      %v1076 = vrot.slane %v369, %v1075
      %v1078 = vunpack.c.l.s4 1983009808
      %v1079 = vunpack.c.0.s8 %v1078
      %v1080 = vlaneseq
      %v1081 = vshrl.u32 %v1080, 7
      %v1082 = vsub.s32 %v1079, %v1081
      %v1083 = vrot.slane %v1069, %v1082
      %v1084 = vcombine.high %v1076, %v1076
      %v1085 = vcombine.high %v1083, %v1083
      %v1087 = vunpack.c.l.s4 1983009808
      %v1088 = vunpack.c.0.s8 %v1087
      %v1089 = vlaneseq
      %v1090 = vshrl.u32 %v1089, 7
      %v1091 = vsub.s32 %v1088, %v1090
      %v1092 = vrot.slane %v370, %v1091
      %v1093 = vcombine.high %v371, %v371
      %v1095 = vunpack.c.l.s4 1983009808
      %v1096 = vunpack.c.0.s8 %v1095
      %v1097 = vlaneseq
      %v1098 = vshrl.u32 %v1097, 7
      %v1099 = vsub.s32 %v1096, %v1098
      %v1100 = vrot.slane %v371, %v1099
      %v1102 = vunpack.c.l.s4 1983009808
      %v1103 = vunpack.c.0.s8 %v1102
      %v1104 = vlaneseq
      %v1105 = vshrl.u32 %v1104, 7
      %v1106 = vsub.s32 %v1103, %v1105
      %v1107 = vrot.slane %v1093, %v1106
      %v1108 = vcombine.high %v1100, %v1100
      %v1109 = vcombine.high %v1107, %v1107
      %v1110 = vcombine.high %v372, %v372
      %v1112 = vunpack.c.l.s4 1983009808
      %v1113 = vunpack.c.0.s8 %v1112
      %v1114 = vlaneseq
      %v1115 = vshrl.u32 %v1114, 7
      %v1116 = vsub.s32 %v1113, %v1115
      %v1117 = vrot.slane %v372, %v1116
      %v1119 = vunpack.c.l.s4 1983009808
      %v1120 = vunpack.c.0.s8 %v1119
      %v1121 = vlaneseq
      %v1122 = vshrl.u32 %v1121, 7
      %v1123 = vsub.s32 %v1120, %v1122
      %v1124 = vrot.slane %v1110, %v1123
      %v1125 = vcombine.high %v1117, %v1117
      %v1126 = vcombine.high %v1124, %v1124
      %v1128 = vunpack.c.l.s4 1983009808
      %v1129 = vunpack.c.0.s8 %v1128
      %v1130 = vlaneseq
      %v1131 = vshrl.u32 %v1130, 7
      %v1132 = vsub.s32 %v1129, %v1131
      %v1133 = vrot.slane %v373, %v1132
      %v1134 = vcombine.high %v374, %v374
      %v1136 = vunpack.c.l.s4 1983009808
      %v1137 = vunpack.c.0.s8 %v1136
      %v1138 = vlaneseq
      %v1139 = vshrl.u32 %v1138, 7
      %v1140 = vsub.s32 %v1137, %v1139
      %v1141 = vrot.slane %v374, %v1140
      %v1143 = vunpack.c.l.s4 1983009808
      %v1144 = vunpack.c.0.s8 %v1143
      %v1145 = vlaneseq
      %v1146 = vshrl.u32 %v1145, 7
      %v1147 = vsub.s32 %v1144, %v1146
      %v1148 = vrot.slane %v1134, %v1147
      %v1149 = vcombine.high %v1141, %v1141
      %v1150 = vcombine.high %v1148, %v1148
      %v1151 = vcombine.high %v375, %v375
      %v1153 = vunpack.c.l.s4 1983009808
      %v1154 = vunpack.c.0.s8 %v1153
      %v1155 = vlaneseq
      %v1156 = vshrl.u32 %v1155, 7
      %v1157 = vsub.s32 %v1154, %v1156
      %v1158 = vrot.slane %v375, %v1157
      %v1160 = vunpack.c.l.s4 1983009808
      %v1161 = vunpack.c.0.s8 %v1160
      %v1162 = vlaneseq
      %v1163 = vshrl.u32 %v1162, 7
      %v1164 = vsub.s32 %v1161, %v1163
      %v1165 = vrot.slane %v1151, %v1164
      %v1166 = vcombine.high %v1158, %v1158
      %v1167 = vcombine.high %v1165, %v1165
      %v1169 = vunpack.c.l.s4 1983009808
      %v1170 = vunpack.c.0.s8 %v1169
      %v1171 = vlaneseq
      %v1172 = vshrl.u32 %v1171, 7
      %v1173 = vsub.s32 %v1170, %v1172
      %v1174 = vrot.slane %v376, %v1173
      %v1175 = vcombine.low %v444, %v452
      %v1176 = vcombine.low %v451, %v453
      %v1178 = vunpack.c.l.s4 1983009808
      %v1179 = vunpack.c.0.s8 %v1178
      %v1180 = vlaneseq
      %v1181 = vshrl.u32 %v1180, 7
      %v1182 = vsub.s32 %v1179, %v1181
      %v1183 = vrot.slane %v1175, %v1182
      %v1185 = vunpack.c.l.s4 1983009808
      %v1186 = vunpack.c.0.s8 %v1185
      %v1187 = vlaneseq
      %v1188 = vshrl.u32 %v1187, 7
      %v1189 = vsub.s32 %v1186, %v1188
      %v1190 = vrot.slane %v1176, %v1189
      %v1191 = vcombine.low %v1183, %v1190
      %v1192 = vcombine.low %v461, %v469
      %v1193 = vcombine.low %v468, %v470
      %v1195 = vunpack.c.l.s4 1983009808
      %v1196 = vunpack.c.0.s8 %v1195
      %v1197 = vlaneseq
      %v1198 = vshrl.u32 %v1197, 7
      %v1199 = vsub.s32 %v1196, %v1198
      %v1200 = vrot.slane %v1192, %v1199
      %v1202 = vunpack.c.l.s4 1983009808
      %v1203 = vunpack.c.0.s8 %v1202
      %v1204 = vlaneseq
      %v1205 = vshrl.u32 %v1204, 7
      %v1206 = vsub.s32 %v1203, %v1205
      %v1207 = vrot.slane %v1193, %v1206
      %v1208 = vcombine.low %v1200, %v1207
      %v1209 = vcombine.low %v477, %v485
      %v1210 = vcombine.low %v493, %v492
      %v1212 = vunpack.c.l.s4 1983009808
      %v1213 = vunpack.c.0.s8 %v1212
      %v1214 = vlaneseq
      %v1215 = vshrl.u32 %v1214, 7
      %v1216 = vsub.s32 %v1213, %v1215
      %v1217 = vrot.slane %v1209, %v1216
      %v1219 = vunpack.c.l.s4 1983009808
      %v1220 = vunpack.c.0.s8 %v1219
      %v1221 = vlaneseq
      %v1222 = vshrl.u32 %v1221, 7
      %v1223 = vsub.s32 %v1220, %v1222
      %v1224 = vrot.slane %v1210, %v1223
      %v1225 = vcombine.low %v1217, %v1224
      %v1226 = vcombine.low %v494, %v502
      %v1227 = vcombine.low %v510, %v509
      %v1229 = vunpack.c.l.s4 1983009808
      %v1230 = vunpack.c.0.s8 %v1229
      %v1231 = vlaneseq
      %v1232 = vshrl.u32 %v1231, 7
      %v1233 = vsub.s32 %v1230, %v1232
      %v1234 = vrot.slane %v1226, %v1233
      %v1236 = vunpack.c.l.s4 1983009808
      %v1237 = vunpack.c.0.s8 %v1236
      %v1238 = vlaneseq
      %v1239 = vshrl.u32 %v1238, 7
      %v1240 = vsub.s32 %v1237, %v1239
      %v1241 = vrot.slane %v1227, %v1240
      %v1242 = vcombine.low %v1234, %v1241
      %v1243 = vcombine.low %v511, %v518
      %v1244 = vcombine.low %v526, %v534
      %v1246 = vunpack.c.l.s4 1983009808
      %v1247 = vunpack.c.0.s8 %v1246
      %v1248 = vlaneseq
      %v1249 = vshrl.u32 %v1248, 7
      %v1250 = vsub.s32 %v1247, %v1249
      %v1251 = vrot.slane %v1243, %v1250
      %v1253 = vunpack.c.l.s4 1983009808
      %v1254 = vunpack.c.0.s8 %v1253
      %v1255 = vlaneseq
      %v1256 = vshrl.u32 %v1255, 7
      %v1257 = vsub.s32 %v1254, %v1256
      %v1258 = vrot.slane %v1244, %v1257
      %v1259 = vcombine.low %v1251, %v1258
      %v1260 = vcombine.low %v533, %v535
      %v1261 = vcombine.low %v543, %v551
      %v1263 = vunpack.c.l.s4 1983009808
      %v1264 = vunpack.c.0.s8 %v1263
      %v1265 = vlaneseq
      %v1266 = vshrl.u32 %v1265, 7
      %v1267 = vsub.s32 %v1264, %v1266
      %v1268 = vrot.slane %v1260, %v1267
      %v1270 = vunpack.c.l.s4 1983009808
      %v1271 = vunpack.c.0.s8 %v1270
      %v1272 = vlaneseq
      %v1273 = vshrl.u32 %v1272, 7
      %v1274 = vsub.s32 %v1271, %v1273
      %v1275 = vrot.slane %v1261, %v1274
      %v1276 = vcombine.low %v1268, %v1275
      %v1277 = vcombine.low %v550, %v552
      %v1278 = vcombine.low %v559, %v567
      %v1280 = vunpack.c.l.s4 1983009808
      %v1281 = vunpack.c.0.s8 %v1280
      %v1282 = vlaneseq
      %v1283 = vshrl.u32 %v1282, 7
      %v1284 = vsub.s32 %v1281, %v1283
      %v1285 = vrot.slane %v1277, %v1284
      %v1287 = vunpack.c.l.s4 1983009808
      %v1288 = vunpack.c.0.s8 %v1287
      %v1289 = vlaneseq
      %v1290 = vshrl.u32 %v1289, 7
      %v1291 = vsub.s32 %v1288, %v1290
      %v1292 = vrot.slane %v1278, %v1291
      %v1293 = vcombine.low %v1285, %v1292
      %v1294 = vcombine.low %v575, %v574
      %v1295 = vcombine.low %v576, %v584
      %v1297 = vunpack.c.l.s4 1983009808
      %v1298 = vunpack.c.0.s8 %v1297
      %v1299 = vlaneseq
      %v1300 = vshrl.u32 %v1299, 7
      %v1301 = vsub.s32 %v1298, %v1300
      %v1302 = vrot.slane %v1294, %v1301
      %v1304 = vunpack.c.l.s4 1983009808
      %v1305 = vunpack.c.0.s8 %v1304
      %v1306 = vlaneseq
      %v1307 = vshrl.u32 %v1306, 7
      %v1308 = vsub.s32 %v1305, %v1307
      %v1309 = vrot.slane %v1295, %v1308
      %v1310 = vcombine.low %v1302, %v1309
      %v1311 = vcombine.low %v592, %v591
      %v1312 = vcombine.low %v593, %v600
      %v1314 = vunpack.c.l.s4 1983009808
      %v1315 = vunpack.c.0.s8 %v1314
      %v1316 = vlaneseq
      %v1317 = vshrl.u32 %v1316, 7
      %v1318 = vsub.s32 %v1315, %v1317
      %v1319 = vrot.slane %v1311, %v1318
      %v1321 = vunpack.c.l.s4 1983009808
      %v1322 = vunpack.c.0.s8 %v1321
      %v1323 = vlaneseq
      %v1324 = vshrl.u32 %v1323, 7
      %v1325 = vsub.s32 %v1322, %v1324
      %v1326 = vrot.slane %v1312, %v1325
      %v1327 = vcombine.low %v1319, %v1326
      %v1328 = vcombine.low %v608, %v616
      %v1329 = vcombine.low %v615, %v617
      %v1331 = vunpack.c.l.s4 1983009808
      %v1332 = vunpack.c.0.s8 %v1331
      %v1333 = vlaneseq
      %v1334 = vshrl.u32 %v1333, 7
      %v1335 = vsub.s32 %v1332, %v1334
      %v1336 = vrot.slane %v1328, %v1335
      %v1338 = vunpack.c.l.s4 1983009808
      %v1339 = vunpack.c.0.s8 %v1338
      %v1340 = vlaneseq
      %v1341 = vshrl.u32 %v1340, 7
      %v1342 = vsub.s32 %v1339, %v1341
      %v1343 = vrot.slane %v1329, %v1342
      %v1344 = vcombine.low %v1336, %v1343
      %v1345 = vcombine.low %v625, %v633
      %v1346 = vcombine.low %v632, %v634
      %v1348 = vunpack.c.l.s4 1983009808
      %v1349 = vunpack.c.0.s8 %v1348
      %v1350 = vlaneseq
      %v1351 = vshrl.u32 %v1350, 7
      %v1352 = vsub.s32 %v1349, %v1351
      %v1353 = vrot.slane %v1345, %v1352
      %v1355 = vunpack.c.l.s4 1983009808
      %v1356 = vunpack.c.0.s8 %v1355
      %v1357 = vlaneseq
      %v1358 = vshrl.u32 %v1357, 7
      %v1359 = vsub.s32 %v1356, %v1358
      %v1360 = vrot.slane %v1346, %v1359
      %v1361 = vcombine.low %v1353, %v1360
      %v1362 = vcombine.low %v641, %v649
      %v1363 = vcombine.low %v657, %v656
      %v1365 = vunpack.c.l.s4 1983009808
      %v1366 = vunpack.c.0.s8 %v1365
      %v1367 = vlaneseq
      %v1368 = vshrl.u32 %v1367, 7
      %v1369 = vsub.s32 %v1366, %v1368
      %v1370 = vrot.slane %v1362, %v1369
      %v1372 = vunpack.c.l.s4 1983009808
      %v1373 = vunpack.c.0.s8 %v1372
      %v1374 = vlaneseq
      %v1375 = vshrl.u32 %v1374, 7
      %v1376 = vsub.s32 %v1373, %v1375
      %v1377 = vrot.slane %v1363, %v1376
      %v1378 = vcombine.low %v1370, %v1377
      %v1379 = vcombine.low %v658, %v666
      %v1380 = vcombine.low %v674, %v673
      %v1382 = vunpack.c.l.s4 1983009808
      %v1383 = vunpack.c.0.s8 %v1382
      %v1384 = vlaneseq
      %v1385 = vshrl.u32 %v1384, 7
      %v1386 = vsub.s32 %v1383, %v1385
      %v1387 = vrot.slane %v1379, %v1386
      %v1389 = vunpack.c.l.s4 1983009808
      %v1390 = vunpack.c.0.s8 %v1389
      %v1391 = vlaneseq
      %v1392 = vshrl.u32 %v1391, 7
      %v1393 = vsub.s32 %v1390, %v1392
      %v1394 = vrot.slane %v1380, %v1393
      %v1395 = vcombine.low %v1387, %v1394
      %v1396 = vcombine.low %v675, %v682
      %v1397 = vcombine.low %v690, %v698
      %v1399 = vunpack.c.l.s4 1983009808
      %v1400 = vunpack.c.0.s8 %v1399
      %v1401 = vlaneseq
      %v1402 = vshrl.u32 %v1401, 7
      %v1403 = vsub.s32 %v1400, %v1402
      %v1404 = vrot.slane %v1396, %v1403
      %v1406 = vunpack.c.l.s4 1983009808
      %v1407 = vunpack.c.0.s8 %v1406
      %v1408 = vlaneseq
      %v1409 = vshrl.u32 %v1408, 7
      %v1410 = vsub.s32 %v1407, %v1409
      %v1411 = vrot.slane %v1397, %v1410
      %v1412 = vcombine.low %v1404, %v1411
      %v1413 = vcombine.low %v697, %v699
      %v1414 = vcombine.low %v707, %v715
      %v1416 = vunpack.c.l.s4 1983009808
      %v1417 = vunpack.c.0.s8 %v1416
      %v1418 = vlaneseq
      %v1419 = vshrl.u32 %v1418, 7
      %v1420 = vsub.s32 %v1417, %v1419
      %v1421 = vrot.slane %v1413, %v1420
      %v1423 = vunpack.c.l.s4 1983009808
      %v1424 = vunpack.c.0.s8 %v1423
      %v1425 = vlaneseq
      %v1426 = vshrl.u32 %v1425, 7
      %v1427 = vsub.s32 %v1424, %v1426
      %v1428 = vrot.slane %v1414, %v1427
      %v1429 = vcombine.low %v1421, %v1428
      %v1430 = vcombine.low %v714, %v716
      %v1431 = vcombine.low %v723, %v731
      %v1433 = vunpack.c.l.s4 1983009808
      %v1434 = vunpack.c.0.s8 %v1433
      %v1435 = vlaneseq
      %v1436 = vshrl.u32 %v1435, 7
      %v1437 = vsub.s32 %v1434, %v1436
      %v1438 = vrot.slane %v1430, %v1437
      %v1440 = vunpack.c.l.s4 1983009808
      %v1441 = vunpack.c.0.s8 %v1440
      %v1442 = vlaneseq
      %v1443 = vshrl.u32 %v1442, 7
      %v1444 = vsub.s32 %v1441, %v1443
      %v1445 = vrot.slane %v1431, %v1444
      %v1446 = vcombine.low %v1438, %v1445
      %v1447 = vcombine.low %v739, %v738
      %v1448 = vcombine.low %v740, %v748
      %v1450 = vunpack.c.l.s4 1983009808
      %v1451 = vunpack.c.0.s8 %v1450
      %v1452 = vlaneseq
      %v1453 = vshrl.u32 %v1452, 7
      %v1454 = vsub.s32 %v1451, %v1453
      %v1455 = vrot.slane %v1447, %v1454
      %v1457 = vunpack.c.l.s4 1983009808
      %v1458 = vunpack.c.0.s8 %v1457
      %v1459 = vlaneseq
      %v1460 = vshrl.u32 %v1459, 7
      %v1461 = vsub.s32 %v1458, %v1460
      %v1462 = vrot.slane %v1448, %v1461
      %v1463 = vcombine.low %v1455, %v1462
      %v1464 = vcombine.low %v756, %v755
      %v1465 = vcombine.low %v757, %v764
      %v1467 = vunpack.c.l.s4 1983009808
      %v1468 = vunpack.c.0.s8 %v1467
      %v1469 = vlaneseq
      %v1470 = vshrl.u32 %v1469, 7
      %v1471 = vsub.s32 %v1468, %v1470
      %v1472 = vrot.slane %v1464, %v1471
      %v1474 = vunpack.c.l.s4 1983009808
      %v1475 = vunpack.c.0.s8 %v1474
      %v1476 = vlaneseq
      %v1477 = vshrl.u32 %v1476, 7
      %v1478 = vsub.s32 %v1475, %v1477
      %v1479 = vrot.slane %v1465, %v1478
      %v1480 = vcombine.low %v1472, %v1479
      %v1481 = vcombine.low %v772, %v780
      %v1482 = vcombine.low %v779, %v781
      %v1484 = vunpack.c.l.s4 1983009808
      %v1485 = vunpack.c.0.s8 %v1484
      %v1486 = vlaneseq
      %v1487 = vshrl.u32 %v1486, 7
      %v1488 = vsub.s32 %v1485, %v1487
      %v1489 = vrot.slane %v1481, %v1488
      %v1491 = vunpack.c.l.s4 1983009808
      %v1492 = vunpack.c.0.s8 %v1491
      %v1493 = vlaneseq
      %v1494 = vshrl.u32 %v1493, 7
      %v1495 = vsub.s32 %v1492, %v1494
      %v1496 = vrot.slane %v1482, %v1495
      %v1497 = vcombine.low %v1489, %v1496
      %v1498 = vcombine.low %v789, %v797
      %v1499 = vcombine.low %v796, %v798
      %v1501 = vunpack.c.l.s4 1983009808
      %v1502 = vunpack.c.0.s8 %v1501
      %v1503 = vlaneseq
      %v1504 = vshrl.u32 %v1503, 7
      %v1505 = vsub.s32 %v1502, %v1504
      %v1506 = vrot.slane %v1498, %v1505
      %v1508 = vunpack.c.l.s4 1983009808
      %v1509 = vunpack.c.0.s8 %v1508
      %v1510 = vlaneseq
      %v1511 = vshrl.u32 %v1510, 7
      %v1512 = vsub.s32 %v1509, %v1511
      %v1513 = vrot.slane %v1499, %v1512
      %v1514 = vcombine.low %v1506, %v1513
      %v1515 = vcombine.low %v805, %v813
      %v1516 = vcombine.low %v821, %v820
      %v1518 = vunpack.c.l.s4 1983009808
      %v1519 = vunpack.c.0.s8 %v1518
      %v1520 = vlaneseq
      %v1521 = vshrl.u32 %v1520, 7
      %v1522 = vsub.s32 %v1519, %v1521
      %v1523 = vrot.slane %v1515, %v1522
      %v1525 = vunpack.c.l.s4 1983009808
      %v1526 = vunpack.c.0.s8 %v1525
      %v1527 = vlaneseq
      %v1528 = vshrl.u32 %v1527, 7
      %v1529 = vsub.s32 %v1526, %v1528
      %v1530 = vrot.slane %v1516, %v1529
      %v1531 = vcombine.low %v1523, %v1530
      %v1532 = vcombine.low %v822, %v830
      %v1533 = vcombine.low %v838, %v837
      %v1535 = vunpack.c.l.s4 1983009808
      %v1536 = vunpack.c.0.s8 %v1535
      %v1537 = vlaneseq
      %v1538 = vshrl.u32 %v1537, 7
      %v1539 = vsub.s32 %v1536, %v1538
      %v1540 = vrot.slane %v1532, %v1539
      %v1542 = vunpack.c.l.s4 1983009808
      %v1543 = vunpack.c.0.s8 %v1542
      %v1544 = vlaneseq
      %v1545 = vshrl.u32 %v1544, 7
      %v1546 = vsub.s32 %v1543, %v1545
      %v1547 = vrot.slane %v1533, %v1546
      %v1548 = vcombine.low %v1540, %v1547
      %v1549 = vcombine.low %v839, %v846
      %v1550 = vcombine.low %v854, %v862
      %v1552 = vunpack.c.l.s4 1983009808
      %v1553 = vunpack.c.0.s8 %v1552
      %v1554 = vlaneseq
      %v1555 = vshrl.u32 %v1554, 7
      %v1556 = vsub.s32 %v1553, %v1555
      %v1557 = vrot.slane %v1549, %v1556
      %v1559 = vunpack.c.l.s4 1983009808
      %v1560 = vunpack.c.0.s8 %v1559
      %v1561 = vlaneseq
      %v1562 = vshrl.u32 %v1561, 7
      %v1563 = vsub.s32 %v1560, %v1562
      %v1564 = vrot.slane %v1550, %v1563
      %v1565 = vcombine.low %v1557, %v1564
      %v1566 = vcombine.low %v861, %v863
      %v1567 = vcombine.low %v871, %v879
      %v1569 = vunpack.c.l.s4 1983009808
      %v1570 = vunpack.c.0.s8 %v1569
      %v1571 = vlaneseq
      %v1572 = vshrl.u32 %v1571, 7
      %v1573 = vsub.s32 %v1570, %v1572
      %v1574 = vrot.slane %v1566, %v1573
      %v1576 = vunpack.c.l.s4 1983009808
      %v1577 = vunpack.c.0.s8 %v1576
      %v1578 = vlaneseq
      %v1579 = vshrl.u32 %v1578, 7
      %v1580 = vsub.s32 %v1577, %v1579
      %v1581 = vrot.slane %v1567, %v1580
      %v1582 = vcombine.low %v1574, %v1581
      %v1583 = vcombine.low %v878, %v880
      %v1584 = vcombine.low %v887, %v895
      %v1586 = vunpack.c.l.s4 1983009808
      %v1587 = vunpack.c.0.s8 %v1586
      %v1588 = vlaneseq
      %v1589 = vshrl.u32 %v1588, 7
      %v1590 = vsub.s32 %v1587, %v1589
      %v1591 = vrot.slane %v1583, %v1590
      %v1593 = vunpack.c.l.s4 1983009808
      %v1594 = vunpack.c.0.s8 %v1593
      %v1595 = vlaneseq
      %v1596 = vshrl.u32 %v1595, 7
      %v1597 = vsub.s32 %v1594, %v1596
      %v1598 = vrot.slane %v1584, %v1597
      %v1599 = vcombine.low %v1591, %v1598
      %v1600 = vcombine.low %v903, %v902
      %v1601 = vcombine.low %v904, %v912
      %v1603 = vunpack.c.l.s4 1983009808
      %v1604 = vunpack.c.0.s8 %v1603
      %v1605 = vlaneseq
      %v1606 = vshrl.u32 %v1605, 7
      %v1607 = vsub.s32 %v1604, %v1606
      %v1608 = vrot.slane %v1600, %v1607
      %v1610 = vunpack.c.l.s4 1983009808
      %v1611 = vunpack.c.0.s8 %v1610
      %v1612 = vlaneseq
      %v1613 = vshrl.u32 %v1612, 7
      %v1614 = vsub.s32 %v1611, %v1613
      %v1615 = vrot.slane %v1601, %v1614
      %v1616 = vcombine.low %v1608, %v1615
      %v1617 = vcombine.low %v920, %v919
      %v1618 = vcombine.low %v921, %v928
      %v1620 = vunpack.c.l.s4 1983009808
      %v1621 = vunpack.c.0.s8 %v1620
      %v1622 = vlaneseq
      %v1623 = vshrl.u32 %v1622, 7
      %v1624 = vsub.s32 %v1621, %v1623
      %v1625 = vrot.slane %v1617, %v1624
      %v1627 = vunpack.c.l.s4 1983009808
      %v1628 = vunpack.c.0.s8 %v1627
      %v1629 = vlaneseq
      %v1630 = vshrl.u32 %v1629, 7
      %v1631 = vsub.s32 %v1628, %v1630
      %v1632 = vrot.slane %v1618, %v1631
      %v1633 = vcombine.low %v1625, %v1632
      %v1634 = vcombine.low %v936, %v944
      %v1635 = vcombine.low %v943, %v945
      %v1637 = vunpack.c.l.s4 1983009808
      %v1638 = vunpack.c.0.s8 %v1637
      %v1639 = vlaneseq
      %v1640 = vshrl.u32 %v1639, 7
      %v1641 = vsub.s32 %v1638, %v1640
      %v1642 = vrot.slane %v1634, %v1641
      %v1644 = vunpack.c.l.s4 1983009808
      %v1645 = vunpack.c.0.s8 %v1644
      %v1646 = vlaneseq
      %v1647 = vshrl.u32 %v1646, 7
      %v1648 = vsub.s32 %v1645, %v1647
      %v1649 = vrot.slane %v1635, %v1648
      %v1650 = vcombine.low %v1642, %v1649
      %v1651 = vcombine.low %v953, %v961
      %v1652 = vcombine.low %v960, %v962
      %v1654 = vunpack.c.l.s4 1983009808
      %v1655 = vunpack.c.0.s8 %v1654
      %v1656 = vlaneseq
      %v1657 = vshrl.u32 %v1656, 7
      %v1658 = vsub.s32 %v1655, %v1657
      %v1659 = vrot.slane %v1651, %v1658
      %v1661 = vunpack.c.l.s4 1983009808
      %v1662 = vunpack.c.0.s8 %v1661
      %v1663 = vlaneseq
      %v1664 = vshrl.u32 %v1663, 7
      %v1665 = vsub.s32 %v1662, %v1664
      %v1666 = vrot.slane %v1652, %v1665
      %v1667 = vcombine.low %v1659, %v1666
      %v1668 = vcombine.low %v969, %v977
      %v1669 = vcombine.low %v985, %v984
      %v1671 = vunpack.c.l.s4 1983009808
      %v1672 = vunpack.c.0.s8 %v1671
      %v1673 = vlaneseq
      %v1674 = vshrl.u32 %v1673, 7
      %v1675 = vsub.s32 %v1672, %v1674
      %v1676 = vrot.slane %v1668, %v1675
      %v1678 = vunpack.c.l.s4 1983009808
      %v1679 = vunpack.c.0.s8 %v1678
      %v1680 = vlaneseq
      %v1681 = vshrl.u32 %v1680, 7
      %v1682 = vsub.s32 %v1679, %v1681
      %v1683 = vrot.slane %v1669, %v1682
      %v1684 = vcombine.low %v1676, %v1683
      %v1685 = vcombine.low %v986, %v994
      %v1686 = vcombine.low %v1002, %v1001
      %v1688 = vunpack.c.l.s4 1983009808
      %v1689 = vunpack.c.0.s8 %v1688
      %v1690 = vlaneseq
      %v1691 = vshrl.u32 %v1690, 7
      %v1692 = vsub.s32 %v1689, %v1691
      %v1693 = vrot.slane %v1685, %v1692
      %v1695 = vunpack.c.l.s4 1983009808
      %v1696 = vunpack.c.0.s8 %v1695
      %v1697 = vlaneseq
      %v1698 = vshrl.u32 %v1697, 7
      %v1699 = vsub.s32 %v1696, %v1698
      %v1700 = vrot.slane %v1686, %v1699
      %v1701 = vcombine.low %v1693, %v1700
      %v1702 = vcombine.low %v1003, %v1010
      %v1703 = vcombine.low %v1018, %v1026
      %v1705 = vunpack.c.l.s4 1983009808
      %v1706 = vunpack.c.0.s8 %v1705
      %v1707 = vlaneseq
      %v1708 = vshrl.u32 %v1707, 7
      %v1709 = vsub.s32 %v1706, %v1708
      %v1710 = vrot.slane %v1702, %v1709
      %v1712 = vunpack.c.l.s4 1983009808
      %v1713 = vunpack.c.0.s8 %v1712
      %v1714 = vlaneseq
      %v1715 = vshrl.u32 %v1714, 7
      %v1716 = vsub.s32 %v1713, %v1715
      %v1717 = vrot.slane %v1703, %v1716
      %v1718 = vcombine.low %v1710, %v1717
      %v1719 = vcombine.low %v1025, %v1027
      %v1720 = vcombine.low %v1035, %v1043
      %v1722 = vunpack.c.l.s4 1983009808
      %v1723 = vunpack.c.0.s8 %v1722
      %v1724 = vlaneseq
      %v1725 = vshrl.u32 %v1724, 7
      %v1726 = vsub.s32 %v1723, %v1725
      %v1727 = vrot.slane %v1719, %v1726
      %v1729 = vunpack.c.l.s4 1983009808
      %v1730 = vunpack.c.0.s8 %v1729
      %v1731 = vlaneseq
      %v1732 = vshrl.u32 %v1731, 7
      %v1733 = vsub.s32 %v1730, %v1732
      %v1734 = vrot.slane %v1720, %v1733
      %v1735 = vcombine.low %v1727, %v1734
      %v1736 = vcombine.low %v1042, %v1044
      %v1737 = vcombine.low %v1051, %v1059
      %v1739 = vunpack.c.l.s4 1983009808
      %v1740 = vunpack.c.0.s8 %v1739
      %v1741 = vlaneseq
      %v1742 = vshrl.u32 %v1741, 7
      %v1743 = vsub.s32 %v1740, %v1742
      %v1744 = vrot.slane %v1736, %v1743
      %v1746 = vunpack.c.l.s4 1983009808
      %v1747 = vunpack.c.0.s8 %v1746
      %v1748 = vlaneseq
      %v1749 = vshrl.u32 %v1748, 7
      %v1750 = vsub.s32 %v1747, %v1749
      %v1751 = vrot.slane %v1737, %v1750
      %v1752 = vcombine.low %v1744, %v1751
      %v1753 = vcombine.low %v1067, %v1066
      %v1754 = vcombine.low %v1068, %v1076
      %v1756 = vunpack.c.l.s4 1983009808
      %v1757 = vunpack.c.0.s8 %v1756
      %v1758 = vlaneseq
      %v1759 = vshrl.u32 %v1758, 7
      %v1760 = vsub.s32 %v1757, %v1759
      %v1761 = vrot.slane %v1753, %v1760
      %v1763 = vunpack.c.l.s4 1983009808
      %v1764 = vunpack.c.0.s8 %v1763
      %v1765 = vlaneseq
      %v1766 = vshrl.u32 %v1765, 7
      %v1767 = vsub.s32 %v1764, %v1766
      %v1768 = vrot.slane %v1754, %v1767
      %v1769 = vcombine.low %v1761, %v1768
      %v1770 = vcombine.low %v1084, %v1083
      %v1771 = vcombine.low %v1085, %v1092
      %v1773 = vunpack.c.l.s4 1983009808
      %v1774 = vunpack.c.0.s8 %v1773
      %v1775 = vlaneseq
      %v1776 = vshrl.u32 %v1775, 7
      %v1777 = vsub.s32 %v1774, %v1776
      %v1778 = vrot.slane %v1770, %v1777
      %v1780 = vunpack.c.l.s4 1983009808
      %v1781 = vunpack.c.0.s8 %v1780
      %v1782 = vlaneseq
      %v1783 = vshrl.u32 %v1782, 7
      %v1784 = vsub.s32 %v1781, %v1783
      %v1785 = vrot.slane %v1771, %v1784
      %v1786 = vcombine.low %v1778, %v1785
      %v1787 = vcombine.low %v1100, %v1108
      %v1788 = vcombine.low %v1107, %v1109
      %v1790 = vunpack.c.l.s4 1983009808
      %v1791 = vunpack.c.0.s8 %v1790
      %v1792 = vlaneseq
      %v1793 = vshrl.u32 %v1792, 7
      %v1794 = vsub.s32 %v1791, %v1793
      %v1795 = vrot.slane %v1787, %v1794
      %v1797 = vunpack.c.l.s4 1983009808
      %v1798 = vunpack.c.0.s8 %v1797
      %v1799 = vlaneseq
      %v1800 = vshrl.u32 %v1799, 7
      %v1801 = vsub.s32 %v1798, %v1800
      %v1802 = vrot.slane %v1788, %v1801
      %v1803 = vcombine.low %v1795, %v1802
      %v1804 = vcombine.low %v1117, %v1125
      %v1805 = vcombine.low %v1124, %v1126
      %v1807 = vunpack.c.l.s4 1983009808
      %v1808 = vunpack.c.0.s8 %v1807
      %v1809 = vlaneseq
      %v1810 = vshrl.u32 %v1809, 7
      %v1811 = vsub.s32 %v1808, %v1810
      %v1812 = vrot.slane %v1804, %v1811
      %v1814 = vunpack.c.l.s4 1983009808
      %v1815 = vunpack.c.0.s8 %v1814
      %v1816 = vlaneseq
      %v1817 = vshrl.u32 %v1816, 7
      %v1818 = vsub.s32 %v1815, %v1817
      %v1819 = vrot.slane %v1805, %v1818
      %v1820 = vcombine.low %v1812, %v1819
      %v1821 = vcombine.low %v1133, %v1141
      %v1822 = vcombine.low %v1149, %v1148
      %v1824 = vunpack.c.l.s4 1983009808
      %v1825 = vunpack.c.0.s8 %v1824
      %v1826 = vlaneseq
      %v1827 = vshrl.u32 %v1826, 7
      %v1828 = vsub.s32 %v1825, %v1827
      %v1829 = vrot.slane %v1821, %v1828
      %v1831 = vunpack.c.l.s4 1983009808
      %v1832 = vunpack.c.0.s8 %v1831
      %v1833 = vlaneseq
      %v1834 = vshrl.u32 %v1833, 7
      %v1835 = vsub.s32 %v1832, %v1834
      %v1836 = vrot.slane %v1822, %v1835
      %v1837 = vcombine.low %v1829, %v1836
      %v1838 = vcombine.low %v1150, %v1158
      %v1839 = vcombine.low %v1166, %v1165
      %v1841 = vunpack.c.l.s4 1983009808
      %v1842 = vunpack.c.0.s8 %v1841
      %v1843 = vlaneseq
      %v1844 = vshrl.u32 %v1843, 7
      %v1845 = vsub.s32 %v1842, %v1844
      %v1846 = vrot.slane %v1838, %v1845
      %v1848 = vunpack.c.l.s4 1983009808
      %v1849 = vunpack.c.0.s8 %v1848
      %v1850 = vlaneseq
      %v1851 = vshrl.u32 %v1850, 7
      %v1852 = vsub.s32 %v1849, %v1851
      %v1853 = vrot.slane %v1839, %v1852
      %v1854 = vcombine.low %v1846, %v1853
      %v1855 = vcombine.low %v1167, %v1174
      %v1857 = vunpack.c.l.s4 1983009808
      %v1858 = vunpack.c.0.s8 %v1857
      %v1859 = vlaneseq
      %v1860 = vshrl.u32 %v1859, 7
      %v1861 = vsub.s32 %v1858, %v1860
      %v1862 = vrot.slane %v1855, %v1861
      %vm1904 = vcmask 31744
      %1905 = vst.msk [vmem:[#allocation2] sm:$0xff] %vm1904, %v1191
      %1906 = vst.msk [vmem:[#allocation2 + $0x8] sm:$0xff] %vm1904, %v1208
      %1907 = vst.msk [vmem:[#allocation2 + $0x10] sm:$0xff] %vm1904, %v1225
      %1908 = vst.msk [vmem:[#allocation2 + $0x18] sm:$0xff] %vm1904, %v1242
      %1909 = vst.msk [vmem:[#allocation2 + $0x20] sm:$0xff] %vm1904, %v1259
      %1910 = vst.msk [vmem:[#allocation2 + $0x28] sm:$0xff] %vm1904, %v1276
      %1911 = vst.msk [vmem:[#allocation2 + $0x30] sm:$0xff] %vm1904, %v1293
      %1912 = vst.msk [vmem:[#allocation2 + $0x38] sm:$0xff] %vm1904, %v1310
      %1913 = vst.msk [vmem:[#allocation2 + $0x40] sm:$0xff] %vm1904, %v1327
      %1914 = vst.msk [vmem:[#allocation2 + $0x48] sm:$0xff] %vm1904, %v1344
      %1915 = vst.msk [vmem:[#allocation2 + $0x50] sm:$0xff] %vm1904, %v1361
      %1916 = vst.msk [vmem:[#allocation2 + $0x58] sm:$0xff] %vm1904, %v1378
      %1917 = vst.msk [vmem:[#allocation2 + $0x60] sm:$0xff] %vm1904, %v1395
      %1918 = vst.msk [vmem:[#allocation2 + $0x68] sm:$0xff] %vm1904, %v1412
      %1919 = vst.msk [vmem:[#allocation2 + $0x70] sm:$0xff] %vm1904, %v1429
      %1920 = vst.msk [vmem:[#allocation2 + $0x78] sm:$0xff] %vm1904, %v1446
      %1921 = vst.msk [vmem:[#allocation2 + $0x80] sm:$0xff] %vm1904, %v1463
      %1922 = vst.msk [vmem:[#allocation2 + $0x88] sm:$0xff] %vm1904, %v1480
      %1923 = vst.msk [vmem:[#allocation2 + $0x90] sm:$0xff] %vm1904, %v1497
      %1924 = vst.msk [vmem:[#allocation2 + $0x98] sm:$0xff] %vm1904, %v1514
      %1925 = vst.msk [vmem:[#allocation2 + $0xa0] sm:$0xff] %vm1904, %v1531
      %1926 = vst.msk [vmem:[#allocation2 + $0xa8] sm:$0xff] %vm1904, %v1548
      %1927 = vst.msk [vmem:[#allocation2 + $0xb0] sm:$0xff] %vm1904, %v1565
      %1928 = vst.msk [vmem:[#allocation2 + $0xb8] sm:$0xff] %vm1904, %v1582
      %1929 = vst.msk [vmem:[#allocation2 + $0xc0] sm:$0xff] %vm1904, %v1599
      %1930 = vst.msk [vmem:[#allocation2 + $0xc8] sm:$0xff] %vm1904, %v1616
      %1931 = vst.msk [vmem:[#allocation2 + $0xd0] sm:$0xff] %vm1904, %v1633
      %1932 = vst.msk [vmem:[#allocation2 + $0xd8] sm:$0xff] %vm1904, %v1650
      %1933 = vst.msk [vmem:[#allocation2 + $0xe0] sm:$0xff] %vm1904, %v1667
      %1934 = vst.msk [vmem:[#allocation2 + $0xe8] sm:$0xff] %vm1904, %v1684
      %1935 = vst.msk [vmem:[#allocation2 + $0xf0] sm:$0xff] %vm1904, %v1701
      %1936 = vst.msk [vmem:[#allocation2 + $0xf8] sm:$0xff] %vm1904, %v1718
      %1937 = vst.msk [vmem:[#allocation2 + $0x100] sm:$0xff] %vm1904, %v1735
      %1938 = vst.msk [vmem:[#allocation2 + $0x108] sm:$0xff] %vm1904, %v1752
      %1939 = vst.msk [vmem:[#allocation2 + $0x110] sm:$0xff] %vm1904, %v1769
      %1940 = vst.msk [vmem:[#allocation2 + $0x118] sm:$0xff] %vm1904, %v1786
      %1941 = vst.msk [vmem:[#allocation2 + $0x120] sm:$0xff] %vm1904, %v1803
      %1942 = vst.msk [vmem:[#allocation2 + $0x128] sm:$0xff] %vm1904, %v1820
      %1943 = vst.msk [vmem:[#allocation2 + $0x130] sm:$0xff] %vm1904, %v1837
      %1944 = vst.msk [vmem:[#allocation2 + $0x138] sm:$0xff] %vm1904, %v1854
      %vm1945 = vcmask 27648
      %1946 = vst.msk [vmem:[#allocation2 + $0x140] sm:$0xf] %vm1945, %v1862
      %v1947 = vcombine.high %v477, %v477
      %v1948 = vcombine.high %v518, %v518
      %v1949 = vcombine.high %v559, %v559
      %v1950 = vcombine.high %v600, %v600
      %v1951 = vcombine.high %v641, %v641
      %v1952 = vcombine.high %v682, %v682
      %v1953 = vcombine.high %v723, %v723
      %v1954 = vcombine.high %v764, %v764
      %v1955 = vcombine.high %v805, %v805
      %v1956 = vcombine.high %v846, %v846
      %v1957 = vcombine.high %v887, %v887
      %v1958 = vcombine.high %v928, %v928
      %v1959 = vcombine.high %v969, %v969
      %v1960 = vcombine.high %v1010, %v1010
      %v1961 = vcombine.high %v1051, %v1051
      %v1962 = vcombine.high %v1092, %v1092
      %v1963 = vcombine.high %v1133, %v1133
      %v1964 = vcombine.high %v1174, %v1174
      %vm1965 = vcmask 1040384
      %vm1966 = vcmask 1042434
      %vm1967 = vmor %vm1965, %vm1966
      %vm1968 = vcmask 1044484
      %vm1969 = vmor %vm1967, %vm1968
      %vm1970 = vcmask 1046534
      %vm1971 = vmor %vm1969, %vm1970
      %v1972 = vrot.slane %v444, 7
      %v1973 = vrot.slane %v1972, 2
      %v1974 = vrot.slane %v452, 7
      %v1975 = vsel %vm1971, %v1973, %v1974
      %v1976 = vrot.slane %v1974, 2
      %v1977 = vrot.slane %v451, 7
      %v1978 = vsel %vm1971, %v1976, %v1977
      %v1979 = vrot.slane %v1977, 2
      %v1980 = vrot.slane %v453, 7
      %v1981 = vsel %vm1971, %v1979, %v1980
      %v1982 = vrot.slane %v1980, 2
      %v1983 = vrot.slane %v461, 7
      %v1984 = vsel %vm1971, %v1982, %v1983
      %v1985 = vrot.slane %v1983, 2
      %v1986 = vrot.slane %v469, 7
      %v1987 = vsel %vm1971, %v1985, %v1986
      %v1988 = vrot.slane %v1986, 2
      %v1989 = vrot.slane %v468, 7
      %v1990 = vsel %vm1971, %v1988, %v1989
      %v1991 = vrot.slane %v1989, 2
      %v1992 = vrot.slane %v470, 7
      %v1993 = vsel %vm1971, %v1991, %v1992
      %v1994 = vrot.slane %v1992, 2
      %v1995 = vrot.slane %v477, 7
      %v1996 = vsel %vm1971, %v1994, %v1995
      %v1997 = vrot.slane %v1995, 2
      %v1998 = vrot.slane %v1947, 7
      %v1999 = vsel %vm1971, %v1997, %v1998
      %v2000 = vrot.slane %v485, 7
      %v2001 = vrot.slane %v2000, 2
      %v2002 = vrot.slane %v493, 7
      %v2003 = vsel %vm1971, %v2001, %v2002
      %v2004 = vrot.slane %v2002, 2
      %v2005 = vrot.slane %v492, 7
      %v2006 = vsel %vm1971, %v2004, %v2005
      %v2007 = vrot.slane %v2005, 2
      %v2008 = vrot.slane %v494, 7
      %v2009 = vsel %vm1971, %v2007, %v2008
      %v2010 = vrot.slane %v2008, 2
      %v2011 = vrot.slane %v502, 7
      %v2012 = vsel %vm1971, %v2010, %v2011
      %v2013 = vrot.slane %v2011, 2
      %v2014 = vrot.slane %v510, 7
      %v2015 = vsel %vm1971, %v2013, %v2014
      %v2016 = vrot.slane %v2014, 2
      %v2017 = vrot.slane %v509, 7
      %v2018 = vsel %vm1971, %v2016, %v2017
      %v2019 = vrot.slane %v2017, 2
      %v2020 = vrot.slane %v511, 7
      %v2021 = vsel %vm1971, %v2019, %v2020
      %v2022 = vrot.slane %v2020, 2
      %v2023 = vrot.slane %v518, 7
      %v2024 = vsel %vm1971, %v2022, %v2023
      %v2025 = vrot.slane %v2023, 2
      %v2026 = vrot.slane %v1948, 7
      %v2027 = vsel %vm1971, %v2025, %v2026
      %v2028 = vrot.slane %v526, 7
      %v2029 = vrot.slane %v2028, 2
      %v2030 = vrot.slane %v534, 7
      %v2031 = vsel %vm1971, %v2029, %v2030
      %v2032 = vrot.slane %v2030, 2
      %v2033 = vrot.slane %v533, 7
      %v2034 = vsel %vm1971, %v2032, %v2033
      %v2035 = vrot.slane %v2033, 2
      %v2036 = vrot.slane %v535, 7
      %v2037 = vsel %vm1971, %v2035, %v2036
      %v2038 = vrot.slane %v2036, 2
      %v2039 = vrot.slane %v543, 7
      %v2040 = vsel %vm1971, %v2038, %v2039
      %v2041 = vrot.slane %v2039, 2
      %v2042 = vrot.slane %v551, 7
      %v2043 = vsel %vm1971, %v2041, %v2042
      %v2044 = vrot.slane %v2042, 2
      %v2045 = vrot.slane %v550, 7
      %v2046 = vsel %vm1971, %v2044, %v2045
      %v2047 = vrot.slane %v2045, 2
      %v2048 = vrot.slane %v552, 7
      %v2049 = vsel %vm1971, %v2047, %v2048
      %v2050 = vrot.slane %v2048, 2
      %v2051 = vrot.slane %v559, 7
      %v2052 = vsel %vm1971, %v2050, %v2051
      %v2053 = vrot.slane %v2051, 2
      %v2054 = vrot.slane %v1949, 7
      %v2055 = vsel %vm1971, %v2053, %v2054
      %v2056 = vrot.slane %v567, 7
      %v2057 = vrot.slane %v2056, 2
      %v2058 = vrot.slane %v575, 7
      %v2059 = vsel %vm1971, %v2057, %v2058
      %v2060 = vrot.slane %v2058, 2
      %v2061 = vrot.slane %v574, 7
      %v2062 = vsel %vm1971, %v2060, %v2061
      %v2063 = vrot.slane %v2061, 2
      %v2064 = vrot.slane %v576, 7
      %v2065 = vsel %vm1971, %v2063, %v2064
      %v2066 = vrot.slane %v2064, 2
      %v2067 = vrot.slane %v584, 7
      %v2068 = vsel %vm1971, %v2066, %v2067
      %v2069 = vrot.slane %v2067, 2
      %v2070 = vrot.slane %v592, 7
      %v2071 = vsel %vm1971, %v2069, %v2070
      %v2072 = vrot.slane %v2070, 2
      %v2073 = vrot.slane %v591, 7
      %v2074 = vsel %vm1971, %v2072, %v2073
      %v2075 = vrot.slane %v2073, 2
      %v2076 = vrot.slane %v593, 7
      %v2077 = vsel %vm1971, %v2075, %v2076
      %v2078 = vrot.slane %v2076, 2
      %v2079 = vrot.slane %v600, 7
      %v2080 = vsel %vm1971, %v2078, %v2079
      %v2081 = vrot.slane %v2079, 2
      %v2082 = vrot.slane %v1950, 7
      %v2083 = vsel %vm1971, %v2081, %v2082
      %v2084 = vrot.slane %v608, 7
      %v2085 = vrot.slane %v2084, 2
      %v2086 = vrot.slane %v616, 7
      %v2087 = vsel %vm1971, %v2085, %v2086
      %v2088 = vrot.slane %v2086, 2
      %v2089 = vrot.slane %v615, 7
      %v2090 = vsel %vm1971, %v2088, %v2089
      %v2091 = vrot.slane %v2089, 2
      %v2092 = vrot.slane %v617, 7
      %v2093 = vsel %vm1971, %v2091, %v2092
      %v2094 = vrot.slane %v2092, 2
      %v2095 = vrot.slane %v625, 7
      %v2096 = vsel %vm1971, %v2094, %v2095
      %v2097 = vrot.slane %v2095, 2
      %v2098 = vrot.slane %v633, 7
      %v2099 = vsel %vm1971, %v2097, %v2098
      %v2100 = vrot.slane %v2098, 2
      %v2101 = vrot.slane %v632, 7
      %v2102 = vsel %vm1971, %v2100, %v2101
      %v2103 = vrot.slane %v2101, 2
      %v2104 = vrot.slane %v634, 7
      %v2105 = vsel %vm1971, %v2103, %v2104
      %v2106 = vrot.slane %v2104, 2
      %v2107 = vrot.slane %v641, 7
      %v2108 = vsel %vm1971, %v2106, %v2107
      %v2109 = vrot.slane %v2107, 2
      %v2110 = vrot.slane %v1951, 7
      %v2111 = vsel %vm1971, %v2109, %v2110
      %v2112 = vrot.slane %v649, 7
      %v2113 = vrot.slane %v2112, 2
      %v2114 = vrot.slane %v657, 7
      %v2115 = vsel %vm1971, %v2113, %v2114
      %v2116 = vrot.slane %v2114, 2
      %v2117 = vrot.slane %v656, 7
      %v2118 = vsel %vm1971, %v2116, %v2117
      %v2119 = vrot.slane %v2117, 2
      %v2120 = vrot.slane %v658, 7
      %v2121 = vsel %vm1971, %v2119, %v2120
      %v2122 = vrot.slane %v2120, 2
      %v2123 = vrot.slane %v666, 7
      %v2124 = vsel %vm1971, %v2122, %v2123
      %v2125 = vrot.slane %v2123, 2
      %v2126 = vrot.slane %v674, 7
      %v2127 = vsel %vm1971, %v2125, %v2126
      %v2128 = vrot.slane %v2126, 2
      %v2129 = vrot.slane %v673, 7
      %v2130 = vsel %vm1971, %v2128, %v2129
      %v2131 = vrot.slane %v2129, 2
      %v2132 = vrot.slane %v675, 7
      %v2133 = vsel %vm1971, %v2131, %v2132
      %v2134 = vrot.slane %v2132, 2
      %v2135 = vrot.slane %v682, 7
      %v2136 = vsel %vm1971, %v2134, %v2135
      %v2137 = vrot.slane %v2135, 2
      %v2138 = vrot.slane %v1952, 7
      %v2139 = vsel %vm1971, %v2137, %v2138
      %v2140 = vrot.slane %v690, 7
      %v2141 = vrot.slane %v2140, 2
      %v2142 = vrot.slane %v698, 7
      %v2143 = vsel %vm1971, %v2141, %v2142
      %v2144 = vrot.slane %v2142, 2
      %v2145 = vrot.slane %v697, 7
      %v2146 = vsel %vm1971, %v2144, %v2145
      %v2147 = vrot.slane %v2145, 2
      %v2148 = vrot.slane %v699, 7
      %v2149 = vsel %vm1971, %v2147, %v2148
      %v2150 = vrot.slane %v2148, 2
      %v2151 = vrot.slane %v707, 7
      %v2152 = vsel %vm1971, %v2150, %v2151
      %v2153 = vrot.slane %v2151, 2
      %v2154 = vrot.slane %v715, 7
      %v2155 = vsel %vm1971, %v2153, %v2154
      %v2156 = vrot.slane %v2154, 2
      %v2157 = vrot.slane %v714, 7
      %v2158 = vsel %vm1971, %v2156, %v2157
      %v2159 = vrot.slane %v2157, 2
      %v2160 = vrot.slane %v716, 7
      %v2161 = vsel %vm1971, %v2159, %v2160
      %v2162 = vrot.slane %v2160, 2
      %v2163 = vrot.slane %v723, 7
      %v2164 = vsel %vm1971, %v2162, %v2163
      %v2165 = vrot.slane %v2163, 2
      %v2166 = vrot.slane %v1953, 7
      %v2167 = vsel %vm1971, %v2165, %v2166
      %v2168 = vrot.slane %v731, 7
      %v2169 = vrot.slane %v2168, 2
      %v2170 = vrot.slane %v739, 7
      %v2171 = vsel %vm1971, %v2169, %v2170
      %v2172 = vrot.slane %v2170, 2
      %v2173 = vrot.slane %v738, 7
      %v2174 = vsel %vm1971, %v2172, %v2173
      %v2175 = vrot.slane %v2173, 2
      %v2176 = vrot.slane %v740, 7
      %v2177 = vsel %vm1971, %v2175, %v2176
      %v2178 = vrot.slane %v2176, 2
      %v2179 = vrot.slane %v748, 7
      %v2180 = vsel %vm1971, %v2178, %v2179
      %v2181 = vrot.slane %v2179, 2
      %v2182 = vrot.slane %v756, 7
      %v2183 = vsel %vm1971, %v2181, %v2182
      %v2184 = vrot.slane %v2182, 2
      %v2185 = vrot.slane %v755, 7
      %v2186 = vsel %vm1971, %v2184, %v2185
      %v2187 = vrot.slane %v2185, 2
      %v2188 = vrot.slane %v757, 7
      %v2189 = vsel %vm1971, %v2187, %v2188
      %v2190 = vrot.slane %v2188, 2
      %v2191 = vrot.slane %v764, 7
      %v2192 = vsel %vm1971, %v2190, %v2191
      %v2193 = vrot.slane %v2191, 2
      %v2194 = vrot.slane %v1954, 7
      %v2195 = vsel %vm1971, %v2193, %v2194
      %v2196 = vrot.slane %v772, 7
      %v2197 = vrot.slane %v2196, 2
      %v2198 = vrot.slane %v780, 7
      %v2199 = vsel %vm1971, %v2197, %v2198
      %v2200 = vrot.slane %v2198, 2
      %v2201 = vrot.slane %v779, 7
      %v2202 = vsel %vm1971, %v2200, %v2201
      %v2203 = vrot.slane %v2201, 2
      %v2204 = vrot.slane %v781, 7
      %v2205 = vsel %vm1971, %v2203, %v2204
      %v2206 = vrot.slane %v2204, 2
      %v2207 = vrot.slane %v789, 7
      %v2208 = vsel %vm1971, %v2206, %v2207
      %v2209 = vrot.slane %v2207, 2
      %v2210 = vrot.slane %v797, 7
      %v2211 = vsel %vm1971, %v2209, %v2210
      %v2212 = vrot.slane %v2210, 2
      %v2213 = vrot.slane %v796, 7
      %v2214 = vsel %vm1971, %v2212, %v2213
      %v2215 = vrot.slane %v2213, 2
      %v2216 = vrot.slane %v798, 7
      %v2217 = vsel %vm1971, %v2215, %v2216
      %v2218 = vrot.slane %v2216, 2
      %v2219 = vrot.slane %v805, 7
      %v2220 = vsel %vm1971, %v2218, %v2219
      %v2221 = vrot.slane %v2219, 2
      %v2222 = vrot.slane %v1955, 7
      %v2223 = vsel %vm1971, %v2221, %v2222
      %v2224 = vrot.slane %v813, 7
      %v2225 = vrot.slane %v2224, 2
      %v2226 = vrot.slane %v821, 7
      %v2227 = vsel %vm1971, %v2225, %v2226
      %v2228 = vrot.slane %v2226, 2
      %v2229 = vrot.slane %v820, 7
      %v2230 = vsel %vm1971, %v2228, %v2229
      %v2231 = vrot.slane %v2229, 2
      %v2232 = vrot.slane %v822, 7
      %v2233 = vsel %vm1971, %v2231, %v2232
      %v2234 = vrot.slane %v2232, 2
      %v2235 = vrot.slane %v830, 7
      %v2236 = vsel %vm1971, %v2234, %v2235
      %v2237 = vrot.slane %v2235, 2
      %v2238 = vrot.slane %v838, 7
      %v2239 = vsel %vm1971, %v2237, %v2238
      %v2240 = vrot.slane %v2238, 2
      %v2241 = vrot.slane %v837, 7
      %v2242 = vsel %vm1971, %v2240, %v2241
      %v2243 = vrot.slane %v2241, 2
      %v2244 = vrot.slane %v839, 7
      %v2245 = vsel %vm1971, %v2243, %v2244
      %v2246 = vrot.slane %v2244, 2
      %v2247 = vrot.slane %v846, 7
      %v2248 = vsel %vm1971, %v2246, %v2247
      %v2249 = vrot.slane %v2247, 2
      %v2250 = vrot.slane %v1956, 7
      %v2251 = vsel %vm1971, %v2249, %v2250
      %v2252 = vrot.slane %v854, 7
      %v2253 = vrot.slane %v2252, 2
      %v2254 = vrot.slane %v862, 7
      %v2255 = vsel %vm1971, %v2253, %v2254
      %v2256 = vrot.slane %v2254, 2
      %v2257 = vrot.slane %v861, 7
      %v2258 = vsel %vm1971, %v2256, %v2257
      %v2259 = vrot.slane %v2257, 2
      %v2260 = vrot.slane %v863, 7
      %v2261 = vsel %vm1971, %v2259, %v2260
      %v2262 = vrot.slane %v2260, 2
      %v2263 = vrot.slane %v871, 7
      %v2264 = vsel %vm1971, %v2262, %v2263
      %v2265 = vrot.slane %v2263, 2
      %v2266 = vrot.slane %v879, 7
      %v2267 = vsel %vm1971, %v2265, %v2266
      %v2268 = vrot.slane %v2266, 2
      %v2269 = vrot.slane %v878, 7
      %v2270 = vsel %vm1971, %v2268, %v2269
      %v2271 = vrot.slane %v2269, 2
      %v2272 = vrot.slane %v880, 7
      %v2273 = vsel %vm1971, %v2271, %v2272
      %v2274 = vrot.slane %v2272, 2
      %v2275 = vrot.slane %v887, 7
      %v2276 = vsel %vm1971, %v2274, %v2275
      %v2277 = vrot.slane %v2275, 2
      %v2278 = vrot.slane %v1957, 7
      %v2279 = vsel %vm1971, %v2277, %v2278
      %v2280 = vrot.slane %v895, 7
      %v2281 = vrot.slane %v2280, 2
      %v2282 = vrot.slane %v903, 7
      %v2283 = vsel %vm1971, %v2281, %v2282
      %v2284 = vrot.slane %v2282, 2
      %v2285 = vrot.slane %v902, 7
      %v2286 = vsel %vm1971, %v2284, %v2285
      %v2287 = vrot.slane %v2285, 2
      %v2288 = vrot.slane %v904, 7
      %v2289 = vsel %vm1971, %v2287, %v2288
      %v2290 = vrot.slane %v2288, 2
      %v2291 = vrot.slane %v912, 7
      %v2292 = vsel %vm1971, %v2290, %v2291
      %v2293 = vrot.slane %v2291, 2
      %v2294 = vrot.slane %v920, 7
      %v2295 = vsel %vm1971, %v2293, %v2294
      %v2296 = vrot.slane %v2294, 2
      %v2297 = vrot.slane %v919, 7
      %v2298 = vsel %vm1971, %v2296, %v2297
      %v2299 = vrot.slane %v2297, 2
      %v2300 = vrot.slane %v921, 7
      %v2301 = vsel %vm1971, %v2299, %v2300
      %v2302 = vrot.slane %v2300, 2
      %v2303 = vrot.slane %v928, 7
      %v2304 = vsel %vm1971, %v2302, %v2303
      %v2305 = vrot.slane %v2303, 2
      %v2306 = vrot.slane %v1958, 7
      %v2307 = vsel %vm1971, %v2305, %v2306
      %v2308 = vrot.slane %v936, 7
      %v2309 = vrot.slane %v2308, 2
      %v2310 = vrot.slane %v944, 7
      %v2311 = vsel %vm1971, %v2309, %v2310
      %v2312 = vrot.slane %v2310, 2
      %v2313 = vrot.slane %v943, 7
      %v2314 = vsel %vm1971, %v2312, %v2313
      %v2315 = vrot.slane %v2313, 2
      %v2316 = vrot.slane %v945, 7
      %v2317 = vsel %vm1971, %v2315, %v2316
      %v2318 = vrot.slane %v2316, 2
      %v2319 = vrot.slane %v953, 7
      %v2320 = vsel %vm1971, %v2318, %v2319
      %v2321 = vrot.slane %v2319, 2
      %v2322 = vrot.slane %v961, 7
      %v2323 = vsel %vm1971, %v2321, %v2322
      %v2324 = vrot.slane %v2322, 2
      %v2325 = vrot.slane %v960, 7
      %v2326 = vsel %vm1971, %v2324, %v2325
      %v2327 = vrot.slane %v2325, 2
      %v2328 = vrot.slane %v962, 7
      %v2329 = vsel %vm1971, %v2327, %v2328
      %v2330 = vrot.slane %v2328, 2
      %v2331 = vrot.slane %v969, 7
      %v2332 = vsel %vm1971, %v2330, %v2331
      %v2333 = vrot.slane %v2331, 2
      %v2334 = vrot.slane %v1959, 7
      %v2335 = vsel %vm1971, %v2333, %v2334
      %v2336 = vrot.slane %v977, 7
      %v2337 = vrot.slane %v2336, 2
      %v2338 = vrot.slane %v985, 7
      %v2339 = vsel %vm1971, %v2337, %v2338
      %v2340 = vrot.slane %v2338, 2
      %v2341 = vrot.slane %v984, 7
      %v2342 = vsel %vm1971, %v2340, %v2341
      %v2343 = vrot.slane %v2341, 2
      %v2344 = vrot.slane %v986, 7
      %v2345 = vsel %vm1971, %v2343, %v2344
      %v2346 = vrot.slane %v2344, 2
      %v2347 = vrot.slane %v994, 7
      %v2348 = vsel %vm1971, %v2346, %v2347
      %v2349 = vrot.slane %v2347, 2
      %v2350 = vrot.slane %v1002, 7
      %v2351 = vsel %vm1971, %v2349, %v2350
      %v2352 = vrot.slane %v2350, 2
      %v2353 = vrot.slane %v1001, 7
      %v2354 = vsel %vm1971, %v2352, %v2353
      %v2355 = vrot.slane %v2353, 2
      %v2356 = vrot.slane %v1003, 7
      %v2357 = vsel %vm1971, %v2355, %v2356
      %v2358 = vrot.slane %v2356, 2
      %v2359 = vrot.slane %v1010, 7
      %v2360 = vsel %vm1971, %v2358, %v2359
      %v2361 = vrot.slane %v2359, 2
      %v2362 = vrot.slane %v1960, 7
      %v2363 = vsel %vm1971, %v2361, %v2362
      %v2364 = vrot.slane %v1018, 7
      %v2365 = vrot.slane %v2364, 2
      %v2366 = vrot.slane %v1026, 7
      %v2367 = vsel %vm1971, %v2365, %v2366
      %v2368 = vrot.slane %v2366, 2
      %v2369 = vrot.slane %v1025, 7
      %v2370 = vsel %vm1971, %v2368, %v2369
      %v2371 = vrot.slane %v2369, 2
      %v2372 = vrot.slane %v1027, 7
      %v2373 = vsel %vm1971, %v2371, %v2372
      %v2374 = vrot.slane %v2372, 2
      %v2375 = vrot.slane %v1035, 7
      %v2376 = vsel %vm1971, %v2374, %v2375
      %v2377 = vrot.slane %v2375, 2
      %v2378 = vrot.slane %v1043, 7
      %v2379 = vsel %vm1971, %v2377, %v2378
      %v2380 = vrot.slane %v2378, 2
      %v2381 = vrot.slane %v1042, 7
      %v2382 = vsel %vm1971, %v2380, %v2381
      %v2383 = vrot.slane %v2381, 2
      %v2384 = vrot.slane %v1044, 7
      %v2385 = vsel %vm1971, %v2383, %v2384
      %v2386 = vrot.slane %v2384, 2
      %v2387 = vrot.slane %v1051, 7
      %v2388 = vsel %vm1971, %v2386, %v2387
      %v2389 = vrot.slane %v2387, 2
      %v2390 = vrot.slane %v1961, 7
      %v2391 = vsel %vm1971, %v2389, %v2390
      %v2392 = vrot.slane %v1059, 7
      %v2393 = vrot.slane %v2392, 2
      %v2394 = vrot.slane %v1067, 7
      %v2395 = vsel %vm1971, %v2393, %v2394
      %v2396 = vrot.slane %v2394, 2
      %v2397 = vrot.slane %v1066, 7
      %v2398 = vsel %vm1971, %v2396, %v2397
      %v2399 = vrot.slane %v2397, 2
      %v2400 = vrot.slane %v1068, 7
      %v2401 = vsel %vm1971, %v2399, %v2400
      %v2402 = vrot.slane %v2400, 2
      %v2403 = vrot.slane %v1076, 7
      %v2404 = vsel %vm1971, %v2402, %v2403
      %v2405 = vrot.slane %v2403, 2
      %v2406 = vrot.slane %v1084, 7
      %v2407 = vsel %vm1971, %v2405, %v2406
      %v2408 = vrot.slane %v2406, 2
      %v2409 = vrot.slane %v1083, 7
      %v2410 = vsel %vm1971, %v2408, %v2409
      %v2411 = vrot.slane %v2409, 2
      %v2412 = vrot.slane %v1085, 7
      %v2413 = vsel %vm1971, %v2411, %v2412
      %v2414 = vrot.slane %v2412, 2
      %v2415 = vrot.slane %v1092, 7
      %v2416 = vsel %vm1971, %v2414, %v2415
      %v2417 = vrot.slane %v2415, 2
      %v2418 = vrot.slane %v1962, 7
      %v2419 = vsel %vm1971, %v2417, %v2418
      %v2420 = vrot.slane %v1100, 7
      %v2421 = vrot.slane %v2420, 2
      %v2422 = vrot.slane %v1108, 7
      %v2423 = vsel %vm1971, %v2421, %v2422
      %v2424 = vrot.slane %v2422, 2
      %v2425 = vrot.slane %v1107, 7
      %v2426 = vsel %vm1971, %v2424, %v2425
      %v2427 = vrot.slane %v2425, 2
      %v2428 = vrot.slane %v1109, 7
      %v2429 = vsel %vm1971, %v2427, %v2428
      %v2430 = vrot.slane %v2428, 2
      %v2431 = vrot.slane %v1117, 7
      %v2432 = vsel %vm1971, %v2430, %v2431
      %v2433 = vrot.slane %v2431, 2
      %v2434 = vrot.slane %v1125, 7
      %v2435 = vsel %vm1971, %v2433, %v2434
      %v2436 = vrot.slane %v2434, 2
      %v2437 = vrot.slane %v1124, 7
      %v2438 = vsel %vm1971, %v2436, %v2437
      %v2439 = vrot.slane %v2437, 2
      %v2440 = vrot.slane %v1126, 7
      %v2441 = vsel %vm1971, %v2439, %v2440
      %v2442 = vrot.slane %v2440, 2
      %v2443 = vrot.slane %v1133, 7
      %v2444 = vsel %vm1971, %v2442, %v2443
      %v2445 = vrot.slane %v2443, 2
      %v2446 = vrot.slane %v1963, 7
      %v2447 = vsel %vm1971, %v2445, %v2446
      %v2448 = vrot.slane %v1141, 7
      %v2449 = vrot.slane %v2448, 2
      %v2450 = vrot.slane %v1149, 7
      %v2451 = vsel %vm1971, %v2449, %v2450
      %v2452 = vrot.slane %v2450, 2
      %v2453 = vrot.slane %v1148, 7
      %v2454 = vsel %vm1971, %v2452, %v2453
      %v2455 = vrot.slane %v2453, 2
      %v2456 = vrot.slane %v1150, 7
      %v2457 = vsel %vm1971, %v2455, %v2456
      %v2458 = vrot.slane %v2456, 2
      %v2459 = vrot.slane %v1158, 7
      %v2460 = vsel %vm1971, %v2458, %v2459
      %v2461 = vrot.slane %v2459, 2
      %v2462 = vrot.slane %v1166, 7
      %v2463 = vsel %vm1971, %v2461, %v2462
      %v2464 = vrot.slane %v2462, 2
      %v2465 = vrot.slane %v1165, 7
      %v2466 = vsel %vm1971, %v2464, %v2465
      %v2467 = vrot.slane %v2465, 2
      %v2468 = vrot.slane %v1167, 7
      %v2469 = vsel %vm1971, %v2467, %v2468
      %v2470 = vrot.slane %v2468, 2
      %v2471 = vrot.slane %v1174, 7
      %v2472 = vsel %vm1971, %v2470, %v2471
      %v2473 = vrot.slane %v2471, 2
      %v2474 = vrot.slane %v1964, 7
      %v2475 = vsel %vm1971, %v2473, %v2474
      %v2476 = vcombine.low %v1975, %v1978
      %v2477 = vcombine.low %v1981, %v1984
      %v2479 = vunpack.c.l.s4 1983009808
      %v2480 = vunpack.c.0.s8 %v2479
      %v2481 = vlaneseq
      %v2482 = vshrl.u32 %v2481, 7
      %v2483 = vsub.s32 %v2480, %v2482
      %v2484 = vrot.slane %v2476, %v2483
      %v2486 = vunpack.c.l.s4 1983009808
      %v2487 = vunpack.c.0.s8 %v2486
      %v2488 = vlaneseq
      %v2489 = vshrl.u32 %v2488, 7
      %v2490 = vsub.s32 %v2487, %v2489
      %v2491 = vrot.slane %v2477, %v2490
      %v2492 = vcombine.low %v2484, %v2491
      %v2493 = vcombine.low %v1987, %v1990
      %v2494 = vcombine.low %v1993, %v1996
      %v2496 = vunpack.c.l.s4 1983009808
      %v2497 = vunpack.c.0.s8 %v2496
      %v2498 = vlaneseq
      %v2499 = vshrl.u32 %v2498, 7
      %v2500 = vsub.s32 %v2497, %v2499
      %v2501 = vrot.slane %v2493, %v2500
      %v2503 = vunpack.c.l.s4 1983009808
      %v2504 = vunpack.c.0.s8 %v2503
      %v2505 = vlaneseq
      %v2506 = vshrl.u32 %v2505, 7
      %v2507 = vsub.s32 %v2504, %v2506
      %v2508 = vrot.slane %v2494, %v2507
      %v2509 = vcombine.low %v2501, %v2508
      %v2510 = vcombine.low %v1999, %v2003
      %v2511 = vcombine.low %v2006, %v2009
      %v2513 = vunpack.c.l.s4 1983009808
      %v2514 = vunpack.c.0.s8 %v2513
      %v2515 = vlaneseq
      %v2516 = vshrl.u32 %v2515, 7
      %v2517 = vsub.s32 %v2514, %v2516
      %v2518 = vrot.slane %v2510, %v2517
      %v2520 = vunpack.c.l.s4 1983009808
      %v2521 = vunpack.c.0.s8 %v2520
      %v2522 = vlaneseq
      %v2523 = vshrl.u32 %v2522, 7
      %v2524 = vsub.s32 %v2521, %v2523
      %v2525 = vrot.slane %v2511, %v2524
      %v2526 = vcombine.low %v2518, %v2525
      %v2527 = vcombine.low %v2012, %v2015
      %v2528 = vcombine.low %v2018, %v2021
      %v2530 = vunpack.c.l.s4 1983009808
      %v2531 = vunpack.c.0.s8 %v2530
      %v2532 = vlaneseq
      %v2533 = vshrl.u32 %v2532, 7
      %v2534 = vsub.s32 %v2531, %v2533
      %v2535 = vrot.slane %v2527, %v2534
      %v2537 = vunpack.c.l.s4 1983009808
      %v2538 = vunpack.c.0.s8 %v2537
      %v2539 = vlaneseq
      %v2540 = vshrl.u32 %v2539, 7
      %v2541 = vsub.s32 %v2538, %v2540
      %v2542 = vrot.slane %v2528, %v2541
      %v2543 = vcombine.low %v2535, %v2542
      %v2544 = vcombine.low %v2024, %v2027
      %v2545 = vcombine.low %v2031, %v2034
      %v2547 = vunpack.c.l.s4 1983009808
      %v2548 = vunpack.c.0.s8 %v2547
      %v2549 = vlaneseq
      %v2550 = vshrl.u32 %v2549, 7
      %v2551 = vsub.s32 %v2548, %v2550
      %v2552 = vrot.slane %v2544, %v2551
      %v2554 = vunpack.c.l.s4 1983009808
      %v2555 = vunpack.c.0.s8 %v2554
      %v2556 = vlaneseq
      %v2557 = vshrl.u32 %v2556, 7
      %v2558 = vsub.s32 %v2555, %v2557
      %v2559 = vrot.slane %v2545, %v2558
      %v2560 = vcombine.low %v2552, %v2559
      %v2561 = vcombine.low %v2037, %v2040
      %v2562 = vcombine.low %v2043, %v2046
      %v2564 = vunpack.c.l.s4 1983009808
      %v2565 = vunpack.c.0.s8 %v2564
      %v2566 = vlaneseq
      %v2567 = vshrl.u32 %v2566, 7
      %v2568 = vsub.s32 %v2565, %v2567
      %v2569 = vrot.slane %v2561, %v2568
      %v2571 = vunpack.c.l.s4 1983009808
      %v2572 = vunpack.c.0.s8 %v2571
      %v2573 = vlaneseq
      %v2574 = vshrl.u32 %v2573, 7
      %v2575 = vsub.s32 %v2572, %v2574
      %v2576 = vrot.slane %v2562, %v2575
      %v2577 = vcombine.low %v2569, %v2576
      %v2578 = vcombine.low %v2049, %v2052
      %v2579 = vcombine.low %v2055, %v2059
      %v2581 = vunpack.c.l.s4 1983009808
      %v2582 = vunpack.c.0.s8 %v2581
      %v2583 = vlaneseq
      %v2584 = vshrl.u32 %v2583, 7
      %v2585 = vsub.s32 %v2582, %v2584
      %v2586 = vrot.slane %v2578, %v2585
      %v2588 = vunpack.c.l.s4 1983009808
      %v2589 = vunpack.c.0.s8 %v2588
      %v2590 = vlaneseq
      %v2591 = vshrl.u32 %v2590, 7
      %v2592 = vsub.s32 %v2589, %v2591
      %v2593 = vrot.slane %v2579, %v2592
      %v2594 = vcombine.low %v2586, %v2593
      %v2595 = vcombine.low %v2062, %v2065
      %v2596 = vcombine.low %v2068, %v2071
      %v2598 = vunpack.c.l.s4 1983009808
      %v2599 = vunpack.c.0.s8 %v2598
      %v2600 = vlaneseq
      %v2601 = vshrl.u32 %v2600, 7
      %v2602 = vsub.s32 %v2599, %v2601
      %v2603 = vrot.slane %v2595, %v2602
      %v2605 = vunpack.c.l.s4 1983009808
      %v2606 = vunpack.c.0.s8 %v2605
      %v2607 = vlaneseq
      %v2608 = vshrl.u32 %v2607, 7
      %v2609 = vsub.s32 %v2606, %v2608
      %v2610 = vrot.slane %v2596, %v2609
      %v2611 = vcombine.low %v2603, %v2610
      %v2612 = vcombine.low %v2074, %v2077
      %v2613 = vcombine.low %v2080, %v2083
      %v2615 = vunpack.c.l.s4 1983009808
      %v2616 = vunpack.c.0.s8 %v2615
      %v2617 = vlaneseq
      %v2618 = vshrl.u32 %v2617, 7
      %v2619 = vsub.s32 %v2616, %v2618
      %v2620 = vrot.slane %v2612, %v2619
      %v2622 = vunpack.c.l.s4 1983009808
      %v2623 = vunpack.c.0.s8 %v2622
      %v2624 = vlaneseq
      %v2625 = vshrl.u32 %v2624, 7
      %v2626 = vsub.s32 %v2623, %v2625
      %v2627 = vrot.slane %v2613, %v2626
      %v2628 = vcombine.low %v2620, %v2627
      %v2629 = vcombine.low %v2087, %v2090
      %v2630 = vcombine.low %v2093, %v2096
      %v2632 = vunpack.c.l.s4 1983009808
      %v2633 = vunpack.c.0.s8 %v2632
      %v2634 = vlaneseq
      %v2635 = vshrl.u32 %v2634, 7
      %v2636 = vsub.s32 %v2633, %v2635
      %v2637 = vrot.slane %v2629, %v2636
      %v2639 = vunpack.c.l.s4 1983009808
      %v2640 = vunpack.c.0.s8 %v2639
      %v2641 = vlaneseq
      %v2642 = vshrl.u32 %v2641, 7
      %v2643 = vsub.s32 %v2640, %v2642
      %v2644 = vrot.slane %v2630, %v2643
      %v2645 = vcombine.low %v2637, %v2644
      %v2646 = vcombine.low %v2099, %v2102
      %v2647 = vcombine.low %v2105, %v2108
      %v2649 = vunpack.c.l.s4 1983009808
      %v2650 = vunpack.c.0.s8 %v2649
      %v2651 = vlaneseq
      %v2652 = vshrl.u32 %v2651, 7
      %v2653 = vsub.s32 %v2650, %v2652
      %v2654 = vrot.slane %v2646, %v2653
      %v2656 = vunpack.c.l.s4 1983009808
      %v2657 = vunpack.c.0.s8 %v2656
      %v2658 = vlaneseq
      %v2659 = vshrl.u32 %v2658, 7
      %v2660 = vsub.s32 %v2657, %v2659
      %v2661 = vrot.slane %v2647, %v2660
      %v2662 = vcombine.low %v2654, %v2661
      %v2663 = vcombine.low %v2111, %v2115
      %v2664 = vcombine.low %v2118, %v2121
      %v2666 = vunpack.c.l.s4 1983009808
      %v2667 = vunpack.c.0.s8 %v2666
      %v2668 = vlaneseq
      %v2669 = vshrl.u32 %v2668, 7
      %v2670 = vsub.s32 %v2667, %v2669
      %v2671 = vrot.slane %v2663, %v2670
      %v2673 = vunpack.c.l.s4 1983009808
      %v2674 = vunpack.c.0.s8 %v2673
      %v2675 = vlaneseq
      %v2676 = vshrl.u32 %v2675, 7
      %v2677 = vsub.s32 %v2674, %v2676
      %v2678 = vrot.slane %v2664, %v2677
      %v2679 = vcombine.low %v2671, %v2678
      %v2680 = vcombine.low %v2124, %v2127
      %v2681 = vcombine.low %v2130, %v2133
      %v2683 = vunpack.c.l.s4 1983009808
      %v2684 = vunpack.c.0.s8 %v2683
      %v2685 = vlaneseq
      %v2686 = vshrl.u32 %v2685, 7
      %v2687 = vsub.s32 %v2684, %v2686
      %v2688 = vrot.slane %v2680, %v2687
      %v2690 = vunpack.c.l.s4 1983009808
      %v2691 = vunpack.c.0.s8 %v2690
      %v2692 = vlaneseq
      %v2693 = vshrl.u32 %v2692, 7
      %v2694 = vsub.s32 %v2691, %v2693
      %v2695 = vrot.slane %v2681, %v2694
      %v2696 = vcombine.low %v2688, %v2695
      %v2697 = vcombine.low %v2136, %v2139
      %v2698 = vcombine.low %v2143, %v2146
      %v2700 = vunpack.c.l.s4 1983009808
      %v2701 = vunpack.c.0.s8 %v2700
      %v2702 = vlaneseq
      %v2703 = vshrl.u32 %v2702, 7
      %v2704 = vsub.s32 %v2701, %v2703
      %v2705 = vrot.slane %v2697, %v2704
      %v2707 = vunpack.c.l.s4 1983009808
      %v2708 = vunpack.c.0.s8 %v2707
      %v2709 = vlaneseq
      %v2710 = vshrl.u32 %v2709, 7
      %v2711 = vsub.s32 %v2708, %v2710
      %v2712 = vrot.slane %v2698, %v2711
      %v2713 = vcombine.low %v2705, %v2712
      %v2714 = vcombine.low %v2149, %v2152
      %v2715 = vcombine.low %v2155, %v2158
      %v2717 = vunpack.c.l.s4 1983009808
      %v2718 = vunpack.c.0.s8 %v2717
      %v2719 = vlaneseq
      %v2720 = vshrl.u32 %v2719, 7
      %v2721 = vsub.s32 %v2718, %v2720
      %v2722 = vrot.slane %v2714, %v2721
      %v2724 = vunpack.c.l.s4 1983009808
      %v2725 = vunpack.c.0.s8 %v2724
      %v2726 = vlaneseq
      %v2727 = vshrl.u32 %v2726, 7
      %v2728 = vsub.s32 %v2725, %v2727
      %v2729 = vrot.slane %v2715, %v2728
      %v2730 = vcombine.low %v2722, %v2729
      %v2731 = vcombine.low %v2161, %v2164
      %v2732 = vcombine.low %v2167, %v2171
      %v2734 = vunpack.c.l.s4 1983009808
      %v2735 = vunpack.c.0.s8 %v2734
      %v2736 = vlaneseq
      %v2737 = vshrl.u32 %v2736, 7
      %v2738 = vsub.s32 %v2735, %v2737
      %v2739 = vrot.slane %v2731, %v2738
      %v2741 = vunpack.c.l.s4 1983009808
      %v2742 = vunpack.c.0.s8 %v2741
      %v2743 = vlaneseq
      %v2744 = vshrl.u32 %v2743, 7
      %v2745 = vsub.s32 %v2742, %v2744
      %v2746 = vrot.slane %v2732, %v2745
      %v2747 = vcombine.low %v2739, %v2746
      %v2748 = vcombine.low %v2174, %v2177
      %v2749 = vcombine.low %v2180, %v2183
      %v2751 = vunpack.c.l.s4 1983009808
      %v2752 = vunpack.c.0.s8 %v2751
      %v2753 = vlaneseq
      %v2754 = vshrl.u32 %v2753, 7
      %v2755 = vsub.s32 %v2752, %v2754
      %v2756 = vrot.slane %v2748, %v2755
      %v2758 = vunpack.c.l.s4 1983009808
      %v2759 = vunpack.c.0.s8 %v2758
      %v2760 = vlaneseq
      %v2761 = vshrl.u32 %v2760, 7
      %v2762 = vsub.s32 %v2759, %v2761
      %v2763 = vrot.slane %v2749, %v2762
      %v2764 = vcombine.low %v2756, %v2763
      %v2765 = vcombine.low %v2186, %v2189
      %v2766 = vcombine.low %v2192, %v2195
      %v2768 = vunpack.c.l.s4 1983009808
      %v2769 = vunpack.c.0.s8 %v2768
      %v2770 = vlaneseq
      %v2771 = vshrl.u32 %v2770, 7
      %v2772 = vsub.s32 %v2769, %v2771
      %v2773 = vrot.slane %v2765, %v2772
      %v2775 = vunpack.c.l.s4 1983009808
      %v2776 = vunpack.c.0.s8 %v2775
      %v2777 = vlaneseq
      %v2778 = vshrl.u32 %v2777, 7
      %v2779 = vsub.s32 %v2776, %v2778
      %v2780 = vrot.slane %v2766, %v2779
      %v2781 = vcombine.low %v2773, %v2780
      %v2782 = vcombine.low %v2199, %v2202
      %v2783 = vcombine.low %v2205, %v2208
      %v2785 = vunpack.c.l.s4 1983009808
      %v2786 = vunpack.c.0.s8 %v2785
      %v2787 = vlaneseq
      %v2788 = vshrl.u32 %v2787, 7
      %v2789 = vsub.s32 %v2786, %v2788
      %v2790 = vrot.slane %v2782, %v2789
      %v2792 = vunpack.c.l.s4 1983009808
      %v2793 = vunpack.c.0.s8 %v2792
      %v2794 = vlaneseq
      %v2795 = vshrl.u32 %v2794, 7
      %v2796 = vsub.s32 %v2793, %v2795
      %v2797 = vrot.slane %v2783, %v2796
      %v2798 = vcombine.low %v2790, %v2797
      %v2799 = vcombine.low %v2211, %v2214
      %v2800 = vcombine.low %v2217, %v2220
      %v2802 = vunpack.c.l.s4 1983009808
      %v2803 = vunpack.c.0.s8 %v2802
      %v2804 = vlaneseq
      %v2805 = vshrl.u32 %v2804, 7
      %v2806 = vsub.s32 %v2803, %v2805
      %v2807 = vrot.slane %v2799, %v2806
      %v2809 = vunpack.c.l.s4 1983009808
      %v2810 = vunpack.c.0.s8 %v2809
      %v2811 = vlaneseq
      %v2812 = vshrl.u32 %v2811, 7
      %v2813 = vsub.s32 %v2810, %v2812
      %v2814 = vrot.slane %v2800, %v2813
      %v2815 = vcombine.low %v2807, %v2814
      %v2816 = vcombine.low %v2223, %v2227
      %v2817 = vcombine.low %v2230, %v2233
      %v2819 = vunpack.c.l.s4 1983009808
      %v2820 = vunpack.c.0.s8 %v2819
      %v2821 = vlaneseq
      %v2822 = vshrl.u32 %v2821, 7
      %v2823 = vsub.s32 %v2820, %v2822
      %v2824 = vrot.slane %v2816, %v2823
      %v2826 = vunpack.c.l.s4 1983009808
      %v2827 = vunpack.c.0.s8 %v2826
      %v2828 = vlaneseq
      %v2829 = vshrl.u32 %v2828, 7
      %v2830 = vsub.s32 %v2827, %v2829
      %v2831 = vrot.slane %v2817, %v2830
      %v2832 = vcombine.low %v2824, %v2831
      %v2833 = vcombine.low %v2236, %v2239
      %v2834 = vcombine.low %v2242, %v2245
      %v2836 = vunpack.c.l.s4 1983009808
      %v2837 = vunpack.c.0.s8 %v2836
      %v2838 = vlaneseq
      %v2839 = vshrl.u32 %v2838, 7
      %v2840 = vsub.s32 %v2837, %v2839
      %v2841 = vrot.slane %v2833, %v2840
      %v2843 = vunpack.c.l.s4 1983009808
      %v2844 = vunpack.c.0.s8 %v2843
      %v2845 = vlaneseq
      %v2846 = vshrl.u32 %v2845, 7
      %v2847 = vsub.s32 %v2844, %v2846
      %v2848 = vrot.slane %v2834, %v2847
      %v2849 = vcombine.low %v2841, %v2848
      %v2850 = vcombine.low %v2248, %v2251
      %v2851 = vcombine.low %v2255, %v2258
      %v2853 = vunpack.c.l.s4 1983009808
      %v2854 = vunpack.c.0.s8 %v2853
      %v2855 = vlaneseq
      %v2856 = vshrl.u32 %v2855, 7
      %v2857 = vsub.s32 %v2854, %v2856
      %v2858 = vrot.slane %v2850, %v2857
      %v2860 = vunpack.c.l.s4 1983009808
      %v2861 = vunpack.c.0.s8 %v2860
      %v2862 = vlaneseq
      %v2863 = vshrl.u32 %v2862, 7
      %v2864 = vsub.s32 %v2861, %v2863
      %v2865 = vrot.slane %v2851, %v2864
      %v2866 = vcombine.low %v2858, %v2865
      %v2867 = vcombine.low %v2261, %v2264
      %v2868 = vcombine.low %v2267, %v2270
      %v2870 = vunpack.c.l.s4 1983009808
      %v2871 = vunpack.c.0.s8 %v2870
      %v2872 = vlaneseq
      %v2873 = vshrl.u32 %v2872, 7
      %v2874 = vsub.s32 %v2871, %v2873
      %v2875 = vrot.slane %v2867, %v2874
      %v2877 = vunpack.c.l.s4 1983009808
      %v2878 = vunpack.c.0.s8 %v2877
      %v2879 = vlaneseq
      %v2880 = vshrl.u32 %v2879, 7
      %v2881 = vsub.s32 %v2878, %v2880
      %v2882 = vrot.slane %v2868, %v2881
      %v2883 = vcombine.low %v2875, %v2882
      %v2884 = vcombine.low %v2273, %v2276
      %v2885 = vcombine.low %v2279, %v2283
      %v2887 = vunpack.c.l.s4 1983009808
      %v2888 = vunpack.c.0.s8 %v2887
      %v2889 = vlaneseq
      %v2890 = vshrl.u32 %v2889, 7
      %v2891 = vsub.s32 %v2888, %v2890
      %v2892 = vrot.slane %v2884, %v2891
      %v2894 = vunpack.c.l.s4 1983009808
      %v2895 = vunpack.c.0.s8 %v2894
      %v2896 = vlaneseq
      %v2897 = vshrl.u32 %v2896, 7
      %v2898 = vsub.s32 %v2895, %v2897
      %v2899 = vrot.slane %v2885, %v2898
      %v2900 = vcombine.low %v2892, %v2899
      %v2901 = vcombine.low %v2286, %v2289
      %v2902 = vcombine.low %v2292, %v2295
      %v2904 = vunpack.c.l.s4 1983009808
      %v2905 = vunpack.c.0.s8 %v2904
      %v2906 = vlaneseq
      %v2907 = vshrl.u32 %v2906, 7
      %v2908 = vsub.s32 %v2905, %v2907
      %v2909 = vrot.slane %v2901, %v2908
      %v2911 = vunpack.c.l.s4 1983009808
      %v2912 = vunpack.c.0.s8 %v2911
      %v2913 = vlaneseq
      %v2914 = vshrl.u32 %v2913, 7
      %v2915 = vsub.s32 %v2912, %v2914
      %v2916 = vrot.slane %v2902, %v2915
      %v2917 = vcombine.low %v2909, %v2916
      %v2918 = vcombine.low %v2298, %v2301
      %v2919 = vcombine.low %v2304, %v2307
      %v2921 = vunpack.c.l.s4 1983009808
      %v2922 = vunpack.c.0.s8 %v2921
      %v2923 = vlaneseq
      %v2924 = vshrl.u32 %v2923, 7
      %v2925 = vsub.s32 %v2922, %v2924
      %v2926 = vrot.slane %v2918, %v2925
      %v2928 = vunpack.c.l.s4 1983009808
      %v2929 = vunpack.c.0.s8 %v2928
      %v2930 = vlaneseq
      %v2931 = vshrl.u32 %v2930, 7
      %v2932 = vsub.s32 %v2929, %v2931
      %v2933 = vrot.slane %v2919, %v2932
      %v2934 = vcombine.low %v2926, %v2933
      %v2935 = vcombine.low %v2311, %v2314
      %v2936 = vcombine.low %v2317, %v2320
      %v2938 = vunpack.c.l.s4 1983009808
      %v2939 = vunpack.c.0.s8 %v2938
      %v2940 = vlaneseq
      %v2941 = vshrl.u32 %v2940, 7
      %v2942 = vsub.s32 %v2939, %v2941
      %v2943 = vrot.slane %v2935, %v2942
      %v2945 = vunpack.c.l.s4 1983009808
      %v2946 = vunpack.c.0.s8 %v2945
      %v2947 = vlaneseq
      %v2948 = vshrl.u32 %v2947, 7
      %v2949 = vsub.s32 %v2946, %v2948
      %v2950 = vrot.slane %v2936, %v2949
      %v2951 = vcombine.low %v2943, %v2950
      %v2952 = vcombine.low %v2323, %v2326
      %v2953 = vcombine.low %v2329, %v2332
      %v2955 = vunpack.c.l.s4 1983009808
      %v2956 = vunpack.c.0.s8 %v2955
      %v2957 = vlaneseq
      %v2958 = vshrl.u32 %v2957, 7
      %v2959 = vsub.s32 %v2956, %v2958
      %v2960 = vrot.slane %v2952, %v2959
      %v2962 = vunpack.c.l.s4 1983009808
      %v2963 = vunpack.c.0.s8 %v2962
      %v2964 = vlaneseq
      %v2965 = vshrl.u32 %v2964, 7
      %v2966 = vsub.s32 %v2963, %v2965
      %v2967 = vrot.slane %v2953, %v2966
      %v2968 = vcombine.low %v2960, %v2967
      %v2969 = vcombine.low %v2335, %v2339
      %v2970 = vcombine.low %v2342, %v2345
      %v2972 = vunpack.c.l.s4 1983009808
      %v2973 = vunpack.c.0.s8 %v2972
      %v2974 = vlaneseq
      %v2975 = vshrl.u32 %v2974, 7
      %v2976 = vsub.s32 %v2973, %v2975
      %v2977 = vrot.slane %v2969, %v2976
      %v2979 = vunpack.c.l.s4 1983009808
      %v2980 = vunpack.c.0.s8 %v2979
      %v2981 = vlaneseq
      %v2982 = vshrl.u32 %v2981, 7
      %v2983 = vsub.s32 %v2980, %v2982
      %v2984 = vrot.slane %v2970, %v2983
      %v2985 = vcombine.low %v2977, %v2984
      %v2986 = vcombine.low %v2348, %v2351
      %v2987 = vcombine.low %v2354, %v2357
      %v2989 = vunpack.c.l.s4 1983009808
      %v2990 = vunpack.c.0.s8 %v2989
      %v2991 = vlaneseq
      %v2992 = vshrl.u32 %v2991, 7
      %v2993 = vsub.s32 %v2990, %v2992
      %v2994 = vrot.slane %v2986, %v2993
      %v2996 = vunpack.c.l.s4 1983009808
      %v2997 = vunpack.c.0.s8 %v2996
      %v2998 = vlaneseq
      %v2999 = vshrl.u32 %v2998, 7
      %v3000 = vsub.s32 %v2997, %v2999
      %v3001 = vrot.slane %v2987, %v3000
      %v3002 = vcombine.low %v2994, %v3001
      %v3003 = vcombine.low %v2360, %v2363
      %v3004 = vcombine.low %v2367, %v2370
      %v3006 = vunpack.c.l.s4 1983009808
      %v3007 = vunpack.c.0.s8 %v3006
      %v3008 = vlaneseq
      %v3009 = vshrl.u32 %v3008, 7
      %v3010 = vsub.s32 %v3007, %v3009
      %v3011 = vrot.slane %v3003, %v3010
      %v3013 = vunpack.c.l.s4 1983009808
      %v3014 = vunpack.c.0.s8 %v3013
      %v3015 = vlaneseq
      %v3016 = vshrl.u32 %v3015, 7
      %v3017 = vsub.s32 %v3014, %v3016
      %v3018 = vrot.slane %v3004, %v3017
      %v3019 = vcombine.low %v3011, %v3018
      %v3020 = vcombine.low %v2373, %v2376
      %v3021 = vcombine.low %v2379, %v2382
      %v3023 = vunpack.c.l.s4 1983009808
      %v3024 = vunpack.c.0.s8 %v3023
      %v3025 = vlaneseq
      %v3026 = vshrl.u32 %v3025, 7
      %v3027 = vsub.s32 %v3024, %v3026
      %v3028 = vrot.slane %v3020, %v3027
      %v3030 = vunpack.c.l.s4 1983009808
      %v3031 = vunpack.c.0.s8 %v3030
      %v3032 = vlaneseq
      %v3033 = vshrl.u32 %v3032, 7
      %v3034 = vsub.s32 %v3031, %v3033
      %v3035 = vrot.slane %v3021, %v3034
      %v3036 = vcombine.low %v3028, %v3035
      %v3037 = vcombine.low %v2385, %v2388
      %v3038 = vcombine.low %v2391, %v2395
      %v3040 = vunpack.c.l.s4 1983009808
      %v3041 = vunpack.c.0.s8 %v3040
      %v3042 = vlaneseq
      %v3043 = vshrl.u32 %v3042, 7
      %v3044 = vsub.s32 %v3041, %v3043
      %v3045 = vrot.slane %v3037, %v3044
      %v3047 = vunpack.c.l.s4 1983009808
      %v3048 = vunpack.c.0.s8 %v3047
      %v3049 = vlaneseq
      %v3050 = vshrl.u32 %v3049, 7
      %v3051 = vsub.s32 %v3048, %v3050
      %v3052 = vrot.slane %v3038, %v3051
      %v3053 = vcombine.low %v3045, %v3052
      %v3054 = vcombine.low %v2398, %v2401
      %v3055 = vcombine.low %v2404, %v2407
      %v3057 = vunpack.c.l.s4 1983009808
      %v3058 = vunpack.c.0.s8 %v3057
      %v3059 = vlaneseq
      %v3060 = vshrl.u32 %v3059, 7
      %v3061 = vsub.s32 %v3058, %v3060
      %v3062 = vrot.slane %v3054, %v3061
      %v3064 = vunpack.c.l.s4 1983009808
      %v3065 = vunpack.c.0.s8 %v3064
      %v3066 = vlaneseq
      %v3067 = vshrl.u32 %v3066, 7
      %v3068 = vsub.s32 %v3065, %v3067
      %v3069 = vrot.slane %v3055, %v3068
      %v3070 = vcombine.low %v3062, %v3069
      %v3071 = vcombine.low %v2410, %v2413
      %v3072 = vcombine.low %v2416, %v2419
      %v3074 = vunpack.c.l.s4 1983009808
      %v3075 = vunpack.c.0.s8 %v3074
      %v3076 = vlaneseq
      %v3077 = vshrl.u32 %v3076, 7
      %v3078 = vsub.s32 %v3075, %v3077
      %v3079 = vrot.slane %v3071, %v3078
      %v3081 = vunpack.c.l.s4 1983009808
      %v3082 = vunpack.c.0.s8 %v3081
      %v3083 = vlaneseq
      %v3084 = vshrl.u32 %v3083, 7
      %v3085 = vsub.s32 %v3082, %v3084
      %v3086 = vrot.slane %v3072, %v3085
      %v3087 = vcombine.low %v3079, %v3086
      %v3088 = vcombine.low %v2423, %v2426
      %v3089 = vcombine.low %v2429, %v2432
      %v3091 = vunpack.c.l.s4 1983009808
      %v3092 = vunpack.c.0.s8 %v3091
      %v3093 = vlaneseq
      %v3094 = vshrl.u32 %v3093, 7
      %v3095 = vsub.s32 %v3092, %v3094
      %v3096 = vrot.slane %v3088, %v3095
      %v3098 = vunpack.c.l.s4 1983009808
      %v3099 = vunpack.c.0.s8 %v3098
      %v3100 = vlaneseq
      %v3101 = vshrl.u32 %v3100, 7
      %v3102 = vsub.s32 %v3099, %v3101
      %v3103 = vrot.slane %v3089, %v3102
      %v3104 = vcombine.low %v3096, %v3103
      %v3105 = vcombine.low %v2435, %v2438
      %v3106 = vcombine.low %v2441, %v2444
      %v3108 = vunpack.c.l.s4 1983009808
      %v3109 = vunpack.c.0.s8 %v3108
      %v3110 = vlaneseq
      %v3111 = vshrl.u32 %v3110, 7
      %v3112 = vsub.s32 %v3109, %v3111
      %v3113 = vrot.slane %v3105, %v3112
      %v3115 = vunpack.c.l.s4 1983009808
      %v3116 = vunpack.c.0.s8 %v3115
      %v3117 = vlaneseq
      %v3118 = vshrl.u32 %v3117, 7
      %v3119 = vsub.s32 %v3116, %v3118
      %v3120 = vrot.slane %v3106, %v3119
      %v3121 = vcombine.low %v3113, %v3120
      %v3122 = vcombine.low %v2447, %v2451
      %v3123 = vcombine.low %v2454, %v2457
      %v3125 = vunpack.c.l.s4 1983009808
      %v3126 = vunpack.c.0.s8 %v3125
      %v3127 = vlaneseq
      %v3128 = vshrl.u32 %v3127, 7
      %v3129 = vsub.s32 %v3126, %v3128
      %v3130 = vrot.slane %v3122, %v3129
      %v3132 = vunpack.c.l.s4 1983009808
      %v3133 = vunpack.c.0.s8 %v3132
      %v3134 = vlaneseq
      %v3135 = vshrl.u32 %v3134, 7
      %v3136 = vsub.s32 %v3133, %v3135
      %v3137 = vrot.slane %v3123, %v3136
      %v3138 = vcombine.low %v3130, %v3137
      %v3139 = vcombine.low %v2460, %v2463
      %v3140 = vcombine.low %v2466, %v2469
      %v3142 = vunpack.c.l.s4 1983009808
      %v3143 = vunpack.c.0.s8 %v3142
      %v3144 = vlaneseq
      %v3145 = vshrl.u32 %v3144, 7
      %v3146 = vsub.s32 %v3143, %v3145
      %v3147 = vrot.slane %v3139, %v3146
      %v3149 = vunpack.c.l.s4 1983009808
      %v3150 = vunpack.c.0.s8 %v3149
      %v3151 = vlaneseq
      %v3152 = vshrl.u32 %v3151, 7
      %v3153 = vsub.s32 %v3150, %v3152
      %v3154 = vrot.slane %v3140, %v3153
      %v3155 = vcombine.low %v3147, %v3154
      %v3156 = vcombine.low %v2472, %v2475
      %v3158 = vunpack.c.l.s4 1983009808
      %v3159 = vunpack.c.0.s8 %v3158
      %v3160 = vlaneseq
      %v3161 = vshrl.u32 %v3160, 7
      %v3162 = vsub.s32 %v3159, %v3161
      %v3163 = vrot.slane %v3156, %v3162
      %3164 = vrot.lane.b32.xlu0 %v2492, 4
      %v3165 = vpop.permute.xlu0 %3164
      %3166 = vrot.lane.b32.xlu0 %v2509, 4
      %v3167 = vpop.permute.xlu0 %3166
      %3168 = vrot.lane.b32.xlu0 %v2526, 4
      %v3169 = vpop.permute.xlu0 %3168
      %3170 = vrot.lane.b32.xlu0 %v2543, 4
      %v3171 = vpop.permute.xlu0 %3170
      %3172 = vrot.lane.b32.xlu0 %v2560, 4
      %v3173 = vpop.permute.xlu0 %3172
      %3174 = vrot.lane.b32.xlu0 %v2577, 4
      %v3175 = vpop.permute.xlu0 %3174
      %3176 = vrot.lane.b32.xlu0 %v2594, 4
      %v3177 = vpop.permute.xlu0 %3176
      %3178 = vrot.lane.b32.xlu0 %v2611, 4
      %v3179 = vpop.permute.xlu0 %3178
      %3180 = vrot.lane.b32.xlu0 %v2628, 4
      %v3181 = vpop.permute.xlu0 %3180
      %3182 = vrot.lane.b32.xlu0 %v2645, 4
      %v3183 = vpop.permute.xlu0 %3182
      %3184 = vrot.lane.b32.xlu0 %v2662, 4
      %v3185 = vpop.permute.xlu0 %3184
      %3186 = vrot.lane.b32.xlu0 %v2679, 4
      %v3187 = vpop.permute.xlu0 %3186
      %3188 = vrot.lane.b32.xlu0 %v2696, 4
      %v3189 = vpop.permute.xlu0 %3188
      %3190 = vrot.lane.b32.xlu0 %v2713, 4
      %v3191 = vpop.permute.xlu0 %3190
      %3192 = vrot.lane.b32.xlu0 %v2730, 4
      %v3193 = vpop.permute.xlu0 %3192
      %3194 = vrot.lane.b32.xlu0 %v2747, 4
      %v3195 = vpop.permute.xlu0 %3194
      %3196 = vrot.lane.b32.xlu0 %v2764, 4
      %v3197 = vpop.permute.xlu0 %3196
      %3198 = vrot.lane.b32.xlu0 %v2781, 4
      %v3199 = vpop.permute.xlu0 %3198
      %3200 = vrot.lane.b32.xlu0 %v2798, 4
      %v3201 = vpop.permute.xlu0 %3200
      %3202 = vrot.lane.b32.xlu0 %v2815, 4
      %v3203 = vpop.permute.xlu0 %3202
      %3204 = vrot.lane.b32.xlu0 %v2832, 4
      %v3205 = vpop.permute.xlu0 %3204
      %3206 = vrot.lane.b32.xlu0 %v2849, 4
      %v3207 = vpop.permute.xlu0 %3206
      %3208 = vrot.lane.b32.xlu0 %v2866, 4
      %v3209 = vpop.permute.xlu0 %3208
      %3210 = vrot.lane.b32.xlu0 %v2883, 4
      %v3211 = vpop.permute.xlu0 %3210
      %3212 = vrot.lane.b32.xlu0 %v2900, 4
      %v3213 = vpop.permute.xlu0 %3212
      %3214 = vrot.lane.b32.xlu0 %v2917, 4
      %v3215 = vpop.permute.xlu0 %3214
      %3216 = vrot.lane.b32.xlu0 %v2934, 4
      %v3217 = vpop.permute.xlu0 %3216
      %3218 = vrot.lane.b32.xlu0 %v2951, 4
      %v3219 = vpop.permute.xlu0 %3218
      %3220 = vrot.lane.b32.xlu0 %v2968, 4
      %v3221 = vpop.permute.xlu0 %3220
      %3222 = vrot.lane.b32.xlu0 %v2985, 4
      %v3223 = vpop.permute.xlu0 %3222
      %3224 = vrot.lane.b32.xlu0 %v3002, 4
      %v3225 = vpop.permute.xlu0 %3224
      %3226 = vrot.lane.b32.xlu0 %v3019, 4
      %v3227 = vpop.permute.xlu0 %3226
      %3228 = vrot.lane.b32.xlu0 %v3036, 4
      %v3229 = vpop.permute.xlu0 %3228
      %3230 = vrot.lane.b32.xlu0 %v3053, 4
      %v3231 = vpop.permute.xlu0 %3230
      %3232 = vrot.lane.b32.xlu0 %v3070, 4
      %v3233 = vpop.permute.xlu0 %3232
      %3234 = vrot.lane.b32.xlu0 %v3087, 4
      %v3235 = vpop.permute.xlu0 %3234
      %3236 = vrot.lane.b32.xlu0 %v3104, 4
      %v3237 = vpop.permute.xlu0 %3236
      %3238 = vrot.lane.b32.xlu0 %v3121, 4
      %v3239 = vpop.permute.xlu0 %3238
      %3240 = vrot.lane.b32.xlu0 %v3138, 4
      %v3241 = vpop.permute.xlu0 %3240
      %3242 = vrot.lane.b32.xlu0 %v3155, 4
      %v3243 = vpop.permute.xlu0 %3242
      %3244 = vrot.lane.b32.xlu0 %v3163, 4
      %v3245 = vpop.permute.xlu0 %3244
      %vm3287 = vcmask 64544
      %3288 = vst.msk [vmem:[#allocation2] sm:$0xff] %vm3287, %v3165
      %3289 = vst.msk [vmem:[#allocation2 + $0x8] sm:$0xff] %vm3287, %v3167
      %3290 = vst.msk [vmem:[#allocation2 + $0x10] sm:$0xff] %vm3287, %v3169
      %3291 = vst.msk [vmem:[#allocation2 + $0x18] sm:$0xff] %vm3287, %v3171
      %3292 = vst.msk [vmem:[#allocation2 + $0x20] sm:$0xff] %vm3287, %v3173
      %3293 = vst.msk [vmem:[#allocation2 + $0x28] sm:$0xff] %vm3287, %v3175
      %3294 = vst.msk [vmem:[#allocation2 + $0x30] sm:$0xff] %vm3287, %v3177
      %3295 = vst.msk [vmem:[#allocation2 + $0x38] sm:$0xff] %vm3287, %v3179
      %3296 = vst.msk [vmem:[#allocation2 + $0x40] sm:$0xff] %vm3287, %v3181
      %3297 = vst.msk [vmem:[#allocation2 + $0x48] sm:$0xff] %vm3287, %v3183
      %3298 = vst.msk [vmem:[#allocation2 + $0x50] sm:$0xff] %vm3287, %v3185
      %3299 = vst.msk [vmem:[#allocation2 + $0x58] sm:$0xff] %vm3287, %v3187
      %3300 = vst.msk [vmem:[#allocation2 + $0x60] sm:$0xff] %vm3287, %v3189
      %3301 = vst.msk [vmem:[#allocation2 + $0x68] sm:$0xff] %vm3287, %v3191
      %3302 = vst.msk [vmem:[#allocation2 + $0x70] sm:$0xff] %vm3287, %v3193
      %3303 = vst.msk [vmem:[#allocation2 + $0x78] sm:$0xff] %vm3287, %v3195
      %3304 = vst.msk [vmem:[#allocation2 + $0x80] sm:$0xff] %vm3287, %v3197
      %3305 = vst.msk [vmem:[#allocation2 + $0x88] sm:$0xff] %vm3287, %v3199
      %3306 = vst.msk [vmem:[#allocation2 + $0x90] sm:$0xff] %vm3287, %v3201
      %3307 = vst.msk [vmem:[#allocation2 + $0x98] sm:$0xff] %vm3287, %v3203
      %3308 = vst.msk [vmem:[#allocation2 + $0xa0] sm:$0xff] %vm3287, %v3205
      %3309 = vst.msk [vmem:[#allocation2 + $0xa8] sm:$0xff] %vm3287, %v3207
      %3310 = vst.msk [vmem:[#allocation2 + $0xb0] sm:$0xff] %vm3287, %v3209
      %3311 = vst.msk [vmem:[#allocation2 + $0xb8] sm:$0xff] %vm3287, %v3211
      %3312 = vst.msk [vmem:[#allocation2 + $0xc0] sm:$0xff] %vm3287, %v3213
      %3313 = vst.msk [vmem:[#allocation2 + $0xc8] sm:$0xff] %vm3287, %v3215
      %3314 = vst.msk [vmem:[#allocation2 + $0xd0] sm:$0xff] %vm3287, %v3217
      %3315 = vst.msk [vmem:[#allocation2 + $0xd8] sm:$0xff] %vm3287, %v3219
      %3316 = vst.msk [vmem:[#allocation2 + $0xe0] sm:$0xff] %vm3287, %v3221
      %3317 = vst.msk [vmem:[#allocation2 + $0xe8] sm:$0xff] %vm3287, %v3223
      %3318 = vst.msk [vmem:[#allocation2 + $0xf0] sm:$0xff] %vm3287, %v3225
      %3319 = vst.msk [vmem:[#allocation2 + $0xf8] sm:$0xff] %vm3287, %v3227
      %3320 = vst.msk [vmem:[#allocation2 + $0x100] sm:$0xff] %vm3287, %v3229
      %3321 = vst.msk [vmem:[#allocation2 + $0x108] sm:$0xff] %vm3287, %v3231
      %3322 = vst.msk [vmem:[#allocation2 + $0x110] sm:$0xff] %vm3287, %v3233
      %3323 = vst.msk [vmem:[#allocation2 + $0x118] sm:$0xff] %vm3287, %v3235
      %3324 = vst.msk [vmem:[#allocation2 + $0x120] sm:$0xff] %vm3287, %v3237
      %3325 = vst.msk [vmem:[#allocation2 + $0x128] sm:$0xff] %vm3287, %v3239
      %3326 = vst.msk [vmem:[#allocation2 + $0x130] sm:$0xff] %vm3287, %v3241
      %3327 = vst.msk [vmem:[#allocation2 + $0x138] sm:$0xff] %vm3287, %v3243
      %vm3328 = vcmask 60448
      %3329 = vst.msk [vmem:[#allocation2 + $0x140] sm:$0xf] %vm3328, %v3245
      %v3330 = vcombine.low %v452, %v451
      %v3331 = vcombine.low %v453, %v461
      %v3333 = vunpack.c.l.s4 1983009808
      %v3334 = vunpack.c.0.s8 %v3333
      %v3335 = vlaneseq
      %v3336 = vshrl.u32 %v3335, 7
      %v3337 = vsub.s32 %v3334, %v3336
      %v3338 = vrot.slane %v3330, %v3337
      %v3340 = vunpack.c.l.s4 1983009808
      %v3341 = vunpack.c.0.s8 %v3340
      %v3342 = vlaneseq
      %v3343 = vshrl.u32 %v3342, 7
      %v3344 = vsub.s32 %v3341, %v3343
      %v3345 = vrot.slane %v3331, %v3344
      %v3346 = vcombine.low %v3338, %v3345
      %v3347 = vcombine.low %v469, %v468
      %v3348 = vcombine.low %v470, %v477
      %v3350 = vunpack.c.l.s4 1983009808
      %v3351 = vunpack.c.0.s8 %v3350
      %v3352 = vlaneseq
      %v3353 = vshrl.u32 %v3352, 7
      %v3354 = vsub.s32 %v3351, %v3353
      %v3355 = vrot.slane %v3347, %v3354
      %v3357 = vunpack.c.l.s4 1983009808
      %v3358 = vunpack.c.0.s8 %v3357
      %v3359 = vlaneseq
      %v3360 = vshrl.u32 %v3359, 7
      %v3361 = vsub.s32 %v3358, %v3360
      %v3362 = vrot.slane %v3348, %v3361
      %v3363 = vcombine.low %v3355, %v3362
      %v3364 = vcombine.low %v1947, %v493
      %v3365 = vcombine.low %v492, %v494
      %v3367 = vunpack.c.l.s4 1983009808
      %v3368 = vunpack.c.0.s8 %v3367
      %v3369 = vlaneseq
      %v3370 = vshrl.u32 %v3369, 7
      %v3371 = vsub.s32 %v3368, %v3370
      %v3372 = vrot.slane %v3364, %v3371
      %v3374 = vunpack.c.l.s4 1983009808
      %v3375 = vunpack.c.0.s8 %v3374
      %v3376 = vlaneseq
      %v3377 = vshrl.u32 %v3376, 7
      %v3378 = vsub.s32 %v3375, %v3377
      %v3379 = vrot.slane %v3365, %v3378
      %v3380 = vcombine.low %v3372, %v3379
      %v3381 = vcombine.low %v502, %v510
      %v3382 = vcombine.low %v509, %v511
      %v3384 = vunpack.c.l.s4 1983009808
      %v3385 = vunpack.c.0.s8 %v3384
      %v3386 = vlaneseq
      %v3387 = vshrl.u32 %v3386, 7
      %v3388 = vsub.s32 %v3385, %v3387
      %v3389 = vrot.slane %v3381, %v3388
      %v3391 = vunpack.c.l.s4 1983009808
      %v3392 = vunpack.c.0.s8 %v3391
      %v3393 = vlaneseq
      %v3394 = vshrl.u32 %v3393, 7
      %v3395 = vsub.s32 %v3392, %v3394
      %v3396 = vrot.slane %v3382, %v3395
      %v3397 = vcombine.low %v3389, %v3396
      %v3398 = vcombine.low %v518, %v1948
      %v3399 = vcombine.low %v534, %v533
      %v3401 = vunpack.c.l.s4 1983009808
      %v3402 = vunpack.c.0.s8 %v3401
      %v3403 = vlaneseq
      %v3404 = vshrl.u32 %v3403, 7
      %v3405 = vsub.s32 %v3402, %v3404
      %v3406 = vrot.slane %v3398, %v3405
      %v3408 = vunpack.c.l.s4 1983009808
      %v3409 = vunpack.c.0.s8 %v3408
      %v3410 = vlaneseq
      %v3411 = vshrl.u32 %v3410, 7
      %v3412 = vsub.s32 %v3409, %v3411
      %v3413 = vrot.slane %v3399, %v3412
      %v3414 = vcombine.low %v3406, %v3413
      %v3415 = vcombine.low %v535, %v543
      %v3416 = vcombine.low %v551, %v550
      %v3418 = vunpack.c.l.s4 1983009808
      %v3419 = vunpack.c.0.s8 %v3418
      %v3420 = vlaneseq
      %v3421 = vshrl.u32 %v3420, 7
      %v3422 = vsub.s32 %v3419, %v3421
      %v3423 = vrot.slane %v3415, %v3422
      %v3425 = vunpack.c.l.s4 1983009808
      %v3426 = vunpack.c.0.s8 %v3425
      %v3427 = vlaneseq
      %v3428 = vshrl.u32 %v3427, 7
      %v3429 = vsub.s32 %v3426, %v3428
      %v3430 = vrot.slane %v3416, %v3429
      %v3431 = vcombine.low %v3423, %v3430
      %v3432 = vcombine.low %v552, %v559
      %v3433 = vcombine.low %v1949, %v575
      %v3435 = vunpack.c.l.s4 1983009808
      %v3436 = vunpack.c.0.s8 %v3435
      %v3437 = vlaneseq
      %v3438 = vshrl.u32 %v3437, 7
      %v3439 = vsub.s32 %v3436, %v3438
      %v3440 = vrot.slane %v3432, %v3439
      %v3442 = vunpack.c.l.s4 1983009808
      %v3443 = vunpack.c.0.s8 %v3442
      %v3444 = vlaneseq
      %v3445 = vshrl.u32 %v3444, 7
      %v3446 = vsub.s32 %v3443, %v3445
      %v3447 = vrot.slane %v3433, %v3446
      %v3448 = vcombine.low %v3440, %v3447
      %v3449 = vcombine.low %v574, %v576
      %v3450 = vcombine.low %v584, %v592
      %v3452 = vunpack.c.l.s4 1983009808
      %v3453 = vunpack.c.0.s8 %v3452
      %v3454 = vlaneseq
      %v3455 = vshrl.u32 %v3454, 7
      %v3456 = vsub.s32 %v3453, %v3455
      %v3457 = vrot.slane %v3449, %v3456
      %v3459 = vunpack.c.l.s4 1983009808
      %v3460 = vunpack.c.0.s8 %v3459
      %v3461 = vlaneseq
      %v3462 = vshrl.u32 %v3461, 7
      %v3463 = vsub.s32 %v3460, %v3462
      %v3464 = vrot.slane %v3450, %v3463
      %v3465 = vcombine.low %v3457, %v3464
      %v3466 = vcombine.low %v591, %v593
      %v3467 = vcombine.low %v600, %v1950
      %v3469 = vunpack.c.l.s4 1983009808
      %v3470 = vunpack.c.0.s8 %v3469
      %v3471 = vlaneseq
      %v3472 = vshrl.u32 %v3471, 7
      %v3473 = vsub.s32 %v3470, %v3472
      %v3474 = vrot.slane %v3466, %v3473
      %v3476 = vunpack.c.l.s4 1983009808
      %v3477 = vunpack.c.0.s8 %v3476
      %v3478 = vlaneseq
      %v3479 = vshrl.u32 %v3478, 7
      %v3480 = vsub.s32 %v3477, %v3479
      %v3481 = vrot.slane %v3467, %v3480
      %v3482 = vcombine.low %v3474, %v3481
      %v3483 = vcombine.low %v616, %v615
      %v3484 = vcombine.low %v617, %v625
      %v3486 = vunpack.c.l.s4 1983009808
      %v3487 = vunpack.c.0.s8 %v3486
      %v3488 = vlaneseq
      %v3489 = vshrl.u32 %v3488, 7
      %v3490 = vsub.s32 %v3487, %v3489
      %v3491 = vrot.slane %v3483, %v3490
      %v3493 = vunpack.c.l.s4 1983009808
      %v3494 = vunpack.c.0.s8 %v3493
      %v3495 = vlaneseq
      %v3496 = vshrl.u32 %v3495, 7
      %v3497 = vsub.s32 %v3494, %v3496
      %v3498 = vrot.slane %v3484, %v3497
      %v3499 = vcombine.low %v3491, %v3498
      %v3500 = vcombine.low %v633, %v632
      %v3501 = vcombine.low %v634, %v641
      %v3503 = vunpack.c.l.s4 1983009808
      %v3504 = vunpack.c.0.s8 %v3503
      %v3505 = vlaneseq
      %v3506 = vshrl.u32 %v3505, 7
      %v3507 = vsub.s32 %v3504, %v3506
      %v3508 = vrot.slane %v3500, %v3507
      %v3510 = vunpack.c.l.s4 1983009808
      %v3511 = vunpack.c.0.s8 %v3510
      %v3512 = vlaneseq
      %v3513 = vshrl.u32 %v3512, 7
      %v3514 = vsub.s32 %v3511, %v3513
      %v3515 = vrot.slane %v3501, %v3514
      %v3516 = vcombine.low %v3508, %v3515
      %v3517 = vcombine.low %v1951, %v657
      %v3518 = vcombine.low %v656, %v658
      %v3520 = vunpack.c.l.s4 1983009808
      %v3521 = vunpack.c.0.s8 %v3520
      %v3522 = vlaneseq
      %v3523 = vshrl.u32 %v3522, 7
      %v3524 = vsub.s32 %v3521, %v3523
      %v3525 = vrot.slane %v3517, %v3524
      %v3527 = vunpack.c.l.s4 1983009808
      %v3528 = vunpack.c.0.s8 %v3527
      %v3529 = vlaneseq
      %v3530 = vshrl.u32 %v3529, 7
      %v3531 = vsub.s32 %v3528, %v3530
      %v3532 = vrot.slane %v3518, %v3531
      %v3533 = vcombine.low %v3525, %v3532
      %v3534 = vcombine.low %v666, %v674
      %v3535 = vcombine.low %v673, %v675
      %v3537 = vunpack.c.l.s4 1983009808
      %v3538 = vunpack.c.0.s8 %v3537
      %v3539 = vlaneseq
      %v3540 = vshrl.u32 %v3539, 7
      %v3541 = vsub.s32 %v3538, %v3540
      %v3542 = vrot.slane %v3534, %v3541
      %v3544 = vunpack.c.l.s4 1983009808
      %v3545 = vunpack.c.0.s8 %v3544
      %v3546 = vlaneseq
      %v3547 = vshrl.u32 %v3546, 7
      %v3548 = vsub.s32 %v3545, %v3547
      %v3549 = vrot.slane %v3535, %v3548
      %v3550 = vcombine.low %v3542, %v3549
      %v3551 = vcombine.low %v682, %v1952
      %v3552 = vcombine.low %v698, %v697
      %v3554 = vunpack.c.l.s4 1983009808
      %v3555 = vunpack.c.0.s8 %v3554
      %v3556 = vlaneseq
      %v3557 = vshrl.u32 %v3556, 7
      %v3558 = vsub.s32 %v3555, %v3557
      %v3559 = vrot.slane %v3551, %v3558
      %v3561 = vunpack.c.l.s4 1983009808
      %v3562 = vunpack.c.0.s8 %v3561
      %v3563 = vlaneseq
      %v3564 = vshrl.u32 %v3563, 7
      %v3565 = vsub.s32 %v3562, %v3564
      %v3566 = vrot.slane %v3552, %v3565
      %v3567 = vcombine.low %v3559, %v3566
      %v3568 = vcombine.low %v699, %v707
      %v3569 = vcombine.low %v715, %v714
      %v3571 = vunpack.c.l.s4 1983009808
      %v3572 = vunpack.c.0.s8 %v3571
      %v3573 = vlaneseq
      %v3574 = vshrl.u32 %v3573, 7
      %v3575 = vsub.s32 %v3572, %v3574
      %v3576 = vrot.slane %v3568, %v3575
      %v3578 = vunpack.c.l.s4 1983009808
      %v3579 = vunpack.c.0.s8 %v3578
      %v3580 = vlaneseq
      %v3581 = vshrl.u32 %v3580, 7
      %v3582 = vsub.s32 %v3579, %v3581
      %v3583 = vrot.slane %v3569, %v3582
      %v3584 = vcombine.low %v3576, %v3583
      %v3585 = vcombine.low %v716, %v723
      %v3586 = vcombine.low %v1953, %v739
      %v3588 = vunpack.c.l.s4 1983009808
      %v3589 = vunpack.c.0.s8 %v3588
      %v3590 = vlaneseq
      %v3591 = vshrl.u32 %v3590, 7
      %v3592 = vsub.s32 %v3589, %v3591
      %v3593 = vrot.slane %v3585, %v3592
      %v3595 = vunpack.c.l.s4 1983009808
      %v3596 = vunpack.c.0.s8 %v3595
      %v3597 = vlaneseq
      %v3598 = vshrl.u32 %v3597, 7
      %v3599 = vsub.s32 %v3596, %v3598
      %v3600 = vrot.slane %v3586, %v3599
      %v3601 = vcombine.low %v3593, %v3600
      %v3602 = vcombine.low %v738, %v740
      %v3603 = vcombine.low %v748, %v756
      %v3605 = vunpack.c.l.s4 1983009808
      %v3606 = vunpack.c.0.s8 %v3605
      %v3607 = vlaneseq
      %v3608 = vshrl.u32 %v3607, 7
      %v3609 = vsub.s32 %v3606, %v3608
      %v3610 = vrot.slane %v3602, %v3609
      %v3612 = vunpack.c.l.s4 1983009808
      %v3613 = vunpack.c.0.s8 %v3612
      %v3614 = vlaneseq
      %v3615 = vshrl.u32 %v3614, 7
      %v3616 = vsub.s32 %v3613, %v3615
      %v3617 = vrot.slane %v3603, %v3616
      %v3618 = vcombine.low %v3610, %v3617
      %v3619 = vcombine.low %v755, %v757
      %v3620 = vcombine.low %v764, %v1954
      %v3622 = vunpack.c.l.s4 1983009808
      %v3623 = vunpack.c.0.s8 %v3622
      %v3624 = vlaneseq
      %v3625 = vshrl.u32 %v3624, 7
      %v3626 = vsub.s32 %v3623, %v3625
      %v3627 = vrot.slane %v3619, %v3626
      %v3629 = vunpack.c.l.s4 1983009808
      %v3630 = vunpack.c.0.s8 %v3629
      %v3631 = vlaneseq
      %v3632 = vshrl.u32 %v3631, 7
      %v3633 = vsub.s32 %v3630, %v3632
      %v3634 = vrot.slane %v3620, %v3633
      %v3635 = vcombine.low %v3627, %v3634
      %v3636 = vcombine.low %v780, %v779
      %v3637 = vcombine.low %v781, %v789
      %v3639 = vunpack.c.l.s4 1983009808
      %v3640 = vunpack.c.0.s8 %v3639
      %v3641 = vlaneseq
      %v3642 = vshrl.u32 %v3641, 7
      %v3643 = vsub.s32 %v3640, %v3642
      %v3644 = vrot.slane %v3636, %v3643
      %v3646 = vunpack.c.l.s4 1983009808
      %v3647 = vunpack.c.0.s8 %v3646
      %v3648 = vlaneseq
      %v3649 = vshrl.u32 %v3648, 7
      %v3650 = vsub.s32 %v3647, %v3649
      %v3651 = vrot.slane %v3637, %v3650
      %v3652 = vcombine.low %v3644, %v3651
      %v3653 = vcombine.low %v797, %v796
      %v3654 = vcombine.low %v798, %v805
      %v3656 = vunpack.c.l.s4 1983009808
      %v3657 = vunpack.c.0.s8 %v3656
      %v3658 = vlaneseq
      %v3659 = vshrl.u32 %v3658, 7
      %v3660 = vsub.s32 %v3657, %v3659
      %v3661 = vrot.slane %v3653, %v3660
      %v3663 = vunpack.c.l.s4 1983009808
      %v3664 = vunpack.c.0.s8 %v3663
      %v3665 = vlaneseq
      %v3666 = vshrl.u32 %v3665, 7
      %v3667 = vsub.s32 %v3664, %v3666
      %v3668 = vrot.slane %v3654, %v3667
      %v3669 = vcombine.low %v3661, %v3668
      %v3670 = vcombine.low %v1955, %v821
      %v3671 = vcombine.low %v820, %v822
      %v3673 = vunpack.c.l.s4 1983009808
      %v3674 = vunpack.c.0.s8 %v3673
      %v3675 = vlaneseq
      %v3676 = vshrl.u32 %v3675, 7
      %v3677 = vsub.s32 %v3674, %v3676
      %v3678 = vrot.slane %v3670, %v3677
      %v3680 = vunpack.c.l.s4 1983009808
      %v3681 = vunpack.c.0.s8 %v3680
      %v3682 = vlaneseq
      %v3683 = vshrl.u32 %v3682, 7
      %v3684 = vsub.s32 %v3681, %v3683
      %v3685 = vrot.slane %v3671, %v3684
      %v3686 = vcombine.low %v3678, %v3685
      %v3687 = vcombine.low %v830, %v838
      %v3688 = vcombine.low %v837, %v839
      %v3690 = vunpack.c.l.s4 1983009808
      %v3691 = vunpack.c.0.s8 %v3690
      %v3692 = vlaneseq
      %v3693 = vshrl.u32 %v3692, 7
      %v3694 = vsub.s32 %v3691, %v3693
      %v3695 = vrot.slane %v3687, %v3694
      %v3697 = vunpack.c.l.s4 1983009808
      %v3698 = vunpack.c.0.s8 %v3697
      %v3699 = vlaneseq
      %v3700 = vshrl.u32 %v3699, 7
      %v3701 = vsub.s32 %v3698, %v3700
      %v3702 = vrot.slane %v3688, %v3701
      %v3703 = vcombine.low %v3695, %v3702
      %v3704 = vcombine.low %v846, %v1956
      %v3705 = vcombine.low %v862, %v861
      %v3707 = vunpack.c.l.s4 1983009808
      %v3708 = vunpack.c.0.s8 %v3707
      %v3709 = vlaneseq
      %v3710 = vshrl.u32 %v3709, 7
      %v3711 = vsub.s32 %v3708, %v3710
      %v3712 = vrot.slane %v3704, %v3711
      %v3714 = vunpack.c.l.s4 1983009808
      %v3715 = vunpack.c.0.s8 %v3714
      %v3716 = vlaneseq
      %v3717 = vshrl.u32 %v3716, 7
      %v3718 = vsub.s32 %v3715, %v3717
      %v3719 = vrot.slane %v3705, %v3718
      %v3720 = vcombine.low %v3712, %v3719
      %v3721 = vcombine.low %v863, %v871
      %v3722 = vcombine.low %v879, %v878
      %v3724 = vunpack.c.l.s4 1983009808
      %v3725 = vunpack.c.0.s8 %v3724
      %v3726 = vlaneseq
      %v3727 = vshrl.u32 %v3726, 7
      %v3728 = vsub.s32 %v3725, %v3727
      %v3729 = vrot.slane %v3721, %v3728
      %v3731 = vunpack.c.l.s4 1983009808
      %v3732 = vunpack.c.0.s8 %v3731
      %v3733 = vlaneseq
      %v3734 = vshrl.u32 %v3733, 7
      %v3735 = vsub.s32 %v3732, %v3734
      %v3736 = vrot.slane %v3722, %v3735
      %v3737 = vcombine.low %v3729, %v3736
      %v3738 = vcombine.low %v880, %v887
      %v3739 = vcombine.low %v1957, %v903
      %v3741 = vunpack.c.l.s4 1983009808
      %v3742 = vunpack.c.0.s8 %v3741
      %v3743 = vlaneseq
      %v3744 = vshrl.u32 %v3743, 7
      %v3745 = vsub.s32 %v3742, %v3744
      %v3746 = vrot.slane %v3738, %v3745
      %v3748 = vunpack.c.l.s4 1983009808
      %v3749 = vunpack.c.0.s8 %v3748
      %v3750 = vlaneseq
      %v3751 = vshrl.u32 %v3750, 7
      %v3752 = vsub.s32 %v3749, %v3751
      %v3753 = vrot.slane %v3739, %v3752
      %v3754 = vcombine.low %v3746, %v3753
      %v3755 = vcombine.low %v902, %v904
      %v3756 = vcombine.low %v912, %v920
      %v3758 = vunpack.c.l.s4 1983009808
      %v3759 = vunpack.c.0.s8 %v3758
      %v3760 = vlaneseq
      %v3761 = vshrl.u32 %v3760, 7
      %v3762 = vsub.s32 %v3759, %v3761
      %v3763 = vrot.slane %v3755, %v3762
      %v3765 = vunpack.c.l.s4 1983009808
      %v3766 = vunpack.c.0.s8 %v3765
      %v3767 = vlaneseq
      %v3768 = vshrl.u32 %v3767, 7
      %v3769 = vsub.s32 %v3766, %v3768
      %v3770 = vrot.slane %v3756, %v3769
      %v3771 = vcombine.low %v3763, %v3770
      %v3772 = vcombine.low %v919, %v921
      %v3773 = vcombine.low %v928, %v1958
      %v3775 = vunpack.c.l.s4 1983009808
      %v3776 = vunpack.c.0.s8 %v3775
      %v3777 = vlaneseq
      %v3778 = vshrl.u32 %v3777, 7
      %v3779 = vsub.s32 %v3776, %v3778
      %v3780 = vrot.slane %v3772, %v3779
      %v3782 = vunpack.c.l.s4 1983009808
      %v3783 = vunpack.c.0.s8 %v3782
      %v3784 = vlaneseq
      %v3785 = vshrl.u32 %v3784, 7
      %v3786 = vsub.s32 %v3783, %v3785
      %v3787 = vrot.slane %v3773, %v3786
      %v3788 = vcombine.low %v3780, %v3787
      %v3789 = vcombine.low %v944, %v943
      %v3790 = vcombine.low %v945, %v953
      %v3792 = vunpack.c.l.s4 1983009808
      %v3793 = vunpack.c.0.s8 %v3792
      %v3794 = vlaneseq
      %v3795 = vshrl.u32 %v3794, 7
      %v3796 = vsub.s32 %v3793, %v3795
      %v3797 = vrot.slane %v3789, %v3796
      %v3799 = vunpack.c.l.s4 1983009808
      %v3800 = vunpack.c.0.s8 %v3799
      %v3801 = vlaneseq
      %v3802 = vshrl.u32 %v3801, 7
      %v3803 = vsub.s32 %v3800, %v3802
      %v3804 = vrot.slane %v3790, %v3803
      %v3805 = vcombine.low %v3797, %v3804
      %v3806 = vcombine.low %v961, %v960
      %v3807 = vcombine.low %v962, %v969
      %v3809 = vunpack.c.l.s4 1983009808
      %v3810 = vunpack.c.0.s8 %v3809
      %v3811 = vlaneseq
      %v3812 = vshrl.u32 %v3811, 7
      %v3813 = vsub.s32 %v3810, %v3812
      %v3814 = vrot.slane %v3806, %v3813
      %v3816 = vunpack.c.l.s4 1983009808
      %v3817 = vunpack.c.0.s8 %v3816
      %v3818 = vlaneseq
      %v3819 = vshrl.u32 %v3818, 7
      %v3820 = vsub.s32 %v3817, %v3819
      %v3821 = vrot.slane %v3807, %v3820
      %v3822 = vcombine.low %v3814, %v3821
      %v3823 = vcombine.low %v1959, %v985
      %v3824 = vcombine.low %v984, %v986
      %v3826 = vunpack.c.l.s4 1983009808
      %v3827 = vunpack.c.0.s8 %v3826
      %v3828 = vlaneseq
      %v3829 = vshrl.u32 %v3828, 7
      %v3830 = vsub.s32 %v3827, %v3829
      %v3831 = vrot.slane %v3823, %v3830
      %v3833 = vunpack.c.l.s4 1983009808
      %v3834 = vunpack.c.0.s8 %v3833
      %v3835 = vlaneseq
      %v3836 = vshrl.u32 %v3835, 7
      %v3837 = vsub.s32 %v3834, %v3836
      %v3838 = vrot.slane %v3824, %v3837
      %v3839 = vcombine.low %v3831, %v3838
      %v3840 = vcombine.low %v994, %v1002
      %v3841 = vcombine.low %v1001, %v1003
      %v3843 = vunpack.c.l.s4 1983009808
      %v3844 = vunpack.c.0.s8 %v3843
      %v3845 = vlaneseq
      %v3846 = vshrl.u32 %v3845, 7
      %v3847 = vsub.s32 %v3844, %v3846
      %v3848 = vrot.slane %v3840, %v3847
      %v3850 = vunpack.c.l.s4 1983009808
      %v3851 = vunpack.c.0.s8 %v3850
      %v3852 = vlaneseq
      %v3853 = vshrl.u32 %v3852, 7
      %v3854 = vsub.s32 %v3851, %v3853
      %v3855 = vrot.slane %v3841, %v3854
      %v3856 = vcombine.low %v3848, %v3855
      %v3857 = vcombine.low %v1010, %v1960
      %v3858 = vcombine.low %v1026, %v1025
      %v3860 = vunpack.c.l.s4 1983009808
      %v3861 = vunpack.c.0.s8 %v3860
      %v3862 = vlaneseq
      %v3863 = vshrl.u32 %v3862, 7
      %v3864 = vsub.s32 %v3861, %v3863
      %v3865 = vrot.slane %v3857, %v3864
      %v3867 = vunpack.c.l.s4 1983009808
      %v3868 = vunpack.c.0.s8 %v3867
      %v3869 = vlaneseq
      %v3870 = vshrl.u32 %v3869, 7
      %v3871 = vsub.s32 %v3868, %v3870
      %v3872 = vrot.slane %v3858, %v3871
      %v3873 = vcombine.low %v3865, %v3872
      %v3874 = vcombine.low %v1027, %v1035
      %v3875 = vcombine.low %v1043, %v1042
      %v3877 = vunpack.c.l.s4 1983009808
      %v3878 = vunpack.c.0.s8 %v3877
      %v3879 = vlaneseq
      %v3880 = vshrl.u32 %v3879, 7
      %v3881 = vsub.s32 %v3878, %v3880
      %v3882 = vrot.slane %v3874, %v3881
      %v3884 = vunpack.c.l.s4 1983009808
      %v3885 = vunpack.c.0.s8 %v3884
      %v3886 = vlaneseq
      %v3887 = vshrl.u32 %v3886, 7
      %v3888 = vsub.s32 %v3885, %v3887
      %v3889 = vrot.slane %v3875, %v3888
      %v3890 = vcombine.low %v3882, %v3889
      %v3891 = vcombine.low %v1044, %v1051
      %v3892 = vcombine.low %v1961, %v1067
      %v3894 = vunpack.c.l.s4 1983009808
      %v3895 = vunpack.c.0.s8 %v3894
      %v3896 = vlaneseq
      %v3897 = vshrl.u32 %v3896, 7
      %v3898 = vsub.s32 %v3895, %v3897
      %v3899 = vrot.slane %v3891, %v3898
      %v3901 = vunpack.c.l.s4 1983009808
      %v3902 = vunpack.c.0.s8 %v3901
      %v3903 = vlaneseq
      %v3904 = vshrl.u32 %v3903, 7
      %v3905 = vsub.s32 %v3902, %v3904
      %v3906 = vrot.slane %v3892, %v3905
      %v3907 = vcombine.low %v3899, %v3906
      %v3908 = vcombine.low %v1066, %v1068
      %v3909 = vcombine.low %v1076, %v1084
      %v3911 = vunpack.c.l.s4 1983009808
      %v3912 = vunpack.c.0.s8 %v3911
      %v3913 = vlaneseq
      %v3914 = vshrl.u32 %v3913, 7
      %v3915 = vsub.s32 %v3912, %v3914
      %v3916 = vrot.slane %v3908, %v3915
      %v3918 = vunpack.c.l.s4 1983009808
      %v3919 = vunpack.c.0.s8 %v3918
      %v3920 = vlaneseq
      %v3921 = vshrl.u32 %v3920, 7
      %v3922 = vsub.s32 %v3919, %v3921
      %v3923 = vrot.slane %v3909, %v3922
      %v3924 = vcombine.low %v3916, %v3923
      %v3925 = vcombine.low %v1083, %v1085
      %v3926 = vcombine.low %v1092, %v1962
      %v3928 = vunpack.c.l.s4 1983009808
      %v3929 = vunpack.c.0.s8 %v3928
      %v3930 = vlaneseq
      %v3931 = vshrl.u32 %v3930, 7
      %v3932 = vsub.s32 %v3929, %v3931
      %v3933 = vrot.slane %v3925, %v3932
      %v3935 = vunpack.c.l.s4 1983009808
      %v3936 = vunpack.c.0.s8 %v3935
      %v3937 = vlaneseq
      %v3938 = vshrl.u32 %v3937, 7
      %v3939 = vsub.s32 %v3936, %v3938
      %v3940 = vrot.slane %v3926, %v3939
      %v3941 = vcombine.low %v3933, %v3940
      %v3942 = vcombine.low %v1108, %v1107
      %v3943 = vcombine.low %v1109, %v1117
      %v3945 = vunpack.c.l.s4 1983009808
      %v3946 = vunpack.c.0.s8 %v3945
      %v3947 = vlaneseq
      %v3948 = vshrl.u32 %v3947, 7
      %v3949 = vsub.s32 %v3946, %v3948
      %v3950 = vrot.slane %v3942, %v3949
      %v3952 = vunpack.c.l.s4 1983009808
      %v3953 = vunpack.c.0.s8 %v3952
      %v3954 = vlaneseq
      %v3955 = vshrl.u32 %v3954, 7
      %v3956 = vsub.s32 %v3953, %v3955
      %v3957 = vrot.slane %v3943, %v3956
      %v3958 = vcombine.low %v3950, %v3957
      %v3959 = vcombine.low %v1125, %v1124
      %v3960 = vcombine.low %v1126, %v1133
      %v3962 = vunpack.c.l.s4 1983009808
      %v3963 = vunpack.c.0.s8 %v3962
      %v3964 = vlaneseq
      %v3965 = vshrl.u32 %v3964, 7
      %v3966 = vsub.s32 %v3963, %v3965
      %v3967 = vrot.slane %v3959, %v3966
      %v3969 = vunpack.c.l.s4 1983009808
      %v3970 = vunpack.c.0.s8 %v3969
      %v3971 = vlaneseq
      %v3972 = vshrl.u32 %v3971, 7
      %v3973 = vsub.s32 %v3970, %v3972
      %v3974 = vrot.slane %v3960, %v3973
      %v3975 = vcombine.low %v3967, %v3974
      %v3976 = vcombine.low %v1963, %v1149
      %v3977 = vcombine.low %v1148, %v1150
      %v3979 = vunpack.c.l.s4 1983009808
      %v3980 = vunpack.c.0.s8 %v3979
      %v3981 = vlaneseq
      %v3982 = vshrl.u32 %v3981, 7
      %v3983 = vsub.s32 %v3980, %v3982
      %v3984 = vrot.slane %v3976, %v3983
      %v3986 = vunpack.c.l.s4 1983009808
      %v3987 = vunpack.c.0.s8 %v3986
      %v3988 = vlaneseq
      %v3989 = vshrl.u32 %v3988, 7
      %v3990 = vsub.s32 %v3987, %v3989
      %v3991 = vrot.slane %v3977, %v3990
      %v3992 = vcombine.low %v3984, %v3991
      %v3993 = vcombine.low %v1158, %v1166
      %v3994 = vcombine.low %v1165, %v1167
      %v3996 = vunpack.c.l.s4 1983009808
      %v3997 = vunpack.c.0.s8 %v3996
      %v3998 = vlaneseq
      %v3999 = vshrl.u32 %v3998, 7
      %v4000 = vsub.s32 %v3997, %v3999
      %v4001 = vrot.slane %v3993, %v4000
      %v4003 = vunpack.c.l.s4 1983009808
      %v4004 = vunpack.c.0.s8 %v4003
      %v4005 = vlaneseq
      %v4006 = vshrl.u32 %v4005, 7
      %v4007 = vsub.s32 %v4004, %v4006
      %v4008 = vrot.slane %v3994, %v4007
      %v4009 = vcombine.low %v4001, %v4008
      %v4010 = vcombine.low %v1174, %v1964
      %v4012 = vunpack.c.l.s4 1983009808
      %v4013 = vunpack.c.0.s8 %v4012
      %v4014 = vlaneseq
      %v4015 = vshrl.u32 %v4014, 7
      %v4016 = vsub.s32 %v4013, %v4015
      %v4017 = vrot.slane %v4010, %v4016
      %4018 = vrot.lane.b32.xlu0 %v3346, 8
      %v4019 = vpop.permute.xlu0 %4018
      %4020 = vrot.lane.b32.xlu0 %v3363, 8
      %v4021 = vpop.permute.xlu0 %4020
      %4022 = vrot.lane.b32.xlu0 %v3380, 8
      %v4023 = vpop.permute.xlu0 %4022
      %4024 = vrot.lane.b32.xlu0 %v3397, 8
      %v4025 = vpop.permute.xlu0 %4024
      %4026 = vrot.lane.b32.xlu0 %v3414, 8
      %v4027 = vpop.permute.xlu0 %4026
      %4028 = vrot.lane.b32.xlu0 %v3431, 8
      %v4029 = vpop.permute.xlu0 %4028
      %4030 = vrot.lane.b32.xlu0 %v3448, 8
      %v4031 = vpop.permute.xlu0 %4030
      %4032 = vrot.lane.b32.xlu0 %v3465, 8
      %v4033 = vpop.permute.xlu0 %4032
      %4034 = vrot.lane.b32.xlu0 %v3482, 8
      %v4035 = vpop.permute.xlu0 %4034
      %4036 = vrot.lane.b32.xlu0 %v3499, 8
      %v4037 = vpop.permute.xlu0 %4036
      %4038 = vrot.lane.b32.xlu0 %v3516, 8
      %v4039 = vpop.permute.xlu0 %4038
      %4040 = vrot.lane.b32.xlu0 %v3533, 8
      %v4041 = vpop.permute.xlu0 %4040
      %4042 = vrot.lane.b32.xlu0 %v3550, 8
      %v4043 = vpop.permute.xlu0 %4042
      %4044 = vrot.lane.b32.xlu0 %v3567, 8
      %v4045 = vpop.permute.xlu0 %4044
      %4046 = vrot.lane.b32.xlu0 %v3584, 8
      %v4047 = vpop.permute.xlu0 %4046
      %4048 = vrot.lane.b32.xlu0 %v3601, 8
      %v4049 = vpop.permute.xlu0 %4048
      %4050 = vrot.lane.b32.xlu0 %v3618, 8
      %v4051 = vpop.permute.xlu0 %4050
      %4052 = vrot.lane.b32.xlu0 %v3635, 8
      %v4053 = vpop.permute.xlu0 %4052
      %4054 = vrot.lane.b32.xlu0 %v3652, 8
      %v4055 = vpop.permute.xlu0 %4054
      %4056 = vrot.lane.b32.xlu0 %v3669, 8
      %v4057 = vpop.permute.xlu0 %4056
      %4058 = vrot.lane.b32.xlu0 %v3686, 8
      %v4059 = vpop.permute.xlu0 %4058
      %4060 = vrot.lane.b32.xlu0 %v3703, 8
      %v4061 = vpop.permute.xlu0 %4060
      %4062 = vrot.lane.b32.xlu0 %v3720, 8
      %v4063 = vpop.permute.xlu0 %4062
      %4064 = vrot.lane.b32.xlu0 %v3737, 8
      %v4065 = vpop.permute.xlu0 %4064
      %4066 = vrot.lane.b32.xlu0 %v3754, 8
      %v4067 = vpop.permute.xlu0 %4066
      %4068 = vrot.lane.b32.xlu0 %v3771, 8
      %v4069 = vpop.permute.xlu0 %4068
      %4070 = vrot.lane.b32.xlu0 %v3788, 8
      %v4071 = vpop.permute.xlu0 %4070
      %4072 = vrot.lane.b32.xlu0 %v3805, 8
      %v4073 = vpop.permute.xlu0 %4072
      %4074 = vrot.lane.b32.xlu0 %v3822, 8
      %v4075 = vpop.permute.xlu0 %4074
      %4076 = vrot.lane.b32.xlu0 %v3839, 8
      %v4077 = vpop.permute.xlu0 %4076
      %4078 = vrot.lane.b32.xlu0 %v3856, 8
      %v4079 = vpop.permute.xlu0 %4078
      %4080 = vrot.lane.b32.xlu0 %v3873, 8
      %v4081 = vpop.permute.xlu0 %4080
      %4082 = vrot.lane.b32.xlu0 %v3890, 8
      %v4083 = vpop.permute.xlu0 %4082
      %4084 = vrot.lane.b32.xlu0 %v3907, 8
      %v4085 = vpop.permute.xlu0 %4084
      %4086 = vrot.lane.b32.xlu0 %v3924, 8
      %v4087 = vpop.permute.xlu0 %4086
      %4088 = vrot.lane.b32.xlu0 %v3941, 8
      %v4089 = vpop.permute.xlu0 %4088
      %4090 = vrot.lane.b32.xlu0 %v3958, 8
      %v4091 = vpop.permute.xlu0 %4090
      %4092 = vrot.lane.b32.xlu0 %v3975, 8
      %v4093 = vpop.permute.xlu0 %4092
      %4094 = vrot.lane.b32.xlu0 %v3992, 8
      %v4095 = vpop.permute.xlu0 %4094
      %4096 = vrot.lane.b32.xlu0 %v4009, 8
      %v4097 = vpop.permute.xlu0 %4096
      %4098 = vrot.lane.b32.xlu0 %v4017, 8
      %v4099 = vpop.permute.xlu0 %4098
      %vm4141 = vcmask 97344
      %4142 = vst.msk [vmem:[#allocation2] sm:$0xff] %vm4141, %v4019
      %4143 = vst.msk [vmem:[#allocation2 + $0x8] sm:$0xff] %vm4141, %v4021
      %4144 = vst.msk [vmem:[#allocation2 + $0x10] sm:$0xff] %vm4141, %v4023
      %4145 = vst.msk [vmem:[#allocation2 + $0x18] sm:$0xff] %vm4141, %v4025
      %4146 = vst.msk [vmem:[#allocation2 + $0x20] sm:$0xff] %vm4141, %v4027
      %4147 = vst.msk [vmem:[#allocation2 + $0x28] sm:$0xff] %vm4141, %v4029
      %4148 = vst.msk [vmem:[#allocation2 + $0x30] sm:$0xff] %vm4141, %v4031
      %4149 = vst.msk [vmem:[#allocation2 + $0x38] sm:$0xff] %vm4141, %v4033
      %4150 = vst.msk [vmem:[#allocation2 + $0x40] sm:$0xff] %vm4141, %v4035
      %4151 = vst.msk [vmem:[#allocation2 + $0x48] sm:$0xff] %vm4141, %v4037
      %4152 = vst.msk [vmem:[#allocation2 + $0x50] sm:$0xff] %vm4141, %v4039
      %4153 = vst.msk [vmem:[#allocation2 + $0x58] sm:$0xff] %vm4141, %v4041
      %4154 = vst.msk [vmem:[#allocation2 + $0x60] sm:$0xff] %vm4141, %v4043
      %4155 = vst.msk [vmem:[#allocation2 + $0x68] sm:$0xff] %vm4141, %v4045
      %4156 = vst.msk [vmem:[#allocation2 + $0x70] sm:$0xff] %vm4141, %v4047
      %4157 = vst.msk [vmem:[#allocation2 + $0x78] sm:$0xff] %vm4141, %v4049
      %4158 = vst.msk [vmem:[#allocation2 + $0x80] sm:$0xff] %vm4141, %v4051
      %4159 = vst.msk [vmem:[#allocation2 + $0x88] sm:$0xff] %vm4141, %v4053
      %4160 = vst.msk [vmem:[#allocation2 + $0x90] sm:$0xff] %vm4141, %v4055
      %4161 = vst.msk [vmem:[#allocation2 + $0x98] sm:$0xff] %vm4141, %v4057
      %4162 = vst.msk [vmem:[#allocation2 + $0xa0] sm:$0xff] %vm4141, %v4059
      %4163 = vst.msk [vmem:[#allocation2 + $0xa8] sm:$0xff] %vm4141, %v4061
      %4164 = vst.msk [vmem:[#allocation2 + $0xb0] sm:$0xff] %vm4141, %v4063
      %4165 = vst.msk [vmem:[#allocation2 + $0xb8] sm:$0xff] %vm4141, %v4065
      %4166 = vst.msk [vmem:[#allocation2 + $0xc0] sm:$0xff] %vm4141, %v4067
      %4167 = vst.msk [vmem:[#allocation2 + $0xc8] sm:$0xff] %vm4141, %v4069
      %4168 = vst.msk [vmem:[#allocation2 + $0xd0] sm:$0xff] %vm4141, %v4071
      %4169 = vst.msk [vmem:[#allocation2 + $0xd8] sm:$0xff] %vm4141, %v4073
      %4170 = vst.msk [vmem:[#allocation2 + $0xe0] sm:$0xff] %vm4141, %v4075
      %4171 = vst.msk [vmem:[#allocation2 + $0xe8] sm:$0xff] %vm4141, %v4077
      %4172 = vst.msk [vmem:[#allocation2 + $0xf0] sm:$0xff] %vm4141, %v4079
      %4173 = vst.msk [vmem:[#allocation2 + $0xf8] sm:$0xff] %vm4141, %v4081
      %4174 = vst.msk [vmem:[#allocation2 + $0x100] sm:$0xff] %vm4141, %v4083
      %4175 = vst.msk [vmem:[#allocation2 + $0x108] sm:$0xff] %vm4141, %v4085
      %4176 = vst.msk [vmem:[#allocation2 + $0x110] sm:$0xff] %vm4141, %v4087
      %4177 = vst.msk [vmem:[#allocation2 + $0x118] sm:$0xff] %vm4141, %v4089
      %4178 = vst.msk [vmem:[#allocation2 + $0x120] sm:$0xff] %vm4141, %v4091
      %4179 = vst.msk [vmem:[#allocation2 + $0x128] sm:$0xff] %vm4141, %v4093
      %4180 = vst.msk [vmem:[#allocation2 + $0x130] sm:$0xff] %vm4141, %v4095
      %4181 = vst.msk [vmem:[#allocation2 + $0x138] sm:$0xff] %vm4141, %v4097
      %vm4182 = vcmask 93248
      %4183 = vst.msk [vmem:[#allocation2 + $0x140] sm:$0xf] %vm4182, %v4099
      %v4187 = vcombine.high %v377, %v377
      %v4189 = vunpack.c.l.s4 1983009808
      %v4190 = vunpack.c.0.s8 %v4189
      %v4191 = vlaneseq
      %v4192 = vshrl.u32 %v4191, 7
      %v4193 = vsub.s32 %v4190, %v4192
      %v4194 = vrot.slane %v377, %v4193
      %v4196 = vunpack.c.l.s4 1983009808
      %v4197 = vunpack.c.0.s8 %v4196
      %v4198 = vlaneseq
      %v4199 = vshrl.u32 %v4198, 7
      %v4200 = vsub.s32 %v4197, %v4199
      %v4201 = vrot.slane %v4187, %v4200
      %v4202 = vcombine.high %v4194, %v4194
      %v4203 = vcombine.high %v4201, %v4201
      %v4204 = vcombine.high %v378, %v378
      %v4206 = vunpack.c.l.s4 1983009808
      %v4207 = vunpack.c.0.s8 %v4206
      %v4208 = vlaneseq
      %v4209 = vshrl.u32 %v4208, 7
      %v4210 = vsub.s32 %v4207, %v4209
      %v4211 = vrot.slane %v378, %v4210
      %v4213 = vunpack.c.l.s4 1983009808
      %v4214 = vunpack.c.0.s8 %v4213
      %v4215 = vlaneseq
      %v4216 = vshrl.u32 %v4215, 7
      %v4217 = vsub.s32 %v4214, %v4216
      %v4218 = vrot.slane %v4204, %v4217
      %v4219 = vcombine.high %v4211, %v4211
      %v4220 = vcombine.high %v4218, %v4218
      %v4222 = vunpack.c.l.s4 1983009808
      %v4223 = vunpack.c.0.s8 %v4222
      %v4224 = vlaneseq
      %v4225 = vshrl.u32 %v4224, 7
      %v4226 = vsub.s32 %v4223, %v4225
      %v4227 = vrot.slane %v379, %v4226
      %v4228 = vcombine.low %v485, %v493
      %v4230 = vunpack.c.l.s4 1983009808
      %v4231 = vunpack.c.0.s8 %v4230
      %v4232 = vlaneseq
      %v4233 = vshrl.u32 %v4232, 7
      %v4234 = vsub.s32 %v4231, %v4233
      %v4235 = vrot.slane %v4228, %v4234
      %v4236 = vcombine.low %v4235, %v3379
      %v4237 = vcombine.low %v518, %v526
      %v4239 = vunpack.c.l.s4 1983009808
      %v4240 = vunpack.c.0.s8 %v4239
      %v4241 = vlaneseq
      %v4242 = vshrl.u32 %v4241, 7
      %v4243 = vsub.s32 %v4240, %v4242
      %v4244 = vrot.slane %v4237, %v4243
      %v4245 = vcombine.low %v4244, %v3413
      %v4246 = vcombine.low %v567, %v575
      %v4248 = vunpack.c.l.s4 1983009808
      %v4249 = vunpack.c.0.s8 %v4248
      %v4250 = vlaneseq
      %v4251 = vshrl.u32 %v4250, 7
      %v4252 = vsub.s32 %v4249, %v4251
      %v4253 = vrot.slane %v4246, %v4252
      %v4254 = vcombine.low %v3440, %v4253
      %v4255 = vcombine.low %v600, %v608
      %v4257 = vunpack.c.l.s4 1983009808
      %v4258 = vunpack.c.0.s8 %v4257
      %v4259 = vlaneseq
      %v4260 = vshrl.u32 %v4259, 7
      %v4261 = vsub.s32 %v4258, %v4260
      %v4262 = vrot.slane %v4255, %v4261
      %v4263 = vcombine.low %v3474, %v4262
      %v4264 = vcombine.low %v649, %v657
      %v4266 = vunpack.c.l.s4 1983009808
      %v4267 = vunpack.c.0.s8 %v4266
      %v4268 = vlaneseq
      %v4269 = vshrl.u32 %v4268, 7
      %v4270 = vsub.s32 %v4267, %v4269
      %v4271 = vrot.slane %v4264, %v4270
      %v4272 = vcombine.low %v4271, %v3532
      %v4273 = vcombine.low %v682, %v690
      %v4275 = vunpack.c.l.s4 1983009808
      %v4276 = vunpack.c.0.s8 %v4275
      %v4277 = vlaneseq
      %v4278 = vshrl.u32 %v4277, 7
      %v4279 = vsub.s32 %v4276, %v4278
      %v4280 = vrot.slane %v4273, %v4279
      %v4281 = vcombine.low %v4280, %v3566
      %v4282 = vcombine.low %v731, %v739
      %v4284 = vunpack.c.l.s4 1983009808
      %v4285 = vunpack.c.0.s8 %v4284
      %v4286 = vlaneseq
      %v4287 = vshrl.u32 %v4286, 7
      %v4288 = vsub.s32 %v4285, %v4287
      %v4289 = vrot.slane %v4282, %v4288
      %v4290 = vcombine.low %v3593, %v4289
      %v4291 = vcombine.low %v764, %v772
      %v4293 = vunpack.c.l.s4 1983009808
      %v4294 = vunpack.c.0.s8 %v4293
      %v4295 = vlaneseq
      %v4296 = vshrl.u32 %v4295, 7
      %v4297 = vsub.s32 %v4294, %v4296
      %v4298 = vrot.slane %v4291, %v4297
      %v4299 = vcombine.low %v3627, %v4298
      %v4300 = vcombine.low %v813, %v821
      %v4302 = vunpack.c.l.s4 1983009808
      %v4303 = vunpack.c.0.s8 %v4302
      %v4304 = vlaneseq
      %v4305 = vshrl.u32 %v4304, 7
      %v4306 = vsub.s32 %v4303, %v4305
      %v4307 = vrot.slane %v4300, %v4306
      %v4308 = vcombine.low %v4307, %v3685
      %v4309 = vcombine.low %v846, %v854
      %v4311 = vunpack.c.l.s4 1983009808
      %v4312 = vunpack.c.0.s8 %v4311
      %v4313 = vlaneseq
      %v4314 = vshrl.u32 %v4313, 7
      %v4315 = vsub.s32 %v4312, %v4314
      %v4316 = vrot.slane %v4309, %v4315
      %v4317 = vcombine.low %v4316, %v3719
      %v4318 = vcombine.low %v895, %v903
      %v4320 = vunpack.c.l.s4 1983009808
      %v4321 = vunpack.c.0.s8 %v4320
      %v4322 = vlaneseq
      %v4323 = vshrl.u32 %v4322, 7
      %v4324 = vsub.s32 %v4321, %v4323
      %v4325 = vrot.slane %v4318, %v4324
      %v4326 = vcombine.low %v3746, %v4325
      %v4327 = vcombine.low %v928, %v936
      %v4329 = vunpack.c.l.s4 1983009808
      %v4330 = vunpack.c.0.s8 %v4329
      %v4331 = vlaneseq
      %v4332 = vshrl.u32 %v4331, 7
      %v4333 = vsub.s32 %v4330, %v4332
      %v4334 = vrot.slane %v4327, %v4333
      %v4335 = vcombine.low %v3780, %v4334
      %v4336 = vcombine.low %v977, %v985
      %v4338 = vunpack.c.l.s4 1983009808
      %v4339 = vunpack.c.0.s8 %v4338
      %v4340 = vlaneseq
      %v4341 = vshrl.u32 %v4340, 7
      %v4342 = vsub.s32 %v4339, %v4341
      %v4343 = vrot.slane %v4336, %v4342
      %v4344 = vcombine.low %v4343, %v3838
      %v4345 = vcombine.low %v1010, %v1018
      %v4347 = vunpack.c.l.s4 1983009808
      %v4348 = vunpack.c.0.s8 %v4347
      %v4349 = vlaneseq
      %v4350 = vshrl.u32 %v4349, 7
      %v4351 = vsub.s32 %v4348, %v4350
      %v4352 = vrot.slane %v4345, %v4351
      %v4353 = vcombine.low %v4352, %v3872
      %v4354 = vcombine.low %v1059, %v1067
      %v4356 = vunpack.c.l.s4 1983009808
      %v4357 = vunpack.c.0.s8 %v4356
      %v4358 = vlaneseq
      %v4359 = vshrl.u32 %v4358, 7
      %v4360 = vsub.s32 %v4357, %v4359
      %v4361 = vrot.slane %v4354, %v4360
      %v4362 = vcombine.low %v3899, %v4361
      %v4363 = vcombine.low %v1092, %v1100
      %v4365 = vunpack.c.l.s4 1983009808
      %v4366 = vunpack.c.0.s8 %v4365
      %v4367 = vlaneseq
      %v4368 = vshrl.u32 %v4367, 7
      %v4369 = vsub.s32 %v4366, %v4368
      %v4370 = vrot.slane %v4363, %v4369
      %v4371 = vcombine.low %v3933, %v4370
      %v4372 = vcombine.low %v1141, %v1149
      %v4374 = vunpack.c.l.s4 1983009808
      %v4375 = vunpack.c.0.s8 %v4374
      %v4376 = vlaneseq
      %v4377 = vshrl.u32 %v4376, 7
      %v4378 = vsub.s32 %v4375, %v4377
      %v4379 = vrot.slane %v4372, %v4378
      %v4380 = vcombine.low %v4379, %v3991
      %v4381 = vcombine.low %v1174, %v4194
      %v4382 = vcombine.low %v4202, %v4201
      %v4384 = vunpack.c.l.s4 1983009808
      %v4385 = vunpack.c.0.s8 %v4384
      %v4386 = vlaneseq
      %v4387 = vshrl.u32 %v4386, 7
      %v4388 = vsub.s32 %v4385, %v4387
      %v4389 = vrot.slane %v4381, %v4388
      %v4391 = vunpack.c.l.s4 1983009808
      %v4392 = vunpack.c.0.s8 %v4391
      %v4393 = vlaneseq
      %v4394 = vshrl.u32 %v4393, 7
      %v4395 = vsub.s32 %v4392, %v4394
      %v4396 = vrot.slane %v4382, %v4395
      %v4397 = vcombine.low %v4389, %v4396
      %v4398 = vcombine.low %v4203, %v4211
      %v4399 = vcombine.low %v4219, %v4218
      %v4401 = vunpack.c.l.s4 1983009808
      %v4402 = vunpack.c.0.s8 %v4401
      %v4403 = vlaneseq
      %v4404 = vshrl.u32 %v4403, 7
      %v4405 = vsub.s32 %v4402, %v4404
      %v4406 = vrot.slane %v4398, %v4405
      %v4408 = vunpack.c.l.s4 1983009808
      %v4409 = vunpack.c.0.s8 %v4408
      %v4410 = vlaneseq
      %v4411 = vshrl.u32 %v4410, 7
      %v4412 = vsub.s32 %v4409, %v4411
      %v4413 = vrot.slane %v4399, %v4412
      %v4414 = vcombine.low %v4406, %v4413
      %v4415 = vcombine.low %v4220, %v4227
      %v4417 = vunpack.c.l.s4 1983009808
      %v4418 = vunpack.c.0.s8 %v4417
      %v4419 = vlaneseq
      %v4420 = vshrl.u32 %v4419, 7
      %v4421 = vsub.s32 %v4418, %v4420
      %v4422 = vrot.slane %v4415, %v4421
      %4423 = vrot.lane.b32.xlu0 %v4236, 12
      %v4424 = vpop.permute.xlu0 %4423
      %4425 = vrot.lane.b32.xlu0 %v3397, 12
      %v4426 = vpop.permute.xlu0 %4425
      %4427 = vrot.lane.b32.xlu0 %v4245, 12
      %v4428 = vpop.permute.xlu0 %4427
      %4429 = vrot.lane.b32.xlu0 %v3431, 12
      %v4430 = vpop.permute.xlu0 %4429
      %4431 = vrot.lane.b32.xlu0 %v4254, 12
      %v4432 = vpop.permute.xlu0 %4431
      %4433 = vrot.lane.b32.xlu0 %v3465, 12
      %v4434 = vpop.permute.xlu0 %4433
      %4435 = vrot.lane.b32.xlu0 %v4263, 12
      %v4436 = vpop.permute.xlu0 %4435
      %4437 = vrot.lane.b32.xlu0 %v3499, 12
      %v4438 = vpop.permute.xlu0 %4437
      %4439 = vrot.lane.b32.xlu0 %v3516, 12
      %v4440 = vpop.permute.xlu0 %4439
      %4441 = vrot.lane.b32.xlu0 %v4272, 12
      %v4442 = vpop.permute.xlu0 %4441
      %4443 = vrot.lane.b32.xlu0 %v3550, 12
      %v4444 = vpop.permute.xlu0 %4443
      %4445 = vrot.lane.b32.xlu0 %v4281, 12
      %v4446 = vpop.permute.xlu0 %4445
      %4447 = vrot.lane.b32.xlu0 %v3584, 12
      %v4448 = vpop.permute.xlu0 %4447
      %4449 = vrot.lane.b32.xlu0 %v4290, 12
      %v4450 = vpop.permute.xlu0 %4449
      %4451 = vrot.lane.b32.xlu0 %v3618, 12
      %v4452 = vpop.permute.xlu0 %4451
      %4453 = vrot.lane.b32.xlu0 %v4299, 12
      %v4454 = vpop.permute.xlu0 %4453
      %4455 = vrot.lane.b32.xlu0 %v3652, 12
      %v4456 = vpop.permute.xlu0 %4455
      %4457 = vrot.lane.b32.xlu0 %v3669, 12
      %v4458 = vpop.permute.xlu0 %4457
      %4459 = vrot.lane.b32.xlu0 %v4308, 12
      %v4460 = vpop.permute.xlu0 %4459
      %4461 = vrot.lane.b32.xlu0 %v3703, 12
      %v4462 = vpop.permute.xlu0 %4461
      %4463 = vrot.lane.b32.xlu0 %v4317, 12
      %v4464 = vpop.permute.xlu0 %4463
      %4465 = vrot.lane.b32.xlu0 %v3737, 12
      %v4466 = vpop.permute.xlu0 %4465
      %4467 = vrot.lane.b32.xlu0 %v4326, 12
      %v4468 = vpop.permute.xlu0 %4467
      %4469 = vrot.lane.b32.xlu0 %v3771, 12
      %v4470 = vpop.permute.xlu0 %4469
      %4471 = vrot.lane.b32.xlu0 %v4335, 12
      %v4472 = vpop.permute.xlu0 %4471
      %4473 = vrot.lane.b32.xlu0 %v3805, 12
      %v4474 = vpop.permute.xlu0 %4473
      %4475 = vrot.lane.b32.xlu0 %v3822, 12
      %v4476 = vpop.permute.xlu0 %4475
      %4477 = vrot.lane.b32.xlu0 %v4344, 12
      %v4478 = vpop.permute.xlu0 %4477
      %4479 = vrot.lane.b32.xlu0 %v3856, 12
      %v4480 = vpop.permute.xlu0 %4479
      %4481 = vrot.lane.b32.xlu0 %v4353, 12
      %v4482 = vpop.permute.xlu0 %4481
      %4483 = vrot.lane.b32.xlu0 %v3890, 12
      %v4484 = vpop.permute.xlu0 %4483
      %4485 = vrot.lane.b32.xlu0 %v4362, 12
      %v4486 = vpop.permute.xlu0 %4485
      %4487 = vrot.lane.b32.xlu0 %v3924, 12
      %v4488 = vpop.permute.xlu0 %4487
      %4489 = vrot.lane.b32.xlu0 %v4371, 12
      %v4490 = vpop.permute.xlu0 %4489
      %4491 = vrot.lane.b32.xlu0 %v3958, 12
      %v4492 = vpop.permute.xlu0 %4491
      %4493 = vrot.lane.b32.xlu0 %v3975, 12
      %v4494 = vpop.permute.xlu0 %4493
      %4495 = vrot.lane.b32.xlu0 %v4380, 12
      %v4496 = vpop.permute.xlu0 %4495
      %4497 = vrot.lane.b32.xlu0 %v4009, 12
      %v4498 = vpop.permute.xlu0 %4497
      %4499 = vrot.lane.b32.xlu0 %v4397, 12
      %v4500 = vpop.permute.xlu0 %4499
      %4501 = vrot.lane.b32.xlu0 %v4414, 12
      %v4502 = vpop.permute.xlu0 %4501
      %4503 = vrot.lane.b32.xlu0 %v4422, 12
      %v4504 = vpop.permute.xlu0 %4503
      %vm4546 = vcmask 130144
      %4547 = vst.msk [vmem:[#allocation2] sm:$0xff] %vm4546, %v4424
      %4548 = vst.msk [vmem:[#allocation2 + $0x8] sm:$0xff] %vm4546, %v4426
      %4549 = vst.msk [vmem:[#allocation2 + $0x10] sm:$0xff] %vm4546, %v4428
      %4550 = vst.msk [vmem:[#allocation2 + $0x18] sm:$0xff] %vm4546, %v4430
      %4551 = vst.msk [vmem:[#allocation2 + $0x20] sm:$0xff] %vm4546, %v4432
      %4552 = vst.msk [vmem:[#allocation2 + $0x28] sm:$0xff] %vm4546, %v4434
      %4553 = vst.msk [vmem:[#allocation2 + $0x30] sm:$0xff] %vm4546, %v4436
      %4554 = vst.msk [vmem:[#allocation2 + $0x38] sm:$0xff] %vm4546, %v4438
      %4555 = vst.msk [vmem:[#allocation2 + $0x40] sm:$0xff] %vm4546, %v4440
      %4556 = vst.msk [vmem:[#allocation2 + $0x48] sm:$0xff] %vm4546, %v4442
      %4557 = vst.msk [vmem:[#allocation2 + $0x50] sm:$0xff] %vm4546, %v4444
      %4558 = vst.msk [vmem:[#allocation2 + $0x58] sm:$0xff] %vm4546, %v4446
      %4559 = vst.msk [vmem:[#allocation2 + $0x60] sm:$0xff] %vm4546, %v4448
      %4560 = vst.msk [vmem:[#allocation2 + $0x68] sm:$0xff] %vm4546, %v4450
      %4561 = vst.msk [vmem:[#allocation2 + $0x70] sm:$0xff] %vm4546, %v4452
      %4562 = vst.msk [vmem:[#allocation2 + $0x78] sm:$0xff] %vm4546, %v4454
      %4563 = vst.msk [vmem:[#allocation2 + $0x80] sm:$0xff] %vm4546, %v4456
      %4564 = vst.msk [vmem:[#allocation2 + $0x88] sm:$0xff] %vm4546, %v4458
      %4565 = vst.msk [vmem:[#allocation2 + $0x90] sm:$0xff] %vm4546, %v4460
      %4566 = vst.msk [vmem:[#allocation2 + $0x98] sm:$0xff] %vm4546, %v4462
      %4567 = vst.msk [vmem:[#allocation2 + $0xa0] sm:$0xff] %vm4546, %v4464
      %4568 = vst.msk [vmem:[#allocation2 + $0xa8] sm:$0xff] %vm4546, %v4466
      %4569 = vst.msk [vmem:[#allocation2 + $0xb0] sm:$0xff] %vm4546, %v4468
      %4570 = vst.msk [vmem:[#allocation2 + $0xb8] sm:$0xff] %vm4546, %v4470
      %4571 = vst.msk [vmem:[#allocation2 + $0xc0] sm:$0xff] %vm4546, %v4472
      %4572 = vst.msk [vmem:[#allocation2 + $0xc8] sm:$0xff] %vm4546, %v4474
      %4573 = vst.msk [vmem:[#allocation2 + $0xd0] sm:$0xff] %vm4546, %v4476
      %4574 = vst.msk [vmem:[#allocation2 + $0xd8] sm:$0xff] %vm4546, %v4478
      %4575 = vst.msk [vmem:[#allocation2 + $0xe0] sm:$0xff] %vm4546, %v4480
      %4576 = vst.msk [vmem:[#allocation2 + $0xe8] sm:$0xff] %vm4546, %v4482
      %4577 = vst.msk [vmem:[#allocation2 + $0xf0] sm:$0xff] %vm4546, %v4484
      %4578 = vst.msk [vmem:[#allocation2 + $0xf8] sm:$0xff] %vm4546, %v4486
      %4579 = vst.msk [vmem:[#allocation2 + $0x100] sm:$0xff] %vm4546, %v4488
      %4580 = vst.msk [vmem:[#allocation2 + $0x108] sm:$0xff] %vm4546, %v4490
      %4581 = vst.msk [vmem:[#allocation2 + $0x110] sm:$0xff] %vm4546, %v4492
      %4582 = vst.msk [vmem:[#allocation2 + $0x118] sm:$0xff] %vm4546, %v4494
      %4583 = vst.msk [vmem:[#allocation2 + $0x120] sm:$0xff] %vm4546, %v4496
      %4584 = vst.msk [vmem:[#allocation2 + $0x128] sm:$0xff] %vm4546, %v4498
      %4585 = vst.msk [vmem:[#allocation2 + $0x130] sm:$0xff] %vm4546, %v4500
      %4586 = vst.msk [vmem:[#allocation2 + $0x138] sm:$0xff] %vm4546, %v4502
      %vm4587 = vcmask 126048
      %4588 = vst.msk [vmem:[#allocation2 + $0x140] sm:$0xf] %vm4587, %v4504
      %v4589 = vcombine.high %v4227, %v4227
      %v4590 = vrot.slane %v4194, 7
      %v4591 = vrot.slane %v4590, 2
      %v4592 = vrot.slane %v4202, 7
      %v4593 = vsel %vm1971, %v4591, %v4592
      %v4594 = vrot.slane %v4592, 2
      %v4595 = vrot.slane %v4201, 7
      %v4596 = vsel %vm1971, %v4594, %v4595
      %v4597 = vrot.slane %v4595, 2
      %v4598 = vrot.slane %v4203, 7
      %v4599 = vsel %vm1971, %v4597, %v4598
      %v4600 = vrot.slane %v4598, 2
      %v4601 = vrot.slane %v4211, 7
      %v4602 = vsel %vm1971, %v4600, %v4601
      %v4603 = vrot.slane %v4601, 2
      %v4604 = vrot.slane %v4219, 7
      %v4605 = vsel %vm1971, %v4603, %v4604
      %v4606 = vrot.slane %v4604, 2
      %v4607 = vrot.slane %v4218, 7
      %v4608 = vsel %vm1971, %v4606, %v4607
      %v4609 = vrot.slane %v4607, 2
      %v4610 = vrot.slane %v4220, 7
      %v4611 = vsel %vm1971, %v4609, %v4610
      %v4612 = vrot.slane %v4610, 2
      %v4613 = vrot.slane %v4227, 7
      %v4614 = vsel %vm1971, %v4612, %v4613
      %v4615 = vrot.slane %v4613, 2
      %v4616 = vrot.slane %v4589, 7
      %v4617 = vsel %vm1971, %v4615, %v4616
      %v4618 = vcombine.low %v2003, %v2006
      %v4619 = vcombine.low %v2009, %v2012
      %v4621 = vunpack.c.l.s4 1983009808
      %v4622 = vunpack.c.0.s8 %v4621
      %v4623 = vlaneseq
      %v4624 = vshrl.u32 %v4623, 7
      %v4625 = vsub.s32 %v4622, %v4624
      %v4626 = vrot.slane %v4618, %v4625
      %v4628 = vunpack.c.l.s4 1983009808
      %v4629 = vunpack.c.0.s8 %v4628
      %v4630 = vlaneseq
      %v4631 = vshrl.u32 %v4630, 7
      %v4632 = vsub.s32 %v4629, %v4631
      %v4633 = vrot.slane %v4619, %v4632
      %v4634 = vcombine.low %v4626, %v4633
      %v4635 = vcombine.low %v2015, %v2018
      %v4636 = vcombine.low %v2021, %v2024
      %v4638 = vunpack.c.l.s4 1983009808
      %v4639 = vunpack.c.0.s8 %v4638
      %v4640 = vlaneseq
      %v4641 = vshrl.u32 %v4640, 7
      %v4642 = vsub.s32 %v4639, %v4641
      %v4643 = vrot.slane %v4635, %v4642
      %v4645 = vunpack.c.l.s4 1983009808
      %v4646 = vunpack.c.0.s8 %v4645
      %v4647 = vlaneseq
      %v4648 = vshrl.u32 %v4647, 7
      %v4649 = vsub.s32 %v4646, %v4648
      %v4650 = vrot.slane %v4636, %v4649
      %v4651 = vcombine.low %v4643, %v4650
      %v4652 = vcombine.low %v2027, %v2031
      %v4653 = vcombine.low %v2034, %v2037
      %v4655 = vunpack.c.l.s4 1983009808
      %v4656 = vunpack.c.0.s8 %v4655
      %v4657 = vlaneseq
      %v4658 = vshrl.u32 %v4657, 7
      %v4659 = vsub.s32 %v4656, %v4658
      %v4660 = vrot.slane %v4652, %v4659
      %v4662 = vunpack.c.l.s4 1983009808
      %v4663 = vunpack.c.0.s8 %v4662
      %v4664 = vlaneseq
      %v4665 = vshrl.u32 %v4664, 7
      %v4666 = vsub.s32 %v4663, %v4665
      %v4667 = vrot.slane %v4653, %v4666
      %v4668 = vcombine.low %v4660, %v4667
      %v4669 = vcombine.low %v2040, %v2043
      %v4670 = vcombine.low %v2046, %v2049
      %v4672 = vunpack.c.l.s4 1983009808
      %v4673 = vunpack.c.0.s8 %v4672
      %v4674 = vlaneseq
      %v4675 = vshrl.u32 %v4674, 7
      %v4676 = vsub.s32 %v4673, %v4675
      %v4677 = vrot.slane %v4669, %v4676
      %v4679 = vunpack.c.l.s4 1983009808
      %v4680 = vunpack.c.0.s8 %v4679
      %v4681 = vlaneseq
      %v4682 = vshrl.u32 %v4681, 7
      %v4683 = vsub.s32 %v4680, %v4682
      %v4684 = vrot.slane %v4670, %v4683
      %v4685 = vcombine.low %v4677, %v4684
      %v4686 = vcombine.low %v2052, %v2055
      %v4687 = vcombine.low %v2059, %v2062
      %v4689 = vunpack.c.l.s4 1983009808
      %v4690 = vunpack.c.0.s8 %v4689
      %v4691 = vlaneseq
      %v4692 = vshrl.u32 %v4691, 7
      %v4693 = vsub.s32 %v4690, %v4692
      %v4694 = vrot.slane %v4686, %v4693
      %v4696 = vunpack.c.l.s4 1983009808
      %v4697 = vunpack.c.0.s8 %v4696
      %v4698 = vlaneseq
      %v4699 = vshrl.u32 %v4698, 7
      %v4700 = vsub.s32 %v4697, %v4699
      %v4701 = vrot.slane %v4687, %v4700
      %v4702 = vcombine.low %v4694, %v4701
      %v4703 = vcombine.low %v2065, %v2068
      %v4704 = vcombine.low %v2071, %v2074
      %v4706 = vunpack.c.l.s4 1983009808
      %v4707 = vunpack.c.0.s8 %v4706
      %v4708 = vlaneseq
      %v4709 = vshrl.u32 %v4708, 7
      %v4710 = vsub.s32 %v4707, %v4709
      %v4711 = vrot.slane %v4703, %v4710
      %v4713 = vunpack.c.l.s4 1983009808
      %v4714 = vunpack.c.0.s8 %v4713
      %v4715 = vlaneseq
      %v4716 = vshrl.u32 %v4715, 7
      %v4717 = vsub.s32 %v4714, %v4716
      %v4718 = vrot.slane %v4704, %v4717
      %v4719 = vcombine.low %v4711, %v4718
      %v4720 = vcombine.low %v2077, %v2080
      %v4721 = vcombine.low %v2083, %v2087
      %v4723 = vunpack.c.l.s4 1983009808
      %v4724 = vunpack.c.0.s8 %v4723
      %v4725 = vlaneseq
      %v4726 = vshrl.u32 %v4725, 7
      %v4727 = vsub.s32 %v4724, %v4726
      %v4728 = vrot.slane %v4720, %v4727
      %v4730 = vunpack.c.l.s4 1983009808
      %v4731 = vunpack.c.0.s8 %v4730
      %v4732 = vlaneseq
      %v4733 = vshrl.u32 %v4732, 7
      %v4734 = vsub.s32 %v4731, %v4733
      %v4735 = vrot.slane %v4721, %v4734
      %v4736 = vcombine.low %v4728, %v4735
      %v4737 = vcombine.low %v2090, %v2093
      %v4738 = vcombine.low %v2096, %v2099
      %v4740 = vunpack.c.l.s4 1983009808
      %v4741 = vunpack.c.0.s8 %v4740
      %v4742 = vlaneseq
      %v4743 = vshrl.u32 %v4742, 7
      %v4744 = vsub.s32 %v4741, %v4743
      %v4745 = vrot.slane %v4737, %v4744
      %v4747 = vunpack.c.l.s4 1983009808
      %v4748 = vunpack.c.0.s8 %v4747
      %v4749 = vlaneseq
      %v4750 = vshrl.u32 %v4749, 7
      %v4751 = vsub.s32 %v4748, %v4750
      %v4752 = vrot.slane %v4738, %v4751
      %v4753 = vcombine.low %v4745, %v4752
      %v4754 = vcombine.low %v2102, %v2105
      %v4755 = vcombine.low %v2108, %v2111
      %v4757 = vunpack.c.l.s4 1983009808
      %v4758 = vunpack.c.0.s8 %v4757
      %v4759 = vlaneseq
      %v4760 = vshrl.u32 %v4759, 7
      %v4761 = vsub.s32 %v4758, %v4760
      %v4762 = vrot.slane %v4754, %v4761
      %v4764 = vunpack.c.l.s4 1983009808
      %v4765 = vunpack.c.0.s8 %v4764
      %v4766 = vlaneseq
      %v4767 = vshrl.u32 %v4766, 7
      %v4768 = vsub.s32 %v4765, %v4767
      %v4769 = vrot.slane %v4755, %v4768
      %v4770 = vcombine.low %v4762, %v4769
      %v4771 = vcombine.low %v2115, %v2118
      %v4772 = vcombine.low %v2121, %v2124
      %v4774 = vunpack.c.l.s4 1983009808
      %v4775 = vunpack.c.0.s8 %v4774
      %v4776 = vlaneseq
      %v4777 = vshrl.u32 %v4776, 7
      %v4778 = vsub.s32 %v4775, %v4777
      %v4779 = vrot.slane %v4771, %v4778
      %v4781 = vunpack.c.l.s4 1983009808
      %v4782 = vunpack.c.0.s8 %v4781
      %v4783 = vlaneseq
      %v4784 = vshrl.u32 %v4783, 7
      %v4785 = vsub.s32 %v4782, %v4784
      %v4786 = vrot.slane %v4772, %v4785
      %v4787 = vcombine.low %v4779, %v4786
      %v4788 = vcombine.low %v2127, %v2130
      %v4789 = vcombine.low %v2133, %v2136
      %v4791 = vunpack.c.l.s4 1983009808
      %v4792 = vunpack.c.0.s8 %v4791
      %v4793 = vlaneseq
      %v4794 = vshrl.u32 %v4793, 7
      %v4795 = vsub.s32 %v4792, %v4794
      %v4796 = vrot.slane %v4788, %v4795
      %v4798 = vunpack.c.l.s4 1983009808
      %v4799 = vunpack.c.0.s8 %v4798
      %v4800 = vlaneseq
      %v4801 = vshrl.u32 %v4800, 7
      %v4802 = vsub.s32 %v4799, %v4801
      %v4803 = vrot.slane %v4789, %v4802
      %v4804 = vcombine.low %v4796, %v4803
      %v4805 = vcombine.low %v2139, %v2143
      %v4806 = vcombine.low %v2146, %v2149
      %v4808 = vunpack.c.l.s4 1983009808
      %v4809 = vunpack.c.0.s8 %v4808
      %v4810 = vlaneseq
      %v4811 = vshrl.u32 %v4810, 7
      %v4812 = vsub.s32 %v4809, %v4811
      %v4813 = vrot.slane %v4805, %v4812
      %v4815 = vunpack.c.l.s4 1983009808
      %v4816 = vunpack.c.0.s8 %v4815
      %v4817 = vlaneseq
      %v4818 = vshrl.u32 %v4817, 7
      %v4819 = vsub.s32 %v4816, %v4818
      %v4820 = vrot.slane %v4806, %v4819
      %v4821 = vcombine.low %v4813, %v4820
      %v4822 = vcombine.low %v2152, %v2155
      %v4823 = vcombine.low %v2158, %v2161
      %v4825 = vunpack.c.l.s4 1983009808
      %v4826 = vunpack.c.0.s8 %v4825
      %v4827 = vlaneseq
      %v4828 = vshrl.u32 %v4827, 7
      %v4829 = vsub.s32 %v4826, %v4828
      %v4830 = vrot.slane %v4822, %v4829
      %v4832 = vunpack.c.l.s4 1983009808
      %v4833 = vunpack.c.0.s8 %v4832
      %v4834 = vlaneseq
      %v4835 = vshrl.u32 %v4834, 7
      %v4836 = vsub.s32 %v4833, %v4835
      %v4837 = vrot.slane %v4823, %v4836
      %v4838 = vcombine.low %v4830, %v4837
      %v4839 = vcombine.low %v2164, %v2167
      %v4840 = vcombine.low %v2171, %v2174
      %v4842 = vunpack.c.l.s4 1983009808
      %v4843 = vunpack.c.0.s8 %v4842
      %v4844 = vlaneseq
      %v4845 = vshrl.u32 %v4844, 7
      %v4846 = vsub.s32 %v4843, %v4845
      %v4847 = vrot.slane %v4839, %v4846
      %v4849 = vunpack.c.l.s4 1983009808
      %v4850 = vunpack.c.0.s8 %v4849
      %v4851 = vlaneseq
      %v4852 = vshrl.u32 %v4851, 7
      %v4853 = vsub.s32 %v4850, %v4852
      %v4854 = vrot.slane %v4840, %v4853
      %v4855 = vcombine.low %v4847, %v4854
      %v4856 = vcombine.low %v2177, %v2180
      %v4857 = vcombine.low %v2183, %v2186
      %v4859 = vunpack.c.l.s4 1983009808
      %v4860 = vunpack.c.0.s8 %v4859
      %v4861 = vlaneseq
      %v4862 = vshrl.u32 %v4861, 7
      %v4863 = vsub.s32 %v4860, %v4862
      %v4864 = vrot.slane %v4856, %v4863
      %v4866 = vunpack.c.l.s4 1983009808
      %v4867 = vunpack.c.0.s8 %v4866
      %v4868 = vlaneseq
      %v4869 = vshrl.u32 %v4868, 7
      %v4870 = vsub.s32 %v4867, %v4869
      %v4871 = vrot.slane %v4857, %v4870
      %v4872 = vcombine.low %v4864, %v4871
      %v4873 = vcombine.low %v2189, %v2192
      %v4874 = vcombine.low %v2195, %v2199
      %v4876 = vunpack.c.l.s4 1983009808
      %v4877 = vunpack.c.0.s8 %v4876
      %v4878 = vlaneseq
      %v4879 = vshrl.u32 %v4878, 7
      %v4880 = vsub.s32 %v4877, %v4879
      %v4881 = vrot.slane %v4873, %v4880
      %v4883 = vunpack.c.l.s4 1983009808
      %v4884 = vunpack.c.0.s8 %v4883
      %v4885 = vlaneseq
      %v4886 = vshrl.u32 %v4885, 7
      %v4887 = vsub.s32 %v4884, %v4886
      %v4888 = vrot.slane %v4874, %v4887
      %v4889 = vcombine.low %v4881, %v4888
      %v4890 = vcombine.low %v2202, %v2205
      %v4891 = vcombine.low %v2208, %v2211
      %v4893 = vunpack.c.l.s4 1983009808
      %v4894 = vunpack.c.0.s8 %v4893
      %v4895 = vlaneseq
      %v4896 = vshrl.u32 %v4895, 7
      %v4897 = vsub.s32 %v4894, %v4896
      %v4898 = vrot.slane %v4890, %v4897
      %v4900 = vunpack.c.l.s4 1983009808
      %v4901 = vunpack.c.0.s8 %v4900
      %v4902 = vlaneseq
      %v4903 = vshrl.u32 %v4902, 7
      %v4904 = vsub.s32 %v4901, %v4903
      %v4905 = vrot.slane %v4891, %v4904
      %v4906 = vcombine.low %v4898, %v4905
      %v4907 = vcombine.low %v2214, %v2217
      %v4908 = vcombine.low %v2220, %v2223
      %v4910 = vunpack.c.l.s4 1983009808
      %v4911 = vunpack.c.0.s8 %v4910
      %v4912 = vlaneseq
      %v4913 = vshrl.u32 %v4912, 7
      %v4914 = vsub.s32 %v4911, %v4913
      %v4915 = vrot.slane %v4907, %v4914
      %v4917 = vunpack.c.l.s4 1983009808
      %v4918 = vunpack.c.0.s8 %v4917
      %v4919 = vlaneseq
      %v4920 = vshrl.u32 %v4919, 7
      %v4921 = vsub.s32 %v4918, %v4920
      %v4922 = vrot.slane %v4908, %v4921
      %v4923 = vcombine.low %v4915, %v4922
      %v4924 = vcombine.low %v2227, %v2230
      %v4925 = vcombine.low %v2233, %v2236
      %v4927 = vunpack.c.l.s4 1983009808
      %v4928 = vunpack.c.0.s8 %v4927
      %v4929 = vlaneseq
      %v4930 = vshrl.u32 %v4929, 7
      %v4931 = vsub.s32 %v4928, %v4930
      %v4932 = vrot.slane %v4924, %v4931
      %v4934 = vunpack.c.l.s4 1983009808
      %v4935 = vunpack.c.0.s8 %v4934
      %v4936 = vlaneseq
      %v4937 = vshrl.u32 %v4936, 7
      %v4938 = vsub.s32 %v4935, %v4937
      %v4939 = vrot.slane %v4925, %v4938
      %v4940 = vcombine.low %v4932, %v4939
      %v4941 = vcombine.low %v2239, %v2242
      %v4942 = vcombine.low %v2245, %v2248
      %v4944 = vunpack.c.l.s4 1983009808
      %v4945 = vunpack.c.0.s8 %v4944
      %v4946 = vlaneseq
      %v4947 = vshrl.u32 %v4946, 7
      %v4948 = vsub.s32 %v4945, %v4947
      %v4949 = vrot.slane %v4941, %v4948
      %v4951 = vunpack.c.l.s4 1983009808
      %v4952 = vunpack.c.0.s8 %v4951
      %v4953 = vlaneseq
      %v4954 = vshrl.u32 %v4953, 7
      %v4955 = vsub.s32 %v4952, %v4954
      %v4956 = vrot.slane %v4942, %v4955
      %v4957 = vcombine.low %v4949, %v4956
      %v4958 = vcombine.low %v2251, %v2255
      %v4959 = vcombine.low %v2258, %v2261
      %v4961 = vunpack.c.l.s4 1983009808
      %v4962 = vunpack.c.0.s8 %v4961
      %v4963 = vlaneseq
      %v4964 = vshrl.u32 %v4963, 7
      %v4965 = vsub.s32 %v4962, %v4964
      %v4966 = vrot.slane %v4958, %v4965
      %v4968 = vunpack.c.l.s4 1983009808
      %v4969 = vunpack.c.0.s8 %v4968
      %v4970 = vlaneseq
      %v4971 = vshrl.u32 %v4970, 7
      %v4972 = vsub.s32 %v4969, %v4971
      %v4973 = vrot.slane %v4959, %v4972
      %v4974 = vcombine.low %v4966, %v4973
      %v4975 = vcombine.low %v2264, %v2267
      %v4976 = vcombine.low %v2270, %v2273
      %v4978 = vunpack.c.l.s4 1983009808
      %v4979 = vunpack.c.0.s8 %v4978
      %v4980 = vlaneseq
      %v4981 = vshrl.u32 %v4980, 7
      %v4982 = vsub.s32 %v4979, %v4981
      %v4983 = vrot.slane %v4975, %v4982
      %v4985 = vunpack.c.l.s4 1983009808
      %v4986 = vunpack.c.0.s8 %v4985
      %v4987 = vlaneseq
      %v4988 = vshrl.u32 %v4987, 7
      %v4989 = vsub.s32 %v4986, %v4988
      %v4990 = vrot.slane %v4976, %v4989
      %v4991 = vcombine.low %v4983, %v4990
      %v4992 = vcombine.low %v2276, %v2279
      %v4993 = vcombine.low %v2283, %v2286
      %v4995 = vunpack.c.l.s4 1983009808
      %v4996 = vunpack.c.0.s8 %v4995
      %v4997 = vlaneseq
      %v4998 = vshrl.u32 %v4997, 7
      %v4999 = vsub.s32 %v4996, %v4998
      %v5000 = vrot.slane %v4992, %v4999
      %v5002 = vunpack.c.l.s4 1983009808
      %v5003 = vunpack.c.0.s8 %v5002
      %v5004 = vlaneseq
      %v5005 = vshrl.u32 %v5004, 7
      %v5006 = vsub.s32 %v5003, %v5005
      %v5007 = vrot.slane %v4993, %v5006
      %v5008 = vcombine.low %v5000, %v5007
      %v5009 = vcombine.low %v2289, %v2292
      %v5010 = vcombine.low %v2295, %v2298
      %v5012 = vunpack.c.l.s4 1983009808
      %v5013 = vunpack.c.0.s8 %v5012
      %v5014 = vlaneseq
      %v5015 = vshrl.u32 %v5014, 7
      %v5016 = vsub.s32 %v5013, %v5015
      %v5017 = vrot.slane %v5009, %v5016
      %v5019 = vunpack.c.l.s4 1983009808
      %v5020 = vunpack.c.0.s8 %v5019
      %v5021 = vlaneseq
      %v5022 = vshrl.u32 %v5021, 7
      %v5023 = vsub.s32 %v5020, %v5022
      %v5024 = vrot.slane %v5010, %v5023
      %v5025 = vcombine.low %v5017, %v5024
      %v5026 = vcombine.low %v2301, %v2304
      %v5027 = vcombine.low %v2307, %v2311
      %v5029 = vunpack.c.l.s4 1983009808
      %v5030 = vunpack.c.0.s8 %v5029
      %v5031 = vlaneseq
      %v5032 = vshrl.u32 %v5031, 7
      %v5033 = vsub.s32 %v5030, %v5032
      %v5034 = vrot.slane %v5026, %v5033
      %v5036 = vunpack.c.l.s4 1983009808
      %v5037 = vunpack.c.0.s8 %v5036
      %v5038 = vlaneseq
      %v5039 = vshrl.u32 %v5038, 7
      %v5040 = vsub.s32 %v5037, %v5039
      %v5041 = vrot.slane %v5027, %v5040
      %v5042 = vcombine.low %v5034, %v5041
      %v5043 = vcombine.low %v2314, %v2317
      %v5044 = vcombine.low %v2320, %v2323
      %v5046 = vunpack.c.l.s4 1983009808
      %v5047 = vunpack.c.0.s8 %v5046
      %v5048 = vlaneseq
      %v5049 = vshrl.u32 %v5048, 7
      %v5050 = vsub.s32 %v5047, %v5049
      %v5051 = vrot.slane %v5043, %v5050
      %v5053 = vunpack.c.l.s4 1983009808
      %v5054 = vunpack.c.0.s8 %v5053
      %v5055 = vlaneseq
      %v5056 = vshrl.u32 %v5055, 7
      %v5057 = vsub.s32 %v5054, %v5056
      %v5058 = vrot.slane %v5044, %v5057
      %v5059 = vcombine.low %v5051, %v5058
      %v5060 = vcombine.low %v2326, %v2329
      %v5061 = vcombine.low %v2332, %v2335
      %v5063 = vunpack.c.l.s4 1983009808
      %v5064 = vunpack.c.0.s8 %v5063
      %v5065 = vlaneseq
      %v5066 = vshrl.u32 %v5065, 7
      %v5067 = vsub.s32 %v5064, %v5066
      %v5068 = vrot.slane %v5060, %v5067
      %v5070 = vunpack.c.l.s4 1983009808
      %v5071 = vunpack.c.0.s8 %v5070
      %v5072 = vlaneseq
      %v5073 = vshrl.u32 %v5072, 7
      %v5074 = vsub.s32 %v5071, %v5073
      %v5075 = vrot.slane %v5061, %v5074
      %v5076 = vcombine.low %v5068, %v5075
      %v5077 = vcombine.low %v2339, %v2342
      %v5078 = vcombine.low %v2345, %v2348
      %v5080 = vunpack.c.l.s4 1983009808
      %v5081 = vunpack.c.0.s8 %v5080
      %v5082 = vlaneseq
      %v5083 = vshrl.u32 %v5082, 7
      %v5084 = vsub.s32 %v5081, %v5083
      %v5085 = vrot.slane %v5077, %v5084
      %v5087 = vunpack.c.l.s4 1983009808
      %v5088 = vunpack.c.0.s8 %v5087
      %v5089 = vlaneseq
      %v5090 = vshrl.u32 %v5089, 7
      %v5091 = vsub.s32 %v5088, %v5090
      %v5092 = vrot.slane %v5078, %v5091
      %v5093 = vcombine.low %v5085, %v5092
      %v5094 = vcombine.low %v2351, %v2354
      %v5095 = vcombine.low %v2357, %v2360
      %v5097 = vunpack.c.l.s4 1983009808
      %v5098 = vunpack.c.0.s8 %v5097
      %v5099 = vlaneseq
      %v5100 = vshrl.u32 %v5099, 7
      %v5101 = vsub.s32 %v5098, %v5100
      %v5102 = vrot.slane %v5094, %v5101
      %v5104 = vunpack.c.l.s4 1983009808
      %v5105 = vunpack.c.0.s8 %v5104
      %v5106 = vlaneseq
      %v5107 = vshrl.u32 %v5106, 7
      %v5108 = vsub.s32 %v5105, %v5107
      %v5109 = vrot.slane %v5095, %v5108
      %v5110 = vcombine.low %v5102, %v5109
      %v5111 = vcombine.low %v2363, %v2367
      %v5112 = vcombine.low %v2370, %v2373
      %v5114 = vunpack.c.l.s4 1983009808
      %v5115 = vunpack.c.0.s8 %v5114
      %v5116 = vlaneseq
      %v5117 = vshrl.u32 %v5116, 7
      %v5118 = vsub.s32 %v5115, %v5117
      %v5119 = vrot.slane %v5111, %v5118
      %v5121 = vunpack.c.l.s4 1983009808
      %v5122 = vunpack.c.0.s8 %v5121
      %v5123 = vlaneseq
      %v5124 = vshrl.u32 %v5123, 7
      %v5125 = vsub.s32 %v5122, %v5124
      %v5126 = vrot.slane %v5112, %v5125
      %v5127 = vcombine.low %v5119, %v5126
      %v5128 = vcombine.low %v2376, %v2379
      %v5129 = vcombine.low %v2382, %v2385
      %v5131 = vunpack.c.l.s4 1983009808
      %v5132 = vunpack.c.0.s8 %v5131
      %v5133 = vlaneseq
      %v5134 = vshrl.u32 %v5133, 7
      %v5135 = vsub.s32 %v5132, %v5134
      %v5136 = vrot.slane %v5128, %v5135
      %v5138 = vunpack.c.l.s4 1983009808
      %v5139 = vunpack.c.0.s8 %v5138
      %v5140 = vlaneseq
      %v5141 = vshrl.u32 %v5140, 7
      %v5142 = vsub.s32 %v5139, %v5141
      %v5143 = vrot.slane %v5129, %v5142
      %v5144 = vcombine.low %v5136, %v5143
      %v5145 = vcombine.low %v2388, %v2391
      %v5146 = vcombine.low %v2395, %v2398
      %v5148 = vunpack.c.l.s4 1983009808
      %v5149 = vunpack.c.0.s8 %v5148
      %v5150 = vlaneseq
      %v5151 = vshrl.u32 %v5150, 7
      %v5152 = vsub.s32 %v5149, %v5151
      %v5153 = vrot.slane %v5145, %v5152
      %v5155 = vunpack.c.l.s4 1983009808
      %v5156 = vunpack.c.0.s8 %v5155
      %v5157 = vlaneseq
      %v5158 = vshrl.u32 %v5157, 7
      %v5159 = vsub.s32 %v5156, %v5158
      %v5160 = vrot.slane %v5146, %v5159
      %v5161 = vcombine.low %v5153, %v5160
      %v5162 = vcombine.low %v2401, %v2404
      %v5163 = vcombine.low %v2407, %v2410
      %v5165 = vunpack.c.l.s4 1983009808
      %v5166 = vunpack.c.0.s8 %v5165
      %v5167 = vlaneseq
      %v5168 = vshrl.u32 %v5167, 7
      %v5169 = vsub.s32 %v5166, %v5168
      %v5170 = vrot.slane %v5162, %v5169
      %v5172 = vunpack.c.l.s4 1983009808
      %v5173 = vunpack.c.0.s8 %v5172
      %v5174 = vlaneseq
      %v5175 = vshrl.u32 %v5174, 7
      %v5176 = vsub.s32 %v5173, %v5175
      %v5177 = vrot.slane %v5163, %v5176
      %v5178 = vcombine.low %v5170, %v5177
      %v5179 = vcombine.low %v2413, %v2416
      %v5180 = vcombine.low %v2419, %v2423
      %v5182 = vunpack.c.l.s4 1983009808
      %v5183 = vunpack.c.0.s8 %v5182
      %v5184 = vlaneseq
      %v5185 = vshrl.u32 %v5184, 7
      %v5186 = vsub.s32 %v5183, %v5185
      %v5187 = vrot.slane %v5179, %v5186
      %v5189 = vunpack.c.l.s4 1983009808
      %v5190 = vunpack.c.0.s8 %v5189
      %v5191 = vlaneseq
      %v5192 = vshrl.u32 %v5191, 7
      %v5193 = vsub.s32 %v5190, %v5192
      %v5194 = vrot.slane %v5180, %v5193
      %v5195 = vcombine.low %v5187, %v5194
      %v5196 = vcombine.low %v2426, %v2429
      %v5197 = vcombine.low %v2432, %v2435
      %v5199 = vunpack.c.l.s4 1983009808
      %v5200 = vunpack.c.0.s8 %v5199
      %v5201 = vlaneseq
      %v5202 = vshrl.u32 %v5201, 7
      %v5203 = vsub.s32 %v5200, %v5202
      %v5204 = vrot.slane %v5196, %v5203
      %v5206 = vunpack.c.l.s4 1983009808
      %v5207 = vunpack.c.0.s8 %v5206
      %v5208 = vlaneseq
      %v5209 = vshrl.u32 %v5208, 7
      %v5210 = vsub.s32 %v5207, %v5209
      %v5211 = vrot.slane %v5197, %v5210
      %v5212 = vcombine.low %v5204, %v5211
      %v5213 = vcombine.low %v2438, %v2441
      %v5214 = vcombine.low %v2444, %v2447
      %v5216 = vunpack.c.l.s4 1983009808
      %v5217 = vunpack.c.0.s8 %v5216
      %v5218 = vlaneseq
      %v5219 = vshrl.u32 %v5218, 7
      %v5220 = vsub.s32 %v5217, %v5219
      %v5221 = vrot.slane %v5213, %v5220
      %v5223 = vunpack.c.l.s4 1983009808
      %v5224 = vunpack.c.0.s8 %v5223
      %v5225 = vlaneseq
      %v5226 = vshrl.u32 %v5225, 7
      %v5227 = vsub.s32 %v5224, %v5226
      %v5228 = vrot.slane %v5214, %v5227
      %v5229 = vcombine.low %v5221, %v5228
      %v5230 = vcombine.low %v2451, %v2454
      %v5231 = vcombine.low %v2457, %v2460
      %v5233 = vunpack.c.l.s4 1983009808
      %v5234 = vunpack.c.0.s8 %v5233
      %v5235 = vlaneseq
      %v5236 = vshrl.u32 %v5235, 7
      %v5237 = vsub.s32 %v5234, %v5236
      %v5238 = vrot.slane %v5230, %v5237
      %v5240 = vunpack.c.l.s4 1983009808
      %v5241 = vunpack.c.0.s8 %v5240
      %v5242 = vlaneseq
      %v5243 = vshrl.u32 %v5242, 7
      %v5244 = vsub.s32 %v5241, %v5243
      %v5245 = vrot.slane %v5231, %v5244
      %v5246 = vcombine.low %v5238, %v5245
      %v5247 = vcombine.low %v2463, %v2466
      %v5248 = vcombine.low %v2469, %v2472
      %v5250 = vunpack.c.l.s4 1983009808
      %v5251 = vunpack.c.0.s8 %v5250
      %v5252 = vlaneseq
      %v5253 = vshrl.u32 %v5252, 7
      %v5254 = vsub.s32 %v5251, %v5253
      %v5255 = vrot.slane %v5247, %v5254
      %v5257 = vunpack.c.l.s4 1983009808
      %v5258 = vunpack.c.0.s8 %v5257
      %v5259 = vlaneseq
      %v5260 = vshrl.u32 %v5259, 7
      %v5261 = vsub.s32 %v5258, %v5260
      %v5262 = vrot.slane %v5248, %v5261
      %v5263 = vcombine.low %v5255, %v5262
      %v5264 = vcombine.low %v2475, %v4593
      %v5265 = vcombine.low %v4596, %v4599
      %v5267 = vunpack.c.l.s4 1983009808
      %v5268 = vunpack.c.0.s8 %v5267
      %v5269 = vlaneseq
      %v5270 = vshrl.u32 %v5269, 7
      %v5271 = vsub.s32 %v5268, %v5270
      %v5272 = vrot.slane %v5264, %v5271
      %v5274 = vunpack.c.l.s4 1983009808
      %v5275 = vunpack.c.0.s8 %v5274
      %v5276 = vlaneseq
      %v5277 = vshrl.u32 %v5276, 7
      %v5278 = vsub.s32 %v5275, %v5277
      %v5279 = vrot.slane %v5265, %v5278
      %v5280 = vcombine.low %v5272, %v5279
      %v5281 = vcombine.low %v4602, %v4605
      %v5282 = vcombine.low %v4608, %v4611
      %v5284 = vunpack.c.l.s4 1983009808
      %v5285 = vunpack.c.0.s8 %v5284
      %v5286 = vlaneseq
      %v5287 = vshrl.u32 %v5286, 7
      %v5288 = vsub.s32 %v5285, %v5287
      %v5289 = vrot.slane %v5281, %v5288
      %v5291 = vunpack.c.l.s4 1983009808
      %v5292 = vunpack.c.0.s8 %v5291
      %v5293 = vlaneseq
      %v5294 = vshrl.u32 %v5293, 7
      %v5295 = vsub.s32 %v5292, %v5294
      %v5296 = vrot.slane %v5282, %v5295
      %v5297 = vcombine.low %v5289, %v5296
      %v5298 = vcombine.low %v4614, %v4617
      %v5300 = vunpack.c.l.s4 1983009808
      %v5301 = vunpack.c.0.s8 %v5300
      %v5302 = vlaneseq
      %v5303 = vshrl.u32 %v5302, 7
      %v5304 = vsub.s32 %v5301, %v5303
      %v5305 = vrot.slane %v5298, %v5304
      %5306 = vrot.lane.b32.xlu0 %v4634, 16
      %v5307 = vpop.permute.xlu0 %5306
      %5308 = vrot.lane.b32.xlu0 %v4651, 16
      %v5309 = vpop.permute.xlu0 %5308
      %5310 = vrot.lane.b32.xlu0 %v4668, 16
      %v5311 = vpop.permute.xlu0 %5310
      %5312 = vrot.lane.b32.xlu0 %v4685, 16
      %v5313 = vpop.permute.xlu0 %5312
      %5314 = vrot.lane.b32.xlu0 %v4702, 16
      %v5315 = vpop.permute.xlu0 %5314
      %5316 = vrot.lane.b32.xlu0 %v4719, 16
      %v5317 = vpop.permute.xlu0 %5316
      %5318 = vrot.lane.b32.xlu0 %v4736, 16
      %v5319 = vpop.permute.xlu0 %5318
      %5320 = vrot.lane.b32.xlu0 %v4753, 16
      %v5321 = vpop.permute.xlu0 %5320
      %5322 = vrot.lane.b32.xlu0 %v4770, 16
      %v5323 = vpop.permute.xlu0 %5322
      %5324 = vrot.lane.b32.xlu0 %v4787, 16
      %v5325 = vpop.permute.xlu0 %5324
      %5326 = vrot.lane.b32.xlu0 %v4804, 16
      %v5327 = vpop.permute.xlu0 %5326
      %5328 = vrot.lane.b32.xlu0 %v4821, 16
      %v5329 = vpop.permute.xlu0 %5328
      %5330 = vrot.lane.b32.xlu0 %v4838, 16
      %v5331 = vpop.permute.xlu0 %5330
      %5332 = vrot.lane.b32.xlu0 %v4855, 16
      %v5333 = vpop.permute.xlu0 %5332
      %5334 = vrot.lane.b32.xlu0 %v4872, 16
      %v5335 = vpop.permute.xlu0 %5334
      %5336 = vrot.lane.b32.xlu0 %v4889, 16
      %v5337 = vpop.permute.xlu0 %5336
      %5338 = vrot.lane.b32.xlu0 %v4906, 16
      %v5339 = vpop.permute.xlu0 %5338
      %5340 = vrot.lane.b32.xlu0 %v4923, 16
      %v5341 = vpop.permute.xlu0 %5340
      %5342 = vrot.lane.b32.xlu0 %v4940, 16
      %v5343 = vpop.permute.xlu0 %5342
      %5344 = vrot.lane.b32.xlu0 %v4957, 16
      %v5345 = vpop.permute.xlu0 %5344
      %5346 = vrot.lane.b32.xlu0 %v4974, 16
      %v5347 = vpop.permute.xlu0 %5346
      %5348 = vrot.lane.b32.xlu0 %v4991, 16
      %v5349 = vpop.permute.xlu0 %5348
      %5350 = vrot.lane.b32.xlu0 %v5008, 16
      %v5351 = vpop.permute.xlu0 %5350
      %5352 = vrot.lane.b32.xlu0 %v5025, 16
      %v5353 = vpop.permute.xlu0 %5352
      %5354 = vrot.lane.b32.xlu0 %v5042, 16
      %v5355 = vpop.permute.xlu0 %5354
      %5356 = vrot.lane.b32.xlu0 %v5059, 16
      %v5357 = vpop.permute.xlu0 %5356
      %5358 = vrot.lane.b32.xlu0 %v5076, 16
      %v5359 = vpop.permute.xlu0 %5358
      %5360 = vrot.lane.b32.xlu0 %v5093, 16
      %v5361 = vpop.permute.xlu0 %5360
      %5362 = vrot.lane.b32.xlu0 %v5110, 16
      %v5363 = vpop.permute.xlu0 %5362
      %5364 = vrot.lane.b32.xlu0 %v5127, 16
      %v5365 = vpop.permute.xlu0 %5364
      %5366 = vrot.lane.b32.xlu0 %v5144, 16
      %v5367 = vpop.permute.xlu0 %5366
      %5368 = vrot.lane.b32.xlu0 %v5161, 16
      %v5369 = vpop.permute.xlu0 %5368
      %5370 = vrot.lane.b32.xlu0 %v5178, 16
      %v5371 = vpop.permute.xlu0 %5370
      %5372 = vrot.lane.b32.xlu0 %v5195, 16
      %v5373 = vpop.permute.xlu0 %5372
      %5374 = vrot.lane.b32.xlu0 %v5212, 16
      %v5375 = vpop.permute.xlu0 %5374
      %5376 = vrot.lane.b32.xlu0 %v5229, 16
      %v5377 = vpop.permute.xlu0 %5376
      %5378 = vrot.lane.b32.xlu0 %v5246, 16
      %v5379 = vpop.permute.xlu0 %5378
      %5380 = vrot.lane.b32.xlu0 %v5263, 16
      %v5381 = vpop.permute.xlu0 %5380
      %5382 = vrot.lane.b32.xlu0 %v5280, 16
      %v5383 = vpop.permute.xlu0 %5382
      %5384 = vrot.lane.b32.xlu0 %v5297, 16
      %v5385 = vpop.permute.xlu0 %5384
      %5386 = vrot.lane.b32.xlu0 %v5305, 16
      %v5387 = vpop.permute.xlu0 %5386
      %vm5429 = vcmask 162944
      %5430 = vst.msk [vmem:[#allocation2] sm:$0xff] %vm5429, %v5307
      %5431 = vst.msk [vmem:[#allocation2 + $0x8] sm:$0xff] %vm5429, %v5309
      %5432 = vst.msk [vmem:[#allocation2 + $0x10] sm:$0xff] %vm5429, %v5311
      %5433 = vst.msk [vmem:[#allocation2 + $0x18] sm:$0xff] %vm5429, %v5313
      %5434 = vst.msk [vmem:[#allocation2 + $0x20] sm:$0xff] %vm5429, %v5315
      %5435 = vst.msk [vmem:[#allocation2 + $0x28] sm:$0xff] %vm5429, %v5317
      %5436 = vst.msk [vmem:[#allocation2 + $0x30] sm:$0xff] %vm5429, %v5319
      %5437 = vst.msk [vmem:[#allocation2 + $0x38] sm:$0xff] %vm5429, %v5321
      %5438 = vst.msk [vmem:[#allocation2 + $0x40] sm:$0xff] %vm5429, %v5323
      %5439 = vst.msk [vmem:[#allocation2 + $0x48] sm:$0xff] %vm5429, %v5325
      %5440 = vst.msk [vmem:[#allocation2 + $0x50] sm:$0xff] %vm5429, %v5327
      %5441 = vst.msk [vmem:[#allocation2 + $0x58] sm:$0xff] %vm5429, %v5329
      %5442 = vst.msk [vmem:[#allocation2 + $0x60] sm:$0xff] %vm5429, %v5331
      %5443 = vst.msk [vmem:[#allocation2 + $0x68] sm:$0xff] %vm5429, %v5333
      %5444 = vst.msk [vmem:[#allocation2 + $0x70] sm:$0xff] %vm5429, %v5335
      %5445 = vst.msk [vmem:[#allocation2 + $0x78] sm:$0xff] %vm5429, %v5337
      %5446 = vst.msk [vmem:[#allocation2 + $0x80] sm:$0xff] %vm5429, %v5339
      %5447 = vst.msk [vmem:[#allocation2 + $0x88] sm:$0xff] %vm5429, %v5341
      %5448 = vst.msk [vmem:[#allocation2 + $0x90] sm:$0xff] %vm5429, %v5343
      %5449 = vst.msk [vmem:[#allocation2 + $0x98] sm:$0xff] %vm5429, %v5345
      %5450 = vst.msk [vmem:[#allocation2 + $0xa0] sm:$0xff] %vm5429, %v5347
      %5451 = vst.msk [vmem:[#allocation2 + $0xa8] sm:$0xff] %vm5429, %v5349
      %5452 = vst.msk [vmem:[#allocation2 + $0xb0] sm:$0xff] %vm5429, %v5351
      %5453 = vst.msk [vmem:[#allocation2 + $0xb8] sm:$0xff] %vm5429, %v5353
      %5454 = vst.msk [vmem:[#allocation2 + $0xc0] sm:$0xff] %vm5429, %v5355
      %5455 = vst.msk [vmem:[#allocation2 + $0xc8] sm:$0xff] %vm5429, %v5357
      %5456 = vst.msk [vmem:[#allocation2 + $0xd0] sm:$0xff] %vm5429, %v5359
      %5457 = vst.msk [vmem:[#allocation2 + $0xd8] sm:$0xff] %vm5429, %v5361
      %5458 = vst.msk [vmem:[#allocation2 + $0xe0] sm:$0xff] %vm5429, %v5363
      %5459 = vst.msk [vmem:[#allocation2 + $0xe8] sm:$0xff] %vm5429, %v5365
      %5460 = vst.msk [vmem:[#allocation2 + $0xf0] sm:$0xff] %vm5429, %v5367
      %5461 = vst.msk [vmem:[#allocation2 + $0xf8] sm:$0xff] %vm5429, %v5369
      %5462 = vst.msk [vmem:[#allocation2 + $0x100] sm:$0xff] %vm5429, %v5371
      %5463 = vst.msk [vmem:[#allocation2 + $0x108] sm:$0xff] %vm5429, %v5373
      %5464 = vst.msk [vmem:[#allocation2 + $0x110] sm:$0xff] %vm5429, %v5375
      %5465 = vst.msk [vmem:[#allocation2 + $0x118] sm:$0xff] %vm5429, %v5377
      %5466 = vst.msk [vmem:[#allocation2 + $0x120] sm:$0xff] %vm5429, %v5379
      %5467 = vst.msk [vmem:[#allocation2 + $0x128] sm:$0xff] %vm5429, %v5381
      %5468 = vst.msk [vmem:[#allocation2 + $0x130] sm:$0xff] %vm5429, %v5383
      %5469 = vst.msk [vmem:[#allocation2 + $0x138] sm:$0xff] %vm5429, %v5385
      %vm5470 = vcmask 158848
      %5471 = vst.msk [vmem:[#allocation2 + $0x140] sm:$0xf] %vm5470, %v5387
      %v5472 = vcombine.low %v1224, %v1234
      %v5473 = vcombine.low %v1241, %v1251
      %v5474 = vcombine.low %v1948, %v534
      %v5476 = vunpack.c.l.s4 1983009808
      %v5477 = vunpack.c.0.s8 %v5476
      %v5478 = vlaneseq
      %v5479 = vshrl.u32 %v5478, 7
      %v5480 = vsub.s32 %v5477, %v5479
      %v5481 = vrot.slane %v5474, %v5480
      %v5482 = vcombine.low %v5481, %v1268
      %v5483 = vcombine.low %v1275, %v1285
      %v5484 = vcombine.low %v559, %v1949
      %v5486 = vunpack.c.l.s4 1983009808
      %v5487 = vunpack.c.0.s8 %v5486
      %v5488 = vlaneseq
      %v5489 = vshrl.u32 %v5488, 7
      %v5490 = vsub.s32 %v5487, %v5489
      %v5491 = vrot.slane %v5484, %v5490
      %v5492 = vcombine.low %v5491, %v1302
      %v5493 = vcombine.low %v1309, %v1319
      %v5494 = vcombine.low %v1950, %v616
      %v5496 = vunpack.c.l.s4 1983009808
      %v5497 = vunpack.c.0.s8 %v5496
      %v5498 = vlaneseq
      %v5499 = vshrl.u32 %v5498, 7
      %v5500 = vsub.s32 %v5497, %v5499
      %v5501 = vrot.slane %v5494, %v5500
      %v5502 = vcombine.low %v1326, %v5501
      %v5503 = vcombine.low %v1343, %v1353
      %v5504 = vcombine.low %v641, %v1951
      %v5506 = vunpack.c.l.s4 1983009808
      %v5507 = vunpack.c.0.s8 %v5506
      %v5508 = vlaneseq
      %v5509 = vshrl.u32 %v5508, 7
      %v5510 = vsub.s32 %v5507, %v5509
      %v5511 = vrot.slane %v5504, %v5510
      %v5512 = vcombine.low %v1360, %v5511
      %v5513 = vcombine.low %v1377, %v1387
      %v5514 = vcombine.low %v1394, %v1404
      %v5515 = vcombine.low %v1952, %v698
      %v5517 = vunpack.c.l.s4 1983009808
      %v5518 = vunpack.c.0.s8 %v5517
      %v5519 = vlaneseq
      %v5520 = vshrl.u32 %v5519, 7
      %v5521 = vsub.s32 %v5518, %v5520
      %v5522 = vrot.slane %v5515, %v5521
      %v5523 = vcombine.low %v5522, %v1421
      %v5524 = vcombine.low %v1428, %v1438
      %v5525 = vcombine.low %v723, %v1953
      %v5527 = vunpack.c.l.s4 1983009808
      %v5528 = vunpack.c.0.s8 %v5527
      %v5529 = vlaneseq
      %v5530 = vshrl.u32 %v5529, 7
      %v5531 = vsub.s32 %v5528, %v5530
      %v5532 = vrot.slane %v5525, %v5531
      %v5533 = vcombine.low %v5532, %v1455
      %v5534 = vcombine.low %v1462, %v1472
      %v5535 = vcombine.low %v1954, %v780
      %v5537 = vunpack.c.l.s4 1983009808
      %v5538 = vunpack.c.0.s8 %v5537
      %v5539 = vlaneseq
      %v5540 = vshrl.u32 %v5539, 7
      %v5541 = vsub.s32 %v5538, %v5540
      %v5542 = vrot.slane %v5535, %v5541
      %v5543 = vcombine.low %v1479, %v5542
      %v5544 = vcombine.low %v1496, %v1506
      %v5545 = vcombine.low %v805, %v1955
      %v5547 = vunpack.c.l.s4 1983009808
      %v5548 = vunpack.c.0.s8 %v5547
      %v5549 = vlaneseq
      %v5550 = vshrl.u32 %v5549, 7
      %v5551 = vsub.s32 %v5548, %v5550
      %v5552 = vrot.slane %v5545, %v5551
      %v5553 = vcombine.low %v1513, %v5552
      %v5554 = vcombine.low %v1530, %v1540
      %v5555 = vcombine.low %v1547, %v1557
      %v5556 = vcombine.low %v1956, %v862
      %v5558 = vunpack.c.l.s4 1983009808
      %v5559 = vunpack.c.0.s8 %v5558
      %v5560 = vlaneseq
      %v5561 = vshrl.u32 %v5560, 7
      %v5562 = vsub.s32 %v5559, %v5561
      %v5563 = vrot.slane %v5556, %v5562
      %v5564 = vcombine.low %v5563, %v1574
      %v5565 = vcombine.low %v1581, %v1591
      %v5566 = vcombine.low %v887, %v1957
      %v5568 = vunpack.c.l.s4 1983009808
      %v5569 = vunpack.c.0.s8 %v5568
      %v5570 = vlaneseq
      %v5571 = vshrl.u32 %v5570, 7
      %v5572 = vsub.s32 %v5569, %v5571
      %v5573 = vrot.slane %v5566, %v5572
      %v5574 = vcombine.low %v5573, %v1608
      %v5575 = vcombine.low %v1615, %v1625
      %v5576 = vcombine.low %v1958, %v944
      %v5578 = vunpack.c.l.s4 1983009808
      %v5579 = vunpack.c.0.s8 %v5578
      %v5580 = vlaneseq
      %v5581 = vshrl.u32 %v5580, 7
      %v5582 = vsub.s32 %v5579, %v5581
      %v5583 = vrot.slane %v5576, %v5582
      %v5584 = vcombine.low %v1632, %v5583
      %v5585 = vcombine.low %v1649, %v1659
      %v5586 = vcombine.low %v969, %v1959
      %v5588 = vunpack.c.l.s4 1983009808
      %v5589 = vunpack.c.0.s8 %v5588
      %v5590 = vlaneseq
      %v5591 = vshrl.u32 %v5590, 7
      %v5592 = vsub.s32 %v5589, %v5591
      %v5593 = vrot.slane %v5586, %v5592
      %v5594 = vcombine.low %v1666, %v5593
      %v5595 = vcombine.low %v1683, %v1693
      %v5596 = vcombine.low %v1700, %v1710
      %v5597 = vcombine.low %v1960, %v1026
      %v5599 = vunpack.c.l.s4 1983009808
      %v5600 = vunpack.c.0.s8 %v5599
      %v5601 = vlaneseq
      %v5602 = vshrl.u32 %v5601, 7
      %v5603 = vsub.s32 %v5600, %v5602
      %v5604 = vrot.slane %v5597, %v5603
      %v5605 = vcombine.low %v5604, %v1727
      %v5606 = vcombine.low %v1734, %v1744
      %v5607 = vcombine.low %v1051, %v1961
      %v5609 = vunpack.c.l.s4 1983009808
      %v5610 = vunpack.c.0.s8 %v5609
      %v5611 = vlaneseq
      %v5612 = vshrl.u32 %v5611, 7
      %v5613 = vsub.s32 %v5610, %v5612
      %v5614 = vrot.slane %v5607, %v5613
      %v5615 = vcombine.low %v5614, %v1761
      %v5616 = vcombine.low %v1768, %v1778
      %v5617 = vcombine.low %v1962, %v1108
      %v5619 = vunpack.c.l.s4 1983009808
      %v5620 = vunpack.c.0.s8 %v5619
      %v5621 = vlaneseq
      %v5622 = vshrl.u32 %v5621, 7
      %v5623 = vsub.s32 %v5620, %v5622
      %v5624 = vrot.slane %v5617, %v5623
      %v5625 = vcombine.low %v1785, %v5624
      %v5626 = vcombine.low %v1802, %v1812
      %v5627 = vcombine.low %v1133, %v1963
      %v5629 = vunpack.c.l.s4 1983009808
      %v5630 = vunpack.c.0.s8 %v5629
      %v5631 = vlaneseq
      %v5632 = vshrl.u32 %v5631, 7
      %v5633 = vsub.s32 %v5630, %v5632
      %v5634 = vrot.slane %v5627, %v5633
      %v5635 = vcombine.low %v1819, %v5634
      %v5636 = vcombine.low %v1836, %v1846
      %v5637 = vcombine.low %v1853, %v1862
      %v5638 = vcombine.low %v1964, %v4202
      %v5639 = vcombine.low %v4201, %v4203
      %v5641 = vunpack.c.l.s4 1983009808
      %v5642 = vunpack.c.0.s8 %v5641
      %v5643 = vlaneseq
      %v5644 = vshrl.u32 %v5643, 7
      %v5645 = vsub.s32 %v5642, %v5644
      %v5646 = vrot.slane %v5638, %v5645
      %v5648 = vunpack.c.l.s4 1983009808
      %v5649 = vunpack.c.0.s8 %v5648
      %v5650 = vlaneseq
      %v5651 = vshrl.u32 %v5650, 7
      %v5652 = vsub.s32 %v5649, %v5651
      %v5653 = vrot.slane %v5639, %v5652
      %v5654 = vcombine.low %v5646, %v5653
      %v5655 = vcombine.low %v4211, %v4219
      %v5656 = vcombine.low %v4218, %v4220
      %v5658 = vunpack.c.l.s4 1983009808
      %v5659 = vunpack.c.0.s8 %v5658
      %v5660 = vlaneseq
      %v5661 = vshrl.u32 %v5660, 7
      %v5662 = vsub.s32 %v5659, %v5661
      %v5663 = vrot.slane %v5655, %v5662
      %v5665 = vunpack.c.l.s4 1983009808
      %v5666 = vunpack.c.0.s8 %v5665
      %v5667 = vlaneseq
      %v5668 = vshrl.u32 %v5667, 7
      %v5669 = vsub.s32 %v5666, %v5668
      %v5670 = vrot.slane %v5656, %v5669
      %v5671 = vcombine.low %v5663, %v5670
      %v5672 = vcombine.low %v4227, %v4589
      %v5674 = vunpack.c.l.s4 1983009808
      %v5675 = vunpack.c.0.s8 %v5674
      %v5676 = vlaneseq
      %v5677 = vshrl.u32 %v5676, 7
      %v5678 = vsub.s32 %v5675, %v5677
      %v5679 = vrot.slane %v5672, %v5678
      %5680 = vrot.lane.b32.xlu0 %v5472, 20
      %v5681 = vpop.permute.xlu0 %5680
      %5682 = vrot.lane.b32.xlu0 %v5473, 20
      %v5683 = vpop.permute.xlu0 %5682
      %5684 = vrot.lane.b32.xlu0 %v5482, 20
      %v5685 = vpop.permute.xlu0 %5684
      %5686 = vrot.lane.b32.xlu0 %v5483, 20
      %v5687 = vpop.permute.xlu0 %5686
      %5688 = vrot.lane.b32.xlu0 %v5492, 20
      %v5689 = vpop.permute.xlu0 %5688
      %5690 = vrot.lane.b32.xlu0 %v5493, 20
      %v5691 = vpop.permute.xlu0 %5690
      %5692 = vrot.lane.b32.xlu0 %v5502, 20
      %v5693 = vpop.permute.xlu0 %5692
      %5694 = vrot.lane.b32.xlu0 %v5503, 20
      %v5695 = vpop.permute.xlu0 %5694
      %5696 = vrot.lane.b32.xlu0 %v5512, 20
      %v5697 = vpop.permute.xlu0 %5696
      %5698 = vrot.lane.b32.xlu0 %v5513, 20
      %v5699 = vpop.permute.xlu0 %5698
      %5700 = vrot.lane.b32.xlu0 %v5514, 20
      %v5701 = vpop.permute.xlu0 %5700
      %5702 = vrot.lane.b32.xlu0 %v5523, 20
      %v5703 = vpop.permute.xlu0 %5702
      %5704 = vrot.lane.b32.xlu0 %v5524, 20
      %v5705 = vpop.permute.xlu0 %5704
      %5706 = vrot.lane.b32.xlu0 %v5533, 20
      %v5707 = vpop.permute.xlu0 %5706
      %5708 = vrot.lane.b32.xlu0 %v5534, 20
      %v5709 = vpop.permute.xlu0 %5708
      %5710 = vrot.lane.b32.xlu0 %v5543, 20
      %v5711 = vpop.permute.xlu0 %5710
      %5712 = vrot.lane.b32.xlu0 %v5544, 20
      %v5713 = vpop.permute.xlu0 %5712
      %5714 = vrot.lane.b32.xlu0 %v5553, 20
      %v5715 = vpop.permute.xlu0 %5714
      %5716 = vrot.lane.b32.xlu0 %v5554, 20
      %v5717 = vpop.permute.xlu0 %5716
      %5718 = vrot.lane.b32.xlu0 %v5555, 20
      %v5719 = vpop.permute.xlu0 %5718
      %5720 = vrot.lane.b32.xlu0 %v5564, 20
      %v5721 = vpop.permute.xlu0 %5720
      %5722 = vrot.lane.b32.xlu0 %v5565, 20
      %v5723 = vpop.permute.xlu0 %5722
      %5724 = vrot.lane.b32.xlu0 %v5574, 20
      %v5725 = vpop.permute.xlu0 %5724
      %5726 = vrot.lane.b32.xlu0 %v5575, 20
      %v5727 = vpop.permute.xlu0 %5726
      %5728 = vrot.lane.b32.xlu0 %v5584, 20
      %v5729 = vpop.permute.xlu0 %5728
      %5730 = vrot.lane.b32.xlu0 %v5585, 20
      %v5731 = vpop.permute.xlu0 %5730
      %5732 = vrot.lane.b32.xlu0 %v5594, 20
      %v5733 = vpop.permute.xlu0 %5732
      %5734 = vrot.lane.b32.xlu0 %v5595, 20
      %v5735 = vpop.permute.xlu0 %5734
      %5736 = vrot.lane.b32.xlu0 %v5596, 20
      %v5737 = vpop.permute.xlu0 %5736
      %5738 = vrot.lane.b32.xlu0 %v5605, 20
      %v5739 = vpop.permute.xlu0 %5738
      %5740 = vrot.lane.b32.xlu0 %v5606, 20
      %v5741 = vpop.permute.xlu0 %5740
      %5742 = vrot.lane.b32.xlu0 %v5615, 20
      %v5743 = vpop.permute.xlu0 %5742
      %5744 = vrot.lane.b32.xlu0 %v5616, 20
      %v5745 = vpop.permute.xlu0 %5744
      %5746 = vrot.lane.b32.xlu0 %v5625, 20
      %v5747 = vpop.permute.xlu0 %5746
      %5748 = vrot.lane.b32.xlu0 %v5626, 20
      %v5749 = vpop.permute.xlu0 %5748
      %5750 = vrot.lane.b32.xlu0 %v5635, 20
      %v5751 = vpop.permute.xlu0 %5750
      %5752 = vrot.lane.b32.xlu0 %v5636, 20
      %v5753 = vpop.permute.xlu0 %5752
      %5754 = vrot.lane.b32.xlu0 %v5637, 20
      %v5755 = vpop.permute.xlu0 %5754
      %5756 = vrot.lane.b32.xlu0 %v5654, 20
      %v5757 = vpop.permute.xlu0 %5756
      %5758 = vrot.lane.b32.xlu0 %v5671, 20
      %v5759 = vpop.permute.xlu0 %5758
      %5760 = vrot.lane.b32.xlu0 %v5679, 20
      %v5761 = vpop.permute.xlu0 %5760
      %vm5803 = vcmask 195744
      %5804 = vst.msk [vmem:[#allocation2] sm:$0xff] %vm5803, %v5681
      %5805 = vst.msk [vmem:[#allocation2 + $0x8] sm:$0xff] %vm5803, %v5683
      %5806 = vst.msk [vmem:[#allocation2 + $0x10] sm:$0xff] %vm5803, %v5685
      %5807 = vst.msk [vmem:[#allocation2 + $0x18] sm:$0xff] %vm5803, %v5687
      %5808 = vst.msk [vmem:[#allocation2 + $0x20] sm:$0xff] %vm5803, %v5689
      %5809 = vst.msk [vmem:[#allocation2 + $0x28] sm:$0xff] %vm5803, %v5691
      %5810 = vst.msk [vmem:[#allocation2 + $0x30] sm:$0xff] %vm5803, %v5693
      %5811 = vst.msk [vmem:[#allocation2 + $0x38] sm:$0xff] %vm5803, %v5695
      %5812 = vst.msk [vmem:[#allocation2 + $0x40] sm:$0xff] %vm5803, %v5697
      %5813 = vst.msk [vmem:[#allocation2 + $0x48] sm:$0xff] %vm5803, %v5699
      %5814 = vst.msk [vmem:[#allocation2 + $0x50] sm:$0xff] %vm5803, %v5701
      %5815 = vst.msk [vmem:[#allocation2 + $0x58] sm:$0xff] %vm5803, %v5703
      %5816 = vst.msk [vmem:[#allocation2 + $0x60] sm:$0xff] %vm5803, %v5705
      %5817 = vst.msk [vmem:[#allocation2 + $0x68] sm:$0xff] %vm5803, %v5707
      %5818 = vst.msk [vmem:[#allocation2 + $0x70] sm:$0xff] %vm5803, %v5709
      %5819 = vst.msk [vmem:[#allocation2 + $0x78] sm:$0xff] %vm5803, %v5711
      %5820 = vst.msk [vmem:[#allocation2 + $0x80] sm:$0xff] %vm5803, %v5713
      %5821 = vst.msk [vmem:[#allocation2 + $0x88] sm:$0xff] %vm5803, %v5715
      %5822 = vst.msk [vmem:[#allocation2 + $0x90] sm:$0xff] %vm5803, %v5717
      %5823 = vst.msk [vmem:[#allocation2 + $0x98] sm:$0xff] %vm5803, %v5719
      %5824 = vst.msk [vmem:[#allocation2 + $0xa0] sm:$0xff] %vm5803, %v5721
      %5825 = vst.msk [vmem:[#allocation2 + $0xa8] sm:$0xff] %vm5803, %v5723
      %5826 = vst.msk [vmem:[#allocation2 + $0xb0] sm:$0xff] %vm5803, %v5725
      %5827 = vst.msk [vmem:[#allocation2 + $0xb8] sm:$0xff] %vm5803, %v5727
      %5828 = vst.msk [vmem:[#allocation2 + $0xc0] sm:$0xff] %vm5803, %v5729
      %5829 = vst.msk [vmem:[#allocation2 + $0xc8] sm:$0xff] %vm5803, %v5731
      %5830 = vst.msk [vmem:[#allocation2 + $0xd0] sm:$0xff] %vm5803, %v5733
      %5831 = vst.msk [vmem:[#allocation2 + $0xd8] sm:$0xff] %vm5803, %v5735
      %5832 = vst.msk [vmem:[#allocation2 + $0xe0] sm:$0xff] %vm5803, %v5737
      %5833 = vst.msk [vmem:[#allocation2 + $0xe8] sm:$0xff] %vm5803, %v5739
      %5834 = vst.msk [vmem:[#allocation2 + $0xf0] sm:$0xff] %vm5803, %v5741
      %5835 = vst.msk [vmem:[#allocation2 + $0xf8] sm:$0xff] %vm5803, %v5743
      %5836 = vst.msk [vmem:[#allocation2 + $0x100] sm:$0xff] %vm5803, %v5745
      %5837 = vst.msk [vmem:[#allocation2 + $0x108] sm:$0xff] %vm5803, %v5747
      %5838 = vst.msk [vmem:[#allocation2 + $0x110] sm:$0xff] %vm5803, %v5749
      %5839 = vst.msk [vmem:[#allocation2 + $0x118] sm:$0xff] %vm5803, %v5751
      %5840 = vst.msk [vmem:[#allocation2 + $0x120] sm:$0xff] %vm5803, %v5753
      %5841 = vst.msk [vmem:[#allocation2 + $0x128] sm:$0xff] %vm5803, %v5755
      %5842 = vst.msk [vmem:[#allocation2 + $0x130] sm:$0xff] %vm5803, %v5757
      %5843 = vst.msk [vmem:[#allocation2 + $0x138] sm:$0xff] %vm5803, %v5759
      %vm5844 = vcmask 191648
      %5845 = vst.msk [vmem:[#allocation2 + $0x140] sm:$0xf] %vm5844, %v5761
      %v5849 = vcombine.high %v380, %v380
      %v5851 = vunpack.c.l.s4 1983009808
      %v5852 = vunpack.c.0.s8 %v5851
      %v5853 = vlaneseq
      %v5854 = vshrl.u32 %v5853, 7
      %v5855 = vsub.s32 %v5852, %v5854
      %v5856 = vrot.slane %v380, %v5855
      %v5858 = vunpack.c.l.s4 1983009808
      %v5859 = vunpack.c.0.s8 %v5858
      %v5860 = vlaneseq
      %v5861 = vshrl.u32 %v5860, 7
      %v5862 = vsub.s32 %v5859, %v5861
      %v5863 = vrot.slane %v5849, %v5862
      %v5864 = vcombine.high %v5856, %v5856
      %v5865 = vcombine.high %v5863, %v5863
      %v5866 = vcombine.high %v381, %v381
      %v5868 = vunpack.c.l.s4 1983009808
      %v5869 = vunpack.c.0.s8 %v5868
      %v5870 = vlaneseq
      %v5871 = vshrl.u32 %v5870, 7
      %v5872 = vsub.s32 %v5869, %v5871
      %v5873 = vrot.slane %v381, %v5872
      %v5875 = vunpack.c.l.s4 1983009808
      %v5876 = vunpack.c.0.s8 %v5875
      %v5877 = vlaneseq
      %v5878 = vshrl.u32 %v5877, 7
      %v5879 = vsub.s32 %v5876, %v5878
      %v5880 = vrot.slane %v5866, %v5879
      %v5881 = vcombine.high %v5873, %v5873
      %v5882 = vcombine.high %v5880, %v5880
      %v5884 = vunpack.c.l.s4 1983009808
      %v5885 = vunpack.c.0.s8 %v5884
      %v5886 = vlaneseq
      %v5887 = vshrl.u32 %v5886, 7
      %v5888 = vsub.s32 %v5885, %v5887
      %v5889 = vrot.slane %v382, %v5888
      %v5890 = vcombine.low %v1258, %v1268
      %v5891 = vcombine.low %v1292, %v1302
      %v5892 = vcombine.low %v1326, %v1336
      %v5893 = vcombine.low %v1360, %v1370
      %v5894 = vcombine.low %v1411, %v1421
      %v5895 = vcombine.low %v1445, %v1455
      %v5896 = vcombine.low %v1479, %v1489
      %v5897 = vcombine.low %v1513, %v1523
      %v5898 = vcombine.low %v1564, %v1574
      %v5899 = vcombine.low %v1598, %v1608
      %v5900 = vcombine.low %v1632, %v1642
      %v5901 = vcombine.low %v1666, %v1676
      %v5902 = vcombine.low %v1717, %v1727
      %v5903 = vcombine.low %v1751, %v1761
      %v5904 = vcombine.low %v1785, %v1795
      %v5905 = vcombine.low %v1819, %v1829
      %v5906 = vcombine.low %v4194, %v4202
      %v5908 = vunpack.c.l.s4 1983009808
      %v5909 = vunpack.c.0.s8 %v5908
      %v5910 = vlaneseq
      %v5911 = vshrl.u32 %v5910, 7
      %v5912 = vsub.s32 %v5909, %v5911
      %v5913 = vrot.slane %v5906, %v5912
      %v5914 = vcombine.low %v5913, %v5653
      %v5915 = vcombine.low %v4227, %v5856
      %v5916 = vcombine.low %v5864, %v5863
      %v5918 = vunpack.c.l.s4 1983009808
      %v5919 = vunpack.c.0.s8 %v5918
      %v5920 = vlaneseq
      %v5921 = vshrl.u32 %v5920, 7
      %v5922 = vsub.s32 %v5919, %v5921
      %v5923 = vrot.slane %v5915, %v5922
      %v5925 = vunpack.c.l.s4 1983009808
      %v5926 = vunpack.c.0.s8 %v5925
      %v5927 = vlaneseq
      %v5928 = vshrl.u32 %v5927, 7
      %v5929 = vsub.s32 %v5926, %v5928
      %v5930 = vrot.slane %v5916, %v5929
      %v5931 = vcombine.low %v5923, %v5930
      %v5932 = vcombine.low %v5865, %v5873
      %v5933 = vcombine.low %v5881, %v5880
      %v5935 = vunpack.c.l.s4 1983009808
      %v5936 = vunpack.c.0.s8 %v5935
      %v5937 = vlaneseq
      %v5938 = vshrl.u32 %v5937, 7
      %v5939 = vsub.s32 %v5936, %v5938
      %v5940 = vrot.slane %v5932, %v5939
      %v5942 = vunpack.c.l.s4 1983009808
      %v5943 = vunpack.c.0.s8 %v5942
      %v5944 = vlaneseq
      %v5945 = vshrl.u32 %v5944, 7
      %v5946 = vsub.s32 %v5943, %v5945
      %v5947 = vrot.slane %v5933, %v5946
      %v5948 = vcombine.low %v5940, %v5947
      %v5949 = vcombine.low %v5882, %v5889
      %v5951 = vunpack.c.l.s4 1983009808
      %v5952 = vunpack.c.0.s8 %v5951
      %v5953 = vlaneseq
      %v5954 = vshrl.u32 %v5953, 7
      %v5955 = vsub.s32 %v5952, %v5954
      %v5956 = vrot.slane %v5949, %v5955
      %5957 = vrot.lane.b32.xlu0 %v5890, 24
      %v5958 = vpop.permute.xlu0 %5957
      %5959 = vrot.lane.b32.xlu0 %v5483, 24
      %v5960 = vpop.permute.xlu0 %5959
      %5961 = vrot.lane.b32.xlu0 %v5891, 24
      %v5962 = vpop.permute.xlu0 %5961
      %5963 = vrot.lane.b32.xlu0 %v5493, 24
      %v5964 = vpop.permute.xlu0 %5963
      %5965 = vrot.lane.b32.xlu0 %v5892, 24
      %v5966 = vpop.permute.xlu0 %5965
      %5967 = vrot.lane.b32.xlu0 %v5503, 24
      %v5968 = vpop.permute.xlu0 %5967
      %5969 = vrot.lane.b32.xlu0 %v5893, 24
      %v5970 = vpop.permute.xlu0 %5969
      %5971 = vrot.lane.b32.xlu0 %v5513, 24
      %v5972 = vpop.permute.xlu0 %5971
      %5973 = vrot.lane.b32.xlu0 %v5514, 24
      %v5974 = vpop.permute.xlu0 %5973
      %5975 = vrot.lane.b32.xlu0 %v5894, 24
      %v5976 = vpop.permute.xlu0 %5975
      %5977 = vrot.lane.b32.xlu0 %v5524, 24
      %v5978 = vpop.permute.xlu0 %5977
      %5979 = vrot.lane.b32.xlu0 %v5895, 24
      %v5980 = vpop.permute.xlu0 %5979
      %5981 = vrot.lane.b32.xlu0 %v5534, 24
      %v5982 = vpop.permute.xlu0 %5981
      %5983 = vrot.lane.b32.xlu0 %v5896, 24
      %v5984 = vpop.permute.xlu0 %5983
      %5985 = vrot.lane.b32.xlu0 %v5544, 24
      %v5986 = vpop.permute.xlu0 %5985
      %5987 = vrot.lane.b32.xlu0 %v5897, 24
      %v5988 = vpop.permute.xlu0 %5987
      %5989 = vrot.lane.b32.xlu0 %v5554, 24
      %v5990 = vpop.permute.xlu0 %5989
      %5991 = vrot.lane.b32.xlu0 %v5555, 24
      %v5992 = vpop.permute.xlu0 %5991
      %5993 = vrot.lane.b32.xlu0 %v5898, 24
      %v5994 = vpop.permute.xlu0 %5993
      %5995 = vrot.lane.b32.xlu0 %v5565, 24
      %v5996 = vpop.permute.xlu0 %5995
      %5997 = vrot.lane.b32.xlu0 %v5899, 24
      %v5998 = vpop.permute.xlu0 %5997
      %5999 = vrot.lane.b32.xlu0 %v5575, 24
      %v6000 = vpop.permute.xlu0 %5999
      %6001 = vrot.lane.b32.xlu0 %v5900, 24
      %v6002 = vpop.permute.xlu0 %6001
      %6003 = vrot.lane.b32.xlu0 %v5585, 24
      %v6004 = vpop.permute.xlu0 %6003
      %6005 = vrot.lane.b32.xlu0 %v5901, 24
      %v6006 = vpop.permute.xlu0 %6005
      %6007 = vrot.lane.b32.xlu0 %v5595, 24
      %v6008 = vpop.permute.xlu0 %6007
      %6009 = vrot.lane.b32.xlu0 %v5596, 24
      %v6010 = vpop.permute.xlu0 %6009
      %6011 = vrot.lane.b32.xlu0 %v5902, 24
      %v6012 = vpop.permute.xlu0 %6011
      %6013 = vrot.lane.b32.xlu0 %v5606, 24
      %v6014 = vpop.permute.xlu0 %6013
      %6015 = vrot.lane.b32.xlu0 %v5903, 24
      %v6016 = vpop.permute.xlu0 %6015
      %6017 = vrot.lane.b32.xlu0 %v5616, 24
      %v6018 = vpop.permute.xlu0 %6017
      %6019 = vrot.lane.b32.xlu0 %v5904, 24
      %v6020 = vpop.permute.xlu0 %6019
      %6021 = vrot.lane.b32.xlu0 %v5626, 24
      %v6022 = vpop.permute.xlu0 %6021
      %6023 = vrot.lane.b32.xlu0 %v5905, 24
      %v6024 = vpop.permute.xlu0 %6023
      %6025 = vrot.lane.b32.xlu0 %v5636, 24
      %v6026 = vpop.permute.xlu0 %6025
      %6027 = vrot.lane.b32.xlu0 %v5637, 24
      %v6028 = vpop.permute.xlu0 %6027
      %6029 = vrot.lane.b32.xlu0 %v5914, 24
      %v6030 = vpop.permute.xlu0 %6029
      %6031 = vrot.lane.b32.xlu0 %v5671, 24
      %v6032 = vpop.permute.xlu0 %6031
      %6033 = vrot.lane.b32.xlu0 %v5931, 24
      %v6034 = vpop.permute.xlu0 %6033
      %6035 = vrot.lane.b32.xlu0 %v5948, 24
      %v6036 = vpop.permute.xlu0 %6035
      %6037 = vrot.lane.b32.xlu0 %v5956, 24
      %v6038 = vpop.permute.xlu0 %6037
      %vm6080 = vcmask 228544
      %6081 = vst.msk [vmem:[#allocation2] sm:$0xff] %vm6080, %v5958
      %6082 = vst.msk [vmem:[#allocation2 + $0x8] sm:$0xff] %vm6080, %v5960
      %6083 = vst.msk [vmem:[#allocation2 + $0x10] sm:$0xff] %vm6080, %v5962
      %6084 = vst.msk [vmem:[#allocation2 + $0x18] sm:$0xff] %vm6080, %v5964
      %6085 = vst.msk [vmem:[#allocation2 + $0x20] sm:$0xff] %vm6080, %v5966
      %6086 = vst.msk [vmem:[#allocation2 + $0x28] sm:$0xff] %vm6080, %v5968
      %6087 = vst.msk [vmem:[#allocation2 + $0x30] sm:$0xff] %vm6080, %v5970
      %6088 = vst.msk [vmem:[#allocation2 + $0x38] sm:$0xff] %vm6080, %v5972
      %6089 = vst.msk [vmem:[#allocation2 + $0x40] sm:$0xff] %vm6080, %v5974
      %6090 = vst.msk [vmem:[#allocation2 + $0x48] sm:$0xff] %vm6080, %v5976
      %6091 = vst.msk [vmem:[#allocation2 + $0x50] sm:$0xff] %vm6080, %v5978
      %6092 = vst.msk [vmem:[#allocation2 + $0x58] sm:$0xff] %vm6080, %v5980
      %6093 = vst.msk [vmem:[#allocation2 + $0x60] sm:$0xff] %vm6080, %v5982
      %6094 = vst.msk [vmem:[#allocation2 + $0x68] sm:$0xff] %vm6080, %v5984
      %6095 = vst.msk [vmem:[#allocation2 + $0x70] sm:$0xff] %vm6080, %v5986
      %6096 = vst.msk [vmem:[#allocation2 + $0x78] sm:$0xff] %vm6080, %v5988
      %6097 = vst.msk [vmem:[#allocation2 + $0x80] sm:$0xff] %vm6080, %v5990
      %6098 = vst.msk [vmem:[#allocation2 + $0x88] sm:$0xff] %vm6080, %v5992
      %6099 = vst.msk [vmem:[#allocation2 + $0x90] sm:$0xff] %vm6080, %v5994
      %6100 = vst.msk [vmem:[#allocation2 + $0x98] sm:$0xff] %vm6080, %v5996
      %6101 = vst.msk [vmem:[#allocation2 + $0xa0] sm:$0xff] %vm6080, %v5998
      %6102 = vst.msk [vmem:[#allocation2 + $0xa8] sm:$0xff] %vm6080, %v6000
      %6103 = vst.msk [vmem:[#allocation2 + $0xb0] sm:$0xff] %vm6080, %v6002
      %6104 = vst.msk [vmem:[#allocation2 + $0xb8] sm:$0xff] %vm6080, %v6004
      %6105 = vst.msk [vmem:[#allocation2 + $0xc0] sm:$0xff] %vm6080, %v6006
      %6106 = vst.msk [vmem:[#allocation2 + $0xc8] sm:$0xff] %vm6080, %v6008
      %6107 = vst.msk [vmem:[#allocation2 + $0xd0] sm:$0xff] %vm6080, %v6010
      %6108 = vst.msk [vmem:[#allocation2 + $0xd8] sm:$0xff] %vm6080, %v6012
      %6109 = vst.msk [vmem:[#allocation2 + $0xe0] sm:$0xff] %vm6080, %v6014
      %6110 = vst.msk [vmem:[#allocation2 + $0xe8] sm:$0xff] %vm6080, %v6016
      %6111 = vst.msk [vmem:[#allocation2 + $0xf0] sm:$0xff] %vm6080, %v6018
      %6112 = vst.msk [vmem:[#allocation2 + $0xf8] sm:$0xff] %vm6080, %v6020
      %6113 = vst.msk [vmem:[#allocation2 + $0x100] sm:$0xff] %vm6080, %v6022
      %6114 = vst.msk [vmem:[#allocation2 + $0x108] sm:$0xff] %vm6080, %v6024
      %6115 = vst.msk [vmem:[#allocation2 + $0x110] sm:$0xff] %vm6080, %v6026
      %6116 = vst.msk [vmem:[#allocation2 + $0x118] sm:$0xff] %vm6080, %v6028
      %6117 = vst.msk [vmem:[#allocation2 + $0x120] sm:$0xff] %vm6080, %v6030
      %6118 = vst.msk [vmem:[#allocation2 + $0x128] sm:$0xff] %vm6080, %v6032
      %6119 = vst.msk [vmem:[#allocation2 + $0x130] sm:$0xff] %vm6080, %v6034
      %6120 = vst.msk [vmem:[#allocation2 + $0x138] sm:$0xff] %vm6080, %v6036
      %vm6121 = vcmask 224448
      %6122 = vst.msk [vmem:[#allocation2 + $0x140] sm:$0xf] %vm6121, %v6038
      %v6123 = vcombine.high %v5889, %v5889
      %v6124 = vrot.slane %v5856, 7
      %v6125 = vrot.slane %v6124, 2
      %v6126 = vrot.slane %v5864, 7
      %v6127 = vsel %vm1971, %v6125, %v6126
      %v6128 = vrot.slane %v6126, 2
      %v6129 = vrot.slane %v5863, 7
      %v6130 = vsel %vm1971, %v6128, %v6129
      %v6131 = vrot.slane %v6129, 2
      %v6132 = vrot.slane %v5865, 7
      %v6133 = vsel %vm1971, %v6131, %v6132
      %v6134 = vrot.slane %v6132, 2
      %v6135 = vrot.slane %v5873, 7
      %v6136 = vsel %vm1971, %v6134, %v6135
      %v6137 = vrot.slane %v6135, 2
      %v6138 = vrot.slane %v5881, 7
      %v6139 = vsel %vm1971, %v6137, %v6138
      %v6140 = vrot.slane %v6138, 2
      %v6141 = vrot.slane %v5880, 7
      %v6142 = vsel %vm1971, %v6140, %v6141
      %v6143 = vrot.slane %v6141, 2
      %v6144 = vrot.slane %v5882, 7
      %v6145 = vsel %vm1971, %v6143, %v6144
      %v6146 = vrot.slane %v6144, 2
      %v6147 = vrot.slane %v5889, 7
      %v6148 = vsel %vm1971, %v6146, %v6147
      %v6149 = vrot.slane %v6147, 2
      %v6150 = vrot.slane %v6123, 7
      %v6151 = vsel %vm1971, %v6149, %v6150
      %v6152 = vcombine.low %v2559, %v2569
      %v6153 = vcombine.low %v2576, %v2586
      %v6154 = vcombine.low %v2593, %v2603
      %v6155 = vcombine.low %v2610, %v2620
      %v6156 = vcombine.low %v2627, %v2637
      %v6157 = vcombine.low %v2644, %v2654
      %v6158 = vcombine.low %v2661, %v2671
      %v6159 = vcombine.low %v2678, %v2688
      %v6160 = vcombine.low %v2695, %v2705
      %v6161 = vcombine.low %v2712, %v2722
      %v6162 = vcombine.low %v2729, %v2739
      %v6163 = vcombine.low %v2746, %v2756
      %v6164 = vcombine.low %v2763, %v2773
      %v6165 = vcombine.low %v2780, %v2790
      %v6166 = vcombine.low %v2797, %v2807
      %v6167 = vcombine.low %v2814, %v2824
      %v6168 = vcombine.low %v2831, %v2841
      %v6169 = vcombine.low %v2848, %v2858
      %v6170 = vcombine.low %v2865, %v2875
      %v6171 = vcombine.low %v2882, %v2892
      %v6172 = vcombine.low %v2899, %v2909
      %v6173 = vcombine.low %v2916, %v2926
      %v6174 = vcombine.low %v2933, %v2943
      %v6175 = vcombine.low %v2950, %v2960
      %v6176 = vcombine.low %v2967, %v2977
      %v6177 = vcombine.low %v2984, %v2994
      %v6178 = vcombine.low %v3001, %v3011
      %v6179 = vcombine.low %v3018, %v3028
      %v6180 = vcombine.low %v3035, %v3045
      %v6181 = vcombine.low %v3052, %v3062
      %v6182 = vcombine.low %v3069, %v3079
      %v6183 = vcombine.low %v3086, %v3096
      %v6184 = vcombine.low %v3103, %v3113
      %v6185 = vcombine.low %v3120, %v3130
      %v6186 = vcombine.low %v3137, %v3147
      %v6187 = vcombine.low %v3154, %v3163
      %v6188 = vcombine.low %v4593, %v4596
      %v6189 = vcombine.low %v4599, %v4602
      %v6191 = vunpack.c.l.s4 1983009808
      %v6192 = vunpack.c.0.s8 %v6191
      %v6193 = vlaneseq
      %v6194 = vshrl.u32 %v6193, 7
      %v6195 = vsub.s32 %v6192, %v6194
      %v6196 = vrot.slane %v6188, %v6195
      %v6198 = vunpack.c.l.s4 1983009808
      %v6199 = vunpack.c.0.s8 %v6198
      %v6200 = vlaneseq
      %v6201 = vshrl.u32 %v6200, 7
      %v6202 = vsub.s32 %v6199, %v6201
      %v6203 = vrot.slane %v6189, %v6202
      %v6204 = vcombine.low %v6196, %v6203
      %v6205 = vcombine.low %v4605, %v4608
      %v6206 = vcombine.low %v4611, %v4614
      %v6208 = vunpack.c.l.s4 1983009808
      %v6209 = vunpack.c.0.s8 %v6208
      %v6210 = vlaneseq
      %v6211 = vshrl.u32 %v6210, 7
      %v6212 = vsub.s32 %v6209, %v6211
      %v6213 = vrot.slane %v6205, %v6212
      %v6215 = vunpack.c.l.s4 1983009808
      %v6216 = vunpack.c.0.s8 %v6215
      %v6217 = vlaneseq
      %v6218 = vshrl.u32 %v6217, 7
      %v6219 = vsub.s32 %v6216, %v6218
      %v6220 = vrot.slane %v6206, %v6219
      %v6221 = vcombine.low %v6213, %v6220
      %v6222 = vcombine.low %v4617, %v6127
      %v6223 = vcombine.low %v6130, %v6133
      %v6225 = vunpack.c.l.s4 1983009808
      %v6226 = vunpack.c.0.s8 %v6225
      %v6227 = vlaneseq
      %v6228 = vshrl.u32 %v6227, 7
      %v6229 = vsub.s32 %v6226, %v6228
      %v6230 = vrot.slane %v6222, %v6229
      %v6232 = vunpack.c.l.s4 1983009808
      %v6233 = vunpack.c.0.s8 %v6232
      %v6234 = vlaneseq
      %v6235 = vshrl.u32 %v6234, 7
      %v6236 = vsub.s32 %v6233, %v6235
      %v6237 = vrot.slane %v6223, %v6236
      %v6238 = vcombine.low %v6230, %v6237
      %v6239 = vcombine.low %v6136, %v6139
      %v6240 = vcombine.low %v6142, %v6145
      %v6242 = vunpack.c.l.s4 1983009808
      %v6243 = vunpack.c.0.s8 %v6242
      %v6244 = vlaneseq
      %v6245 = vshrl.u32 %v6244, 7
      %v6246 = vsub.s32 %v6243, %v6245
      %v6247 = vrot.slane %v6239, %v6246
      %v6249 = vunpack.c.l.s4 1983009808
      %v6250 = vunpack.c.0.s8 %v6249
      %v6251 = vlaneseq
      %v6252 = vshrl.u32 %v6251, 7
      %v6253 = vsub.s32 %v6250, %v6252
      %v6254 = vrot.slane %v6240, %v6253
      %v6255 = vcombine.low %v6247, %v6254
      %v6256 = vcombine.low %v6148, %v6151
      %v6258 = vunpack.c.l.s4 1983009808
      %v6259 = vunpack.c.0.s8 %v6258
      %v6260 = vlaneseq
      %v6261 = vshrl.u32 %v6260, 7
      %v6262 = vsub.s32 %v6259, %v6261
      %v6263 = vrot.slane %v6256, %v6262
      %6264 = vrot.lane.b32.xlu0 %v6152, 28
      %v6265 = vpop.permute.xlu0 %6264
      %6266 = vrot.lane.b32.xlu0 %v6153, 28
      %v6267 = vpop.permute.xlu0 %6266
      %6268 = vrot.lane.b32.xlu0 %v6154, 28
      %v6269 = vpop.permute.xlu0 %6268
      %6270 = vrot.lane.b32.xlu0 %v6155, 28
      %v6271 = vpop.permute.xlu0 %6270
      %6272 = vrot.lane.b32.xlu0 %v6156, 28
      %v6273 = vpop.permute.xlu0 %6272
      %6274 = vrot.lane.b32.xlu0 %v6157, 28
      %v6275 = vpop.permute.xlu0 %6274
      %6276 = vrot.lane.b32.xlu0 %v6158, 28
      %v6277 = vpop.permute.xlu0 %6276
      %6278 = vrot.lane.b32.xlu0 %v6159, 28
      %v6279 = vpop.permute.xlu0 %6278
      %6280 = vrot.lane.b32.xlu0 %v6160, 28
      %v6281 = vpop.permute.xlu0 %6280
      %6282 = vrot.lane.b32.xlu0 %v6161, 28
      %v6283 = vpop.permute.xlu0 %6282
      %6284 = vrot.lane.b32.xlu0 %v6162, 28
      %v6285 = vpop.permute.xlu0 %6284
      %6286 = vrot.lane.b32.xlu0 %v6163, 28
      %v6287 = vpop.permute.xlu0 %6286
      %6288 = vrot.lane.b32.xlu0 %v6164, 28
      %v6289 = vpop.permute.xlu0 %6288
      %6290 = vrot.lane.b32.xlu0 %v6165, 28
      %v6291 = vpop.permute.xlu0 %6290
      %6292 = vrot.lane.b32.xlu0 %v6166, 28
      %v6293 = vpop.permute.xlu0 %6292
      %6294 = vrot.lane.b32.xlu0 %v6167, 28
      %v6295 = vpop.permute.xlu0 %6294
      %6296 = vrot.lane.b32.xlu0 %v6168, 28
      %v6297 = vpop.permute.xlu0 %6296
      %6298 = vrot.lane.b32.xlu0 %v6169, 28
      %v6299 = vpop.permute.xlu0 %6298
      %6300 = vrot.lane.b32.xlu0 %v6170, 28
      %v6301 = vpop.permute.xlu0 %6300
      %6302 = vrot.lane.b32.xlu0 %v6171, 28
      %v6303 = vpop.permute.xlu0 %6302
      %6304 = vrot.lane.b32.xlu0 %v6172, 28
      %v6305 = vpop.permute.xlu0 %6304
      %6306 = vrot.lane.b32.xlu0 %v6173, 28
      %v6307 = vpop.permute.xlu0 %6306
      %6308 = vrot.lane.b32.xlu0 %v6174, 28
      %v6309 = vpop.permute.xlu0 %6308
      %6310 = vrot.lane.b32.xlu0 %v6175, 28
      %v6311 = vpop.permute.xlu0 %6310
      %6312 = vrot.lane.b32.xlu0 %v6176, 28
      %v6313 = vpop.permute.xlu0 %6312
      %6314 = vrot.lane.b32.xlu0 %v6177, 28
      %v6315 = vpop.permute.xlu0 %6314
      %6316 = vrot.lane.b32.xlu0 %v6178, 28
      %v6317 = vpop.permute.xlu0 %6316
      %6318 = vrot.lane.b32.xlu0 %v6179, 28
      %v6319 = vpop.permute.xlu0 %6318
      %6320 = vrot.lane.b32.xlu0 %v6180, 28
      %v6321 = vpop.permute.xlu0 %6320
      %6322 = vrot.lane.b32.xlu0 %v6181, 28
      %v6323 = vpop.permute.xlu0 %6322
      %6324 = vrot.lane.b32.xlu0 %v6182, 28
      %v6325 = vpop.permute.xlu0 %6324
      %6326 = vrot.lane.b32.xlu0 %v6183, 28
      %v6327 = vpop.permute.xlu0 %6326
      %6328 = vrot.lane.b32.xlu0 %v6184, 28
      %v6329 = vpop.permute.xlu0 %6328
      %6330 = vrot.lane.b32.xlu0 %v6185, 28
      %v6331 = vpop.permute.xlu0 %6330
      %6332 = vrot.lane.b32.xlu0 %v6186, 28
      %v6333 = vpop.permute.xlu0 %6332
      %6334 = vrot.lane.b32.xlu0 %v6187, 28
      %v6335 = vpop.permute.xlu0 %6334
      %6336 = vrot.lane.b32.xlu0 %v6204, 28
      %v6337 = vpop.permute.xlu0 %6336
      %6338 = vrot.lane.b32.xlu0 %v6221, 28
      %v6339 = vpop.permute.xlu0 %6338
      %6340 = vrot.lane.b32.xlu0 %v6238, 28
      %v6341 = vpop.permute.xlu0 %6340
      %6342 = vrot.lane.b32.xlu0 %v6255, 28
      %v6343 = vpop.permute.xlu0 %6342
      %6344 = vrot.lane.b32.xlu0 %v6263, 28
      %v6345 = vpop.permute.xlu0 %6344
      %vm6387 = vcmask 261344
      %6388 = vst.msk [vmem:[#allocation2] sm:$0xff] %vm6387, %v6265
      %6389 = vst.msk [vmem:[#allocation2 + $0x8] sm:$0xff] %vm6387, %v6267
      %6390 = vst.msk [vmem:[#allocation2 + $0x10] sm:$0xff] %vm6387, %v6269
      %6391 = vst.msk [vmem:[#allocation2 + $0x18] sm:$0xff] %vm6387, %v6271
      %6392 = vst.msk [vmem:[#allocation2 + $0x20] sm:$0xff] %vm6387, %v6273
      %6393 = vst.msk [vmem:[#allocation2 + $0x28] sm:$0xff] %vm6387, %v6275
      %6394 = vst.msk [vmem:[#allocation2 + $0x30] sm:$0xff] %vm6387, %v6277
      %6395 = vst.msk [vmem:[#allocation2 + $0x38] sm:$0xff] %vm6387, %v6279
      %6396 = vst.msk [vmem:[#allocation2 + $0x40] sm:$0xff] %vm6387, %v6281
      %6397 = vst.msk [vmem:[#allocation2 + $0x48] sm:$0xff] %vm6387, %v6283
      %6398 = vst.msk [vmem:[#allocation2 + $0x50] sm:$0xff] %vm6387, %v6285
      %6399 = vst.msk [vmem:[#allocation2 + $0x58] sm:$0xff] %vm6387, %v6287
      %6400 = vst.msk [vmem:[#allocation2 + $0x60] sm:$0xff] %vm6387, %v6289
      %6401 = vst.msk [vmem:[#allocation2 + $0x68] sm:$0xff] %vm6387, %v6291
      %6402 = vst.msk [vmem:[#allocation2 + $0x70] sm:$0xff] %vm6387, %v6293
      %6403 = vst.msk [vmem:[#allocation2 + $0x78] sm:$0xff] %vm6387, %v6295
      %6404 = vst.msk [vmem:[#allocation2 + $0x80] sm:$0xff] %vm6387, %v6297
      %6405 = vst.msk [vmem:[#allocation2 + $0x88] sm:$0xff] %vm6387, %v6299
      %6406 = vst.msk [vmem:[#allocation2 + $0x90] sm:$0xff] %vm6387, %v6301
      %6407 = vst.msk [vmem:[#allocation2 + $0x98] sm:$0xff] %vm6387, %v6303
      %6408 = vst.msk [vmem:[#allocation2 + $0xa0] sm:$0xff] %vm6387, %v6305
      %6409 = vst.msk [vmem:[#allocation2 + $0xa8] sm:$0xff] %vm6387, %v6307
      %6410 = vst.msk [vmem:[#allocation2 + $0xb0] sm:$0xff] %vm6387, %v6309
      %6411 = vst.msk [vmem:[#allocation2 + $0xb8] sm:$0xff] %vm6387, %v6311
      %6412 = vst.msk [vmem:[#allocation2 + $0xc0] sm:$0xff] %vm6387, %v6313
      %6413 = vst.msk [vmem:[#allocation2 + $0xc8] sm:$0xff] %vm6387, %v6315
      %6414 = vst.msk [vmem:[#allocation2 + $0xd0] sm:$0xff] %vm6387, %v6317
      %6415 = vst.msk [vmem:[#allocation2 + $0xd8] sm:$0xff] %vm6387, %v6319
      %6416 = vst.msk [vmem:[#allocation2 + $0xe0] sm:$0xff] %vm6387, %v6321
      %6417 = vst.msk [vmem:[#allocation2 + $0xe8] sm:$0xff] %vm6387, %v6323
      %6418 = vst.msk [vmem:[#allocation2 + $0xf0] sm:$0xff] %vm6387, %v6325
      %6419 = vst.msk [vmem:[#allocation2 + $0xf8] sm:$0xff] %vm6387, %v6327
      %6420 = vst.msk [vmem:[#allocation2 + $0x100] sm:$0xff] %vm6387, %v6329
      %6421 = vst.msk [vmem:[#allocation2 + $0x108] sm:$0xff] %vm6387, %v6331
      %6422 = vst.msk [vmem:[#allocation2 + $0x110] sm:$0xff] %vm6387, %v6333
      %6423 = vst.msk [vmem:[#allocation2 + $0x118] sm:$0xff] %vm6387, %v6335
      %6424 = vst.msk [vmem:[#allocation2 + $0x120] sm:$0xff] %vm6387, %v6337
      %6425 = vst.msk [vmem:[#allocation2 + $0x128] sm:$0xff] %vm6387, %v6339
      %6426 = vst.msk [vmem:[#allocation2 + $0x130] sm:$0xff] %vm6387, %v6341
      %6427 = vst.msk [vmem:[#allocation2 + $0x138] sm:$0xff] %vm6387, %v6343
      %vm6428 = vcmask 257248
      %6429 = vst.msk [vmem:[#allocation2 + $0x140] sm:$0xf] %vm6428, %v6345
      %v6430 = vcombine.low %v3413, %v3423
      %v6431 = vcombine.low %v3430, %v3440
      %v6432 = vcombine.low %v3447, %v3457
      %v6433 = vcombine.low %v3464, %v3474
      %v6434 = vcombine.low %v3481, %v3491
      %v6435 = vcombine.low %v3498, %v3508
      %v6436 = vcombine.low %v3515, %v3525
      %v6437 = vcombine.low %v3532, %v3542
      %v6438 = vcombine.low %v3549, %v3559
      %v6439 = vcombine.low %v3566, %v3576
      %v6440 = vcombine.low %v3583, %v3593
      %v6441 = vcombine.low %v3600, %v3610
      %v6442 = vcombine.low %v3617, %v3627
      %v6443 = vcombine.low %v3634, %v3644
      %v6444 = vcombine.low %v3651, %v3661
      %v6445 = vcombine.low %v3668, %v3678
      %v6446 = vcombine.low %v3685, %v3695
      %v6447 = vcombine.low %v3702, %v3712
      %v6448 = vcombine.low %v3719, %v3729
      %v6449 = vcombine.low %v3736, %v3746
      %v6450 = vcombine.low %v3753, %v3763
      %v6451 = vcombine.low %v3770, %v3780
      %v6452 = vcombine.low %v3787, %v3797
      %v6453 = vcombine.low %v3804, %v3814
      %v6454 = vcombine.low %v3821, %v3831
      %v6455 = vcombine.low %v3838, %v3848
      %v6456 = vcombine.low %v3855, %v3865
      %v6457 = vcombine.low %v3872, %v3882
      %v6458 = vcombine.low %v3889, %v3899
      %v6459 = vcombine.low %v3906, %v3916
      %v6460 = vcombine.low %v3923, %v3933
      %v6461 = vcombine.low %v3940, %v3950
      %v6462 = vcombine.low %v3957, %v3967
      %v6463 = vcombine.low %v3974, %v3984
      %v6464 = vcombine.low %v3991, %v4001
      %v6465 = vcombine.low %v4008, %v4017
      %v6466 = vcombine.low %v4396, %v4406
      %v6467 = vcombine.low %v4413, %v4422
      %v6468 = vcombine.low %v4589, %v5864
      %v6469 = vcombine.low %v5863, %v5865
      %v6471 = vunpack.c.l.s4 1983009808
      %v6472 = vunpack.c.0.s8 %v6471
      %v6473 = vlaneseq
      %v6474 = vshrl.u32 %v6473, 7
      %v6475 = vsub.s32 %v6472, %v6474
      %v6476 = vrot.slane %v6468, %v6475
      %v6478 = vunpack.c.l.s4 1983009808
      %v6479 = vunpack.c.0.s8 %v6478
      %v6480 = vlaneseq
      %v6481 = vshrl.u32 %v6480, 7
      %v6482 = vsub.s32 %v6479, %v6481
      %v6483 = vrot.slane %v6469, %v6482
      %v6484 = vcombine.low %v6476, %v6483
      %v6485 = vcombine.low %v5873, %v5881
      %v6486 = vcombine.low %v5880, %v5882
      %v6488 = vunpack.c.l.s4 1983009808
      %v6489 = vunpack.c.0.s8 %v6488
      %v6490 = vlaneseq
      %v6491 = vshrl.u32 %v6490, 7
      %v6492 = vsub.s32 %v6489, %v6491
      %v6493 = vrot.slane %v6485, %v6492
      %v6495 = vunpack.c.l.s4 1983009808
      %v6496 = vunpack.c.0.s8 %v6495
      %v6497 = vlaneseq
      %v6498 = vshrl.u32 %v6497, 7
      %v6499 = vsub.s32 %v6496, %v6498
      %v6500 = vrot.slane %v6486, %v6499
      %v6501 = vcombine.low %v6493, %v6500
      %v6502 = vcombine.low %v5889, %v6123
      %v6504 = vunpack.c.l.s4 1983009808
      %v6505 = vunpack.c.0.s8 %v6504
      %v6506 = vlaneseq
      %v6507 = vshrl.u32 %v6506, 7
      %v6508 = vsub.s32 %v6505, %v6507
      %v6509 = vrot.slane %v6502, %v6508
      %6510 = vrot.lane.b32.xlu0 %v6430, 32
      %v6511 = vpop.permute.xlu0 %6510
      %6512 = vrot.lane.b32.xlu0 %v6431, 32
      %v6513 = vpop.permute.xlu0 %6512
      %6514 = vrot.lane.b32.xlu0 %v6432, 32
      %v6515 = vpop.permute.xlu0 %6514
      %6516 = vrot.lane.b32.xlu0 %v6433, 32
      %v6517 = vpop.permute.xlu0 %6516
      %6518 = vrot.lane.b32.xlu0 %v6434, 32
      %v6519 = vpop.permute.xlu0 %6518
      %6520 = vrot.lane.b32.xlu0 %v6435, 32
      %v6521 = vpop.permute.xlu0 %6520
      %6522 = vrot.lane.b32.xlu0 %v6436, 32
      %v6523 = vpop.permute.xlu0 %6522
      %6524 = vrot.lane.b32.xlu0 %v6437, 32
      %v6525 = vpop.permute.xlu0 %6524
      %6526 = vrot.lane.b32.xlu0 %v6438, 32
      %v6527 = vpop.permute.xlu0 %6526
      %6528 = vrot.lane.b32.xlu0 %v6439, 32
      %v6529 = vpop.permute.xlu0 %6528
      %6530 = vrot.lane.b32.xlu0 %v6440, 32
      %v6531 = vpop.permute.xlu0 %6530
      %6532 = vrot.lane.b32.xlu0 %v6441, 32
      %v6533 = vpop.permute.xlu0 %6532
      %6534 = vrot.lane.b32.xlu0 %v6442, 32
      %v6535 = vpop.permute.xlu0 %6534
      %6536 = vrot.lane.b32.xlu0 %v6443, 32
      %v6537 = vpop.permute.xlu0 %6536
      %6538 = vrot.lane.b32.xlu0 %v6444, 32
      %v6539 = vpop.permute.xlu0 %6538
      %6540 = vrot.lane.b32.xlu0 %v6445, 32
      %v6541 = vpop.permute.xlu0 %6540
      %6542 = vrot.lane.b32.xlu0 %v6446, 32
      %v6543 = vpop.permute.xlu0 %6542
      %6544 = vrot.lane.b32.xlu0 %v6447, 32
      %v6545 = vpop.permute.xlu0 %6544
      %6546 = vrot.lane.b32.xlu0 %v6448, 32
      %v6547 = vpop.permute.xlu0 %6546
      %6548 = vrot.lane.b32.xlu0 %v6449, 32
      %v6549 = vpop.permute.xlu0 %6548
      %6550 = vrot.lane.b32.xlu0 %v6450, 32
      %v6551 = vpop.permute.xlu0 %6550
      %6552 = vrot.lane.b32.xlu0 %v6451, 32
      %v6553 = vpop.permute.xlu0 %6552
      %6554 = vrot.lane.b32.xlu0 %v6452, 32
      %v6555 = vpop.permute.xlu0 %6554
      %6556 = vrot.lane.b32.xlu0 %v6453, 32
      %v6557 = vpop.permute.xlu0 %6556
      %6558 = vrot.lane.b32.xlu0 %v6454, 32
      %v6559 = vpop.permute.xlu0 %6558
      %6560 = vrot.lane.b32.xlu0 %v6455, 32
      %v6561 = vpop.permute.xlu0 %6560
      %6562 = vrot.lane.b32.xlu0 %v6456, 32
      %v6563 = vpop.permute.xlu0 %6562
      %6564 = vrot.lane.b32.xlu0 %v6457, 32
      %v6565 = vpop.permute.xlu0 %6564
      %6566 = vrot.lane.b32.xlu0 %v6458, 32
      %v6567 = vpop.permute.xlu0 %6566
      %6568 = vrot.lane.b32.xlu0 %v6459, 32
      %v6569 = vpop.permute.xlu0 %6568
      %6570 = vrot.lane.b32.xlu0 %v6460, 32
      %v6571 = vpop.permute.xlu0 %6570
      %6572 = vrot.lane.b32.xlu0 %v6461, 32
      %v6573 = vpop.permute.xlu0 %6572
      %6574 = vrot.lane.b32.xlu0 %v6462, 32
      %v6575 = vpop.permute.xlu0 %6574
      %6576 = vrot.lane.b32.xlu0 %v6463, 32
      %v6577 = vpop.permute.xlu0 %6576
      %6578 = vrot.lane.b32.xlu0 %v6464, 32
      %v6579 = vpop.permute.xlu0 %6578
      %6580 = vrot.lane.b32.xlu0 %v6465, 32
      %v6581 = vpop.permute.xlu0 %6580
      %6582 = vrot.lane.b32.xlu0 %v6466, 32
      %v6583 = vpop.permute.xlu0 %6582
      %6584 = vrot.lane.b32.xlu0 %v6467, 32
      %v6585 = vpop.permute.xlu0 %6584
      %6586 = vrot.lane.b32.xlu0 %v6484, 32
      %v6587 = vpop.permute.xlu0 %6586
      %6588 = vrot.lane.b32.xlu0 %v6501, 32
      %v6589 = vpop.permute.xlu0 %6588
      %6590 = vrot.lane.b32.xlu0 %v6509, 32
      %v6591 = vpop.permute.xlu0 %6590
      %vm6633 = vcmask 294144
      %6634 = vst.msk [vmem:[#allocation2] sm:$0xff] %vm6633, %v6511
      %6635 = vst.msk [vmem:[#allocation2 + $0x8] sm:$0xff] %vm6633, %v6513
      %6636 = vst.msk [vmem:[#allocation2 + $0x10] sm:$0xff] %vm6633, %v6515
      %6637 = vst.msk [vmem:[#allocation2 + $0x18] sm:$0xff] %vm6633, %v6517
      %6638 = vst.msk [vmem:[#allocation2 + $0x20] sm:$0xff] %vm6633, %v6519
      %6639 = vst.msk [vmem:[#allocation2 + $0x28] sm:$0xff] %vm6633, %v6521
      %6640 = vst.msk [vmem:[#allocation2 + $0x30] sm:$0xff] %vm6633, %v6523
      %6641 = vst.msk [vmem:[#allocation2 + $0x38] sm:$0xff] %vm6633, %v6525
      %6642 = vst.msk [vmem:[#allocation2 + $0x40] sm:$0xff] %vm6633, %v6527
      %6643 = vst.msk [vmem:[#allocation2 + $0x48] sm:$0xff] %vm6633, %v6529
      %6644 = vst.msk [vmem:[#allocation2 + $0x50] sm:$0xff] %vm6633, %v6531
      %6645 = vst.msk [vmem:[#allocation2 + $0x58] sm:$0xff] %vm6633, %v6533
      %6646 = vst.msk [vmem:[#allocation2 + $0x60] sm:$0xff] %vm6633, %v6535
      %6647 = vst.msk [vmem:[#allocation2 + $0x68] sm:$0xff] %vm6633, %v6537
      %6648 = vst.msk [vmem:[#allocation2 + $0x70] sm:$0xff] %vm6633, %v6539
      %6649 = vst.msk [vmem:[#allocation2 + $0x78] sm:$0xff] %vm6633, %v6541
      %6650 = vst.msk [vmem:[#allocation2 + $0x80] sm:$0xff] %vm6633, %v6543
      %6651 = vst.msk [vmem:[#allocation2 + $0x88] sm:$0xff] %vm6633, %v6545
      %6652 = vst.msk [vmem:[#allocation2 + $0x90] sm:$0xff] %vm6633, %v6547
      %6653 = vst.msk [vmem:[#allocation2 + $0x98] sm:$0xff] %vm6633, %v6549
      %6654 = vst.msk [vmem:[#allocation2 + $0xa0] sm:$0xff] %vm6633, %v6551
      %6655 = vst.msk [vmem:[#allocation2 + $0xa8] sm:$0xff] %vm6633, %v6553
      %6656 = vst.msk [vmem:[#allocation2 + $0xb0] sm:$0xff] %vm6633, %v6555
      %6657 = vst.msk [vmem:[#allocation2 + $0xb8] sm:$0xff] %vm6633, %v6557
      %6658 = vst.msk [vmem:[#allocation2 + $0xc0] sm:$0xff] %vm6633, %v6559
      %6659 = vst.msk [vmem:[#allocation2 + $0xc8] sm:$0xff] %vm6633, %v6561
      %6660 = vst.msk [vmem:[#allocation2 + $0xd0] sm:$0xff] %vm6633, %v6563
      %6661 = vst.msk [vmem:[#allocation2 + $0xd8] sm:$0xff] %vm6633, %v6565
      %6662 = vst.msk [vmem:[#allocation2 + $0xe0] sm:$0xff] %vm6633, %v6567
      %6663 = vst.msk [vmem:[#allocation2 + $0xe8] sm:$0xff] %vm6633, %v6569
      %6664 = vst.msk [vmem:[#allocation2 + $0xf0] sm:$0xff] %vm6633, %v6571
      %6665 = vst.msk [vmem:[#allocation2 + $0xf8] sm:$0xff] %vm6633, %v6573
      %6666 = vst.msk [vmem:[#allocation2 + $0x100] sm:$0xff] %vm6633, %v6575
      %6667 = vst.msk [vmem:[#allocation2 + $0x108] sm:$0xff] %vm6633, %v6577
      %6668 = vst.msk [vmem:[#allocation2 + $0x110] sm:$0xff] %vm6633, %v6579
      %6669 = vst.msk [vmem:[#allocation2 + $0x118] sm:$0xff] %vm6633, %v6581
      %6670 = vst.msk [vmem:[#allocation2 + $0x120] sm:$0xff] %vm6633, %v6583
      %6671 = vst.msk [vmem:[#allocation2 + $0x128] sm:$0xff] %vm6633, %v6585
      %6672 = vst.msk [vmem:[#allocation2 + $0x130] sm:$0xff] %vm6633, %v6587
      %6673 = vst.msk [vmem:[#allocation2 + $0x138] sm:$0xff] %vm6633, %v6589
      %vm6674 = vcmask 290048
      %6675 = vst.msk [vmem:[#allocation2 + $0x140] sm:$0xf] %vm6674, %v6591
      %v6676 = vld [vmem:[#allocation2] sm:$0xff]
      %v6677 = vld [vmem:[#allocation2 + $0x8] sm:$0xff]
      %v6678 = vld [vmem:[#allocation2 + $0x10] sm:$0xff]
      %v6679 = vld [vmem:[#allocation2 + $0x18] sm:$0xff]
      %v6680 = vld [vmem:[#allocation2 + $0x20] sm:$0xff]
      %v6681 = vld [vmem:[#allocation2 + $0x28] sm:$0xff]
      %v6682 = vld [vmem:[#allocation2 + $0x30] sm:$0xff]
      %v6683 = vld [vmem:[#allocation2 + $0x38] sm:$0xff]
      %v6684 = vld [vmem:[#allocation2 + $0x40] sm:$0xff]
      %v6685 = vld [vmem:[#allocation2 + $0x48] sm:$0xff]
      %v6686 = vld [vmem:[#allocation2 + $0x50] sm:$0xff]
      %v6687 = vld [vmem:[#allocation2 + $0x58] sm:$0xff]
      %v6688 = vld [vmem:[#allocation2 + $0x60] sm:$0xff]
      %v6689 = vld [vmem:[#allocation2 + $0x68] sm:$0xff]
      %v6690 = vld [vmem:[#allocation2 + $0x70] sm:$0xff]
      %v6691 = vld [vmem:[#allocation2 + $0x78] sm:$0xff]
      %v6692 = vld [vmem:[#allocation2 + $0x80] sm:$0xff]
      %v6693 = vld [vmem:[#allocation2 + $0x88] sm:$0xff]
      %v6694 = vld [vmem:[#allocation2 + $0x90] sm:$0xff]
      %v6695 = vld [vmem:[#allocation2 + $0x98] sm:$0xff]
      %v6696 = vld [vmem:[#allocation2 + $0xa0] sm:$0xff]
      %v6697 = vld [vmem:[#allocation2 + $0xa8] sm:$0xff]
      %v6698 = vld [vmem:[#allocation2 + $0xb0] sm:$0xff]
      %v6699 = vld [vmem:[#allocation2 + $0xb8] sm:$0xff]
      %v6700 = vld [vmem:[#allocation2 + $0xc0] sm:$0xff]
      %v6701 = vld [vmem:[#allocation2 + $0xc8] sm:$0xff]
      %v6702 = vld [vmem:[#allocation2 + $0xd0] sm:$0xff]
      %v6703 = vld [vmem:[#allocation2 + $0xd8] sm:$0xff]
      %v6704 = vld [vmem:[#allocation2 + $0xe0] sm:$0xff]
      %v6705 = vld [vmem:[#allocation2 + $0xe8] sm:$0xff]
      %v6706 = vld [vmem:[#allocation2 + $0xf0] sm:$0xff]
      %v6707 = vld [vmem:[#allocation2 + $0xf8] sm:$0xff]
      %v6708 = vld [vmem:[#allocation2 + $0x100] sm:$0xff]
      %v6709 = vld [vmem:[#allocation2 + $0x108] sm:$0xff]
      %v6710 = vld [vmem:[#allocation2 + $0x110] sm:$0xff]
      %v6711 = vld [vmem:[#allocation2 + $0x118] sm:$0xff]
      %v6712 = vld [vmem:[#allocation2 + $0x120] sm:$0xff]
      %v6713 = vld [vmem:[#allocation2 + $0x128] sm:$0xff]
      %v6714 = vld [vmem:[#allocation2 + $0x130] sm:$0xff]
      %v6715 = vld [vmem:[#allocation2 + $0x138] sm:$0xff]
      %v6716 = vld [vmem:[#allocation2 + $0x140] sm:$0xf]
      %v6717 = vld [vmem:[%s2] sm:$0xff]
      %v6718 = vld [vmem:[%s2 + $0x8] sm:$0xff]
      %v6719 = vld [vmem:[%s2 + $0x10] sm:$0xff]
      %v6720 = vld [vmem:[%s2 + $0x18] sm:$0xff]
      %v6721 = vld [vmem:[%s2 + $0x20] sm:$0xf]
      %v6722 = vld [vmem:[%s3] sm:$0x1]
      %v6724 = vlaneseq
      %v6725 = vshrl.u32 %v6724, 7
      %v6726 = vsub.s32 0, %v6725
      %v6727 = vrot.slane %v6722, %v6726
      %vm6729 = vcmask 293888
      %v6731 = vsel %vm6729, %v6676, 0
      %v6734 = vsel %vm6729, %v6677, 0
      %v6737 = vsel %vm6729, %v6678, 0
      %v6740 = vsel %vm6729, %v6679, 0
      %v6743 = vsel %vm6729, %v6680, 0
      %v6746 = vsel %vm6729, %v6681, 0
      %v6749 = vsel %vm6729, %v6682, 0
      %v6752 = vsel %vm6729, %v6683, 0
      %v6755 = vsel %vm6729, %v6684, 0
      %v6758 = vsel %vm6729, %v6685, 0
      %v6761 = vsel %vm6729, %v6686, 0
      %v6764 = vsel %vm6729, %v6687, 0
      %v6767 = vsel %vm6729, %v6688, 0
      %v6770 = vsel %vm6729, %v6689, 0
      %v6773 = vsel %vm6729, %v6690, 0
      %v6776 = vsel %vm6729, %v6691, 0
      %v6779 = vsel %vm6729, %v6692, 0
      %v6782 = vsel %vm6729, %v6693, 0
      %v6785 = vsel %vm6729, %v6694, 0
      %v6788 = vsel %vm6729, %v6695, 0
      %v6791 = vsel %vm6729, %v6696, 0
      %v6794 = vsel %vm6729, %v6697, 0
      %v6797 = vsel %vm6729, %v6698, 0
      %v6800 = vsel %vm6729, %v6699, 0
      %v6803 = vsel %vm6729, %v6700, 0
      %v6806 = vsel %vm6729, %v6701, 0
      %v6809 = vsel %vm6729, %v6702, 0
      %v6812 = vsel %vm6729, %v6703, 0
      %v6815 = vsel %vm6729, %v6704, 0
      %v6818 = vsel %vm6729, %v6705, 0
      %v6821 = vsel %vm6729, %v6706, 0
      %v6824 = vsel %vm6729, %v6707, 0
      %v6827 = vsel %vm6729, %v6708, 0
      %v6830 = vsel %vm6729, %v6709, 0
      %v6833 = vsel %vm6729, %v6710, 0
      %v6836 = vsel %vm6729, %v6711, 0
      %v6839 = vsel %vm6729, %v6712, 0
      %v6842 = vsel %vm6729, %v6713, 0
      %v6845 = vsel %vm6729, %v6714, 0
      %v6848 = vsel %vm6729, %v6715, 0
      %v6851 = vsel %vm6729, %v6716, 0
      %vm6853 = vcmask 1043456
      %v6855 = vsel %vm6853, %v6721, 0
      %6857 = vmatprep.subr.mxu0 0.0
      %6858 = vmatpush1.msra.mxu0 %v6717
      %6859 = vmatprep.subr.mxu0 0.0
      %6860 = vmatpush1.msra.mxu0 %v6718
      %6861 = vmatprep.subr.mxu0 0.0
      %6862 = vmatpush1.msra.mxu0 %v6719
      %6863 = vmatprep.subr.mxu0 0.0
      %6864 = vmatpush1.msra.mxu0 %v6720
      %6865 = vmatprep.subr.mxu0 0.0
      %6866 = vmatpush1.msra.mxu0 %v6855
      %6867 = vmatprep.subr.mxu0 0.0
      %6868 = vmatpush1.msra.mxu0 0.0
      %6869 = vmatprep.subr.mxu0 0.0
      %6870 = vmatpush1.msra.mxu0 0.0
      %6871 = vmatprep.subr.mxu0 0.0
      %6872 = vmatpush1.msra.mxu0 0.0
      %6873 = vmatprep.subr.mxu0 0.0
      %6874 = vmatpush1.msra.mxu0 0.0
      %6875 = vmatprep.subr.mxu0 0.0
      %6876 = vmatpush1.msra.mxu0 0.0
      %6877 = vmatprep.subr.mxu0 0.0
      %6878 = vmatpush1.msra.mxu0 0.0
      %6879 = vmatprep.subr.mxu0 0.0
      %6880 = vmatpush1.msra.mxu0 0.0
      %6881 = vmatprep.subr.mxu0 0.0
      %6882 = vmatpush1.msra.mxu0 0.0
      %6883 = vmatprep.subr.mxu0 0.0
      %6884 = vmatpush1.msra.mxu0 0.0
      %6885 = vmatprep.subr.mxu0 0.0
      %6886 = vmatpush1.msra.mxu0 0.0
      %6887 = vmatprep.subr.mxu0 0.0
      %6888 = vmatpush1.msra.mxu0 0.0
      %6889 = vmatprep.subr.mxu0 0.0
      %6890 = vmatpush1.msra.mxu0 0.0
      %6891 = vmatprep.subr.mxu0 0.0
      %6892 = vmatpush1.msra.mxu0 0.0
      %6893 = vmatprep.subr.mxu0 0.0
      %6894 = vmatpush1.msra.mxu0 0.0
      %6895 = vmatprep.subr.mxu0 0.0
      %6896 = vmatpush1.msra.mxu0 0.0
      %6897 = vmatprep.subr.mxu0 0.0
      %6898 = vmatpush1.msra.mxu0 0.0
      %6899 = vmatprep.subr.mxu0 0.0
      %6900 = vmatpush1.msra.mxu0 0.0
      %6901 = vmatprep.subr.mxu0 0.0
      %6902 = vmatpush1.msra.mxu0 0.0
      %6903 = vmatprep.subr.mxu0 0.0
      %6904 = vmatpush1.msra.mxu0 0.0
      %6905 = vmatprep.subr.mxu0 0.0
      %6906 = vmatpush1.msra.mxu0 0.0
      %6907 = vmatprep.subr.mxu0 0.0
      %6908 = vmatpush1.msra.mxu0 0.0
      %6909 = vmatprep.subr.mxu0 0.0
      %6910 = vmatpush1.msra.mxu0 0.0
      %6911 = vmatprep.subr.mxu0 0.0
      %6912 = vmatpush1.msra.mxu0 0.0
      %6913 = vmatprep.subr.mxu0 0.0
      %6914 = vmatpush1.msra.mxu0 0.0
      %6915 = vmatprep.subr.mxu0 0.0
      %6916 = vmatpush1.msra.mxu0 0.0
      %6917 = vmatprep.subr.mxu0 0.0
      %6918 = vmatpush1.msra.mxu0 0.0
      %6919 = vmatprep.subr.mxu0 0.0
      %6920 = vmatpush1.msra.mxu0 0.0
      %6921 = vmatprep.mubr.f32.mxu0 0.0
      %6922 = vmatmul.mubr.f32.gmra.mrb[0].mxu0 %v6731
      %v6923 = vpop.f32.mrb[0].mxu0
      %v6924 = vadd.f32 %v6727, %v6923
      %v6925 = vpop.f32.mrb[0].mxu0
      %6926 = vmatprep.mubr.f32.mxu0 0.0
      %6927 = vmatmul.mubr.f32.gmra.mrb[0].mxu0 %v6734
      %v6928 = vpop.f32.mrb[0].mxu0
      %v6929 = vadd.f32 %v6727, %v6928
      %v6930 = vpop.f32.mrb[0].mxu0
      %6931 = vmatprep.mubr.f32.mxu0 0.0
      %6932 = vmatmul.mubr.f32.gmra.mrb[0].mxu0 %v6737
      %v6933 = vpop.f32.mrb[0].mxu0
      %v6934 = vadd.f32 %v6727, %v6933
      %v6935 = vpop.f32.mrb[0].mxu0
      %6936 = vmatprep.mubr.f32.mxu0 0.0
      %6937 = vmatmul.mubr.f32.gmra.mrb[0].mxu0 %v6740
      %v6938 = vpop.f32.mrb[0].mxu0
      %v6939 = vadd.f32 %v6727, %v6938
      %v6940 = vpop.f32.mrb[0].mxu0
      %6941 = vmatprep.mubr.f32.mxu0 0.0
      %6942 = vmatmul.mubr.f32.gmra.mrb[0].mxu0 %v6743
      %v6943 = vpop.f32.mrb[0].mxu0
      %v6944 = vadd.f32 %v6727, %v6943
      %v6945 = vpop.f32.mrb[0].mxu0
      %6946 = vmatprep.mubr.f32.mxu0 0.0
      %6947 = vmatmul.mubr.f32.gmra.mrb[0].mxu0 %v6746
      %v6948 = vpop.f32.mrb[0].mxu0
      %v6949 = vadd.f32 %v6727, %v6948
      %v6950 = vpop.f32.mrb[0].mxu0
      %6951 = vmatprep.mubr.f32.mxu0 0.0
      %6952 = vmatmul.mubr.f32.gmra.mrb[0].mxu0 %v6749
      %v6953 = vpop.f32.mrb[0].mxu0
      %v6954 = vadd.f32 %v6727, %v6953
      %v6955 = vpop.f32.mrb[0].mxu0
      %6956 = vmatprep.mubr.f32.mxu0 0.0
      %6957 = vmatmul.mubr.f32.gmra.mrb[0].mxu0 %v6752
      %v6958 = vpop.f32.mrb[0].mxu0
      %v6959 = vadd.f32 %v6727, %v6958
      %v6960 = vpop.f32.mrb[0].mxu0
      %6961 = vmatprep.mubr.f32.mxu0 0.0
      %6962 = vmatmul.mubr.f32.gmra.mrb[0].mxu0 %v6755
      %v6963 = vpop.f32.mrb[0].mxu0
      %v6964 = vadd.f32 %v6727, %v6963
      %v6965 = vpop.f32.mrb[0].mxu0
      %6966 = vmatprep.mubr.f32.mxu0 0.0
      %6967 = vmatmul.mubr.f32.gmra.mrb[0].mxu0 %v6758
      %v6968 = vpop.f32.mrb[0].mxu0
      %v6969 = vadd.f32 %v6727, %v6968
      %v6970 = vpop.f32.mrb[0].mxu0
      %6971 = vmatprep.mubr.f32.mxu0 0.0
      %6972 = vmatmul.mubr.f32.gmra.mrb[0].mxu0 %v6761
      %v6973 = vpop.f32.mrb[0].mxu0
      %v6974 = vadd.f32 %v6727, %v6973
      %v6975 = vpop.f32.mrb[0].mxu0
      %6976 = vmatprep.mubr.f32.mxu0 0.0
      %6977 = vmatmul.mubr.f32.gmra.mrb[0].mxu0 %v6764
      %v6978 = vpop.f32.mrb[0].mxu0
      %v6979 = vadd.f32 %v6727, %v6978
      %v6980 = vpop.f32.mrb[0].mxu0
      %6981 = vmatprep.mubr.f32.mxu0 0.0
      %6982 = vmatmul.mubr.f32.gmra.mrb[0].mxu0 %v6767
      %v6983 = vpop.f32.mrb[0].mxu0
      %v6984 = vadd.f32 %v6727, %v6983
      %v6985 = vpop.f32.mrb[0].mxu0
      %6986 = vmatprep.mubr.f32.mxu0 0.0
      %6987 = vmatmul.mubr.f32.gmra.mrb[0].mxu0 %v6770
      %v6988 = vpop.f32.mrb[0].mxu0
      %v6989 = vadd.f32 %v6727, %v6988
      %v6990 = vpop.f32.mrb[0].mxu0
      %6991 = vmatprep.mubr.f32.mxu0 0.0
      %6992 = vmatmul.mubr.f32.gmra.mrb[0].mxu0 %v6773
      %v6993 = vpop.f32.mrb[0].mxu0
      %v6994 = vadd.f32 %v6727, %v6993
      %v6995 = vpop.f32.mrb[0].mxu0
      %6996 = vmatprep.mubr.f32.mxu0 0.0
      %6997 = vmatmul.mubr.f32.gmra.mrb[0].mxu0 %v6776
      %v6998 = vpop.f32.mrb[0].mxu0
      %v6999 = vadd.f32 %v6727, %v6998
      %v7000 = vpop.f32.mrb[0].mxu0
      %7001 = vmatprep.mubr.f32.mxu0 0.0
      %7002 = vmatmul.mubr.f32.gmra.mrb[0].mxu0 %v6779
      %v7003 = vpop.f32.mrb[0].mxu0
      %v7004 = vadd.f32 %v6727, %v7003
      %v7005 = vpop.f32.mrb[0].mxu0
      %7006 = vmatprep.mubr.f32.mxu0 0.0
      %7007 = vmatmul.mubr.f32.gmra.mrb[0].mxu0 %v6782
      %v7008 = vpop.f32.mrb[0].mxu0
      %v7009 = vadd.f32 %v6727, %v7008
      %v7010 = vpop.f32.mrb[0].mxu0
      %7011 = vmatprep.mubr.f32.mxu0 0.0
      %7012 = vmatmul.mubr.f32.gmra.mrb[0].mxu0 %v6785
      %v7013 = vpop.f32.mrb[0].mxu0
      %v7014 = vadd.f32 %v6727, %v7013
      %v7015 = vpop.f32.mrb[0].mxu0
      %7016 = vmatprep.mubr.f32.mxu0 0.0
      %7017 = vmatmul.mubr.f32.gmra.mrb[0].mxu0 %v6788
      %v7018 = vpop.f32.mrb[0].mxu0
      %v7019 = vadd.f32 %v6727, %v7018
      %v7020 = vpop.f32.mrb[0].mxu0
      %7021 = vmatprep.mubr.f32.mxu0 0.0
      %7022 = vmatmul.mubr.f32.gmra.mrb[0].mxu0 %v6791
      %v7023 = vpop.f32.mrb[0].mxu0
      %v7024 = vadd.f32 %v6727, %v7023
      %v7025 = vpop.f32.mrb[0].mxu0
      %7026 = vmatprep.mubr.f32.mxu0 0.0
      %7027 = vmatmul.mubr.f32.gmra.mrb[0].mxu0 %v6794
      %v7028 = vpop.f32.mrb[0].mxu0
      %v7029 = vadd.f32 %v6727, %v7028
      %v7030 = vpop.f32.mrb[0].mxu0
      %7031 = vmatprep.mubr.f32.mxu0 0.0
      %7032 = vmatmul.mubr.f32.gmra.mrb[0].mxu0 %v6797
      %v7033 = vpop.f32.mrb[0].mxu0
      %v7034 = vadd.f32 %v6727, %v7033
      %v7035 = vpop.f32.mrb[0].mxu0
      %7036 = vmatprep.mubr.f32.mxu0 0.0
      %7037 = vmatmul.mubr.f32.gmra.mrb[0].mxu0 %v6800
      %v7038 = vpop.f32.mrb[0].mxu0
      %v7039 = vadd.f32 %v6727, %v7038
      %v7040 = vpop.f32.mrb[0].mxu0
      %7041 = vmatprep.mubr.f32.mxu0 0.0
      %7042 = vmatmul.mubr.f32.gmra.mrb[0].mxu0 %v6803
      %v7043 = vpop.f32.mrb[0].mxu0
      %v7044 = vadd.f32 %v6727, %v7043
      %v7045 = vpop.f32.mrb[0].mxu0
      %7046 = vmatprep.mubr.f32.mxu0 0.0
      %7047 = vmatmul.mubr.f32.gmra.mrb[0].mxu0 %v6806
      %v7048 = vpop.f32.mrb[0].mxu0
      %v7049 = vadd.f32 %v6727, %v7048
      %v7050 = vpop.f32.mrb[0].mxu0
      %7051 = vmatprep.mubr.f32.mxu0 0.0
      %7052 = vmatmul.mubr.f32.gmra.mrb[0].mxu0 %v6809
      %v7053 = vpop.f32.mrb[0].mxu0
      %v7054 = vadd.f32 %v6727, %v7053
      %v7055 = vpop.f32.mrb[0].mxu0
      %7056 = vmatprep.mubr.f32.mxu0 0.0
      %7057 = vmatmul.mubr.f32.gmra.mrb[0].mxu0 %v6812
      %v7058 = vpop.f32.mrb[0].mxu0
      %v7059 = vadd.f32 %v6727, %v7058
      %v7060 = vpop.f32.mrb[0].mxu0
      %7061 = vmatprep.mubr.f32.mxu0 0.0
      %7062 = vmatmul.mubr.f32.gmra.mrb[0].mxu0 %v6815
      %v7063 = vpop.f32.mrb[0].mxu0
      %v7064 = vadd.f32 %v6727, %v7063
      %v7065 = vpop.f32.mrb[0].mxu0
      %7066 = vmatprep.mubr.f32.mxu0 0.0
      %7067 = vmatmul.mubr.f32.gmra.mrb[0].mxu0 %v6818
      %v7068 = vpop.f32.mrb[0].mxu0
      %v7069 = vadd.f32 %v6727, %v7068
      %v7070 = vpop.f32.mrb[0].mxu0
      %7071 = vmatprep.mubr.f32.mxu0 0.0
      %7072 = vmatmul.mubr.f32.gmra.mrb[0].mxu0 %v6821
      %v7073 = vpop.f32.mrb[0].mxu0
      %v7074 = vadd.f32 %v6727, %v7073
      %v7075 = vpop.f32.mrb[0].mxu0
      %7076 = vmatprep.mubr.f32.mxu0 0.0
      %7077 = vmatmul.mubr.f32.gmra.mrb[0].mxu0 %v6824
      %v7078 = vpop.f32.mrb[0].mxu0
      %v7079 = vadd.f32 %v6727, %v7078
      %v7080 = vpop.f32.mrb[0].mxu0
      %7081 = vmatprep.mubr.f32.mxu0 0.0
      %7082 = vmatmul.mubr.f32.gmra.mrb[0].mxu0 %v6827
      %v7083 = vpop.f32.mrb[0].mxu0
      %v7084 = vadd.f32 %v6727, %v7083
      %v7085 = vpop.f32.mrb[0].mxu0
      %7086 = vmatprep.mubr.f32.mxu0 0.0
      %7087 = vmatmul.mubr.f32.gmra.mrb[0].mxu0 %v6830
      %v7088 = vpop.f32.mrb[0].mxu0
      %v7089 = vadd.f32 %v6727, %v7088
      %v7090 = vpop.f32.mrb[0].mxu0
      %7091 = vmatprep.mubr.f32.mxu0 0.0
      %7092 = vmatmul.mubr.f32.gmra.mrb[0].mxu0 %v6833
      %v7093 = vpop.f32.mrb[0].mxu0
      %v7094 = vadd.f32 %v6727, %v7093
      %v7095 = vpop.f32.mrb[0].mxu0
      %7096 = vmatprep.mubr.f32.mxu0 0.0
      %7097 = vmatmul.mubr.f32.gmra.mrb[0].mxu0 %v6836
      %v7098 = vpop.f32.mrb[0].mxu0
      %v7099 = vadd.f32 %v6727, %v7098
      %v7100 = vpop.f32.mrb[0].mxu0
      %7101 = vmatprep.mubr.f32.mxu0 0.0
      %7102 = vmatmul.mubr.f32.gmra.mrb[0].mxu0 %v6839
      %v7103 = vpop.f32.mrb[0].mxu0
      %v7104 = vadd.f32 %v6727, %v7103
      %v7105 = vpop.f32.mrb[0].mxu0
      %7106 = vmatprep.mubr.f32.mxu0 0.0
      %7107 = vmatmul.mubr.f32.gmra.mrb[0].mxu0 %v6842
      %v7108 = vpop.f32.mrb[0].mxu0
      %v7109 = vadd.f32 %v6727, %v7108
      %v7110 = vpop.f32.mrb[0].mxu0
      %7111 = vmatprep.mubr.f32.mxu0 0.0
      %7112 = vmatmul.mubr.f32.gmra.mrb[0].mxu0 %v6845
      %v7113 = vpop.f32.mrb[0].mxu0
      %v7114 = vadd.f32 %v6727, %v7113
      %v7115 = vpop.f32.mrb[0].mxu0
      %7116 = vmatprep.mubr.f32.mxu0 0.0
      %7117 = vmatmul.mubr.f32.gmra.mrb[0].mxu0 %v6848
      %v7118 = vpop.f32.mrb[0].mxu0
      %v7119 = vadd.f32 %v6727, %v7118
      %v7120 = vpop.f32.mrb[0].mxu0
      %7121 = vmatprep.mubr.f32.mxu0 0.0
      %7122 = vmatmul.mubr.f32.gmra.mrb[0].mxu0 %v6851
      %v7123 = vpop.f32.mrb[0].mxu0
      %v7124 = vadd.f32 %v6727, %v7123
      %v7125 = vpop.f32.mrb[0].mxu0
      %7126 = vdwg.mxu0
      %v7127 = vmax.f32 %v6924, 0.0
      %v7128 = vmax.f32 %v6929, 0.0
      %v7129 = vmax.f32 %v6934, 0.0
      %v7130 = vmax.f32 %v6939, 0.0
      %v7131 = vmax.f32 %v6944, 0.0
      %v7132 = vmax.f32 %v6949, 0.0
      %v7133 = vmax.f32 %v6954, 0.0
      %v7134 = vmax.f32 %v6959, 0.0
      %v7135 = vmax.f32 %v6964, 0.0
      %v7136 = vmax.f32 %v6969, 0.0
      %v7137 = vmax.f32 %v6974, 0.0
      %v7138 = vmax.f32 %v6979, 0.0
      %v7139 = vmax.f32 %v6984, 0.0
      %v7140 = vmax.f32 %v6989, 0.0
      %v7141 = vmax.f32 %v6994, 0.0
      %v7142 = vmax.f32 %v6999, 0.0
      %v7143 = vmax.f32 %v7004, 0.0
      %v7144 = vmax.f32 %v7009, 0.0
      %v7145 = vmax.f32 %v7014, 0.0
      %v7146 = vmax.f32 %v7019, 0.0
      %v7147 = vmax.f32 %v7024, 0.0
      %v7148 = vmax.f32 %v7029, 0.0
      %v7149 = vmax.f32 %v7034, 0.0
      %v7150 = vmax.f32 %v7039, 0.0
      %v7151 = vmax.f32 %v7044, 0.0
      %v7152 = vmax.f32 %v7049, 0.0
      %v7153 = vmax.f32 %v7054, 0.0
      %v7154 = vmax.f32 %v7059, 0.0
      %v7155 = vmax.f32 %v7064, 0.0
      %v7156 = vmax.f32 %v7069, 0.0
      %v7157 = vmax.f32 %v7074, 0.0
      %v7158 = vmax.f32 %v7079, 0.0
      %v7159 = vmax.f32 %v7084, 0.0
      %v7160 = vmax.f32 %v7089, 0.0
      %v7161 = vmax.f32 %v7094, 0.0
      %v7162 = vmax.f32 %v7099, 0.0
      %v7163 = vmax.f32 %v7104, 0.0
      %v7164 = vmax.f32 %v7109, 0.0
      %v7165 = vmax.f32 %v7114, 0.0
      %v7166 = vmax.f32 %v7119, 0.0
      %v7167 = vmax.f32 %v7124, 0.0
      %v7168 = vld [vmem:[%s1] sm:$0xff]
      %v7169 = vld [vmem:[%s1 + $0x8] sm:$0xff]
      %v7170 = vld [vmem:[%s1 + $0x10] sm:$0xff]
      %v7171 = vld [vmem:[%s1 + $0x18] sm:$0xff]
      %v7172 = vld [vmem:[%s1 + $0x20] sm:$0xff]
      %v7173 = vld [vmem:[%s1 + $0x28] sm:$0xff]
      %v7174 = vld [vmem:[%s1 + $0x30] sm:$0xff]
      %v7175 = vld [vmem:[%s1 + $0x38] sm:$0xff]
      %v7176 = vld [vmem:[%s1 + $0x40] sm:$0xff]
      %v7177 = vld [vmem:[%s1 + $0x48] sm:$0xff]
      %v7178 = vld [vmem:[%s1 + $0x50] sm:$0xff]
      %v7179 = vld [vmem:[%s1 + $0x58] sm:$0xff]
      %v7180 = vld [vmem:[%s1 + $0x60] sm:$0xff]
      %v7181 = vld [vmem:[%s1 + $0x68] sm:$0xff]
      %v7182 = vld [vmem:[%s1 + $0x70] sm:$0xff]
      %v7183 = vld [vmem:[%s1 + $0x78] sm:$0xff]
      %v7184 = vld [vmem:[%s1 + $0x80] sm:$0xff]
      %v7185 = vld [vmem:[%s1 + $0x88] sm:$0xff]
      %v7186 = vld [vmem:[%s1 + $0x90] sm:$0xff]
      %v7187 = vld [vmem:[%s1 + $0x98] sm:$0xff]
      %v7188 = vld [vmem:[%s1 + $0xa0] sm:$0xff]
      %v7189 = vld [vmem:[%s1 + $0xa8] sm:$0xff]
      %v7190 = vld [vmem:[%s1 + $0xb0] sm:$0xff]
      %v7191 = vld [vmem:[%s1 + $0xb8] sm:$0xff]
      %v7192 = vld [vmem:[%s1 + $0xc0] sm:$0xff]
      %v7193 = vld [vmem:[%s1 + $0xc8] sm:$0xff]
      %v7194 = vld [vmem:[%s1 + $0xd0] sm:$0xff]
      %v7195 = vld [vmem:[%s1 + $0xd8] sm:$0xff]
      %v7196 = vld [vmem:[%s1 + $0xe0] sm:$0xff]
      %v7197 = vld [vmem:[%s1 + $0xe8] sm:$0xff]
      %v7198 = vld [vmem:[%s1 + $0xf0] sm:$0xff]
      %v7199 = vld [vmem:[%s1 + $0xf8] sm:$0xff]
      %v7200 = vld [vmem:[%s1 + $0x100] sm:$0xff]
      %v7201 = vld [vmem:[%s1 + $0x108] sm:$0xff]
      %v7202 = vld [vmem:[%s1 + $0x110] sm:$0xff]
      %v7203 = vld [vmem:[%s1 + $0x118] sm:$0xff]
      %v7204 = vld [vmem:[%s1 + $0x120] sm:$0xff]
      %v7205 = vld [vmem:[%s1 + $0x128] sm:$0xff]
      %v7206 = vld [vmem:[%s1 + $0x130] sm:$0xff]
      %v7207 = vld [vmem:[%s1 + $0x138] sm:$0xff]
      %v7208 = vld [vmem:[%s1 + $0x140] sm:$0xf]
      %v7209 = vmul.f32 %v7127, %v7168
      %v7210 = vmul.f32 %v7128, %v7169
      %v7211 = vmul.f32 %v7129, %v7170
      %v7212 = vmul.f32 %v7130, %v7171
      %v7213 = vmul.f32 %v7131, %v7172
      %v7214 = vmul.f32 %v7132, %v7173
      %v7215 = vmul.f32 %v7133, %v7174
      %v7216 = vmul.f32 %v7134, %v7175
      %v7217 = vmul.f32 %v7135, %v7176
      %v7218 = vmul.f32 %v7136, %v7177
      %v7219 = vmul.f32 %v7137, %v7178
      %v7220 = vmul.f32 %v7138, %v7179
      %v7221 = vmul.f32 %v7139, %v7180
      %v7222 = vmul.f32 %v7140, %v7181
      %v7223 = vmul.f32 %v7141, %v7182
      %v7224 = vmul.f32 %v7142, %v7183
      %v7225 = vmul.f32 %v7143, %v7184
      %v7226 = vmul.f32 %v7144, %v7185
      %v7227 = vmul.f32 %v7145, %v7186
      %v7228 = vmul.f32 %v7146, %v7187
      %v7229 = vmul.f32 %v7147, %v7188
      %v7230 = vmul.f32 %v7148, %v7189
      %v7231 = vmul.f32 %v7149, %v7190
      %v7232 = vmul.f32 %v7150, %v7191
      %v7233 = vmul.f32 %v7151, %v7192
      %v7234 = vmul.f32 %v7152, %v7193
      %v7235 = vmul.f32 %v7153, %v7194
      %v7236 = vmul.f32 %v7154, %v7195
      %v7237 = vmul.f32 %v7155, %v7196
      %v7238 = vmul.f32 %v7156, %v7197
      %v7239 = vmul.f32 %v7157, %v7198
      %v7240 = vmul.f32 %v7158, %v7199
      %v7241 = vmul.f32 %v7159, %v7200
      %v7242 = vmul.f32 %v7160, %v7201
      %v7243 = vmul.f32 %v7161, %v7202
      %v7244 = vmul.f32 %v7162, %v7203
      %v7245 = vmul.f32 %v7163, %v7204
      %v7246 = vmul.f32 %v7164, %v7205
      %v7247 = vmul.f32 %v7165, %v7206
      %v7248 = vmul.f32 %v7166, %v7207
      %v7249 = vmul.f32 %v7167, %v7208
      %v7291 = vcombine.high %v7209, %v7209
      %v7293 = vunpack.c.l.s4 1983009808
      %v7294 = vunpack.c.0.s8 %v7293
      %v7295 = vlaneseq
      %v7296 = vshrl.u32 %v7295, 7
      %v7297 = vsub.s32 %v7294, %v7296
      %v7298 = vrot.slane %v7209, %v7297
      %v7300 = vunpack.c.l.s4 1983009808
      %v7301 = vunpack.c.0.s8 %v7300
      %v7302 = vlaneseq
      %v7303 = vshrl.u32 %v7302, 7
      %v7304 = vsub.s32 %v7301, %v7303
      %v7305 = vrot.slane %v7291, %v7304
      %v7306 = vcombine.high %v7298, %v7298
      %v7307 = vcombine.high %v7305, %v7305
      %v7308 = vcombine.high %v7210, %v7210
      %v7310 = vunpack.c.l.s4 1983009808
      %v7311 = vunpack.c.0.s8 %v7310
      %v7312 = vlaneseq
      %v7313 = vshrl.u32 %v7312, 7
      %v7314 = vsub.s32 %v7311, %v7313
      %v7315 = vrot.slane %v7210, %v7314
      %v7317 = vunpack.c.l.s4 1983009808
      %v7318 = vunpack.c.0.s8 %v7317
      %v7319 = vlaneseq
      %v7320 = vshrl.u32 %v7319, 7
      %v7321 = vsub.s32 %v7318, %v7320
      %v7322 = vrot.slane %v7308, %v7321
      %v7323 = vcombine.high %v7315, %v7315
      %v7324 = vcombine.high %v7322, %v7322
      %v7325 = vcombine.high %v7211, %v7211
      %v7327 = vunpack.c.l.s4 1983009808
      %v7328 = vunpack.c.0.s8 %v7327
      %v7329 = vlaneseq
      %v7330 = vshrl.u32 %v7329, 7
      %v7331 = vsub.s32 %v7328, %v7330
      %v7332 = vrot.slane %v7211, %v7331
      %v7334 = vunpack.c.l.s4 1983009808
      %v7335 = vunpack.c.0.s8 %v7334
      %v7336 = vlaneseq
      %v7337 = vshrl.u32 %v7336, 7
      %v7338 = vsub.s32 %v7335, %v7337
      %v7339 = vrot.slane %v7325, %v7338
      %v7340 = vcombine.high %v7332, %v7332
      %v7341 = vcombine.high %v7339, %v7339
      %v7342 = vcombine.high %v7212, %v7212
      %v7344 = vunpack.c.l.s4 1983009808
      %v7345 = vunpack.c.0.s8 %v7344
      %v7346 = vlaneseq
      %v7347 = vshrl.u32 %v7346, 7
      %v7348 = vsub.s32 %v7345, %v7347
      %v7349 = vrot.slane %v7212, %v7348
      %v7351 = vunpack.c.l.s4 1983009808
      %v7352 = vunpack.c.0.s8 %v7351
      %v7353 = vlaneseq
      %v7354 = vshrl.u32 %v7353, 7
      %v7355 = vsub.s32 %v7352, %v7354
      %v7356 = vrot.slane %v7342, %v7355
      %v7357 = vcombine.high %v7349, %v7349
      %v7358 = vcombine.high %v7356, %v7356
      %v7359 = vcombine.high %v7213, %v7213
      %v7361 = vunpack.c.l.s4 1983009808
      %v7362 = vunpack.c.0.s8 %v7361
      %v7363 = vlaneseq
      %v7364 = vshrl.u32 %v7363, 7
      %v7365 = vsub.s32 %v7362, %v7364
      %v7366 = vrot.slane %v7213, %v7365
      %v7368 = vunpack.c.l.s4 1983009808
      %v7369 = vunpack.c.0.s8 %v7368
      %v7370 = vlaneseq
      %v7371 = vshrl.u32 %v7370, 7
      %v7372 = vsub.s32 %v7369, %v7371
      %v7373 = vrot.slane %v7359, %v7372
      %v7374 = vcombine.high %v7366, %v7366
      %v7375 = vcombine.high %v7373, %v7373
      %v7376 = vcombine.high %v7214, %v7214
      %v7378 = vunpack.c.l.s4 1983009808
      %v7379 = vunpack.c.0.s8 %v7378
      %v7380 = vlaneseq
      %v7381 = vshrl.u32 %v7380, 7
      %v7382 = vsub.s32 %v7379, %v7381
      %v7383 = vrot.slane %v7214, %v7382
      %v7385 = vunpack.c.l.s4 1983009808
      %v7386 = vunpack.c.0.s8 %v7385
      %v7387 = vlaneseq
      %v7388 = vshrl.u32 %v7387, 7
      %v7389 = vsub.s32 %v7386, %v7388
      %v7390 = vrot.slane %v7376, %v7389
      %v7391 = vcombine.high %v7383, %v7383
      %v7392 = vcombine.high %v7390, %v7390
      %v7393 = vcombine.high %v7215, %v7215
      %v7395 = vunpack.c.l.s4 1983009808
      %v7396 = vunpack.c.0.s8 %v7395
      %v7397 = vlaneseq
      %v7398 = vshrl.u32 %v7397, 7
      %v7399 = vsub.s32 %v7396, %v7398
      %v7400 = vrot.slane %v7215, %v7399
      %v7402 = vunpack.c.l.s4 1983009808
      %v7403 = vunpack.c.0.s8 %v7402
      %v7404 = vlaneseq
      %v7405 = vshrl.u32 %v7404, 7
      %v7406 = vsub.s32 %v7403, %v7405
      %v7407 = vrot.slane %v7393, %v7406
      %v7408 = vcombine.high %v7400, %v7400
      %v7409 = vcombine.high %v7407, %v7407
      %v7410 = vcombine.high %v7216, %v7216
      %v7412 = vunpack.c.l.s4 1983009808
      %v7413 = vunpack.c.0.s8 %v7412
      %v7414 = vlaneseq
      %v7415 = vshrl.u32 %v7414, 7
      %v7416 = vsub.s32 %v7413, %v7415
      %v7417 = vrot.slane %v7216, %v7416
      %v7419 = vunpack.c.l.s4 1983009808
      %v7420 = vunpack.c.0.s8 %v7419
      %v7421 = vlaneseq
      %v7422 = vshrl.u32 %v7421, 7
      %v7423 = vsub.s32 %v7420, %v7422
      %v7424 = vrot.slane %v7410, %v7423
      %v7425 = vcombine.high %v7417, %v7417
      %v7426 = vcombine.high %v7424, %v7424
      %v7427 = vcombine.high %v7217, %v7217
      %v7429 = vunpack.c.l.s4 1983009808
      %v7430 = vunpack.c.0.s8 %v7429
      %v7431 = vlaneseq
      %v7432 = vshrl.u32 %v7431, 7
      %v7433 = vsub.s32 %v7430, %v7432
      %v7434 = vrot.slane %v7217, %v7433
      %v7436 = vunpack.c.l.s4 1983009808
      %v7437 = vunpack.c.0.s8 %v7436
      %v7438 = vlaneseq
      %v7439 = vshrl.u32 %v7438, 7
      %v7440 = vsub.s32 %v7437, %v7439
      %v7441 = vrot.slane %v7427, %v7440
      %v7442 = vcombine.high %v7434, %v7434
      %v7443 = vcombine.high %v7441, %v7441
      %v7444 = vcombine.high %v7218, %v7218
      %v7446 = vunpack.c.l.s4 1983009808
      %v7447 = vunpack.c.0.s8 %v7446
      %v7448 = vlaneseq
      %v7449 = vshrl.u32 %v7448, 7
      %v7450 = vsub.s32 %v7447, %v7449
      %v7451 = vrot.slane %v7218, %v7450
      %v7453 = vunpack.c.l.s4 1983009808
      %v7454 = vunpack.c.0.s8 %v7453
      %v7455 = vlaneseq
      %v7456 = vshrl.u32 %v7455, 7
      %v7457 = vsub.s32 %v7454, %v7456
      %v7458 = vrot.slane %v7444, %v7457
      %v7459 = vcombine.high %v7451, %v7451
      %v7460 = vcombine.high %v7458, %v7458
      %v7461 = vcombine.high %v7219, %v7219
      %v7463 = vunpack.c.l.s4 1983009808
      %v7464 = vunpack.c.0.s8 %v7463
      %v7465 = vlaneseq
      %v7466 = vshrl.u32 %v7465, 7
      %v7467 = vsub.s32 %v7464, %v7466
      %v7468 = vrot.slane %v7219, %v7467
      %v7470 = vunpack.c.l.s4 1983009808
      %v7471 = vunpack.c.0.s8 %v7470
      %v7472 = vlaneseq
      %v7473 = vshrl.u32 %v7472, 7
      %v7474 = vsub.s32 %v7471, %v7473
      %v7475 = vrot.slane %v7461, %v7474
      %v7476 = vcombine.high %v7468, %v7468
      %v7477 = vcombine.high %v7475, %v7475
      %v7478 = vcombine.high %v7220, %v7220
      %v7480 = vunpack.c.l.s4 1983009808
      %v7481 = vunpack.c.0.s8 %v7480
      %v7482 = vlaneseq
      %v7483 = vshrl.u32 %v7482, 7
      %v7484 = vsub.s32 %v7481, %v7483
      %v7485 = vrot.slane %v7220, %v7484
      %v7487 = vunpack.c.l.s4 1983009808
      %v7488 = vunpack.c.0.s8 %v7487
      %v7489 = vlaneseq
      %v7490 = vshrl.u32 %v7489, 7
      %v7491 = vsub.s32 %v7488, %v7490
      %v7492 = vrot.slane %v7478, %v7491
      %v7493 = vcombine.high %v7485, %v7485
      %v7494 = vcombine.high %v7492, %v7492
      %v7495 = vcombine.high %v7221, %v7221
      %v7497 = vunpack.c.l.s4 1983009808
      %v7498 = vunpack.c.0.s8 %v7497
      %v7499 = vlaneseq
      %v7500 = vshrl.u32 %v7499, 7
      %v7501 = vsub.s32 %v7498, %v7500
      %v7502 = vrot.slane %v7221, %v7501
      %v7504 = vunpack.c.l.s4 1983009808
      %v7505 = vunpack.c.0.s8 %v7504
      %v7506 = vlaneseq
      %v7507 = vshrl.u32 %v7506, 7
      %v7508 = vsub.s32 %v7505, %v7507
      %v7509 = vrot.slane %v7495, %v7508
      %v7510 = vcombine.high %v7502, %v7502
      %v7511 = vcombine.high %v7509, %v7509
      %v7512 = vcombine.high %v7222, %v7222
      %v7514 = vunpack.c.l.s4 1983009808
      %v7515 = vunpack.c.0.s8 %v7514
      %v7516 = vlaneseq
      %v7517 = vshrl.u32 %v7516, 7
      %v7518 = vsub.s32 %v7515, %v7517
      %v7519 = vrot.slane %v7222, %v7518
      %v7521 = vunpack.c.l.s4 1983009808
      %v7522 = vunpack.c.0.s8 %v7521
      %v7523 = vlaneseq
      %v7524 = vshrl.u32 %v7523, 7
      %v7525 = vsub.s32 %v7522, %v7524
      %v7526 = vrot.slane %v7512, %v7525
      %v7527 = vcombine.high %v7519, %v7519
      %v7528 = vcombine.high %v7526, %v7526
      %v7529 = vcombine.high %v7223, %v7223
      %v7531 = vunpack.c.l.s4 1983009808
      %v7532 = vunpack.c.0.s8 %v7531
      %v7533 = vlaneseq
      %v7534 = vshrl.u32 %v7533, 7
      %v7535 = vsub.s32 %v7532, %v7534
      %v7536 = vrot.slane %v7223, %v7535
      %v7538 = vunpack.c.l.s4 1983009808
      %v7539 = vunpack.c.0.s8 %v7538
      %v7540 = vlaneseq
      %v7541 = vshrl.u32 %v7540, 7
      %v7542 = vsub.s32 %v7539, %v7541
      %v7543 = vrot.slane %v7529, %v7542
      %v7544 = vcombine.high %v7536, %v7536
      %v7545 = vcombine.high %v7543, %v7543
      %v7546 = vcombine.high %v7224, %v7224
      %v7548 = vunpack.c.l.s4 1983009808
      %v7549 = vunpack.c.0.s8 %v7548
      %v7550 = vlaneseq
      %v7551 = vshrl.u32 %v7550, 7
      %v7552 = vsub.s32 %v7549, %v7551
      %v7553 = vrot.slane %v7224, %v7552
      %v7555 = vunpack.c.l.s4 1983009808
      %v7556 = vunpack.c.0.s8 %v7555
      %v7557 = vlaneseq
      %v7558 = vshrl.u32 %v7557, 7
      %v7559 = vsub.s32 %v7556, %v7558
      %v7560 = vrot.slane %v7546, %v7559
      %v7561 = vcombine.high %v7553, %v7553
      %v7562 = vcombine.high %v7560, %v7560
      %v7563 = vcombine.high %v7225, %v7225
      %v7565 = vunpack.c.l.s4 1983009808
      %v7566 = vunpack.c.0.s8 %v7565
      %v7567 = vlaneseq
      %v7568 = vshrl.u32 %v7567, 7
      %v7569 = vsub.s32 %v7566, %v7568
      %v7570 = vrot.slane %v7225, %v7569
      %v7572 = vunpack.c.l.s4 1983009808
      %v7573 = vunpack.c.0.s8 %v7572
      %v7574 = vlaneseq
      %v7575 = vshrl.u32 %v7574, 7
      %v7576 = vsub.s32 %v7573, %v7575
      %v7577 = vrot.slane %v7563, %v7576
      %v7578 = vcombine.high %v7570, %v7570
      %v7579 = vcombine.high %v7577, %v7577
      %v7580 = vcombine.high %v7226, %v7226
      %v7582 = vunpack.c.l.s4 1983009808
      %v7583 = vunpack.c.0.s8 %v7582
      %v7584 = vlaneseq
      %v7585 = vshrl.u32 %v7584, 7
      %v7586 = vsub.s32 %v7583, %v7585
      %v7587 = vrot.slane %v7226, %v7586
      %v7589 = vunpack.c.l.s4 1983009808
      %v7590 = vunpack.c.0.s8 %v7589
      %v7591 = vlaneseq
      %v7592 = vshrl.u32 %v7591, 7
      %v7593 = vsub.s32 %v7590, %v7592
      %v7594 = vrot.slane %v7580, %v7593
      %v7595 = vcombine.high %v7587, %v7587
      %v7596 = vcombine.high %v7594, %v7594
      %v7597 = vcombine.high %v7227, %v7227
      %v7599 = vunpack.c.l.s4 1983009808
      %v7600 = vunpack.c.0.s8 %v7599
      %v7601 = vlaneseq
      %v7602 = vshrl.u32 %v7601, 7
      %v7603 = vsub.s32 %v7600, %v7602
      %v7604 = vrot.slane %v7227, %v7603
      %v7606 = vunpack.c.l.s4 1983009808
      %v7607 = vunpack.c.0.s8 %v7606
      %v7608 = vlaneseq
      %v7609 = vshrl.u32 %v7608, 7
      %v7610 = vsub.s32 %v7607, %v7609
      %v7611 = vrot.slane %v7597, %v7610
      %v7612 = vcombine.high %v7604, %v7604
      %v7613 = vcombine.high %v7611, %v7611
      %v7614 = vcombine.high %v7228, %v7228
      %v7616 = vunpack.c.l.s4 1983009808
      %v7617 = vunpack.c.0.s8 %v7616
      %v7618 = vlaneseq
      %v7619 = vshrl.u32 %v7618, 7
      %v7620 = vsub.s32 %v7617, %v7619
      %v7621 = vrot.slane %v7228, %v7620
      %v7623 = vunpack.c.l.s4 1983009808
      %v7624 = vunpack.c.0.s8 %v7623
      %v7625 = vlaneseq
      %v7626 = vshrl.u32 %v7625, 7
      %v7627 = vsub.s32 %v7624, %v7626
      %v7628 = vrot.slane %v7614, %v7627
      %v7629 = vcombine.high %v7621, %v7621
      %v7630 = vcombine.high %v7628, %v7628
      %v7631 = vcombine.high %v7229, %v7229
      %v7633 = vunpack.c.l.s4 1983009808
      %v7634 = vunpack.c.0.s8 %v7633
      %v7635 = vlaneseq
      %v7636 = vshrl.u32 %v7635, 7
      %v7637 = vsub.s32 %v7634, %v7636
      %v7638 = vrot.slane %v7229, %v7637
      %v7640 = vunpack.c.l.s4 1983009808
      %v7641 = vunpack.c.0.s8 %v7640
      %v7642 = vlaneseq
      %v7643 = vshrl.u32 %v7642, 7
      %v7644 = vsub.s32 %v7641, %v7643
      %v7645 = vrot.slane %v7631, %v7644
      %v7646 = vcombine.high %v7638, %v7638
      %v7647 = vcombine.high %v7645, %v7645
      %v7648 = vcombine.high %v7230, %v7230
      %v7650 = vunpack.c.l.s4 1983009808
      %v7651 = vunpack.c.0.s8 %v7650
      %v7652 = vlaneseq
      %v7653 = vshrl.u32 %v7652, 7
      %v7654 = vsub.s32 %v7651, %v7653
      %v7655 = vrot.slane %v7230, %v7654
      %v7657 = vunpack.c.l.s4 1983009808
      %v7658 = vunpack.c.0.s8 %v7657
      %v7659 = vlaneseq
      %v7660 = vshrl.u32 %v7659, 7
      %v7661 = vsub.s32 %v7658, %v7660
      %v7662 = vrot.slane %v7648, %v7661
      %v7663 = vcombine.high %v7655, %v7655
      %v7664 = vcombine.high %v7662, %v7662
      %v7665 = vcombine.high %v7231, %v7231
      %v7667 = vunpack.c.l.s4 1983009808
      %v7668 = vunpack.c.0.s8 %v7667
      %v7669 = vlaneseq
      %v7670 = vshrl.u32 %v7669, 7
      %v7671 = vsub.s32 %v7668, %v7670
      %v7672 = vrot.slane %v7231, %v7671
      %v7674 = vunpack.c.l.s4 1983009808
      %v7675 = vunpack.c.0.s8 %v7674
      %v7676 = vlaneseq
      %v7677 = vshrl.u32 %v7676, 7
      %v7678 = vsub.s32 %v7675, %v7677
      %v7679 = vrot.slane %v7665, %v7678
      %v7680 = vcombine.high %v7672, %v7672
      %v7681 = vcombine.high %v7679, %v7679
      %v7682 = vcombine.high %v7232, %v7232
      %v7684 = vunpack.c.l.s4 1983009808
      %v7685 = vunpack.c.0.s8 %v7684
      %v7686 = vlaneseq
      %v7687 = vshrl.u32 %v7686, 7
      %v7688 = vsub.s32 %v7685, %v7687
      %v7689 = vrot.slane %v7232, %v7688
      %v7691 = vunpack.c.l.s4 1983009808
      %v7692 = vunpack.c.0.s8 %v7691
      %v7693 = vlaneseq
      %v7694 = vshrl.u32 %v7693, 7
      %v7695 = vsub.s32 %v7692, %v7694
      %v7696 = vrot.slane %v7682, %v7695
      %v7697 = vcombine.high %v7689, %v7689
      %v7698 = vcombine.high %v7696, %v7696
      %v7699 = vcombine.high %v7233, %v7233
      %v7701 = vunpack.c.l.s4 1983009808
      %v7702 = vunpack.c.0.s8 %v7701
      %v7703 = vlaneseq
      %v7704 = vshrl.u32 %v7703, 7
      %v7705 = vsub.s32 %v7702, %v7704
      %v7706 = vrot.slane %v7233, %v7705
      %v7708 = vunpack.c.l.s4 1983009808
      %v7709 = vunpack.c.0.s8 %v7708
      %v7710 = vlaneseq
      %v7711 = vshrl.u32 %v7710, 7
      %v7712 = vsub.s32 %v7709, %v7711
      %v7713 = vrot.slane %v7699, %v7712
      %v7714 = vcombine.high %v7706, %v7706
      %v7715 = vcombine.high %v7713, %v7713
      %v7716 = vcombine.high %v7234, %v7234
      %v7718 = vunpack.c.l.s4 1983009808
      %v7719 = vunpack.c.0.s8 %v7718
      %v7720 = vlaneseq
      %v7721 = vshrl.u32 %v7720, 7
      %v7722 = vsub.s32 %v7719, %v7721
      %v7723 = vrot.slane %v7234, %v7722
      %v7725 = vunpack.c.l.s4 1983009808
      %v7726 = vunpack.c.0.s8 %v7725
      %v7727 = vlaneseq
      %v7728 = vshrl.u32 %v7727, 7
      %v7729 = vsub.s32 %v7726, %v7728
      %v7730 = vrot.slane %v7716, %v7729
      %v7731 = vcombine.high %v7723, %v7723
      %v7732 = vcombine.high %v7730, %v7730
      %v7733 = vcombine.high %v7235, %v7235
      %v7735 = vunpack.c.l.s4 1983009808
      %v7736 = vunpack.c.0.s8 %v7735
      %v7737 = vlaneseq
      %v7738 = vshrl.u32 %v7737, 7
      %v7739 = vsub.s32 %v7736, %v7738
      %v7740 = vrot.slane %v7235, %v7739
      %v7742 = vunpack.c.l.s4 1983009808
      %v7743 = vunpack.c.0.s8 %v7742
      %v7744 = vlaneseq
      %v7745 = vshrl.u32 %v7744, 7
      %v7746 = vsub.s32 %v7743, %v7745
      %v7747 = vrot.slane %v7733, %v7746
      %v7748 = vcombine.high %v7740, %v7740
      %v7749 = vcombine.high %v7747, %v7747
      %v7750 = vcombine.high %v7236, %v7236
      %v7752 = vunpack.c.l.s4 1983009808
      %v7753 = vunpack.c.0.s8 %v7752
      %v7754 = vlaneseq
      %v7755 = vshrl.u32 %v7754, 7
      %v7756 = vsub.s32 %v7753, %v7755
      %v7757 = vrot.slane %v7236, %v7756
      %v7759 = vunpack.c.l.s4 1983009808
      %v7760 = vunpack.c.0.s8 %v7759
      %v7761 = vlaneseq
      %v7762 = vshrl.u32 %v7761, 7
      %v7763 = vsub.s32 %v7760, %v7762
      %v7764 = vrot.slane %v7750, %v7763
      %v7765 = vcombine.high %v7757, %v7757
      %v7766 = vcombine.high %v7764, %v7764
      %v7767 = vcombine.high %v7237, %v7237
      %v7769 = vunpack.c.l.s4 1983009808
      %v7770 = vunpack.c.0.s8 %v7769
      %v7771 = vlaneseq
      %v7772 = vshrl.u32 %v7771, 7
      %v7773 = vsub.s32 %v7770, %v7772
      %v7774 = vrot.slane %v7237, %v7773
      %v7776 = vunpack.c.l.s4 1983009808
      %v7777 = vunpack.c.0.s8 %v7776
      %v7778 = vlaneseq
      %v7779 = vshrl.u32 %v7778, 7
      %v7780 = vsub.s32 %v7777, %v7779
      %v7781 = vrot.slane %v7767, %v7780
      %v7782 = vcombine.high %v7774, %v7774
      %v7783 = vcombine.high %v7781, %v7781
      %v7784 = vcombine.high %v7238, %v7238
      %v7786 = vunpack.c.l.s4 1983009808
      %v7787 = vunpack.c.0.s8 %v7786
      %v7788 = vlaneseq
      %v7789 = vshrl.u32 %v7788, 7
      %v7790 = vsub.s32 %v7787, %v7789
      %v7791 = vrot.slane %v7238, %v7790
      %v7793 = vunpack.c.l.s4 1983009808
      %v7794 = vunpack.c.0.s8 %v7793
      %v7795 = vlaneseq
      %v7796 = vshrl.u32 %v7795, 7
      %v7797 = vsub.s32 %v7794, %v7796
      %v7798 = vrot.slane %v7784, %v7797
      %v7799 = vcombine.high %v7791, %v7791
      %v7800 = vcombine.high %v7798, %v7798
      %v7801 = vcombine.high %v7239, %v7239
      %v7803 = vunpack.c.l.s4 1983009808
      %v7804 = vunpack.c.0.s8 %v7803
      %v7805 = vlaneseq
      %v7806 = vshrl.u32 %v7805, 7
      %v7807 = vsub.s32 %v7804, %v7806
      %v7808 = vrot.slane %v7239, %v7807
      %v7810 = vunpack.c.l.s4 1983009808
      %v7811 = vunpack.c.0.s8 %v7810
      %v7812 = vlaneseq
      %v7813 = vshrl.u32 %v7812, 7
      %v7814 = vsub.s32 %v7811, %v7813
      %v7815 = vrot.slane %v7801, %v7814
      %v7816 = vcombine.high %v7808, %v7808
      %v7817 = vcombine.high %v7815, %v7815
      %v7818 = vcombine.high %v7240, %v7240
      %v7820 = vunpack.c.l.s4 1983009808
      %v7821 = vunpack.c.0.s8 %v7820
      %v7822 = vlaneseq
      %v7823 = vshrl.u32 %v7822, 7
      %v7824 = vsub.s32 %v7821, %v7823
      %v7825 = vrot.slane %v7240, %v7824
      %v7827 = vunpack.c.l.s4 1983009808
      %v7828 = vunpack.c.0.s8 %v7827
      %v7829 = vlaneseq
      %v7830 = vshrl.u32 %v7829, 7
      %v7831 = vsub.s32 %v7828, %v7830
      %v7832 = vrot.slane %v7818, %v7831
      %v7833 = vcombine.high %v7825, %v7825
      %v7834 = vcombine.high %v7832, %v7832
      %v7835 = vcombine.high %v7241, %v7241
      %v7837 = vunpack.c.l.s4 1983009808
      %v7838 = vunpack.c.0.s8 %v7837
      %v7839 = vlaneseq
      %v7840 = vshrl.u32 %v7839, 7
      %v7841 = vsub.s32 %v7838, %v7840
      %v7842 = vrot.slane %v7241, %v7841
      %v7844 = vunpack.c.l.s4 1983009808
      %v7845 = vunpack.c.0.s8 %v7844
      %v7846 = vlaneseq
      %v7847 = vshrl.u32 %v7846, 7
      %v7848 = vsub.s32 %v7845, %v7847
      %v7849 = vrot.slane %v7835, %v7848
      %v7850 = vcombine.high %v7842, %v7842
      %v7851 = vcombine.high %v7849, %v7849
      %v7852 = vcombine.high %v7242, %v7242
      %v7854 = vunpack.c.l.s4 1983009808
      %v7855 = vunpack.c.0.s8 %v7854
      %v7856 = vlaneseq
      %v7857 = vshrl.u32 %v7856, 7
      %v7858 = vsub.s32 %v7855, %v7857
      %v7859 = vrot.slane %v7242, %v7858
      %v7861 = vunpack.c.l.s4 1983009808
      %v7862 = vunpack.c.0.s8 %v7861
      %v7863 = vlaneseq
      %v7864 = vshrl.u32 %v7863, 7
      %v7865 = vsub.s32 %v7862, %v7864
      %v7866 = vrot.slane %v7852, %v7865
      %v7867 = vcombine.high %v7859, %v7859
      %v7868 = vcombine.high %v7866, %v7866
      %v7869 = vcombine.high %v7243, %v7243
      %v7871 = vunpack.c.l.s4 1983009808
      %v7872 = vunpack.c.0.s8 %v7871
      %v7873 = vlaneseq
      %v7874 = vshrl.u32 %v7873, 7
      %v7875 = vsub.s32 %v7872, %v7874
      %v7876 = vrot.slane %v7243, %v7875
      %v7878 = vunpack.c.l.s4 1983009808
      %v7879 = vunpack.c.0.s8 %v7878
      %v7880 = vlaneseq
      %v7881 = vshrl.u32 %v7880, 7
      %v7882 = vsub.s32 %v7879, %v7881
      %v7883 = vrot.slane %v7869, %v7882
      %v7884 = vcombine.high %v7876, %v7876
      %v7885 = vcombine.high %v7883, %v7883
      %v7886 = vcombine.high %v7244, %v7244
      %v7888 = vunpack.c.l.s4 1983009808
      %v7889 = vunpack.c.0.s8 %v7888
      %v7890 = vlaneseq
      %v7891 = vshrl.u32 %v7890, 7
      %v7892 = vsub.s32 %v7889, %v7891
      %v7893 = vrot.slane %v7244, %v7892
      %v7895 = vunpack.c.l.s4 1983009808
      %v7896 = vunpack.c.0.s8 %v7895
      %v7897 = vlaneseq
      %v7898 = vshrl.u32 %v7897, 7
      %v7899 = vsub.s32 %v7896, %v7898
      %v7900 = vrot.slane %v7886, %v7899
      %v7901 = vcombine.high %v7893, %v7893
      %v7902 = vcombine.high %v7900, %v7900
      %v7903 = vcombine.high %v7245, %v7245
      %v7905 = vunpack.c.l.s4 1983009808
      %v7906 = vunpack.c.0.s8 %v7905
      %v7907 = vlaneseq
      %v7908 = vshrl.u32 %v7907, 7
      %v7909 = vsub.s32 %v7906, %v7908
      %v7910 = vrot.slane %v7245, %v7909
      %v7912 = vunpack.c.l.s4 1983009808
      %v7913 = vunpack.c.0.s8 %v7912
      %v7914 = vlaneseq
      %v7915 = vshrl.u32 %v7914, 7
      %v7916 = vsub.s32 %v7913, %v7915
      %v7917 = vrot.slane %v7903, %v7916
      %v7918 = vcombine.high %v7910, %v7910
      %v7919 = vcombine.high %v7917, %v7917
      %v7920 = vcombine.high %v7246, %v7246
      %v7922 = vunpack.c.l.s4 1983009808
      %v7923 = vunpack.c.0.s8 %v7922
      %v7924 = vlaneseq
      %v7925 = vshrl.u32 %v7924, 7
      %v7926 = vsub.s32 %v7923, %v7925
      %v7927 = vrot.slane %v7246, %v7926
      %v7929 = vunpack.c.l.s4 1983009808
      %v7930 = vunpack.c.0.s8 %v7929
      %v7931 = vlaneseq
      %v7932 = vshrl.u32 %v7931, 7
      %v7933 = vsub.s32 %v7930, %v7932
      %v7934 = vrot.slane %v7920, %v7933
      %v7935 = vcombine.high %v7927, %v7927
      %v7936 = vcombine.high %v7934, %v7934
      %v7937 = vcombine.high %v7247, %v7247
      %v7939 = vunpack.c.l.s4 1983009808
      %v7940 = vunpack.c.0.s8 %v7939
      %v7941 = vlaneseq
      %v7942 = vshrl.u32 %v7941, 7
      %v7943 = vsub.s32 %v7940, %v7942
      %v7944 = vrot.slane %v7247, %v7943
      %v7946 = vunpack.c.l.s4 1983009808
      %v7947 = vunpack.c.0.s8 %v7946
      %v7948 = vlaneseq
      %v7949 = vshrl.u32 %v7948, 7
      %v7950 = vsub.s32 %v7947, %v7949
      %v7951 = vrot.slane %v7937, %v7950
      %v7952 = vcombine.high %v7944, %v7944
      %v7953 = vcombine.high %v7951, %v7951
      %v7954 = vcombine.high %v7248, %v7248
      %v7956 = vunpack.c.l.s4 1983009808
      %v7957 = vunpack.c.0.s8 %v7956
      %v7958 = vlaneseq
      %v7959 = vshrl.u32 %v7958, 7
      %v7960 = vsub.s32 %v7957, %v7959
      %v7961 = vrot.slane %v7248, %v7960
      %v7963 = vunpack.c.l.s4 1983009808
      %v7964 = vunpack.c.0.s8 %v7963
      %v7965 = vlaneseq
      %v7966 = vshrl.u32 %v7965, 7
      %v7967 = vsub.s32 %v7964, %v7966
      %v7968 = vrot.slane %v7954, %v7967
      %v7969 = vcombine.high %v7961, %v7961
      %v7970 = vcombine.high %v7968, %v7968
      %v7972 = vunpack.c.l.s4 1983009808
      %v7973 = vunpack.c.0.s8 %v7972
      %v7974 = vlaneseq
      %v7975 = vshrl.u32 %v7974, 7
      %v7976 = vsub.s32 %v7973, %v7975
      %v7977 = vrot.slane %v7249, %v7976
      %v7978 = vcombine.high %v7977, %v7977
      %v7979 = vcombine.low %v7298, %v7306
      %v7980 = vcombine.low %v7305, %v7307
      %v7982 = vunpack.c.l.s4 1983009808
      %v7983 = vunpack.c.0.s8 %v7982
      %v7984 = vlaneseq
      %v7985 = vshrl.u32 %v7984, 7
      %v7986 = vsub.s32 %v7983, %v7985
      %v7987 = vrot.slane %v7979, %v7986
      %v7989 = vunpack.c.l.s4 1983009808
      %v7990 = vunpack.c.0.s8 %v7989
      %v7991 = vlaneseq
      %v7992 = vshrl.u32 %v7991, 7
      %v7993 = vsub.s32 %v7990, %v7992
      %v7994 = vrot.slane %v7980, %v7993
      %v7995 = vcombine.low %v7987, %v7994
      %v7996 = vcombine.low %v7315, %v7323
      %v7997 = vcombine.low %v7322, %v7324
      %v7999 = vunpack.c.l.s4 1983009808
      %v8000 = vunpack.c.0.s8 %v7999
      %v8001 = vlaneseq
      %v8002 = vshrl.u32 %v8001, 7
      %v8003 = vsub.s32 %v8000, %v8002
      %v8004 = vrot.slane %v7996, %v8003
      %v8006 = vunpack.c.l.s4 1983009808
      %v8007 = vunpack.c.0.s8 %v8006
      %v8008 = vlaneseq
      %v8009 = vshrl.u32 %v8008, 7
      %v8010 = vsub.s32 %v8007, %v8009
      %v8011 = vrot.slane %v7997, %v8010
      %v8012 = vcombine.low %v8004, %v8011
      %v8013 = vcombine.low %v7340, %v7339
      %v8014 = vcombine.low %v7341, %v7349
      %v8016 = vunpack.c.l.s4 1983009808
      %v8017 = vunpack.c.0.s8 %v8016
      %v8018 = vlaneseq
      %v8019 = vshrl.u32 %v8018, 7
      %v8020 = vsub.s32 %v8017, %v8019
      %v8021 = vrot.slane %v8013, %v8020
      %v8023 = vunpack.c.l.s4 1983009808
      %v8024 = vunpack.c.0.s8 %v8023
      %v8025 = vlaneseq
      %v8026 = vshrl.u32 %v8025, 7
      %v8027 = vsub.s32 %v8024, %v8026
      %v8028 = vrot.slane %v8014, %v8027
      %v8029 = vcombine.low %v8021, %v8028
      %v8030 = vcombine.low %v7357, %v7356
      %v8031 = vcombine.low %v7358, %v7366
      %v8033 = vunpack.c.l.s4 1983009808
      %v8034 = vunpack.c.0.s8 %v8033
      %v8035 = vlaneseq
      %v8036 = vshrl.u32 %v8035, 7
      %v8037 = vsub.s32 %v8034, %v8036
      %v8038 = vrot.slane %v8030, %v8037
      %v8040 = vunpack.c.l.s4 1983009808
      %v8041 = vunpack.c.0.s8 %v8040
      %v8042 = vlaneseq
      %v8043 = vshrl.u32 %v8042, 7
      %v8044 = vsub.s32 %v8041, %v8043
      %v8045 = vrot.slane %v8031, %v8044
      %v8046 = vcombine.low %v8038, %v8045
      %v8047 = vcombine.low %v7373, %v7375
      %v8048 = vcombine.low %v7383, %v7391
      %v8050 = vunpack.c.l.s4 1983009808
      %v8051 = vunpack.c.0.s8 %v8050
      %v8052 = vlaneseq
      %v8053 = vshrl.u32 %v8052, 7
      %v8054 = vsub.s32 %v8051, %v8053
      %v8055 = vrot.slane %v8047, %v8054
      %v8057 = vunpack.c.l.s4 1983009808
      %v8058 = vunpack.c.0.s8 %v8057
      %v8059 = vlaneseq
      %v8060 = vshrl.u32 %v8059, 7
      %v8061 = vsub.s32 %v8058, %v8060
      %v8062 = vrot.slane %v8048, %v8061
      %v8063 = vcombine.low %v8055, %v8062
      %v8064 = vcombine.low %v7390, %v7392
      %v8065 = vcombine.low %v7400, %v7408
      %v8067 = vunpack.c.l.s4 1983009808
      %v8068 = vunpack.c.0.s8 %v8067
      %v8069 = vlaneseq
      %v8070 = vshrl.u32 %v8069, 7
      %v8071 = vsub.s32 %v8068, %v8070
      %v8072 = vrot.slane %v8064, %v8071
      %v8074 = vunpack.c.l.s4 1983009808
      %v8075 = vunpack.c.0.s8 %v8074
      %v8076 = vlaneseq
      %v8077 = vshrl.u32 %v8076, 7
      %v8078 = vsub.s32 %v8075, %v8077
      %v8079 = vrot.slane %v8065, %v8078
      %v8080 = vcombine.low %v8072, %v8079
      %v8081 = vcombine.low %v7409, %v7417
      %v8082 = vcombine.low %v7425, %v7424
      %v8084 = vunpack.c.l.s4 1983009808
      %v8085 = vunpack.c.0.s8 %v8084
      %v8086 = vlaneseq
      %v8087 = vshrl.u32 %v8086, 7
      %v8088 = vsub.s32 %v8085, %v8087
      %v8089 = vrot.slane %v8081, %v8088
      %v8091 = vunpack.c.l.s4 1983009808
      %v8092 = vunpack.c.0.s8 %v8091
      %v8093 = vlaneseq
      %v8094 = vshrl.u32 %v8093, 7
      %v8095 = vsub.s32 %v8092, %v8094
      %v8096 = vrot.slane %v8082, %v8095
      %v8097 = vcombine.low %v8089, %v8096
      %v8098 = vcombine.low %v7426, %v7434
      %v8099 = vcombine.low %v7442, %v7441
      %v8101 = vunpack.c.l.s4 1983009808
      %v8102 = vunpack.c.0.s8 %v8101
      %v8103 = vlaneseq
      %v8104 = vshrl.u32 %v8103, 7
      %v8105 = vsub.s32 %v8102, %v8104
      %v8106 = vrot.slane %v8098, %v8105
      %v8108 = vunpack.c.l.s4 1983009808
      %v8109 = vunpack.c.0.s8 %v8108
      %v8110 = vlaneseq
      %v8111 = vshrl.u32 %v8110, 7
      %v8112 = vsub.s32 %v8109, %v8111
      %v8113 = vrot.slane %v8099, %v8112
      %v8114 = vcombine.low %v8106, %v8113
      %v8115 = vcombine.low %v7451, %v7459
      %v8116 = vcombine.low %v7458, %v7460
      %v8118 = vunpack.c.l.s4 1983009808
      %v8119 = vunpack.c.0.s8 %v8118
      %v8120 = vlaneseq
      %v8121 = vshrl.u32 %v8120, 7
      %v8122 = vsub.s32 %v8119, %v8121
      %v8123 = vrot.slane %v8115, %v8122
      %v8125 = vunpack.c.l.s4 1983009808
      %v8126 = vunpack.c.0.s8 %v8125
      %v8127 = vlaneseq
      %v8128 = vshrl.u32 %v8127, 7
      %v8129 = vsub.s32 %v8126, %v8128
      %v8130 = vrot.slane %v8116, %v8129
      %v8131 = vcombine.low %v8123, %v8130
      %v8132 = vcombine.low %v7468, %v7476
      %v8133 = vcombine.low %v7475, %v7477
      %v8135 = vunpack.c.l.s4 1983009808
      %v8136 = vunpack.c.0.s8 %v8135
      %v8137 = vlaneseq
      %v8138 = vshrl.u32 %v8137, 7
      %v8139 = vsub.s32 %v8136, %v8138
      %v8140 = vrot.slane %v8132, %v8139
      %v8142 = vunpack.c.l.s4 1983009808
      %v8143 = vunpack.c.0.s8 %v8142
      %v8144 = vlaneseq
      %v8145 = vshrl.u32 %v8144, 7
      %v8146 = vsub.s32 %v8143, %v8145
      %v8147 = vrot.slane %v8133, %v8146
      %v8148 = vcombine.low %v8140, %v8147
      %v8149 = vcombine.low %v7493, %v7492
      %v8150 = vcombine.low %v7494, %v7502
      %v8152 = vunpack.c.l.s4 1983009808
      %v8153 = vunpack.c.0.s8 %v8152
      %v8154 = vlaneseq
      %v8155 = vshrl.u32 %v8154, 7
      %v8156 = vsub.s32 %v8153, %v8155
      %v8157 = vrot.slane %v8149, %v8156
      %v8159 = vunpack.c.l.s4 1983009808
      %v8160 = vunpack.c.0.s8 %v8159
      %v8161 = vlaneseq
      %v8162 = vshrl.u32 %v8161, 7
      %v8163 = vsub.s32 %v8160, %v8162
      %v8164 = vrot.slane %v8150, %v8163
      %v8165 = vcombine.low %v8157, %v8164
      %v8166 = vcombine.low %v7510, %v7509
      %v8167 = vcombine.low %v7511, %v7519
      %v8169 = vunpack.c.l.s4 1983009808
      %v8170 = vunpack.c.0.s8 %v8169
      %v8171 = vlaneseq
      %v8172 = vshrl.u32 %v8171, 7
      %v8173 = vsub.s32 %v8170, %v8172
      %v8174 = vrot.slane %v8166, %v8173
      %v8176 = vunpack.c.l.s4 1983009808
      %v8177 = vunpack.c.0.s8 %v8176
      %v8178 = vlaneseq
      %v8179 = vshrl.u32 %v8178, 7
      %v8180 = vsub.s32 %v8177, %v8179
      %v8181 = vrot.slane %v8167, %v8180
      %v8182 = vcombine.low %v8174, %v8181
      %v8183 = vcombine.low %v7526, %v7528
      %v8184 = vcombine.low %v7536, %v7544
      %v8186 = vunpack.c.l.s4 1983009808
      %v8187 = vunpack.c.0.s8 %v8186
      %v8188 = vlaneseq
      %v8189 = vshrl.u32 %v8188, 7
      %v8190 = vsub.s32 %v8187, %v8189
      %v8191 = vrot.slane %v8183, %v8190
      %v8193 = vunpack.c.l.s4 1983009808
      %v8194 = vunpack.c.0.s8 %v8193
      %v8195 = vlaneseq
      %v8196 = vshrl.u32 %v8195, 7
      %v8197 = vsub.s32 %v8194, %v8196
      %v8198 = vrot.slane %v8184, %v8197
      %v8199 = vcombine.low %v8191, %v8198
      %v8200 = vcombine.low %v7543, %v7545
      %v8201 = vcombine.low %v7553, %v7561
      %v8203 = vunpack.c.l.s4 1983009808
      %v8204 = vunpack.c.0.s8 %v8203
      %v8205 = vlaneseq
      %v8206 = vshrl.u32 %v8205, 7
      %v8207 = vsub.s32 %v8204, %v8206
      %v8208 = vrot.slane %v8200, %v8207
      %v8210 = vunpack.c.l.s4 1983009808
      %v8211 = vunpack.c.0.s8 %v8210
      %v8212 = vlaneseq
      %v8213 = vshrl.u32 %v8212, 7
      %v8214 = vsub.s32 %v8211, %v8213
      %v8215 = vrot.slane %v8201, %v8214
      %v8216 = vcombine.low %v8208, %v8215
      %v8217 = vcombine.low %v7562, %v7570
      %v8218 = vcombine.low %v7578, %v7577
      %v8220 = vunpack.c.l.s4 1983009808
      %v8221 = vunpack.c.0.s8 %v8220
      %v8222 = vlaneseq
      %v8223 = vshrl.u32 %v8222, 7
      %v8224 = vsub.s32 %v8221, %v8223
      %v8225 = vrot.slane %v8217, %v8224
      %v8227 = vunpack.c.l.s4 1983009808
      %v8228 = vunpack.c.0.s8 %v8227
      %v8229 = vlaneseq
      %v8230 = vshrl.u32 %v8229, 7
      %v8231 = vsub.s32 %v8228, %v8230
      %v8232 = vrot.slane %v8218, %v8231
      %v8233 = vcombine.low %v8225, %v8232
      %v8234 = vcombine.low %v7579, %v7587
      %v8235 = vcombine.low %v7595, %v7594
      %v8237 = vunpack.c.l.s4 1983009808
      %v8238 = vunpack.c.0.s8 %v8237
      %v8239 = vlaneseq
      %v8240 = vshrl.u32 %v8239, 7
      %v8241 = vsub.s32 %v8238, %v8240
      %v8242 = vrot.slane %v8234, %v8241
      %v8244 = vunpack.c.l.s4 1983009808
      %v8245 = vunpack.c.0.s8 %v8244
      %v8246 = vlaneseq
      %v8247 = vshrl.u32 %v8246, 7
      %v8248 = vsub.s32 %v8245, %v8247
      %v8249 = vrot.slane %v8235, %v8248
      %v8250 = vcombine.low %v8242, %v8249
      %v8251 = vcombine.low %v7604, %v7612
      %v8252 = vcombine.low %v7611, %v7613
      %v8254 = vunpack.c.l.s4 1983009808
      %v8255 = vunpack.c.0.s8 %v8254
      %v8256 = vlaneseq
      %v8257 = vshrl.u32 %v8256, 7
      %v8258 = vsub.s32 %v8255, %v8257
      %v8259 = vrot.slane %v8251, %v8258
      %v8261 = vunpack.c.l.s4 1983009808
      %v8262 = vunpack.c.0.s8 %v8261
      %v8263 = vlaneseq
      %v8264 = vshrl.u32 %v8263, 7
      %v8265 = vsub.s32 %v8262, %v8264
      %v8266 = vrot.slane %v8252, %v8265
      %v8267 = vcombine.low %v8259, %v8266
      %v8268 = vcombine.low %v7621, %v7629
      %v8269 = vcombine.low %v7628, %v7630
      %v8271 = vunpack.c.l.s4 1983009808
      %v8272 = vunpack.c.0.s8 %v8271
      %v8273 = vlaneseq
      %v8274 = vshrl.u32 %v8273, 7
      %v8275 = vsub.s32 %v8272, %v8274
      %v8276 = vrot.slane %v8268, %v8275
      %v8278 = vunpack.c.l.s4 1983009808
      %v8279 = vunpack.c.0.s8 %v8278
      %v8280 = vlaneseq
      %v8281 = vshrl.u32 %v8280, 7
      %v8282 = vsub.s32 %v8279, %v8281
      %v8283 = vrot.slane %v8269, %v8282
      %v8284 = vcombine.low %v8276, %v8283
      %v8285 = vcombine.low %v7646, %v7645
      %v8286 = vcombine.low %v7647, %v7655
      %v8288 = vunpack.c.l.s4 1983009808
      %v8289 = vunpack.c.0.s8 %v8288
      %v8290 = vlaneseq
      %v8291 = vshrl.u32 %v8290, 7
      %v8292 = vsub.s32 %v8289, %v8291
      %v8293 = vrot.slane %v8285, %v8292
      %v8295 = vunpack.c.l.s4 1983009808
      %v8296 = vunpack.c.0.s8 %v8295
      %v8297 = vlaneseq
      %v8298 = vshrl.u32 %v8297, 7
      %v8299 = vsub.s32 %v8296, %v8298
      %v8300 = vrot.slane %v8286, %v8299
      %v8301 = vcombine.low %v8293, %v8300
      %v8302 = vcombine.low %v7663, %v7662
      %v8303 = vcombine.low %v7664, %v7672
      %v8305 = vunpack.c.l.s4 1983009808
      %v8306 = vunpack.c.0.s8 %v8305
      %v8307 = vlaneseq
      %v8308 = vshrl.u32 %v8307, 7
      %v8309 = vsub.s32 %v8306, %v8308
      %v8310 = vrot.slane %v8302, %v8309
      %v8312 = vunpack.c.l.s4 1983009808
      %v8313 = vunpack.c.0.s8 %v8312
      %v8314 = vlaneseq
      %v8315 = vshrl.u32 %v8314, 7
      %v8316 = vsub.s32 %v8313, %v8315
      %v8317 = vrot.slane %v8303, %v8316
      %v8318 = vcombine.low %v8310, %v8317
      %v8319 = vcombine.low %v7679, %v7681
      %v8320 = vcombine.low %v7689, %v7697
      %v8322 = vunpack.c.l.s4 1983009808
      %v8323 = vunpack.c.0.s8 %v8322
      %v8324 = vlaneseq
      %v8325 = vshrl.u32 %v8324, 7
      %v8326 = vsub.s32 %v8323, %v8325
      %v8327 = vrot.slane %v8319, %v8326
      %v8329 = vunpack.c.l.s4 1983009808
      %v8330 = vunpack.c.0.s8 %v8329
      %v8331 = vlaneseq
      %v8332 = vshrl.u32 %v8331, 7
      %v8333 = vsub.s32 %v8330, %v8332
      %v8334 = vrot.slane %v8320, %v8333
      %v8335 = vcombine.low %v8327, %v8334
      %v8336 = vcombine.low %v7696, %v7698
      %v8337 = vcombine.low %v7706, %v7714
      %v8339 = vunpack.c.l.s4 1983009808
      %v8340 = vunpack.c.0.s8 %v8339
      %v8341 = vlaneseq
      %v8342 = vshrl.u32 %v8341, 7
      %v8343 = vsub.s32 %v8340, %v8342
      %v8344 = vrot.slane %v8336, %v8343
      %v8346 = vunpack.c.l.s4 1983009808
      %v8347 = vunpack.c.0.s8 %v8346
      %v8348 = vlaneseq
      %v8349 = vshrl.u32 %v8348, 7
      %v8350 = vsub.s32 %v8347, %v8349
      %v8351 = vrot.slane %v8337, %v8350
      %v8352 = vcombine.low %v8344, %v8351
      %v8353 = vcombine.low %v7715, %v7723
      %v8354 = vcombine.low %v7731, %v7730
      %v8356 = vunpack.c.l.s4 1983009808
      %v8357 = vunpack.c.0.s8 %v8356
      %v8358 = vlaneseq
      %v8359 = vshrl.u32 %v8358, 7
      %v8360 = vsub.s32 %v8357, %v8359
      %v8361 = vrot.slane %v8353, %v8360
      %v8363 = vunpack.c.l.s4 1983009808
      %v8364 = vunpack.c.0.s8 %v8363
      %v8365 = vlaneseq
      %v8366 = vshrl.u32 %v8365, 7
      %v8367 = vsub.s32 %v8364, %v8366
      %v8368 = vrot.slane %v8354, %v8367
      %v8369 = vcombine.low %v8361, %v8368
      %v8370 = vcombine.low %v7732, %v7740
      %v8371 = vcombine.low %v7748, %v7747
      %v8373 = vunpack.c.l.s4 1983009808
      %v8374 = vunpack.c.0.s8 %v8373
      %v8375 = vlaneseq
      %v8376 = vshrl.u32 %v8375, 7
      %v8377 = vsub.s32 %v8374, %v8376
      %v8378 = vrot.slane %v8370, %v8377
      %v8380 = vunpack.c.l.s4 1983009808
      %v8381 = vunpack.c.0.s8 %v8380
      %v8382 = vlaneseq
      %v8383 = vshrl.u32 %v8382, 7
      %v8384 = vsub.s32 %v8381, %v8383
      %v8385 = vrot.slane %v8371, %v8384
      %v8386 = vcombine.low %v8378, %v8385
      %v8387 = vcombine.low %v7757, %v7765
      %v8388 = vcombine.low %v7764, %v7766
      %v8390 = vunpack.c.l.s4 1983009808
      %v8391 = vunpack.c.0.s8 %v8390
      %v8392 = vlaneseq
      %v8393 = vshrl.u32 %v8392, 7
      %v8394 = vsub.s32 %v8391, %v8393
      %v8395 = vrot.slane %v8387, %v8394
      %v8397 = vunpack.c.l.s4 1983009808
      %v8398 = vunpack.c.0.s8 %v8397
      %v8399 = vlaneseq
      %v8400 = vshrl.u32 %v8399, 7
      %v8401 = vsub.s32 %v8398, %v8400
      %v8402 = vrot.slane %v8388, %v8401
      %v8403 = vcombine.low %v8395, %v8402
      %v8404 = vcombine.low %v7774, %v7782
      %v8405 = vcombine.low %v7781, %v7783
      %v8407 = vunpack.c.l.s4 1983009808
      %v8408 = vunpack.c.0.s8 %v8407
      %v8409 = vlaneseq
      %v8410 = vshrl.u32 %v8409, 7
      %v8411 = vsub.s32 %v8408, %v8410
      %v8412 = vrot.slane %v8404, %v8411
      %v8414 = vunpack.c.l.s4 1983009808
      %v8415 = vunpack.c.0.s8 %v8414
      %v8416 = vlaneseq
      %v8417 = vshrl.u32 %v8416, 7
      %v8418 = vsub.s32 %v8415, %v8417
      %v8419 = vrot.slane %v8405, %v8418
      %v8420 = vcombine.low %v8412, %v8419
      %v8421 = vcombine.low %v7799, %v7798
      %v8422 = vcombine.low %v7800, %v7808
      %v8424 = vunpack.c.l.s4 1983009808
      %v8425 = vunpack.c.0.s8 %v8424
      %v8426 = vlaneseq
      %v8427 = vshrl.u32 %v8426, 7
      %v8428 = vsub.s32 %v8425, %v8427
      %v8429 = vrot.slane %v8421, %v8428
      %v8431 = vunpack.c.l.s4 1983009808
      %v8432 = vunpack.c.0.s8 %v8431
      %v8433 = vlaneseq
      %v8434 = vshrl.u32 %v8433, 7
      %v8435 = vsub.s32 %v8432, %v8434
      %v8436 = vrot.slane %v8422, %v8435
      %v8437 = vcombine.low %v8429, %v8436
      %v8438 = vcombine.low %v7816, %v7815
      %v8439 = vcombine.low %v7817, %v7825
      %v8441 = vunpack.c.l.s4 1983009808
      %v8442 = vunpack.c.0.s8 %v8441
      %v8443 = vlaneseq
      %v8444 = vshrl.u32 %v8443, 7
      %v8445 = vsub.s32 %v8442, %v8444
      %v8446 = vrot.slane %v8438, %v8445
      %v8448 = vunpack.c.l.s4 1983009808
      %v8449 = vunpack.c.0.s8 %v8448
      %v8450 = vlaneseq
      %v8451 = vshrl.u32 %v8450, 7
      %v8452 = vsub.s32 %v8449, %v8451
      %v8453 = vrot.slane %v8439, %v8452
      %v8454 = vcombine.low %v8446, %v8453
      %v8455 = vcombine.low %v7832, %v7834
      %v8456 = vcombine.low %v7842, %v7850
      %v8458 = vunpack.c.l.s4 1983009808
      %v8459 = vunpack.c.0.s8 %v8458
      %v8460 = vlaneseq
      %v8461 = vshrl.u32 %v8460, 7
      %v8462 = vsub.s32 %v8459, %v8461
      %v8463 = vrot.slane %v8455, %v8462
      %v8465 = vunpack.c.l.s4 1983009808
      %v8466 = vunpack.c.0.s8 %v8465
      %v8467 = vlaneseq
      %v8468 = vshrl.u32 %v8467, 7
      %v8469 = vsub.s32 %v8466, %v8468
      %v8470 = vrot.slane %v8456, %v8469
      %v8471 = vcombine.low %v8463, %v8470
      %v8472 = vcombine.low %v7849, %v7851
      %v8473 = vcombine.low %v7859, %v7867
      %v8475 = vunpack.c.l.s4 1983009808
      %v8476 = vunpack.c.0.s8 %v8475
      %v8477 = vlaneseq
      %v8478 = vshrl.u32 %v8477, 7
      %v8479 = vsub.s32 %v8476, %v8478
      %v8480 = vrot.slane %v8472, %v8479
      %v8482 = vunpack.c.l.s4 1983009808
      %v8483 = vunpack.c.0.s8 %v8482
      %v8484 = vlaneseq
      %v8485 = vshrl.u32 %v8484, 7
      %v8486 = vsub.s32 %v8483, %v8485
      %v8487 = vrot.slane %v8473, %v8486
      %v8488 = vcombine.low %v8480, %v8487
      %v8489 = vcombine.low %v7868, %v7876
      %v8490 = vcombine.low %v7884, %v7883
      %v8492 = vunpack.c.l.s4 1983009808
      %v8493 = vunpack.c.0.s8 %v8492
      %v8494 = vlaneseq
      %v8495 = vshrl.u32 %v8494, 7
      %v8496 = vsub.s32 %v8493, %v8495
      %v8497 = vrot.slane %v8489, %v8496
      %v8499 = vunpack.c.l.s4 1983009808
      %v8500 = vunpack.c.0.s8 %v8499
      %v8501 = vlaneseq
      %v8502 = vshrl.u32 %v8501, 7
      %v8503 = vsub.s32 %v8500, %v8502
      %v8504 = vrot.slane %v8490, %v8503
      %v8505 = vcombine.low %v8497, %v8504
      %v8506 = vcombine.low %v7885, %v7893
      %v8507 = vcombine.low %v7901, %v7900
      %v8509 = vunpack.c.l.s4 1983009808
      %v8510 = vunpack.c.0.s8 %v8509
      %v8511 = vlaneseq
      %v8512 = vshrl.u32 %v8511, 7
      %v8513 = vsub.s32 %v8510, %v8512
      %v8514 = vrot.slane %v8506, %v8513
      %v8516 = vunpack.c.l.s4 1983009808
      %v8517 = vunpack.c.0.s8 %v8516
      %v8518 = vlaneseq
      %v8519 = vshrl.u32 %v8518, 7
      %v8520 = vsub.s32 %v8517, %v8519
      %v8521 = vrot.slane %v8507, %v8520
      %v8522 = vcombine.low %v8514, %v8521
      %vm8555 = vcmask 64512
      %8556 = vst.msk [vmem:[#allocation3] sm:$0xff] %vm8555, %v7995
      %8557 = vst.msk [vmem:[#allocation3 + $0x8] sm:$0xff] %vm8555, %v8012
      %8558 = vst.msk [vmem:[#allocation3 + $0x10] sm:$0xff] %vm8555, %v8029
      %8559 = vst.msk [vmem:[#allocation3 + $0x18] sm:$0xff] %vm8555, %v8046
      %8560 = vst.msk [vmem:[#allocation3 + $0x20] sm:$0xff] %vm8555, %v8063
      %8561 = vst.msk [vmem:[#allocation3 + $0x28] sm:$0xff] %vm8555, %v8080
      %8562 = vst.msk [vmem:[#allocation3 + $0x30] sm:$0xff] %vm8555, %v8097
      %8563 = vst.msk [vmem:[#allocation3 + $0x38] sm:$0xff] %vm8555, %v8114
      %8564 = vst.msk [vmem:[#allocation3 + $0x40] sm:$0xff] %vm8555, %v8131
      %8565 = vst.msk [vmem:[#allocation3 + $0x48] sm:$0xff] %vm8555, %v8148
      %8566 = vst.msk [vmem:[#allocation3 + $0x50] sm:$0xff] %vm8555, %v8165
      %8567 = vst.msk [vmem:[#allocation3 + $0x58] sm:$0xff] %vm8555, %v8182
      %8568 = vst.msk [vmem:[#allocation3 + $0x60] sm:$0xff] %vm8555, %v8199
      %8569 = vst.msk [vmem:[#allocation3 + $0x68] sm:$0xff] %vm8555, %v8216
      %8570 = vst.msk [vmem:[#allocation3 + $0x70] sm:$0xff] %vm8555, %v8233
      %8571 = vst.msk [vmem:[#allocation3 + $0x78] sm:$0xff] %vm8555, %v8250
      %8572 = vst.msk [vmem:[#allocation3 + $0x80] sm:$0xff] %vm8555, %v8267
      %8573 = vst.msk [vmem:[#allocation3 + $0x88] sm:$0xff] %vm8555, %v8284
      %8574 = vst.msk [vmem:[#allocation3 + $0x90] sm:$0xff] %vm8555, %v8301
      %8575 = vst.msk [vmem:[#allocation3 + $0x98] sm:$0xff] %vm8555, %v8318
      %8576 = vst.msk [vmem:[#allocation3 + $0xa0] sm:$0xff] %vm8555, %v8335
      %8577 = vst.msk [vmem:[#allocation3 + $0xa8] sm:$0xff] %vm8555, %v8352
      %8578 = vst.msk [vmem:[#allocation3 + $0xb0] sm:$0xff] %vm8555, %v8369
      %8579 = vst.msk [vmem:[#allocation3 + $0xb8] sm:$0xff] %vm8555, %v8386
      %8580 = vst.msk [vmem:[#allocation3 + $0xc0] sm:$0xff] %vm8555, %v8403
      %8581 = vst.msk [vmem:[#allocation3 + $0xc8] sm:$0xff] %vm8555, %v8420
      %8582 = vst.msk [vmem:[#allocation3 + $0xd0] sm:$0xff] %vm8555, %v8437
      %8583 = vst.msk [vmem:[#allocation3 + $0xd8] sm:$0xff] %vm8555, %v8454
      %8584 = vst.msk [vmem:[#allocation3 + $0xe0] sm:$0xff] %vm8555, %v8471
      %8585 = vst.msk [vmem:[#allocation3 + $0xe8] sm:$0xff] %vm8555, %v8488
      %8586 = vst.msk [vmem:[#allocation3 + $0xf0] sm:$0xff] %vm8555, %v8505
      %8587 = vst.msk [vmem:[#allocation3 + $0xf8] sm:$0xff] %vm8555, %v8522
      %v8588 = vrot.slane %v7298, 7
      %v8589 = vrot.slane %v8588, 2
      %v8590 = vrot.slane %v7306, 7
      %v8591 = vsel %vm1971, %v8589, %v8590
      %v8592 = vrot.slane %v8590, 2
      %v8593 = vrot.slane %v7305, 7
      %v8594 = vsel %vm1971, %v8592, %v8593
      %v8595 = vrot.slane %v8593, 2
      %v8596 = vrot.slane %v7307, 7
      %v8597 = vsel %vm1971, %v8595, %v8596
      %v8598 = vrot.slane %v8596, 2
      %v8599 = vrot.slane %v7315, 7
      %v8600 = vsel %vm1971, %v8598, %v8599
      %v8601 = vrot.slane %v8599, 2
      %v8602 = vrot.slane %v7323, 7
      %v8603 = vsel %vm1971, %v8601, %v8602
      %v8604 = vrot.slane %v8602, 2
      %v8605 = vrot.slane %v7322, 7
      %v8606 = vsel %vm1971, %v8604, %v8605
      %v8607 = vrot.slane %v8605, 2
      %v8608 = vrot.slane %v7324, 7
      %v8609 = vsel %vm1971, %v8607, %v8608
      %v8610 = vrot.slane %v8608, 2
      %v8611 = vrot.slane %v7332, 7
      %v8612 = vsel %vm1971, %v8610, %v8611
      %v8613 = vrot.slane %v7340, 7
      %v8614 = vrot.slane %v8613, 2
      %v8615 = vrot.slane %v7339, 7
      %v8616 = vsel %vm1971, %v8614, %v8615
      %v8617 = vrot.slane %v8615, 2
      %v8618 = vrot.slane %v7341, 7
      %v8619 = vsel %vm1971, %v8617, %v8618
      %v8620 = vrot.slane %v8618, 2
      %v8621 = vrot.slane %v7349, 7
      %v8622 = vsel %vm1971, %v8620, %v8621
      %v8623 = vrot.slane %v8621, 2
      %v8624 = vrot.slane %v7357, 7
      %v8625 = vsel %vm1971, %v8623, %v8624
      %v8626 = vrot.slane %v8624, 2
      %v8627 = vrot.slane %v7356, 7
      %v8628 = vsel %vm1971, %v8626, %v8627
      %v8629 = vrot.slane %v8627, 2
      %v8630 = vrot.slane %v7358, 7
      %v8631 = vsel %vm1971, %v8629, %v8630
      %v8632 = vrot.slane %v8630, 2
      %v8633 = vrot.slane %v7366, 7
      %v8634 = vsel %vm1971, %v8632, %v8633
      %v8635 = vrot.slane %v8633, 2
      %v8636 = vrot.slane %v7374, 7
      %v8637 = vsel %vm1971, %v8635, %v8636
      %v8638 = vrot.slane %v7373, 7
      %v8639 = vrot.slane %v8638, 2
      %v8640 = vrot.slane %v7375, 7
      %v8641 = vsel %vm1971, %v8639, %v8640
      %v8642 = vrot.slane %v8640, 2
      %v8643 = vrot.slane %v7383, 7
      %v8644 = vsel %vm1971, %v8642, %v8643
      %v8645 = vrot.slane %v8643, 2
      %v8646 = vrot.slane %v7391, 7
      %v8647 = vsel %vm1971, %v8645, %v8646
      %v8648 = vrot.slane %v8646, 2
      %v8649 = vrot.slane %v7390, 7
      %v8650 = vsel %vm1971, %v8648, %v8649
      %v8651 = vrot.slane %v8649, 2
      %v8652 = vrot.slane %v7392, 7
      %v8653 = vsel %vm1971, %v8651, %v8652
      %v8654 = vrot.slane %v8652, 2
      %v8655 = vrot.slane %v7400, 7
      %v8656 = vsel %vm1971, %v8654, %v8655
      %v8657 = vrot.slane %v8655, 2
      %v8658 = vrot.slane %v7408, 7
      %v8659 = vsel %vm1971, %v8657, %v8658
      %v8660 = vrot.slane %v8658, 2
      %v8661 = vrot.slane %v7407, 7
      %v8662 = vsel %vm1971, %v8660, %v8661
      %v8663 = vrot.slane %v7409, 7
      %v8664 = vrot.slane %v8663, 2
      %v8665 = vrot.slane %v7417, 7
      %v8666 = vsel %vm1971, %v8664, %v8665
      %v8667 = vrot.slane %v8665, 2
      %v8668 = vrot.slane %v7425, 7
      %v8669 = vsel %vm1971, %v8667, %v8668
      %v8670 = vrot.slane %v8668, 2
      %v8671 = vrot.slane %v7424, 7
      %v8672 = vsel %vm1971, %v8670, %v8671
      %v8673 = vrot.slane %v8671, 2
      %v8674 = vrot.slane %v7426, 7
      %v8675 = vsel %vm1971, %v8673, %v8674
      %v8676 = vrot.slane %v8674, 2
      %v8677 = vrot.slane %v7434, 7
      %v8678 = vsel %vm1971, %v8676, %v8677
      %v8679 = vrot.slane %v8677, 2
      %v8680 = vrot.slane %v7442, 7
      %v8681 = vsel %vm1971, %v8679, %v8680
      %v8682 = vrot.slane %v8680, 2
      %v8683 = vrot.slane %v7441, 7
      %v8684 = vsel %vm1971, %v8682, %v8683
      %v8685 = vrot.slane %v8683, 2
      %v8686 = vrot.slane %v7443, 7
      %v8687 = vsel %vm1971, %v8685, %v8686
      %v8688 = vrot.slane %v7451, 7
      %v8689 = vrot.slane %v8688, 2
      %v8690 = vrot.slane %v7459, 7
      %v8691 = vsel %vm1971, %v8689, %v8690
      %v8692 = vrot.slane %v8690, 2
      %v8693 = vrot.slane %v7458, 7
      %v8694 = vsel %vm1971, %v8692, %v8693
      %v8695 = vrot.slane %v8693, 2
      %v8696 = vrot.slane %v7460, 7
      %v8697 = vsel %vm1971, %v8695, %v8696
      %v8698 = vrot.slane %v8696, 2
      %v8699 = vrot.slane %v7468, 7
      %v8700 = vsel %vm1971, %v8698, %v8699
      %v8701 = vrot.slane %v8699, 2
      %v8702 = vrot.slane %v7476, 7
      %v8703 = vsel %vm1971, %v8701, %v8702
      %v8704 = vrot.slane %v8702, 2
      %v8705 = vrot.slane %v7475, 7
      %v8706 = vsel %vm1971, %v8704, %v8705
      %v8707 = vrot.slane %v8705, 2
      %v8708 = vrot.slane %v7477, 7
      %v8709 = vsel %vm1971, %v8707, %v8708
      %v8710 = vrot.slane %v8708, 2
      %v8711 = vrot.slane %v7485, 7
      %v8712 = vsel %vm1971, %v8710, %v8711
      %v8713 = vrot.slane %v7493, 7
      %v8714 = vrot.slane %v8713, 2
      %v8715 = vrot.slane %v7492, 7
      %v8716 = vsel %vm1971, %v8714, %v8715
      %v8717 = vrot.slane %v8715, 2
      %v8718 = vrot.slane %v7494, 7
      %v8719 = vsel %vm1971, %v8717, %v8718
      %v8720 = vrot.slane %v8718, 2
      %v8721 = vrot.slane %v7502, 7
      %v8722 = vsel %vm1971, %v8720, %v8721
      %v8723 = vrot.slane %v8721, 2
      %v8724 = vrot.slane %v7510, 7
      %v8725 = vsel %vm1971, %v8723, %v8724
      %v8726 = vrot.slane %v8724, 2
      %v8727 = vrot.slane %v7509, 7
      %v8728 = vsel %vm1971, %v8726, %v8727
      %v8729 = vrot.slane %v8727, 2
      %v8730 = vrot.slane %v7511, 7
      %v8731 = vsel %vm1971, %v8729, %v8730
      %v8732 = vrot.slane %v8730, 2
      %v8733 = vrot.slane %v7519, 7
      %v8734 = vsel %vm1971, %v8732, %v8733
      %v8735 = vrot.slane %v8733, 2
      %v8736 = vrot.slane %v7527, 7
      %v8737 = vsel %vm1971, %v8735, %v8736
      %v8738 = vrot.slane %v7526, 7
      %v8739 = vrot.slane %v8738, 2
      %v8740 = vrot.slane %v7528, 7
      %v8741 = vsel %vm1971, %v8739, %v8740
      %v8742 = vrot.slane %v8740, 2
      %v8743 = vrot.slane %v7536, 7
      %v8744 = vsel %vm1971, %v8742, %v8743
      %v8745 = vrot.slane %v8743, 2
      %v8746 = vrot.slane %v7544, 7
      %v8747 = vsel %vm1971, %v8745, %v8746
      %v8748 = vrot.slane %v8746, 2
      %v8749 = vrot.slane %v7543, 7
      %v8750 = vsel %vm1971, %v8748, %v8749
      %v8751 = vrot.slane %v8749, 2
      %v8752 = vrot.slane %v7545, 7
      %v8753 = vsel %vm1971, %v8751, %v8752
      %v8754 = vrot.slane %v8752, 2
      %v8755 = vrot.slane %v7553, 7
      %v8756 = vsel %vm1971, %v8754, %v8755
      %v8757 = vrot.slane %v8755, 2
      %v8758 = vrot.slane %v7561, 7
      %v8759 = vsel %vm1971, %v8757, %v8758
      %v8760 = vrot.slane %v8758, 2
      %v8761 = vrot.slane %v7560, 7
      %v8762 = vsel %vm1971, %v8760, %v8761
      %v8763 = vrot.slane %v7562, 7
      %v8764 = vrot.slane %v8763, 2
      %v8765 = vrot.slane %v7570, 7
      %v8766 = vsel %vm1971, %v8764, %v8765
      %v8767 = vrot.slane %v8765, 2
      %v8768 = vrot.slane %v7578, 7
      %v8769 = vsel %vm1971, %v8767, %v8768
      %v8770 = vrot.slane %v8768, 2
      %v8771 = vrot.slane %v7577, 7
      %v8772 = vsel %vm1971, %v8770, %v8771
      %v8773 = vrot.slane %v8771, 2
      %v8774 = vrot.slane %v7579, 7
      %v8775 = vsel %vm1971, %v8773, %v8774
      %v8776 = vrot.slane %v8774, 2
      %v8777 = vrot.slane %v7587, 7
      %v8778 = vsel %vm1971, %v8776, %v8777
      %v8779 = vrot.slane %v8777, 2
      %v8780 = vrot.slane %v7595, 7
      %v8781 = vsel %vm1971, %v8779, %v8780
      %v8782 = vrot.slane %v8780, 2
      %v8783 = vrot.slane %v7594, 7
      %v8784 = vsel %vm1971, %v8782, %v8783
      %v8785 = vrot.slane %v8783, 2
      %v8786 = vrot.slane %v7596, 7
      %v8787 = vsel %vm1971, %v8785, %v8786
      %v8788 = vrot.slane %v7604, 7
      %v8789 = vrot.slane %v8788, 2
      %v8790 = vrot.slane %v7612, 7
      %v8791 = vsel %vm1971, %v8789, %v8790
      %v8792 = vrot.slane %v8790, 2
      %v8793 = vrot.slane %v7611, 7
      %v8794 = vsel %vm1971, %v8792, %v8793
      %v8795 = vrot.slane %v8793, 2
      %v8796 = vrot.slane %v7613, 7
      %v8797 = vsel %vm1971, %v8795, %v8796
      %v8798 = vrot.slane %v8796, 2
      %v8799 = vrot.slane %v7621, 7
      %v8800 = vsel %vm1971, %v8798, %v8799
      %v8801 = vrot.slane %v8799, 2
      %v8802 = vrot.slane %v7629, 7
      %v8803 = vsel %vm1971, %v8801, %v8802
      %v8804 = vrot.slane %v8802, 2
      %v8805 = vrot.slane %v7628, 7
      %v8806 = vsel %vm1971, %v8804, %v8805
      %v8807 = vrot.slane %v8805, 2
      %v8808 = vrot.slane %v7630, 7
      %v8809 = vsel %vm1971, %v8807, %v8808
      %v8810 = vrot.slane %v8808, 2
      %v8811 = vrot.slane %v7638, 7
      %v8812 = vsel %vm1971, %v8810, %v8811
      %v8813 = vrot.slane %v7646, 7
      %v8814 = vrot.slane %v8813, 2
      %v8815 = vrot.slane %v7645, 7
      %v8816 = vsel %vm1971, %v8814, %v8815
      %v8817 = vrot.slane %v8815, 2
      %v8818 = vrot.slane %v7647, 7
      %v8819 = vsel %vm1971, %v8817, %v8818
      %v8820 = vrot.slane %v8818, 2
      %v8821 = vrot.slane %v7655, 7
      %v8822 = vsel %vm1971, %v8820, %v8821
      %v8823 = vrot.slane %v8821, 2
      %v8824 = vrot.slane %v7663, 7
      %v8825 = vsel %vm1971, %v8823, %v8824
      %v8826 = vrot.slane %v8824, 2
      %v8827 = vrot.slane %v7662, 7
      %v8828 = vsel %vm1971, %v8826, %v8827
      %v8829 = vrot.slane %v8827, 2
      %v8830 = vrot.slane %v7664, 7
      %v8831 = vsel %vm1971, %v8829, %v8830
      %v8832 = vrot.slane %v8830, 2
      %v8833 = vrot.slane %v7672, 7
      %v8834 = vsel %vm1971, %v8832, %v8833
      %v8835 = vrot.slane %v8833, 2
      %v8836 = vrot.slane %v7680, 7
      %v8837 = vsel %vm1971, %v8835, %v8836
      %v8838 = vrot.slane %v7679, 7
      %v8839 = vrot.slane %v8838, 2
      %v8840 = vrot.slane %v7681, 7
      %v8841 = vsel %vm1971, %v8839, %v8840
      %v8842 = vrot.slane %v8840, 2
      %v8843 = vrot.slane %v7689, 7
      %v8844 = vsel %vm1971, %v8842, %v8843
      %v8845 = vrot.slane %v8843, 2
      %v8846 = vrot.slane %v7697, 7
      %v8847 = vsel %vm1971, %v8845, %v8846
      %v8848 = vrot.slane %v8846, 2
      %v8849 = vrot.slane %v7696, 7
      %v8850 = vsel %vm1971, %v8848, %v8849
      %v8851 = vrot.slane %v8849, 2
      %v8852 = vrot.slane %v7698, 7
      %v8853 = vsel %vm1971, %v8851, %v8852
      %v8854 = vrot.slane %v8852, 2
      %v8855 = vrot.slane %v7706, 7
      %v8856 = vsel %vm1971, %v8854, %v8855
      %v8857 = vrot.slane %v8855, 2
      %v8858 = vrot.slane %v7714, 7
      %v8859 = vsel %vm1971, %v8857, %v8858
      %v8860 = vrot.slane %v8858, 2
      %v8861 = vrot.slane %v7713, 7
      %v8862 = vsel %vm1971, %v8860, %v8861
      %v8863 = vrot.slane %v7715, 7
      %v8864 = vrot.slane %v8863, 2
      %v8865 = vrot.slane %v7723, 7
      %v8866 = vsel %vm1971, %v8864, %v8865
      %v8867 = vrot.slane %v8865, 2
      %v8868 = vrot.slane %v7731, 7
      %v8869 = vsel %vm1971, %v8867, %v8868
      %v8870 = vrot.slane %v8868, 2
      %v8871 = vrot.slane %v7730, 7
      %v8872 = vsel %vm1971, %v8870, %v8871
      %v8873 = vrot.slane %v8871, 2
      %v8874 = vrot.slane %v7732, 7
      %v8875 = vsel %vm1971, %v8873, %v8874
      %v8876 = vrot.slane %v8874, 2
      %v8877 = vrot.slane %v7740, 7
      %v8878 = vsel %vm1971, %v8876, %v8877
      %v8879 = vrot.slane %v8877, 2
      %v8880 = vrot.slane %v7748, 7
      %v8881 = vsel %vm1971, %v8879, %v8880
      %v8882 = vrot.slane %v8880, 2
      %v8883 = vrot.slane %v7747, 7
      %v8884 = vsel %vm1971, %v8882, %v8883
      %v8885 = vrot.slane %v8883, 2
      %v8886 = vrot.slane %v7749, 7
      %v8887 = vsel %vm1971, %v8885, %v8886
      %v8888 = vrot.slane %v7757, 7
      %v8889 = vrot.slane %v8888, 2
      %v8890 = vrot.slane %v7765, 7
      %v8891 = vsel %vm1971, %v8889, %v8890
      %v8892 = vrot.slane %v8890, 2
      %v8893 = vrot.slane %v7764, 7
      %v8894 = vsel %vm1971, %v8892, %v8893
      %v8895 = vrot.slane %v8893, 2
      %v8896 = vrot.slane %v7766, 7
      %v8897 = vsel %vm1971, %v8895, %v8896
      %v8898 = vrot.slane %v8896, 2
      %v8899 = vrot.slane %v7774, 7
      %v8900 = vsel %vm1971, %v8898, %v8899
      %v8901 = vrot.slane %v8899, 2
      %v8902 = vrot.slane %v7782, 7
      %v8903 = vsel %vm1971, %v8901, %v8902
      %v8904 = vrot.slane %v8902, 2
      %v8905 = vrot.slane %v7781, 7
      %v8906 = vsel %vm1971, %v8904, %v8905
      %v8907 = vrot.slane %v8905, 2
      %v8908 = vrot.slane %v7783, 7
      %v8909 = vsel %vm1971, %v8907, %v8908
      %v8910 = vrot.slane %v8908, 2
      %v8911 = vrot.slane %v7791, 7
      %v8912 = vsel %vm1971, %v8910, %v8911
      %v8913 = vrot.slane %v7799, 7
      %v8914 = vrot.slane %v8913, 2
      %v8915 = vrot.slane %v7798, 7
      %v8916 = vsel %vm1971, %v8914, %v8915
      %v8917 = vrot.slane %v8915, 2
      %v8918 = vrot.slane %v7800, 7
      %v8919 = vsel %vm1971, %v8917, %v8918
      %v8920 = vrot.slane %v8918, 2
      %v8921 = vrot.slane %v7808, 7
      %v8922 = vsel %vm1971, %v8920, %v8921
      %v8923 = vrot.slane %v8921, 2
      %v8924 = vrot.slane %v7816, 7
      %v8925 = vsel %vm1971, %v8923, %v8924
      %v8926 = vrot.slane %v8924, 2
      %v8927 = vrot.slane %v7815, 7
      %v8928 = vsel %vm1971, %v8926, %v8927
      %v8929 = vrot.slane %v8927, 2
      %v8930 = vrot.slane %v7817, 7
      %v8931 = vsel %vm1971, %v8929, %v8930
      %v8932 = vrot.slane %v8930, 2
      %v8933 = vrot.slane %v7825, 7
      %v8934 = vsel %vm1971, %v8932, %v8933
      %v8935 = vrot.slane %v8933, 2
      %v8936 = vrot.slane %v7833, 7
      %v8937 = vsel %vm1971, %v8935, %v8936
      %v8938 = vrot.slane %v7832, 7
      %v8939 = vrot.slane %v8938, 2
      %v8940 = vrot.slane %v7834, 7
      %v8941 = vsel %vm1971, %v8939, %v8940
      %v8942 = vrot.slane %v8940, 2
      %v8943 = vrot.slane %v7842, 7
      %v8944 = vsel %vm1971, %v8942, %v8943
      %v8945 = vrot.slane %v8943, 2
      %v8946 = vrot.slane %v7850, 7
      %v8947 = vsel %vm1971, %v8945, %v8946
      %v8948 = vrot.slane %v8946, 2
      %v8949 = vrot.slane %v7849, 7
      %v8950 = vsel %vm1971, %v8948, %v8949
      %v8951 = vrot.slane %v8949, 2
      %v8952 = vrot.slane %v7851, 7
      %v8953 = vsel %vm1971, %v8951, %v8952
      %v8954 = vrot.slane %v8952, 2
      %v8955 = vrot.slane %v7859, 7
      %v8956 = vsel %vm1971, %v8954, %v8955
      %v8957 = vrot.slane %v8955, 2
      %v8958 = vrot.slane %v7867, 7
      %v8959 = vsel %vm1971, %v8957, %v8958
      %v8960 = vrot.slane %v8958, 2
      %v8961 = vrot.slane %v7866, 7
      %v8962 = vsel %vm1971, %v8960, %v8961
      %v8963 = vrot.slane %v7868, 7
      %v8964 = vrot.slane %v8963, 2
      %v8965 = vrot.slane %v7876, 7
      %v8966 = vsel %vm1971, %v8964, %v8965
      %v8967 = vrot.slane %v8965, 2
      %v8968 = vrot.slane %v7884, 7
      %v8969 = vsel %vm1971, %v8967, %v8968
      %v8970 = vrot.slane %v8968, 2
      %v8971 = vrot.slane %v7883, 7
      %v8972 = vsel %vm1971, %v8970, %v8971
      %v8973 = vrot.slane %v8971, 2
      %v8974 = vrot.slane %v7885, 7
      %v8975 = vsel %vm1971, %v8973, %v8974
      %v8976 = vrot.slane %v8974, 2
      %v8977 = vrot.slane %v7893, 7
      %v8978 = vsel %vm1971, %v8976, %v8977
      %v8979 = vrot.slane %v8977, 2
      %v8980 = vrot.slane %v7901, 7
      %v8981 = vsel %vm1971, %v8979, %v8980
      %v8982 = vrot.slane %v8980, 2
      %v8983 = vrot.slane %v7900, 7
      %v8984 = vsel %vm1971, %v8982, %v8983
      %v8985 = vrot.slane %v8983, 2
      %v8986 = vrot.slane %v7902, 7
      %v8987 = vsel %vm1971, %v8985, %v8986
      %v8988 = vcombine.low %v8591, %v8594
      %v8989 = vcombine.low %v8597, %v8600
      %v8991 = vunpack.c.l.s4 1983009808
      %v8992 = vunpack.c.0.s8 %v8991
      %v8993 = vlaneseq
      %v8994 = vshrl.u32 %v8993, 7
      %v8995 = vsub.s32 %v8992, %v8994
      %v8996 = vrot.slane %v8988, %v8995
      %v8998 = vunpack.c.l.s4 1983009808
      %v8999 = vunpack.c.0.s8 %v8998
      %v9000 = vlaneseq
      %v9001 = vshrl.u32 %v9000, 7
      %v9002 = vsub.s32 %v8999, %v9001
      %v9003 = vrot.slane %v8989, %v9002
      %v9004 = vcombine.low %v8996, %v9003
      %v9005 = vcombine.low %v8603, %v8606
      %v9006 = vcombine.low %v8609, %v8612
      %v9008 = vunpack.c.l.s4 1983009808
      %v9009 = vunpack.c.0.s8 %v9008
      %v9010 = vlaneseq
      %v9011 = vshrl.u32 %v9010, 7
      %v9012 = vsub.s32 %v9009, %v9011
      %v9013 = vrot.slane %v9005, %v9012
      %v9015 = vunpack.c.l.s4 1983009808
      %v9016 = vunpack.c.0.s8 %v9015
      %v9017 = vlaneseq
      %v9018 = vshrl.u32 %v9017, 7
      %v9019 = vsub.s32 %v9016, %v9018
      %v9020 = vrot.slane %v9006, %v9019
      %v9021 = vcombine.low %v9013, %v9020
      %v9022 = vcombine.low %v8616, %v8619
      %v9023 = vcombine.low %v8622, %v8625
      %v9025 = vunpack.c.l.s4 1983009808
      %v9026 = vunpack.c.0.s8 %v9025
      %v9027 = vlaneseq
      %v9028 = vshrl.u32 %v9027, 7
      %v9029 = vsub.s32 %v9026, %v9028
      %v9030 = vrot.slane %v9022, %v9029
      %v9032 = vunpack.c.l.s4 1983009808
      %v9033 = vunpack.c.0.s8 %v9032
      %v9034 = vlaneseq
      %v9035 = vshrl.u32 %v9034, 7
      %v9036 = vsub.s32 %v9033, %v9035
      %v9037 = vrot.slane %v9023, %v9036
      %v9038 = vcombine.low %v9030, %v9037
      %v9039 = vcombine.low %v8628, %v8631
      %v9040 = vcombine.low %v8634, %v8637
      %v9042 = vunpack.c.l.s4 1983009808
      %v9043 = vunpack.c.0.s8 %v9042
      %v9044 = vlaneseq
      %v9045 = vshrl.u32 %v9044, 7
      %v9046 = vsub.s32 %v9043, %v9045
      %v9047 = vrot.slane %v9039, %v9046
      %v9049 = vunpack.c.l.s4 1983009808
      %v9050 = vunpack.c.0.s8 %v9049
      %v9051 = vlaneseq
      %v9052 = vshrl.u32 %v9051, 7
      %v9053 = vsub.s32 %v9050, %v9052
      %v9054 = vrot.slane %v9040, %v9053
      %v9055 = vcombine.low %v9047, %v9054
      %v9056 = vcombine.low %v8641, %v8644
      %v9057 = vcombine.low %v8647, %v8650
      %v9059 = vunpack.c.l.s4 1983009808
      %v9060 = vunpack.c.0.s8 %v9059
      %v9061 = vlaneseq
      %v9062 = vshrl.u32 %v9061, 7
      %v9063 = vsub.s32 %v9060, %v9062
      %v9064 = vrot.slane %v9056, %v9063
      %v9066 = vunpack.c.l.s4 1983009808
      %v9067 = vunpack.c.0.s8 %v9066
      %v9068 = vlaneseq
      %v9069 = vshrl.u32 %v9068, 7
      %v9070 = vsub.s32 %v9067, %v9069
      %v9071 = vrot.slane %v9057, %v9070
      %v9072 = vcombine.low %v9064, %v9071
      %v9073 = vcombine.low %v8653, %v8656
      %v9074 = vcombine.low %v8659, %v8662
      %v9076 = vunpack.c.l.s4 1983009808
      %v9077 = vunpack.c.0.s8 %v9076
      %v9078 = vlaneseq
      %v9079 = vshrl.u32 %v9078, 7
      %v9080 = vsub.s32 %v9077, %v9079
      %v9081 = vrot.slane %v9073, %v9080
      %v9083 = vunpack.c.l.s4 1983009808
      %v9084 = vunpack.c.0.s8 %v9083
      %v9085 = vlaneseq
      %v9086 = vshrl.u32 %v9085, 7
      %v9087 = vsub.s32 %v9084, %v9086
      %v9088 = vrot.slane %v9074, %v9087
      %v9089 = vcombine.low %v9081, %v9088
      %v9090 = vcombine.low %v8666, %v8669
      %v9091 = vcombine.low %v8672, %v8675
      %v9093 = vunpack.c.l.s4 1983009808
      %v9094 = vunpack.c.0.s8 %v9093
      %v9095 = vlaneseq
      %v9096 = vshrl.u32 %v9095, 7
      %v9097 = vsub.s32 %v9094, %v9096
      %v9098 = vrot.slane %v9090, %v9097
      %v9100 = vunpack.c.l.s4 1983009808
      %v9101 = vunpack.c.0.s8 %v9100
      %v9102 = vlaneseq
      %v9103 = vshrl.u32 %v9102, 7
      %v9104 = vsub.s32 %v9101, %v9103
      %v9105 = vrot.slane %v9091, %v9104
      %v9106 = vcombine.low %v9098, %v9105
      %v9107 = vcombine.low %v8678, %v8681
      %v9108 = vcombine.low %v8684, %v8687
      %v9110 = vunpack.c.l.s4 1983009808
      %v9111 = vunpack.c.0.s8 %v9110
      %v9112 = vlaneseq
      %v9113 = vshrl.u32 %v9112, 7
      %v9114 = vsub.s32 %v9111, %v9113
      %v9115 = vrot.slane %v9107, %v9114
      %v9117 = vunpack.c.l.s4 1983009808
      %v9118 = vunpack.c.0.s8 %v9117
      %v9119 = vlaneseq
      %v9120 = vshrl.u32 %v9119, 7
      %v9121 = vsub.s32 %v9118, %v9120
      %v9122 = vrot.slane %v9108, %v9121
      %v9123 = vcombine.low %v9115, %v9122
      %v9124 = vcombine.low %v8691, %v8694
      %v9125 = vcombine.low %v8697, %v8700
      %v9127 = vunpack.c.l.s4 1983009808
      %v9128 = vunpack.c.0.s8 %v9127
      %v9129 = vlaneseq
      %v9130 = vshrl.u32 %v9129, 7
      %v9131 = vsub.s32 %v9128, %v9130
      %v9132 = vrot.slane %v9124, %v9131
      %v9134 = vunpack.c.l.s4 1983009808
      %v9135 = vunpack.c.0.s8 %v9134
      %v9136 = vlaneseq
      %v9137 = vshrl.u32 %v9136, 7
      %v9138 = vsub.s32 %v9135, %v9137
      %v9139 = vrot.slane %v9125, %v9138
      %v9140 = vcombine.low %v9132, %v9139
      %v9141 = vcombine.low %v8703, %v8706
      %v9142 = vcombine.low %v8709, %v8712
      %v9144 = vunpack.c.l.s4 1983009808
      %v9145 = vunpack.c.0.s8 %v9144
      %v9146 = vlaneseq
      %v9147 = vshrl.u32 %v9146, 7
      %v9148 = vsub.s32 %v9145, %v9147
      %v9149 = vrot.slane %v9141, %v9148
      %v9151 = vunpack.c.l.s4 1983009808
      %v9152 = vunpack.c.0.s8 %v9151
      %v9153 = vlaneseq
      %v9154 = vshrl.u32 %v9153, 7
      %v9155 = vsub.s32 %v9152, %v9154
      %v9156 = vrot.slane %v9142, %v9155
      %v9157 = vcombine.low %v9149, %v9156
      %v9158 = vcombine.low %v8716, %v8719
      %v9159 = vcombine.low %v8722, %v8725
      %v9161 = vunpack.c.l.s4 1983009808
      %v9162 = vunpack.c.0.s8 %v9161
      %v9163 = vlaneseq
      %v9164 = vshrl.u32 %v9163, 7
      %v9165 = vsub.s32 %v9162, %v9164
      %v9166 = vrot.slane %v9158, %v9165
      %v9168 = vunpack.c.l.s4 1983009808
      %v9169 = vunpack.c.0.s8 %v9168
      %v9170 = vlaneseq
      %v9171 = vshrl.u32 %v9170, 7
      %v9172 = vsub.s32 %v9169, %v9171
      %v9173 = vrot.slane %v9159, %v9172
      %v9174 = vcombine.low %v9166, %v9173
      %v9175 = vcombine.low %v8728, %v8731
      %v9176 = vcombine.low %v8734, %v8737
      %v9178 = vunpack.c.l.s4 1983009808
      %v9179 = vunpack.c.0.s8 %v9178
      %v9180 = vlaneseq
      %v9181 = vshrl.u32 %v9180, 7
      %v9182 = vsub.s32 %v9179, %v9181
      %v9183 = vrot.slane %v9175, %v9182
      %v9185 = vunpack.c.l.s4 1983009808
      %v9186 = vunpack.c.0.s8 %v9185
      %v9187 = vlaneseq
      %v9188 = vshrl.u32 %v9187, 7
      %v9189 = vsub.s32 %v9186, %v9188
      %v9190 = vrot.slane %v9176, %v9189
      %v9191 = vcombine.low %v9183, %v9190
      %v9192 = vcombine.low %v8741, %v8744
      %v9193 = vcombine.low %v8747, %v8750
      %v9195 = vunpack.c.l.s4 1983009808
      %v9196 = vunpack.c.0.s8 %v9195
      %v9197 = vlaneseq
      %v9198 = vshrl.u32 %v9197, 7
      %v9199 = vsub.s32 %v9196, %v9198
      %v9200 = vrot.slane %v9192, %v9199
      %v9202 = vunpack.c.l.s4 1983009808
      %v9203 = vunpack.c.0.s8 %v9202
      %v9204 = vlaneseq
      %v9205 = vshrl.u32 %v9204, 7
      %v9206 = vsub.s32 %v9203, %v9205
      %v9207 = vrot.slane %v9193, %v9206
      %v9208 = vcombine.low %v9200, %v9207
      %v9209 = vcombine.low %v8753, %v8756
      %v9210 = vcombine.low %v8759, %v8762
      %v9212 = vunpack.c.l.s4 1983009808
      %v9213 = vunpack.c.0.s8 %v9212
      %v9214 = vlaneseq
      %v9215 = vshrl.u32 %v9214, 7
      %v9216 = vsub.s32 %v9213, %v9215
      %v9217 = vrot.slane %v9209, %v9216
      %v9219 = vunpack.c.l.s4 1983009808
      %v9220 = vunpack.c.0.s8 %v9219
      %v9221 = vlaneseq
      %v9222 = vshrl.u32 %v9221, 7
      %v9223 = vsub.s32 %v9220, %v9222
      %v9224 = vrot.slane %v9210, %v9223
      %v9225 = vcombine.low %v9217, %v9224
      %v9226 = vcombine.low %v8766, %v8769
      %v9227 = vcombine.low %v8772, %v8775
      %v9229 = vunpack.c.l.s4 1983009808
      %v9230 = vunpack.c.0.s8 %v9229
      %v9231 = vlaneseq
      %v9232 = vshrl.u32 %v9231, 7
      %v9233 = vsub.s32 %v9230, %v9232
      %v9234 = vrot.slane %v9226, %v9233
      %v9236 = vunpack.c.l.s4 1983009808
      %v9237 = vunpack.c.0.s8 %v9236
      %v9238 = vlaneseq
      %v9239 = vshrl.u32 %v9238, 7
      %v9240 = vsub.s32 %v9237, %v9239
      %v9241 = vrot.slane %v9227, %v9240
      %v9242 = vcombine.low %v9234, %v9241
      %v9243 = vcombine.low %v8778, %v8781
      %v9244 = vcombine.low %v8784, %v8787
      %v9246 = vunpack.c.l.s4 1983009808
      %v9247 = vunpack.c.0.s8 %v9246
      %v9248 = vlaneseq
      %v9249 = vshrl.u32 %v9248, 7
      %v9250 = vsub.s32 %v9247, %v9249
      %v9251 = vrot.slane %v9243, %v9250
      %v9253 = vunpack.c.l.s4 1983009808
      %v9254 = vunpack.c.0.s8 %v9253
      %v9255 = vlaneseq
      %v9256 = vshrl.u32 %v9255, 7
      %v9257 = vsub.s32 %v9254, %v9256
      %v9258 = vrot.slane %v9244, %v9257
      %v9259 = vcombine.low %v9251, %v9258
      %v9260 = vcombine.low %v8791, %v8794
      %v9261 = vcombine.low %v8797, %v8800
      %v9263 = vunpack.c.l.s4 1983009808
      %v9264 = vunpack.c.0.s8 %v9263
      %v9265 = vlaneseq
      %v9266 = vshrl.u32 %v9265, 7
      %v9267 = vsub.s32 %v9264, %v9266
      %v9268 = vrot.slane %v9260, %v9267
      %v9270 = vunpack.c.l.s4 1983009808
      %v9271 = vunpack.c.0.s8 %v9270
      %v9272 = vlaneseq
      %v9273 = vshrl.u32 %v9272, 7
      %v9274 = vsub.s32 %v9271, %v9273
      %v9275 = vrot.slane %v9261, %v9274
      %v9276 = vcombine.low %v9268, %v9275
      %v9277 = vcombine.low %v8803, %v8806
      %v9278 = vcombine.low %v8809, %v8812
      %v9280 = vunpack.c.l.s4 1983009808
      %v9281 = vunpack.c.0.s8 %v9280
      %v9282 = vlaneseq
      %v9283 = vshrl.u32 %v9282, 7
      %v9284 = vsub.s32 %v9281, %v9283
      %v9285 = vrot.slane %v9277, %v9284
      %v9287 = vunpack.c.l.s4 1983009808
      %v9288 = vunpack.c.0.s8 %v9287
      %v9289 = vlaneseq
      %v9290 = vshrl.u32 %v9289, 7
      %v9291 = vsub.s32 %v9288, %v9290
      %v9292 = vrot.slane %v9278, %v9291
      %v9293 = vcombine.low %v9285, %v9292
      %v9294 = vcombine.low %v8816, %v8819
      %v9295 = vcombine.low %v8822, %v8825
      %v9297 = vunpack.c.l.s4 1983009808
      %v9298 = vunpack.c.0.s8 %v9297
      %v9299 = vlaneseq
      %v9300 = vshrl.u32 %v9299, 7
      %v9301 = vsub.s32 %v9298, %v9300
      %v9302 = vrot.slane %v9294, %v9301
      %v9304 = vunpack.c.l.s4 1983009808
      %v9305 = vunpack.c.0.s8 %v9304
      %v9306 = vlaneseq
      %v9307 = vshrl.u32 %v9306, 7
      %v9308 = vsub.s32 %v9305, %v9307
      %v9309 = vrot.slane %v9295, %v9308
      %v9310 = vcombine.low %v9302, %v9309
      %v9311 = vcombine.low %v8828, %v8831
      %v9312 = vcombine.low %v8834, %v8837
      %v9314 = vunpack.c.l.s4 1983009808
      %v9315 = vunpack.c.0.s8 %v9314
      %v9316 = vlaneseq
      %v9317 = vshrl.u32 %v9316, 7
      %v9318 = vsub.s32 %v9315, %v9317
      %v9319 = vrot.slane %v9311, %v9318
      %v9321 = vunpack.c.l.s4 1983009808
      %v9322 = vunpack.c.0.s8 %v9321
      %v9323 = vlaneseq
      %v9324 = vshrl.u32 %v9323, 7
      %v9325 = vsub.s32 %v9322, %v9324
      %v9326 = vrot.slane %v9312, %v9325
      %v9327 = vcombine.low %v9319, %v9326
      %v9328 = vcombine.low %v8841, %v8844
      %v9329 = vcombine.low %v8847, %v8850
      %v9331 = vunpack.c.l.s4 1983009808
      %v9332 = vunpack.c.0.s8 %v9331
      %v9333 = vlaneseq
      %v9334 = vshrl.u32 %v9333, 7
      %v9335 = vsub.s32 %v9332, %v9334
      %v9336 = vrot.slane %v9328, %v9335
      %v9338 = vunpack.c.l.s4 1983009808
      %v9339 = vunpack.c.0.s8 %v9338
      %v9340 = vlaneseq
      %v9341 = vshrl.u32 %v9340, 7
      %v9342 = vsub.s32 %v9339, %v9341
      %v9343 = vrot.slane %v9329, %v9342
      %v9344 = vcombine.low %v9336, %v9343
      %v9345 = vcombine.low %v8853, %v8856
      %v9346 = vcombine.low %v8859, %v8862
      %v9348 = vunpack.c.l.s4 1983009808
      %v9349 = vunpack.c.0.s8 %v9348
      %v9350 = vlaneseq
      %v9351 = vshrl.u32 %v9350, 7
      %v9352 = vsub.s32 %v9349, %v9351
      %v9353 = vrot.slane %v9345, %v9352
      %v9355 = vunpack.c.l.s4 1983009808
      %v9356 = vunpack.c.0.s8 %v9355
      %v9357 = vlaneseq
      %v9358 = vshrl.u32 %v9357, 7
      %v9359 = vsub.s32 %v9356, %v9358
      %v9360 = vrot.slane %v9346, %v9359
      %v9361 = vcombine.low %v9353, %v9360
      %v9362 = vcombine.low %v8866, %v8869
      %v9363 = vcombine.low %v8872, %v8875
      %v9365 = vunpack.c.l.s4 1983009808
      %v9366 = vunpack.c.0.s8 %v9365
      %v9367 = vlaneseq
      %v9368 = vshrl.u32 %v9367, 7
      %v9369 = vsub.s32 %v9366, %v9368
      %v9370 = vrot.slane %v9362, %v9369
      %v9372 = vunpack.c.l.s4 1983009808
      %v9373 = vunpack.c.0.s8 %v9372
      %v9374 = vlaneseq
      %v9375 = vshrl.u32 %v9374, 7
      %v9376 = vsub.s32 %v9373, %v9375
      %v9377 = vrot.slane %v9363, %v9376
      %v9378 = vcombine.low %v9370, %v9377
      %v9379 = vcombine.low %v8878, %v8881
      %v9380 = vcombine.low %v8884, %v8887
      %v9382 = vunpack.c.l.s4 1983009808
      %v9383 = vunpack.c.0.s8 %v9382
      %v9384 = vlaneseq
      %v9385 = vshrl.u32 %v9384, 7
      %v9386 = vsub.s32 %v9383, %v9385
      %v9387 = vrot.slane %v9379, %v9386
      %v9389 = vunpack.c.l.s4 1983009808
      %v9390 = vunpack.c.0.s8 %v9389
      %v9391 = vlaneseq
      %v9392 = vshrl.u32 %v9391, 7
      %v9393 = vsub.s32 %v9390, %v9392
      %v9394 = vrot.slane %v9380, %v9393
      %v9395 = vcombine.low %v9387, %v9394
      %v9396 = vcombine.low %v8891, %v8894
      %v9397 = vcombine.low %v8897, %v8900
      %v9399 = vunpack.c.l.s4 1983009808
      %v9400 = vunpack.c.0.s8 %v9399
      %v9401 = vlaneseq
      %v9402 = vshrl.u32 %v9401, 7
      %v9403 = vsub.s32 %v9400, %v9402
      %v9404 = vrot.slane %v9396, %v9403
      %v9406 = vunpack.c.l.s4 1983009808
      %v9407 = vunpack.c.0.s8 %v9406
      %v9408 = vlaneseq
      %v9409 = vshrl.u32 %v9408, 7
      %v9410 = vsub.s32 %v9407, %v9409
      %v9411 = vrot.slane %v9397, %v9410
      %v9412 = vcombine.low %v9404, %v9411
      %v9413 = vcombine.low %v8903, %v8906
      %v9414 = vcombine.low %v8909, %v8912
      %v9416 = vunpack.c.l.s4 1983009808
      %v9417 = vunpack.c.0.s8 %v9416
      %v9418 = vlaneseq
      %v9419 = vshrl.u32 %v9418, 7
      %v9420 = vsub.s32 %v9417, %v9419
      %v9421 = vrot.slane %v9413, %v9420
      %v9423 = vunpack.c.l.s4 1983009808
      %v9424 = vunpack.c.0.s8 %v9423
      %v9425 = vlaneseq
      %v9426 = vshrl.u32 %v9425, 7
      %v9427 = vsub.s32 %v9424, %v9426
      %v9428 = vrot.slane %v9414, %v9427
      %v9429 = vcombine.low %v9421, %v9428
      %v9430 = vcombine.low %v8916, %v8919
      %v9431 = vcombine.low %v8922, %v8925
      %v9433 = vunpack.c.l.s4 1983009808
      %v9434 = vunpack.c.0.s8 %v9433
      %v9435 = vlaneseq
      %v9436 = vshrl.u32 %v9435, 7
      %v9437 = vsub.s32 %v9434, %v9436
      %v9438 = vrot.slane %v9430, %v9437
      %v9440 = vunpack.c.l.s4 1983009808
      %v9441 = vunpack.c.0.s8 %v9440
      %v9442 = vlaneseq
      %v9443 = vshrl.u32 %v9442, 7
      %v9444 = vsub.s32 %v9441, %v9443
      %v9445 = vrot.slane %v9431, %v9444
      %v9446 = vcombine.low %v9438, %v9445
      %v9447 = vcombine.low %v8928, %v8931
      %v9448 = vcombine.low %v8934, %v8937
      %v9450 = vunpack.c.l.s4 1983009808
      %v9451 = vunpack.c.0.s8 %v9450
      %v9452 = vlaneseq
      %v9453 = vshrl.u32 %v9452, 7
      %v9454 = vsub.s32 %v9451, %v9453
      %v9455 = vrot.slane %v9447, %v9454
      %v9457 = vunpack.c.l.s4 1983009808
      %v9458 = vunpack.c.0.s8 %v9457
      %v9459 = vlaneseq
      %v9460 = vshrl.u32 %v9459, 7
      %v9461 = vsub.s32 %v9458, %v9460
      %v9462 = vrot.slane %v9448, %v9461
      %v9463 = vcombine.low %v9455, %v9462
      %v9464 = vcombine.low %v8941, %v8944
      %v9465 = vcombine.low %v8947, %v8950
      %v9467 = vunpack.c.l.s4 1983009808
      %v9468 = vunpack.c.0.s8 %v9467
      %v9469 = vlaneseq
      %v9470 = vshrl.u32 %v9469, 7
      %v9471 = vsub.s32 %v9468, %v9470
      %v9472 = vrot.slane %v9464, %v9471
      %v9474 = vunpack.c.l.s4 1983009808
      %v9475 = vunpack.c.0.s8 %v9474
      %v9476 = vlaneseq
      %v9477 = vshrl.u32 %v9476, 7
      %v9478 = vsub.s32 %v9475, %v9477
      %v9479 = vrot.slane %v9465, %v9478
      %v9480 = vcombine.low %v9472, %v9479
      %v9481 = vcombine.low %v8953, %v8956
      %v9482 = vcombine.low %v8959, %v8962
      %v9484 = vunpack.c.l.s4 1983009808
      %v9485 = vunpack.c.0.s8 %v9484
      %v9486 = vlaneseq
      %v9487 = vshrl.u32 %v9486, 7
      %v9488 = vsub.s32 %v9485, %v9487
      %v9489 = vrot.slane %v9481, %v9488
      %v9491 = vunpack.c.l.s4 1983009808
      %v9492 = vunpack.c.0.s8 %v9491
      %v9493 = vlaneseq
      %v9494 = vshrl.u32 %v9493, 7
      %v9495 = vsub.s32 %v9492, %v9494
      %v9496 = vrot.slane %v9482, %v9495
      %v9497 = vcombine.low %v9489, %v9496
      %v9498 = vcombine.low %v8966, %v8969
      %v9499 = vcombine.low %v8972, %v8975
      %v9501 = vunpack.c.l.s4 1983009808
      %v9502 = vunpack.c.0.s8 %v9501
      %v9503 = vlaneseq
      %v9504 = vshrl.u32 %v9503, 7
      %v9505 = vsub.s32 %v9502, %v9504
      %v9506 = vrot.slane %v9498, %v9505
      %v9508 = vunpack.c.l.s4 1983009808
      %v9509 = vunpack.c.0.s8 %v9508
      %v9510 = vlaneseq
      %v9511 = vshrl.u32 %v9510, 7
      %v9512 = vsub.s32 %v9509, %v9511
      %v9513 = vrot.slane %v9499, %v9512
      %v9514 = vcombine.low %v9506, %v9513
      %v9515 = vcombine.low %v8978, %v8981
      %v9516 = vcombine.low %v8984, %v8987
      %v9518 = vunpack.c.l.s4 1983009808
      %v9519 = vunpack.c.0.s8 %v9518
      %v9520 = vlaneseq
      %v9521 = vshrl.u32 %v9520, 7
      %v9522 = vsub.s32 %v9519, %v9521
      %v9523 = vrot.slane %v9515, %v9522
      %v9525 = vunpack.c.l.s4 1983009808
      %v9526 = vunpack.c.0.s8 %v9525
      %v9527 = vlaneseq
      %v9528 = vshrl.u32 %v9527, 7
      %v9529 = vsub.s32 %v9526, %v9528
      %v9530 = vrot.slane %v9516, %v9529
      %v9531 = vcombine.low %v9523, %v9530
      %9532 = vrot.lane.b32.xlu0 %v9004, 8
      %v9533 = vpop.permute.xlu0 %9532
      %9534 = vrot.lane.b32.xlu0 %v9021, 8
      %v9535 = vpop.permute.xlu0 %9534
      %9536 = vrot.lane.b32.xlu0 %v9038, 8
      %v9537 = vpop.permute.xlu0 %9536
      %9538 = vrot.lane.b32.xlu0 %v9055, 8
      %v9539 = vpop.permute.xlu0 %9538
      %9540 = vrot.lane.b32.xlu0 %v9072, 8
      %v9541 = vpop.permute.xlu0 %9540
      %9542 = vrot.lane.b32.xlu0 %v9089, 8
      %v9543 = vpop.permute.xlu0 %9542
      %9544 = vrot.lane.b32.xlu0 %v9106, 8
      %v9545 = vpop.permute.xlu0 %9544
      %9546 = vrot.lane.b32.xlu0 %v9123, 8
      %v9547 = vpop.permute.xlu0 %9546
      %9548 = vrot.lane.b32.xlu0 %v9140, 8
      %v9549 = vpop.permute.xlu0 %9548
      %9550 = vrot.lane.b32.xlu0 %v9157, 8
      %v9551 = vpop.permute.xlu0 %9550
      %9552 = vrot.lane.b32.xlu0 %v9174, 8
      %v9553 = vpop.permute.xlu0 %9552
      %9554 = vrot.lane.b32.xlu0 %v9191, 8
      %v9555 = vpop.permute.xlu0 %9554
      %9556 = vrot.lane.b32.xlu0 %v9208, 8
      %v9557 = vpop.permute.xlu0 %9556
      %9558 = vrot.lane.b32.xlu0 %v9225, 8
      %v9559 = vpop.permute.xlu0 %9558
      %9560 = vrot.lane.b32.xlu0 %v9242, 8
      %v9561 = vpop.permute.xlu0 %9560
      %9562 = vrot.lane.b32.xlu0 %v9259, 8
      %v9563 = vpop.permute.xlu0 %9562
      %9564 = vrot.lane.b32.xlu0 %v9276, 8
      %v9565 = vpop.permute.xlu0 %9564
      %9566 = vrot.lane.b32.xlu0 %v9293, 8
      %v9567 = vpop.permute.xlu0 %9566
      %9568 = vrot.lane.b32.xlu0 %v9310, 8
      %v9569 = vpop.permute.xlu0 %9568
      %9570 = vrot.lane.b32.xlu0 %v9327, 8
      %v9571 = vpop.permute.xlu0 %9570
      %9572 = vrot.lane.b32.xlu0 %v9344, 8
      %v9573 = vpop.permute.xlu0 %9572
      %9574 = vrot.lane.b32.xlu0 %v9361, 8
      %v9575 = vpop.permute.xlu0 %9574
      %9576 = vrot.lane.b32.xlu0 %v9378, 8
      %v9577 = vpop.permute.xlu0 %9576
      %9578 = vrot.lane.b32.xlu0 %v9395, 8
      %v9579 = vpop.permute.xlu0 %9578
      %9580 = vrot.lane.b32.xlu0 %v9412, 8
      %v9581 = vpop.permute.xlu0 %9580
      %9582 = vrot.lane.b32.xlu0 %v9429, 8
      %v9583 = vpop.permute.xlu0 %9582
      %9584 = vrot.lane.b32.xlu0 %v9446, 8
      %v9585 = vpop.permute.xlu0 %9584
      %9586 = vrot.lane.b32.xlu0 %v9463, 8
      %v9587 = vpop.permute.xlu0 %9586
      %9588 = vrot.lane.b32.xlu0 %v9480, 8
      %v9589 = vpop.permute.xlu0 %9588
      %9590 = vrot.lane.b32.xlu0 %v9497, 8
      %v9591 = vpop.permute.xlu0 %9590
      %9592 = vrot.lane.b32.xlu0 %v9514, 8
      %v9593 = vpop.permute.xlu0 %9592
      %9594 = vrot.lane.b32.xlu0 %v9531, 8
      %v9595 = vpop.permute.xlu0 %9594
      %vm9628 = vcmask 130112
      %9629 = vst.msk [vmem:[#allocation3] sm:$0xff] %vm9628, %v9533
      %9630 = vst.msk [vmem:[#allocation3 + $0x8] sm:$0xff] %vm9628, %v9535
      %9631 = vst.msk [vmem:[#allocation3 + $0x10] sm:$0xff] %vm9628, %v9537
      %9632 = vst.msk [vmem:[#allocation3 + $0x18] sm:$0xff] %vm9628, %v9539
      %9633 = vst.msk [vmem:[#allocation3 + $0x20] sm:$0xff] %vm9628, %v9541
      %9634 = vst.msk [vmem:[#allocation3 + $0x28] sm:$0xff] %vm9628, %v9543
      %9635 = vst.msk [vmem:[#allocation3 + $0x30] sm:$0xff] %vm9628, %v9545
      %9636 = vst.msk [vmem:[#allocation3 + $0x38] sm:$0xff] %vm9628, %v9547
      %9637 = vst.msk [vmem:[#allocation3 + $0x40] sm:$0xff] %vm9628, %v9549
      %9638 = vst.msk [vmem:[#allocation3 + $0x48] sm:$0xff] %vm9628, %v9551
      %9639 = vst.msk [vmem:[#allocation3 + $0x50] sm:$0xff] %vm9628, %v9553
      %9640 = vst.msk [vmem:[#allocation3 + $0x58] sm:$0xff] %vm9628, %v9555
      %9641 = vst.msk [vmem:[#allocation3 + $0x60] sm:$0xff] %vm9628, %v9557
      %9642 = vst.msk [vmem:[#allocation3 + $0x68] sm:$0xff] %vm9628, %v9559
      %9643 = vst.msk [vmem:[#allocation3 + $0x70] sm:$0xff] %vm9628, %v9561
      %9644 = vst.msk [vmem:[#allocation3 + $0x78] sm:$0xff] %vm9628, %v9563
      %9645 = vst.msk [vmem:[#allocation3 + $0x80] sm:$0xff] %vm9628, %v9565
      %9646 = vst.msk [vmem:[#allocation3 + $0x88] sm:$0xff] %vm9628, %v9567
      %9647 = vst.msk [vmem:[#allocation3 + $0x90] sm:$0xff] %vm9628, %v9569
      %9648 = vst.msk [vmem:[#allocation3 + $0x98] sm:$0xff] %vm9628, %v9571
      %9649 = vst.msk [vmem:[#allocation3 + $0xa0] sm:$0xff] %vm9628, %v9573
      %9650 = vst.msk [vmem:[#allocation3 + $0xa8] sm:$0xff] %vm9628, %v9575
      %9651 = vst.msk [vmem:[#allocation3 + $0xb0] sm:$0xff] %vm9628, %v9577
      %9652 = vst.msk [vmem:[#allocation3 + $0xb8] sm:$0xff] %vm9628, %v9579
      %9653 = vst.msk [vmem:[#allocation3 + $0xc0] sm:$0xff] %vm9628, %v9581
      %9654 = vst.msk [vmem:[#allocation3 + $0xc8] sm:$0xff] %vm9628, %v9583
      %9655 = vst.msk [vmem:[#allocation3 + $0xd0] sm:$0xff] %vm9628, %v9585
      %9656 = vst.msk [vmem:[#allocation3 + $0xd8] sm:$0xff] %vm9628, %v9587
      %9657 = vst.msk [vmem:[#allocation3 + $0xe0] sm:$0xff] %vm9628, %v9589
      %9658 = vst.msk [vmem:[#allocation3 + $0xe8] sm:$0xff] %vm9628, %v9591
      %9659 = vst.msk [vmem:[#allocation3 + $0xf0] sm:$0xff] %vm9628, %v9593
      %9660 = vst.msk [vmem:[#allocation3 + $0xf8] sm:$0xff] %vm9628, %v9595
      %v9661 = vcombine.low %v7306, %v7305
      %v9662 = vcombine.low %v7307, %v7315
      %v9664 = vunpack.c.l.s4 1983009808
      %v9665 = vunpack.c.0.s8 %v9664
      %v9666 = vlaneseq
      %v9667 = vshrl.u32 %v9666, 7
      %v9668 = vsub.s32 %v9665, %v9667
      %v9669 = vrot.slane %v9661, %v9668
      %v9671 = vunpack.c.l.s4 1983009808
      %v9672 = vunpack.c.0.s8 %v9671
      %v9673 = vlaneseq
      %v9674 = vshrl.u32 %v9673, 7
      %v9675 = vsub.s32 %v9672, %v9674
      %v9676 = vrot.slane %v9662, %v9675
      %v9677 = vcombine.low %v9669, %v9676
      %v9678 = vcombine.low %v7323, %v7322
      %v9679 = vcombine.low %v7324, %v7332
      %v9681 = vunpack.c.l.s4 1983009808
      %v9682 = vunpack.c.0.s8 %v9681
      %v9683 = vlaneseq
      %v9684 = vshrl.u32 %v9683, 7
      %v9685 = vsub.s32 %v9682, %v9684
      %v9686 = vrot.slane %v9678, %v9685
      %v9688 = vunpack.c.l.s4 1983009808
      %v9689 = vunpack.c.0.s8 %v9688
      %v9690 = vlaneseq
      %v9691 = vshrl.u32 %v9690, 7
      %v9692 = vsub.s32 %v9689, %v9691
      %v9693 = vrot.slane %v9679, %v9692
      %v9694 = vcombine.low %v9686, %v9693
      %v9695 = vcombine.low %v7339, %v7341
      %v9696 = vcombine.low %v7349, %v7357
      %v9698 = vunpack.c.l.s4 1983009808
      %v9699 = vunpack.c.0.s8 %v9698
      %v9700 = vlaneseq
      %v9701 = vshrl.u32 %v9700, 7
      %v9702 = vsub.s32 %v9699, %v9701
      %v9703 = vrot.slane %v9695, %v9702
      %v9705 = vunpack.c.l.s4 1983009808
      %v9706 = vunpack.c.0.s8 %v9705
      %v9707 = vlaneseq
      %v9708 = vshrl.u32 %v9707, 7
      %v9709 = vsub.s32 %v9706, %v9708
      %v9710 = vrot.slane %v9696, %v9709
      %v9711 = vcombine.low %v9703, %v9710
      %v9712 = vcombine.low %v7356, %v7358
      %v9713 = vcombine.low %v7366, %v7374
      %v9715 = vunpack.c.l.s4 1983009808
      %v9716 = vunpack.c.0.s8 %v9715
      %v9717 = vlaneseq
      %v9718 = vshrl.u32 %v9717, 7
      %v9719 = vsub.s32 %v9716, %v9718
      %v9720 = vrot.slane %v9712, %v9719
      %v9722 = vunpack.c.l.s4 1983009808
      %v9723 = vunpack.c.0.s8 %v9722
      %v9724 = vlaneseq
      %v9725 = vshrl.u32 %v9724, 7
      %v9726 = vsub.s32 %v9723, %v9725
      %v9727 = vrot.slane %v9713, %v9726
      %v9728 = vcombine.low %v9720, %v9727
      %v9729 = vcombine.low %v7375, %v7383
      %v9730 = vcombine.low %v7391, %v7390
      %v9732 = vunpack.c.l.s4 1983009808
      %v9733 = vunpack.c.0.s8 %v9732
      %v9734 = vlaneseq
      %v9735 = vshrl.u32 %v9734, 7
      %v9736 = vsub.s32 %v9733, %v9735
      %v9737 = vrot.slane %v9729, %v9736
      %v9739 = vunpack.c.l.s4 1983009808
      %v9740 = vunpack.c.0.s8 %v9739
      %v9741 = vlaneseq
      %v9742 = vshrl.u32 %v9741, 7
      %v9743 = vsub.s32 %v9740, %v9742
      %v9744 = vrot.slane %v9730, %v9743
      %v9745 = vcombine.low %v9737, %v9744
      %v9746 = vcombine.low %v7392, %v7400
      %v9747 = vcombine.low %v7408, %v7407
      %v9749 = vunpack.c.l.s4 1983009808
      %v9750 = vunpack.c.0.s8 %v9749
      %v9751 = vlaneseq
      %v9752 = vshrl.u32 %v9751, 7
      %v9753 = vsub.s32 %v9750, %v9752
      %v9754 = vrot.slane %v9746, %v9753
      %v9756 = vunpack.c.l.s4 1983009808
      %v9757 = vunpack.c.0.s8 %v9756
      %v9758 = vlaneseq
      %v9759 = vshrl.u32 %v9758, 7
      %v9760 = vsub.s32 %v9757, %v9759
      %v9761 = vrot.slane %v9747, %v9760
      %v9762 = vcombine.low %v9754, %v9761
      %v9763 = vcombine.low %v7417, %v7425
      %v9764 = vcombine.low %v7424, %v7426
      %v9766 = vunpack.c.l.s4 1983009808
      %v9767 = vunpack.c.0.s8 %v9766
      %v9768 = vlaneseq
      %v9769 = vshrl.u32 %v9768, 7
      %v9770 = vsub.s32 %v9767, %v9769
      %v9771 = vrot.slane %v9763, %v9770
      %v9773 = vunpack.c.l.s4 1983009808
      %v9774 = vunpack.c.0.s8 %v9773
      %v9775 = vlaneseq
      %v9776 = vshrl.u32 %v9775, 7
      %v9777 = vsub.s32 %v9774, %v9776
      %v9778 = vrot.slane %v9764, %v9777
      %v9779 = vcombine.low %v9771, %v9778
      %v9780 = vcombine.low %v7434, %v7442
      %v9781 = vcombine.low %v7441, %v7443
      %v9783 = vunpack.c.l.s4 1983009808
      %v9784 = vunpack.c.0.s8 %v9783
      %v9785 = vlaneseq
      %v9786 = vshrl.u32 %v9785, 7
      %v9787 = vsub.s32 %v9784, %v9786
      %v9788 = vrot.slane %v9780, %v9787
      %v9790 = vunpack.c.l.s4 1983009808
      %v9791 = vunpack.c.0.s8 %v9790
      %v9792 = vlaneseq
      %v9793 = vshrl.u32 %v9792, 7
      %v9794 = vsub.s32 %v9791, %v9793
      %v9795 = vrot.slane %v9781, %v9794
      %v9796 = vcombine.low %v9788, %v9795
      %v9797 = vcombine.low %v7459, %v7458
      %v9798 = vcombine.low %v7460, %v7468
      %v9800 = vunpack.c.l.s4 1983009808
      %v9801 = vunpack.c.0.s8 %v9800
      %v9802 = vlaneseq
      %v9803 = vshrl.u32 %v9802, 7
      %v9804 = vsub.s32 %v9801, %v9803
      %v9805 = vrot.slane %v9797, %v9804
      %v9807 = vunpack.c.l.s4 1983009808
      %v9808 = vunpack.c.0.s8 %v9807
      %v9809 = vlaneseq
      %v9810 = vshrl.u32 %v9809, 7
      %v9811 = vsub.s32 %v9808, %v9810
      %v9812 = vrot.slane %v9798, %v9811
      %v9813 = vcombine.low %v9805, %v9812
      %v9814 = vcombine.low %v7476, %v7475
      %v9815 = vcombine.low %v7477, %v7485
      %v9817 = vunpack.c.l.s4 1983009808
      %v9818 = vunpack.c.0.s8 %v9817
      %v9819 = vlaneseq
      %v9820 = vshrl.u32 %v9819, 7
      %v9821 = vsub.s32 %v9818, %v9820
      %v9822 = vrot.slane %v9814, %v9821
      %v9824 = vunpack.c.l.s4 1983009808
      %v9825 = vunpack.c.0.s8 %v9824
      %v9826 = vlaneseq
      %v9827 = vshrl.u32 %v9826, 7
      %v9828 = vsub.s32 %v9825, %v9827
      %v9829 = vrot.slane %v9815, %v9828
      %v9830 = vcombine.low %v9822, %v9829
      %v9831 = vcombine.low %v7492, %v7494
      %v9832 = vcombine.low %v7502, %v7510
      %v9834 = vunpack.c.l.s4 1983009808
      %v9835 = vunpack.c.0.s8 %v9834
      %v9836 = vlaneseq
      %v9837 = vshrl.u32 %v9836, 7
      %v9838 = vsub.s32 %v9835, %v9837
      %v9839 = vrot.slane %v9831, %v9838
      %v9841 = vunpack.c.l.s4 1983009808
      %v9842 = vunpack.c.0.s8 %v9841
      %v9843 = vlaneseq
      %v9844 = vshrl.u32 %v9843, 7
      %v9845 = vsub.s32 %v9842, %v9844
      %v9846 = vrot.slane %v9832, %v9845
      %v9847 = vcombine.low %v9839, %v9846
      %v9848 = vcombine.low %v7509, %v7511
      %v9849 = vcombine.low %v7519, %v7527
      %v9851 = vunpack.c.l.s4 1983009808
      %v9852 = vunpack.c.0.s8 %v9851
      %v9853 = vlaneseq
      %v9854 = vshrl.u32 %v9853, 7
      %v9855 = vsub.s32 %v9852, %v9854
      %v9856 = vrot.slane %v9848, %v9855
      %v9858 = vunpack.c.l.s4 1983009808
      %v9859 = vunpack.c.0.s8 %v9858
      %v9860 = vlaneseq
      %v9861 = vshrl.u32 %v9860, 7
      %v9862 = vsub.s32 %v9859, %v9861
      %v9863 = vrot.slane %v9849, %v9862
      %v9864 = vcombine.low %v9856, %v9863
      %v9865 = vcombine.low %v7528, %v7536
      %v9866 = vcombine.low %v7544, %v7543
      %v9868 = vunpack.c.l.s4 1983009808
      %v9869 = vunpack.c.0.s8 %v9868
      %v9870 = vlaneseq
      %v9871 = vshrl.u32 %v9870, 7
      %v9872 = vsub.s32 %v9869, %v9871
      %v9873 = vrot.slane %v9865, %v9872
      %v9875 = vunpack.c.l.s4 1983009808
      %v9876 = vunpack.c.0.s8 %v9875
      %v9877 = vlaneseq
      %v9878 = vshrl.u32 %v9877, 7
      %v9879 = vsub.s32 %v9876, %v9878
      %v9880 = vrot.slane %v9866, %v9879
      %v9881 = vcombine.low %v9873, %v9880
      %v9882 = vcombine.low %v7545, %v7553
      %v9883 = vcombine.low %v7561, %v7560
      %v9885 = vunpack.c.l.s4 1983009808
      %v9886 = vunpack.c.0.s8 %v9885
      %v9887 = vlaneseq
      %v9888 = vshrl.u32 %v9887, 7
      %v9889 = vsub.s32 %v9886, %v9888
      %v9890 = vrot.slane %v9882, %v9889
      %v9892 = vunpack.c.l.s4 1983009808
      %v9893 = vunpack.c.0.s8 %v9892
      %v9894 = vlaneseq
      %v9895 = vshrl.u32 %v9894, 7
      %v9896 = vsub.s32 %v9893, %v9895
      %v9897 = vrot.slane %v9883, %v9896
      %v9898 = vcombine.low %v9890, %v9897
      %v9899 = vcombine.low %v7570, %v7578
      %v9900 = vcombine.low %v7577, %v7579
      %v9902 = vunpack.c.l.s4 1983009808
      %v9903 = vunpack.c.0.s8 %v9902
      %v9904 = vlaneseq
      %v9905 = vshrl.u32 %v9904, 7
      %v9906 = vsub.s32 %v9903, %v9905
      %v9907 = vrot.slane %v9899, %v9906
      %v9909 = vunpack.c.l.s4 1983009808
      %v9910 = vunpack.c.0.s8 %v9909
      %v9911 = vlaneseq
      %v9912 = vshrl.u32 %v9911, 7
      %v9913 = vsub.s32 %v9910, %v9912
      %v9914 = vrot.slane %v9900, %v9913
      %v9915 = vcombine.low %v9907, %v9914
      %v9916 = vcombine.low %v7587, %v7595
      %v9917 = vcombine.low %v7594, %v7596
      %v9919 = vunpack.c.l.s4 1983009808
      %v9920 = vunpack.c.0.s8 %v9919
      %v9921 = vlaneseq
      %v9922 = vshrl.u32 %v9921, 7
      %v9923 = vsub.s32 %v9920, %v9922
      %v9924 = vrot.slane %v9916, %v9923
      %v9926 = vunpack.c.l.s4 1983009808
      %v9927 = vunpack.c.0.s8 %v9926
      %v9928 = vlaneseq
      %v9929 = vshrl.u32 %v9928, 7
      %v9930 = vsub.s32 %v9927, %v9929
      %v9931 = vrot.slane %v9917, %v9930
      %v9932 = vcombine.low %v9924, %v9931
      %v9933 = vcombine.low %v7612, %v7611
      %v9934 = vcombine.low %v7613, %v7621
      %v9936 = vunpack.c.l.s4 1983009808
      %v9937 = vunpack.c.0.s8 %v9936
      %v9938 = vlaneseq
      %v9939 = vshrl.u32 %v9938, 7
      %v9940 = vsub.s32 %v9937, %v9939
      %v9941 = vrot.slane %v9933, %v9940
      %v9943 = vunpack.c.l.s4 1983009808
      %v9944 = vunpack.c.0.s8 %v9943
      %v9945 = vlaneseq
      %v9946 = vshrl.u32 %v9945, 7
      %v9947 = vsub.s32 %v9944, %v9946
      %v9948 = vrot.slane %v9934, %v9947
      %v9949 = vcombine.low %v9941, %v9948
      %v9950 = vcombine.low %v7629, %v7628
      %v9951 = vcombine.low %v7630, %v7638
      %v9953 = vunpack.c.l.s4 1983009808
      %v9954 = vunpack.c.0.s8 %v9953
      %v9955 = vlaneseq
      %v9956 = vshrl.u32 %v9955, 7
      %v9957 = vsub.s32 %v9954, %v9956
      %v9958 = vrot.slane %v9950, %v9957
      %v9960 = vunpack.c.l.s4 1983009808
      %v9961 = vunpack.c.0.s8 %v9960
      %v9962 = vlaneseq
      %v9963 = vshrl.u32 %v9962, 7
      %v9964 = vsub.s32 %v9961, %v9963
      %v9965 = vrot.slane %v9951, %v9964
      %v9966 = vcombine.low %v9958, %v9965
      %v9967 = vcombine.low %v7645, %v7647
      %v9968 = vcombine.low %v7655, %v7663
      %v9970 = vunpack.c.l.s4 1983009808
      %v9971 = vunpack.c.0.s8 %v9970
      %v9972 = vlaneseq
      %v9973 = vshrl.u32 %v9972, 7
      %v9974 = vsub.s32 %v9971, %v9973
      %v9975 = vrot.slane %v9967, %v9974
      %v9977 = vunpack.c.l.s4 1983009808
      %v9978 = vunpack.c.0.s8 %v9977
      %v9979 = vlaneseq
      %v9980 = vshrl.u32 %v9979, 7
      %v9981 = vsub.s32 %v9978, %v9980
      %v9982 = vrot.slane %v9968, %v9981
      %v9983 = vcombine.low %v9975, %v9982
      %v9984 = vcombine.low %v7662, %v7664
      %v9985 = vcombine.low %v7672, %v7680
      %v9987 = vunpack.c.l.s4 1983009808
      %v9988 = vunpack.c.0.s8 %v9987
      %v9989 = vlaneseq
      %v9990 = vshrl.u32 %v9989, 7
      %v9991 = vsub.s32 %v9988, %v9990
      %v9992 = vrot.slane %v9984, %v9991
      %v9994 = vunpack.c.l.s4 1983009808
      %v9995 = vunpack.c.0.s8 %v9994
      %v9996 = vlaneseq
      %v9997 = vshrl.u32 %v9996, 7
      %v9998 = vsub.s32 %v9995, %v9997
      %v9999 = vrot.slane %v9985, %v9998
      %v10000 = vcombine.low %v9992, %v9999
      %v10001 = vcombine.low %v7681, %v7689
      %v10002 = vcombine.low %v7697, %v7696
      %v10004 = vunpack.c.l.s4 1983009808
      %v10005 = vunpack.c.0.s8 %v10004
      %v10006 = vlaneseq
      %v10007 = vshrl.u32 %v10006, 7
      %v10008 = vsub.s32 %v10005, %v10007
      %v10009 = vrot.slane %v10001, %v10008
      %v10011 = vunpack.c.l.s4 1983009808
      %v10012 = vunpack.c.0.s8 %v10011
      %v10013 = vlaneseq
      %v10014 = vshrl.u32 %v10013, 7
      %v10015 = vsub.s32 %v10012, %v10014
      %v10016 = vrot.slane %v10002, %v10015
      %v10017 = vcombine.low %v10009, %v10016
      %v10018 = vcombine.low %v7698, %v7706
      %v10019 = vcombine.low %v7714, %v7713
      %v10021 = vunpack.c.l.s4 1983009808
      %v10022 = vunpack.c.0.s8 %v10021
      %v10023 = vlaneseq
      %v10024 = vshrl.u32 %v10023, 7
      %v10025 = vsub.s32 %v10022, %v10024
      %v10026 = vrot.slane %v10018, %v10025
      %v10028 = vunpack.c.l.s4 1983009808
      %v10029 = vunpack.c.0.s8 %v10028
      %v10030 = vlaneseq
      %v10031 = vshrl.u32 %v10030, 7
      %v10032 = vsub.s32 %v10029, %v10031
      %v10033 = vrot.slane %v10019, %v10032
      %v10034 = vcombine.low %v10026, %v10033
      %v10035 = vcombine.low %v7723, %v7731
      %v10036 = vcombine.low %v7730, %v7732
      %v10038 = vunpack.c.l.s4 1983009808
      %v10039 = vunpack.c.0.s8 %v10038
      %v10040 = vlaneseq
      %v10041 = vshrl.u32 %v10040, 7
      %v10042 = vsub.s32 %v10039, %v10041
      %v10043 = vrot.slane %v10035, %v10042
      %v10045 = vunpack.c.l.s4 1983009808
      %v10046 = vunpack.c.0.s8 %v10045
      %v10047 = vlaneseq
      %v10048 = vshrl.u32 %v10047, 7
      %v10049 = vsub.s32 %v10046, %v10048
      %v10050 = vrot.slane %v10036, %v10049
      %v10051 = vcombine.low %v10043, %v10050
      %v10052 = vcombine.low %v7740, %v7748
      %v10053 = vcombine.low %v7747, %v7749
      %v10055 = vunpack.c.l.s4 1983009808
      %v10056 = vunpack.c.0.s8 %v10055
      %v10057 = vlaneseq
      %v10058 = vshrl.u32 %v10057, 7
      %v10059 = vsub.s32 %v10056, %v10058
      %v10060 = vrot.slane %v10052, %v10059
      %v10062 = vunpack.c.l.s4 1983009808
      %v10063 = vunpack.c.0.s8 %v10062
      %v10064 = vlaneseq
      %v10065 = vshrl.u32 %v10064, 7
      %v10066 = vsub.s32 %v10063, %v10065
      %v10067 = vrot.slane %v10053, %v10066
      %v10068 = vcombine.low %v10060, %v10067
      %v10069 = vcombine.low %v7765, %v7764
      %v10070 = vcombine.low %v7766, %v7774
      %v10072 = vunpack.c.l.s4 1983009808
      %v10073 = vunpack.c.0.s8 %v10072
      %v10074 = vlaneseq
      %v10075 = vshrl.u32 %v10074, 7
      %v10076 = vsub.s32 %v10073, %v10075
      %v10077 = vrot.slane %v10069, %v10076
      %v10079 = vunpack.c.l.s4 1983009808
      %v10080 = vunpack.c.0.s8 %v10079
      %v10081 = vlaneseq
      %v10082 = vshrl.u32 %v10081, 7
      %v10083 = vsub.s32 %v10080, %v10082
      %v10084 = vrot.slane %v10070, %v10083
      %v10085 = vcombine.low %v10077, %v10084
      %v10086 = vcombine.low %v7782, %v7781
      %v10087 = vcombine.low %v7783, %v7791
      %v10089 = vunpack.c.l.s4 1983009808
      %v10090 = vunpack.c.0.s8 %v10089
      %v10091 = vlaneseq
      %v10092 = vshrl.u32 %v10091, 7
      %v10093 = vsub.s32 %v10090, %v10092
      %v10094 = vrot.slane %v10086, %v10093
      %v10096 = vunpack.c.l.s4 1983009808
      %v10097 = vunpack.c.0.s8 %v10096
      %v10098 = vlaneseq
      %v10099 = vshrl.u32 %v10098, 7
      %v10100 = vsub.s32 %v10097, %v10099
      %v10101 = vrot.slane %v10087, %v10100
      %v10102 = vcombine.low %v10094, %v10101
      %v10103 = vcombine.low %v7798, %v7800
      %v10104 = vcombine.low %v7808, %v7816
      %v10106 = vunpack.c.l.s4 1983009808
      %v10107 = vunpack.c.0.s8 %v10106
      %v10108 = vlaneseq
      %v10109 = vshrl.u32 %v10108, 7
      %v10110 = vsub.s32 %v10107, %v10109
      %v10111 = vrot.slane %v10103, %v10110
      %v10113 = vunpack.c.l.s4 1983009808
      %v10114 = vunpack.c.0.s8 %v10113
      %v10115 = vlaneseq
      %v10116 = vshrl.u32 %v10115, 7
      %v10117 = vsub.s32 %v10114, %v10116
      %v10118 = vrot.slane %v10104, %v10117
      %v10119 = vcombine.low %v10111, %v10118
      %v10120 = vcombine.low %v7815, %v7817
      %v10121 = vcombine.low %v7825, %v7833
      %v10123 = vunpack.c.l.s4 1983009808
      %v10124 = vunpack.c.0.s8 %v10123
      %v10125 = vlaneseq
      %v10126 = vshrl.u32 %v10125, 7
      %v10127 = vsub.s32 %v10124, %v10126
      %v10128 = vrot.slane %v10120, %v10127
      %v10130 = vunpack.c.l.s4 1983009808
      %v10131 = vunpack.c.0.s8 %v10130
      %v10132 = vlaneseq
      %v10133 = vshrl.u32 %v10132, 7
      %v10134 = vsub.s32 %v10131, %v10133
      %v10135 = vrot.slane %v10121, %v10134
      %v10136 = vcombine.low %v10128, %v10135
      %v10137 = vcombine.low %v7834, %v7842
      %v10138 = vcombine.low %v7850, %v7849
      %v10140 = vunpack.c.l.s4 1983009808
      %v10141 = vunpack.c.0.s8 %v10140
      %v10142 = vlaneseq
      %v10143 = vshrl.u32 %v10142, 7
      %v10144 = vsub.s32 %v10141, %v10143
      %v10145 = vrot.slane %v10137, %v10144
      %v10147 = vunpack.c.l.s4 1983009808
      %v10148 = vunpack.c.0.s8 %v10147
      %v10149 = vlaneseq
      %v10150 = vshrl.u32 %v10149, 7
      %v10151 = vsub.s32 %v10148, %v10150
      %v10152 = vrot.slane %v10138, %v10151
      %v10153 = vcombine.low %v10145, %v10152
      %v10154 = vcombine.low %v7851, %v7859
      %v10155 = vcombine.low %v7867, %v7866
      %v10157 = vunpack.c.l.s4 1983009808
      %v10158 = vunpack.c.0.s8 %v10157
      %v10159 = vlaneseq
      %v10160 = vshrl.u32 %v10159, 7
      %v10161 = vsub.s32 %v10158, %v10160
      %v10162 = vrot.slane %v10154, %v10161
      %v10164 = vunpack.c.l.s4 1983009808
      %v10165 = vunpack.c.0.s8 %v10164
      %v10166 = vlaneseq
      %v10167 = vshrl.u32 %v10166, 7
      %v10168 = vsub.s32 %v10165, %v10167
      %v10169 = vrot.slane %v10155, %v10168
      %v10170 = vcombine.low %v10162, %v10169
      %v10171 = vcombine.low %v7876, %v7884
      %v10172 = vcombine.low %v7883, %v7885
      %v10174 = vunpack.c.l.s4 1983009808
      %v10175 = vunpack.c.0.s8 %v10174
      %v10176 = vlaneseq
      %v10177 = vshrl.u32 %v10176, 7
      %v10178 = vsub.s32 %v10175, %v10177
      %v10179 = vrot.slane %v10171, %v10178
      %v10181 = vunpack.c.l.s4 1983009808
      %v10182 = vunpack.c.0.s8 %v10181
      %v10183 = vlaneseq
      %v10184 = vshrl.u32 %v10183, 7
      %v10185 = vsub.s32 %v10182, %v10184
      %v10186 = vrot.slane %v10172, %v10185
      %v10187 = vcombine.low %v10179, %v10186
      %v10188 = vcombine.low %v7893, %v7901
      %v10189 = vcombine.low %v7900, %v7902
      %v10191 = vunpack.c.l.s4 1983009808
      %v10192 = vunpack.c.0.s8 %v10191
      %v10193 = vlaneseq
      %v10194 = vshrl.u32 %v10193, 7
      %v10195 = vsub.s32 %v10192, %v10194
      %v10196 = vrot.slane %v10188, %v10195
      %v10198 = vunpack.c.l.s4 1983009808
      %v10199 = vunpack.c.0.s8 %v10198
      %v10200 = vlaneseq
      %v10201 = vshrl.u32 %v10200, 7
      %v10202 = vsub.s32 %v10199, %v10201
      %v10203 = vrot.slane %v10189, %v10202
      %v10204 = vcombine.low %v10196, %v10203
      %10205 = vrot.lane.b32.xlu0 %v9677, 16
      %v10206 = vpop.permute.xlu0 %10205
      %10207 = vrot.lane.b32.xlu0 %v9694, 16
      %v10208 = vpop.permute.xlu0 %10207
      %10209 = vrot.lane.b32.xlu0 %v9711, 16
      %v10210 = vpop.permute.xlu0 %10209
      %10211 = vrot.lane.b32.xlu0 %v9728, 16
      %v10212 = vpop.permute.xlu0 %10211
      %10213 = vrot.lane.b32.xlu0 %v9745, 16
      %v10214 = vpop.permute.xlu0 %10213
      %10215 = vrot.lane.b32.xlu0 %v9762, 16
      %v10216 = vpop.permute.xlu0 %10215
      %10217 = vrot.lane.b32.xlu0 %v9779, 16
      %v10218 = vpop.permute.xlu0 %10217
      %10219 = vrot.lane.b32.xlu0 %v9796, 16
      %v10220 = vpop.permute.xlu0 %10219
      %10221 = vrot.lane.b32.xlu0 %v9813, 16
      %v10222 = vpop.permute.xlu0 %10221
      %10223 = vrot.lane.b32.xlu0 %v9830, 16
      %v10224 = vpop.permute.xlu0 %10223
      %10225 = vrot.lane.b32.xlu0 %v9847, 16
      %v10226 = vpop.permute.xlu0 %10225
      %10227 = vrot.lane.b32.xlu0 %v9864, 16
      %v10228 = vpop.permute.xlu0 %10227
      %10229 = vrot.lane.b32.xlu0 %v9881, 16
      %v10230 = vpop.permute.xlu0 %10229
      %10231 = vrot.lane.b32.xlu0 %v9898, 16
      %v10232 = vpop.permute.xlu0 %10231
      %10233 = vrot.lane.b32.xlu0 %v9915, 16
      %v10234 = vpop.permute.xlu0 %10233
      %10235 = vrot.lane.b32.xlu0 %v9932, 16
      %v10236 = vpop.permute.xlu0 %10235
      %10237 = vrot.lane.b32.xlu0 %v9949, 16
      %v10238 = vpop.permute.xlu0 %10237
      %10239 = vrot.lane.b32.xlu0 %v9966, 16
      %v10240 = vpop.permute.xlu0 %10239
      %10241 = vrot.lane.b32.xlu0 %v9983, 16
      %v10242 = vpop.permute.xlu0 %10241
      %10243 = vrot.lane.b32.xlu0 %v10000, 16
      %v10244 = vpop.permute.xlu0 %10243
      %10245 = vrot.lane.b32.xlu0 %v10017, 16
      %v10246 = vpop.permute.xlu0 %10245
      %10247 = vrot.lane.b32.xlu0 %v10034, 16
      %v10248 = vpop.permute.xlu0 %10247
      %10249 = vrot.lane.b32.xlu0 %v10051, 16
      %v10250 = vpop.permute.xlu0 %10249
      %10251 = vrot.lane.b32.xlu0 %v10068, 16
      %v10252 = vpop.permute.xlu0 %10251
      %10253 = vrot.lane.b32.xlu0 %v10085, 16
      %v10254 = vpop.permute.xlu0 %10253
      %10255 = vrot.lane.b32.xlu0 %v10102, 16
      %v10256 = vpop.permute.xlu0 %10255
      %10257 = vrot.lane.b32.xlu0 %v10119, 16
      %v10258 = vpop.permute.xlu0 %10257
      %10259 = vrot.lane.b32.xlu0 %v10136, 16
      %v10260 = vpop.permute.xlu0 %10259
      %10261 = vrot.lane.b32.xlu0 %v10153, 16
      %v10262 = vpop.permute.xlu0 %10261
      %10263 = vrot.lane.b32.xlu0 %v10170, 16
      %v10264 = vpop.permute.xlu0 %10263
      %10265 = vrot.lane.b32.xlu0 %v10187, 16
      %v10266 = vpop.permute.xlu0 %10265
      %10267 = vrot.lane.b32.xlu0 %v10204, 16
      %v10268 = vpop.permute.xlu0 %10267
      %vm10301 = vcmask 195712
      %10302 = vst.msk [vmem:[#allocation3] sm:$0xff] %vm10301, %v10206
      %10303 = vst.msk [vmem:[#allocation3 + $0x8] sm:$0xff] %vm10301, %v10208
      %10304 = vst.msk [vmem:[#allocation3 + $0x10] sm:$0xff] %vm10301, %v10210
      %10305 = vst.msk [vmem:[#allocation3 + $0x18] sm:$0xff] %vm10301, %v10212
      %10306 = vst.msk [vmem:[#allocation3 + $0x20] sm:$0xff] %vm10301, %v10214
      %10307 = vst.msk [vmem:[#allocation3 + $0x28] sm:$0xff] %vm10301, %v10216
      %10308 = vst.msk [vmem:[#allocation3 + $0x30] sm:$0xff] %vm10301, %v10218
      %10309 = vst.msk [vmem:[#allocation3 + $0x38] sm:$0xff] %vm10301, %v10220
      %10310 = vst.msk [vmem:[#allocation3 + $0x40] sm:$0xff] %vm10301, %v10222
      %10311 = vst.msk [vmem:[#allocation3 + $0x48] sm:$0xff] %vm10301, %v10224
      %10312 = vst.msk [vmem:[#allocation3 + $0x50] sm:$0xff] %vm10301, %v10226
      %10313 = vst.msk [vmem:[#allocation3 + $0x58] sm:$0xff] %vm10301, %v10228
      %10314 = vst.msk [vmem:[#allocation3 + $0x60] sm:$0xff] %vm10301, %v10230
      %10315 = vst.msk [vmem:[#allocation3 + $0x68] sm:$0xff] %vm10301, %v10232
      %10316 = vst.msk [vmem:[#allocation3 + $0x70] sm:$0xff] %vm10301, %v10234
      %10317 = vst.msk [vmem:[#allocation3 + $0x78] sm:$0xff] %vm10301, %v10236
      %10318 = vst.msk [vmem:[#allocation3 + $0x80] sm:$0xff] %vm10301, %v10238
      %10319 = vst.msk [vmem:[#allocation3 + $0x88] sm:$0xff] %vm10301, %v10240
      %10320 = vst.msk [vmem:[#allocation3 + $0x90] sm:$0xff] %vm10301, %v10242
      %10321 = vst.msk [vmem:[#allocation3 + $0x98] sm:$0xff] %vm10301, %v10244
      %10322 = vst.msk [vmem:[#allocation3 + $0xa0] sm:$0xff] %vm10301, %v10246
      %10323 = vst.msk [vmem:[#allocation3 + $0xa8] sm:$0xff] %vm10301, %v10248
      %10324 = vst.msk [vmem:[#allocation3 + $0xb0] sm:$0xff] %vm10301, %v10250
      %10325 = vst.msk [vmem:[#allocation3 + $0xb8] sm:$0xff] %vm10301, %v10252
      %10326 = vst.msk [vmem:[#allocation3 + $0xc0] sm:$0xff] %vm10301, %v10254
      %10327 = vst.msk [vmem:[#allocation3 + $0xc8] sm:$0xff] %vm10301, %v10256
      %10328 = vst.msk [vmem:[#allocation3 + $0xd0] sm:$0xff] %vm10301, %v10258
      %10329 = vst.msk [vmem:[#allocation3 + $0xd8] sm:$0xff] %vm10301, %v10260
      %10330 = vst.msk [vmem:[#allocation3 + $0xe0] sm:$0xff] %vm10301, %v10262
      %10331 = vst.msk [vmem:[#allocation3 + $0xe8] sm:$0xff] %vm10301, %v10264
      %10332 = vst.msk [vmem:[#allocation3 + $0xf0] sm:$0xff] %vm10301, %v10266
      %10333 = vst.msk [vmem:[#allocation3 + $0xf8] sm:$0xff] %vm10301, %v10268
      %v10334 = vcombine.low %v7910, %v7918
      %v10335 = vcombine.low %v7917, %v7919
      %v10337 = vunpack.c.l.s4 1983009808
      %v10338 = vunpack.c.0.s8 %v10337
      %v10339 = vlaneseq
      %v10340 = vshrl.u32 %v10339, 7
      %v10341 = vsub.s32 %v10338, %v10340
      %v10342 = vrot.slane %v10334, %v10341
      %v10344 = vunpack.c.l.s4 1983009808
      %v10345 = vunpack.c.0.s8 %v10344
      %v10346 = vlaneseq
      %v10347 = vshrl.u32 %v10346, 7
      %v10348 = vsub.s32 %v10345, %v10347
      %v10349 = vrot.slane %v10335, %v10348
      %v10350 = vcombine.low %v10342, %v10349
      %v10351 = vcombine.low %v7927, %v7935
      %v10352 = vcombine.low %v7934, %v7936
      %v10354 = vunpack.c.l.s4 1983009808
      %v10355 = vunpack.c.0.s8 %v10354
      %v10356 = vlaneseq
      %v10357 = vshrl.u32 %v10356, 7
      %v10358 = vsub.s32 %v10355, %v10357
      %v10359 = vrot.slane %v10351, %v10358
      %v10361 = vunpack.c.l.s4 1983009808
      %v10362 = vunpack.c.0.s8 %v10361
      %v10363 = vlaneseq
      %v10364 = vshrl.u32 %v10363, 7
      %v10365 = vsub.s32 %v10362, %v10364
      %v10366 = vrot.slane %v10352, %v10365
      %v10367 = vcombine.low %v10359, %v10366
      %10368 = vrot.lane.b32.xlu0 %v8029, 24
      %v10369 = vpop.permute.xlu0 %10368
      %10370 = vrot.lane.b32.xlu0 %v8046, 24
      %v10371 = vpop.permute.xlu0 %10370
      %10372 = vrot.lane.b32.xlu0 %v8063, 24
      %v10373 = vpop.permute.xlu0 %10372
      %10374 = vrot.lane.b32.xlu0 %v8080, 24
      %v10375 = vpop.permute.xlu0 %10374
      %10376 = vrot.lane.b32.xlu0 %v8097, 24
      %v10377 = vpop.permute.xlu0 %10376
      %10378 = vrot.lane.b32.xlu0 %v8114, 24
      %v10379 = vpop.permute.xlu0 %10378
      %10380 = vrot.lane.b32.xlu0 %v8131, 24
      %v10381 = vpop.permute.xlu0 %10380
      %10382 = vrot.lane.b32.xlu0 %v8148, 24
      %v10383 = vpop.permute.xlu0 %10382
      %10384 = vrot.lane.b32.xlu0 %v8165, 24
      %v10385 = vpop.permute.xlu0 %10384
      %10386 = vrot.lane.b32.xlu0 %v8182, 24
      %v10387 = vpop.permute.xlu0 %10386
      %10388 = vrot.lane.b32.xlu0 %v8199, 24
      %v10389 = vpop.permute.xlu0 %10388
      %10390 = vrot.lane.b32.xlu0 %v8216, 24
      %v10391 = vpop.permute.xlu0 %10390
      %10392 = vrot.lane.b32.xlu0 %v8233, 24
      %v10393 = vpop.permute.xlu0 %10392
      %10394 = vrot.lane.b32.xlu0 %v8250, 24
      %v10395 = vpop.permute.xlu0 %10394
      %10396 = vrot.lane.b32.xlu0 %v8267, 24
      %v10397 = vpop.permute.xlu0 %10396
      %10398 = vrot.lane.b32.xlu0 %v8284, 24
      %v10399 = vpop.permute.xlu0 %10398
      %10400 = vrot.lane.b32.xlu0 %v8301, 24
      %v10401 = vpop.permute.xlu0 %10400
      %10402 = vrot.lane.b32.xlu0 %v8318, 24
      %v10403 = vpop.permute.xlu0 %10402
      %10404 = vrot.lane.b32.xlu0 %v8335, 24
      %v10405 = vpop.permute.xlu0 %10404
      %10406 = vrot.lane.b32.xlu0 %v8352, 24
      %v10407 = vpop.permute.xlu0 %10406
      %10408 = vrot.lane.b32.xlu0 %v8369, 24
      %v10409 = vpop.permute.xlu0 %10408
      %10410 = vrot.lane.b32.xlu0 %v8386, 24
      %v10411 = vpop.permute.xlu0 %10410
      %10412 = vrot.lane.b32.xlu0 %v8403, 24
      %v10413 = vpop.permute.xlu0 %10412
      %10414 = vrot.lane.b32.xlu0 %v8420, 24
      %v10415 = vpop.permute.xlu0 %10414
      %10416 = vrot.lane.b32.xlu0 %v8437, 24
      %v10417 = vpop.permute.xlu0 %10416
      %10418 = vrot.lane.b32.xlu0 %v8454, 24
      %v10419 = vpop.permute.xlu0 %10418
      %10420 = vrot.lane.b32.xlu0 %v8471, 24
      %v10421 = vpop.permute.xlu0 %10420
      %10422 = vrot.lane.b32.xlu0 %v8488, 24
      %v10423 = vpop.permute.xlu0 %10422
      %10424 = vrot.lane.b32.xlu0 %v8505, 24
      %v10425 = vpop.permute.xlu0 %10424
      %10426 = vrot.lane.b32.xlu0 %v8522, 24
      %v10427 = vpop.permute.xlu0 %10426
      %10428 = vrot.lane.b32.xlu0 %v10350, 24
      %v10429 = vpop.permute.xlu0 %10428
      %10430 = vrot.lane.b32.xlu0 %v10367, 24
      %v10431 = vpop.permute.xlu0 %10430
      %vm10464 = vcmask 261312
      %10465 = vst.msk [vmem:[#allocation3] sm:$0xff] %vm10464, %v10369
      %10466 = vst.msk [vmem:[#allocation3 + $0x8] sm:$0xff] %vm10464, %v10371
      %10467 = vst.msk [vmem:[#allocation3 + $0x10] sm:$0xff] %vm10464, %v10373
      %10468 = vst.msk [vmem:[#allocation3 + $0x18] sm:$0xff] %vm10464, %v10375
      %10469 = vst.msk [vmem:[#allocation3 + $0x20] sm:$0xff] %vm10464, %v10377
      %10470 = vst.msk [vmem:[#allocation3 + $0x28] sm:$0xff] %vm10464, %v10379
      %10471 = vst.msk [vmem:[#allocation3 + $0x30] sm:$0xff] %vm10464, %v10381
      %10472 = vst.msk [vmem:[#allocation3 + $0x38] sm:$0xff] %vm10464, %v10383
      %10473 = vst.msk [vmem:[#allocation3 + $0x40] sm:$0xff] %vm10464, %v10385
      %10474 = vst.msk [vmem:[#allocation3 + $0x48] sm:$0xff] %vm10464, %v10387
      %10475 = vst.msk [vmem:[#allocation3 + $0x50] sm:$0xff] %vm10464, %v10389
      %10476 = vst.msk [vmem:[#allocation3 + $0x58] sm:$0xff] %vm10464, %v10391
      %10477 = vst.msk [vmem:[#allocation3 + $0x60] sm:$0xff] %vm10464, %v10393
      %10478 = vst.msk [vmem:[#allocation3 + $0x68] sm:$0xff] %vm10464, %v10395
      %10479 = vst.msk [vmem:[#allocation3 + $0x70] sm:$0xff] %vm10464, %v10397
      %10480 = vst.msk [vmem:[#allocation3 + $0x78] sm:$0xff] %vm10464, %v10399
      %10481 = vst.msk [vmem:[#allocation3 + $0x80] sm:$0xff] %vm10464, %v10401
      %10482 = vst.msk [vmem:[#allocation3 + $0x88] sm:$0xff] %vm10464, %v10403
      %10483 = vst.msk [vmem:[#allocation3 + $0x90] sm:$0xff] %vm10464, %v10405
      %10484 = vst.msk [vmem:[#allocation3 + $0x98] sm:$0xff] %vm10464, %v10407
      %10485 = vst.msk [vmem:[#allocation3 + $0xa0] sm:$0xff] %vm10464, %v10409
      %10486 = vst.msk [vmem:[#allocation3 + $0xa8] sm:$0xff] %vm10464, %v10411
      %10487 = vst.msk [vmem:[#allocation3 + $0xb0] sm:$0xff] %vm10464, %v10413
      %10488 = vst.msk [vmem:[#allocation3 + $0xb8] sm:$0xff] %vm10464, %v10415
      %10489 = vst.msk [vmem:[#allocation3 + $0xc0] sm:$0xff] %vm10464, %v10417
      %10490 = vst.msk [vmem:[#allocation3 + $0xc8] sm:$0xff] %vm10464, %v10419
      %10491 = vst.msk [vmem:[#allocation3 + $0xd0] sm:$0xff] %vm10464, %v10421
      %10492 = vst.msk [vmem:[#allocation3 + $0xd8] sm:$0xff] %vm10464, %v10423
      %10493 = vst.msk [vmem:[#allocation3 + $0xe0] sm:$0xff] %vm10464, %v10425
      %10494 = vst.msk [vmem:[#allocation3 + $0xe8] sm:$0xff] %vm10464, %v10427
      %10495 = vst.msk [vmem:[#allocation3 + $0xf0] sm:$0xff] %vm10464, %v10429
      %10496 = vst.msk [vmem:[#allocation3 + $0xf8] sm:$0xff] %vm10464, %v10431
      %v10497 = vrot.slane %v7910, 7
      %v10498 = vrot.slane %v10497, 2
      %v10499 = vrot.slane %v7918, 7
      %v10500 = vsel %vm1971, %v10498, %v10499
      %v10501 = vrot.slane %v10499, 2
      %v10502 = vrot.slane %v7917, 7
      %v10503 = vsel %vm1971, %v10501, %v10502
      %v10504 = vrot.slane %v10502, 2
      %v10505 = vrot.slane %v7919, 7
      %v10506 = vsel %vm1971, %v10504, %v10505
      %v10507 = vrot.slane %v10505, 2
      %v10508 = vrot.slane %v7927, 7
      %v10509 = vsel %vm1971, %v10507, %v10508
      %v10510 = vrot.slane %v10508, 2
      %v10511 = vrot.slane %v7935, 7
      %v10512 = vsel %vm1971, %v10510, %v10511
      %v10513 = vrot.slane %v10511, 2
      %v10514 = vrot.slane %v7934, 7
      %v10515 = vsel %vm1971, %v10513, %v10514
      %v10516 = vrot.slane %v10514, 2
      %v10517 = vrot.slane %v7936, 7
      %v10518 = vsel %vm1971, %v10516, %v10517
      %v10519 = vrot.slane %v10517, 2
      %v10520 = vrot.slane %v7944, 7
      %v10521 = vsel %vm1971, %v10519, %v10520
      %v10522 = vcombine.low %v10500, %v10503
      %v10523 = vcombine.low %v10506, %v10509
      %v10525 = vunpack.c.l.s4 1983009808
      %v10526 = vunpack.c.0.s8 %v10525
      %v10527 = vlaneseq
      %v10528 = vshrl.u32 %v10527, 7
      %v10529 = vsub.s32 %v10526, %v10528
      %v10530 = vrot.slane %v10522, %v10529
      %v10532 = vunpack.c.l.s4 1983009808
      %v10533 = vunpack.c.0.s8 %v10532
      %v10534 = vlaneseq
      %v10535 = vshrl.u32 %v10534, 7
      %v10536 = vsub.s32 %v10533, %v10535
      %v10537 = vrot.slane %v10523, %v10536
      %v10538 = vcombine.low %v10530, %v10537
      %v10539 = vcombine.low %v10512, %v10515
      %v10540 = vcombine.low %v10518, %v10521
      %v10542 = vunpack.c.l.s4 1983009808
      %v10543 = vunpack.c.0.s8 %v10542
      %v10544 = vlaneseq
      %v10545 = vshrl.u32 %v10544, 7
      %v10546 = vsub.s32 %v10543, %v10545
      %v10547 = vrot.slane %v10539, %v10546
      %v10549 = vunpack.c.l.s4 1983009808
      %v10550 = vunpack.c.0.s8 %v10549
      %v10551 = vlaneseq
      %v10552 = vshrl.u32 %v10551, 7
      %v10553 = vsub.s32 %v10550, %v10552
      %v10554 = vrot.slane %v10540, %v10553
      %v10555 = vcombine.low %v10547, %v10554
      %10556 = vrot.lane.b32.xlu0 %v9038, 32
      %v10557 = vpop.permute.xlu0 %10556
      %10558 = vrot.lane.b32.xlu0 %v9055, 32
      %v10559 = vpop.permute.xlu0 %10558
      %10560 = vrot.lane.b32.xlu0 %v9072, 32
      %v10561 = vpop.permute.xlu0 %10560
      %10562 = vrot.lane.b32.xlu0 %v9089, 32
      %v10563 = vpop.permute.xlu0 %10562
      %10564 = vrot.lane.b32.xlu0 %v9106, 32
      %v10565 = vpop.permute.xlu0 %10564
      %10566 = vrot.lane.b32.xlu0 %v9123, 32
      %v10567 = vpop.permute.xlu0 %10566
      %10568 = vrot.lane.b32.xlu0 %v9140, 32
      %v10569 = vpop.permute.xlu0 %10568
      %10570 = vrot.lane.b32.xlu0 %v9157, 32
      %v10571 = vpop.permute.xlu0 %10570
      %10572 = vrot.lane.b32.xlu0 %v9174, 32
      %v10573 = vpop.permute.xlu0 %10572
      %10574 = vrot.lane.b32.xlu0 %v9191, 32
      %v10575 = vpop.permute.xlu0 %10574
      %10576 = vrot.lane.b32.xlu0 %v9208, 32
      %v10577 = vpop.permute.xlu0 %10576
      %10578 = vrot.lane.b32.xlu0 %v9225, 32
      %v10579 = vpop.permute.xlu0 %10578
      %10580 = vrot.lane.b32.xlu0 %v9242, 32
      %v10581 = vpop.permute.xlu0 %10580
      %10582 = vrot.lane.b32.xlu0 %v9259, 32
      %v10583 = vpop.permute.xlu0 %10582
      %10584 = vrot.lane.b32.xlu0 %v9276, 32
      %v10585 = vpop.permute.xlu0 %10584
      %10586 = vrot.lane.b32.xlu0 %v9293, 32
      %v10587 = vpop.permute.xlu0 %10586
      %10588 = vrot.lane.b32.xlu0 %v9310, 32
      %v10589 = vpop.permute.xlu0 %10588
      %10590 = vrot.lane.b32.xlu0 %v9327, 32
      %v10591 = vpop.permute.xlu0 %10590
      %10592 = vrot.lane.b32.xlu0 %v9344, 32
      %v10593 = vpop.permute.xlu0 %10592
      %10594 = vrot.lane.b32.xlu0 %v9361, 32
      %v10595 = vpop.permute.xlu0 %10594
      %10596 = vrot.lane.b32.xlu0 %v9378, 32
      %v10597 = vpop.permute.xlu0 %10596
      %10598 = vrot.lane.b32.xlu0 %v9395, 32
      %v10599 = vpop.permute.xlu0 %10598
      %10600 = vrot.lane.b32.xlu0 %v9412, 32
      %v10601 = vpop.permute.xlu0 %10600
      %10602 = vrot.lane.b32.xlu0 %v9429, 32
      %v10603 = vpop.permute.xlu0 %10602
      %10604 = vrot.lane.b32.xlu0 %v9446, 32
      %v10605 = vpop.permute.xlu0 %10604
      %10606 = vrot.lane.b32.xlu0 %v9463, 32
      %v10607 = vpop.permute.xlu0 %10606
      %10608 = vrot.lane.b32.xlu0 %v9480, 32
      %v10609 = vpop.permute.xlu0 %10608
      %10610 = vrot.lane.b32.xlu0 %v9497, 32
      %v10611 = vpop.permute.xlu0 %10610
      %10612 = vrot.lane.b32.xlu0 %v9514, 32
      %v10613 = vpop.permute.xlu0 %10612
      %10614 = vrot.lane.b32.xlu0 %v9531, 32
      %v10615 = vpop.permute.xlu0 %10614
      %10616 = vrot.lane.b32.xlu0 %v10538, 32
      %v10617 = vpop.permute.xlu0 %10616
      %10618 = vrot.lane.b32.xlu0 %v10555, 32
      %v10619 = vpop.permute.xlu0 %10618
      %vm10652 = vcmask 326912
      %10653 = vst.msk [vmem:[#allocation3] sm:$0xff] %vm10652, %v10557
      %10654 = vst.msk [vmem:[#allocation3 + $0x8] sm:$0xff] %vm10652, %v10559
      %10655 = vst.msk [vmem:[#allocation3 + $0x10] sm:$0xff] %vm10652, %v10561
      %10656 = vst.msk [vmem:[#allocation3 + $0x18] sm:$0xff] %vm10652, %v10563
      %10657 = vst.msk [vmem:[#allocation3 + $0x20] sm:$0xff] %vm10652, %v10565
      %10658 = vst.msk [vmem:[#allocation3 + $0x28] sm:$0xff] %vm10652, %v10567
      %10659 = vst.msk [vmem:[#allocation3 + $0x30] sm:$0xff] %vm10652, %v10569
      %10660 = vst.msk [vmem:[#allocation3 + $0x38] sm:$0xff] %vm10652, %v10571
      %10661 = vst.msk [vmem:[#allocation3 + $0x40] sm:$0xff] %vm10652, %v10573
      %10662 = vst.msk [vmem:[#allocation3 + $0x48] sm:$0xff] %vm10652, %v10575
      %10663 = vst.msk [vmem:[#allocation3 + $0x50] sm:$0xff] %vm10652, %v10577
      %10664 = vst.msk [vmem:[#allocation3 + $0x58] sm:$0xff] %vm10652, %v10579
      %10665 = vst.msk [vmem:[#allocation3 + $0x60] sm:$0xff] %vm10652, %v10581
      %10666 = vst.msk [vmem:[#allocation3 + $0x68] sm:$0xff] %vm10652, %v10583
      %10667 = vst.msk [vmem:[#allocation3 + $0x70] sm:$0xff] %vm10652, %v10585
      %10668 = vst.msk [vmem:[#allocation3 + $0x78] sm:$0xff] %vm10652, %v10587
      %10669 = vst.msk [vmem:[#allocation3 + $0x80] sm:$0xff] %vm10652, %v10589
      %10670 = vst.msk [vmem:[#allocation3 + $0x88] sm:$0xff] %vm10652, %v10591
      %10671 = vst.msk [vmem:[#allocation3 + $0x90] sm:$0xff] %vm10652, %v10593
      %10672 = vst.msk [vmem:[#allocation3 + $0x98] sm:$0xff] %vm10652, %v10595
      %10673 = vst.msk [vmem:[#allocation3 + $0xa0] sm:$0xff] %vm10652, %v10597
      %10674 = vst.msk [vmem:[#allocation3 + $0xa8] sm:$0xff] %vm10652, %v10599
      %10675 = vst.msk [vmem:[#allocation3 + $0xb0] sm:$0xff] %vm10652, %v10601
      %10676 = vst.msk [vmem:[#allocation3 + $0xb8] sm:$0xff] %vm10652, %v10603
      %10677 = vst.msk [vmem:[#allocation3 + $0xc0] sm:$0xff] %vm10652, %v10605
      %10678 = vst.msk [vmem:[#allocation3 + $0xc8] sm:$0xff] %vm10652, %v10607
      %10679 = vst.msk [vmem:[#allocation3 + $0xd0] sm:$0xff] %vm10652, %v10609
      %10680 = vst.msk [vmem:[#allocation3 + $0xd8] sm:$0xff] %vm10652, %v10611
      %10681 = vst.msk [vmem:[#allocation3 + $0xe0] sm:$0xff] %vm10652, %v10613
      %10682 = vst.msk [vmem:[#allocation3 + $0xe8] sm:$0xff] %vm10652, %v10615
      %10683 = vst.msk [vmem:[#allocation3 + $0xf0] sm:$0xff] %vm10652, %v10617
      %10684 = vst.msk [vmem:[#allocation3 + $0xf8] sm:$0xff] %vm10652, %v10619
      %v10685 = vcombine.low %v7918, %v7917
      %v10686 = vcombine.low %v7919, %v7927
      %v10688 = vunpack.c.l.s4 1983009808
      %v10689 = vunpack.c.0.s8 %v10688
      %v10690 = vlaneseq
      %v10691 = vshrl.u32 %v10690, 7
      %v10692 = vsub.s32 %v10689, %v10691
      %v10693 = vrot.slane %v10685, %v10692
      %v10695 = vunpack.c.l.s4 1983009808
      %v10696 = vunpack.c.0.s8 %v10695
      %v10697 = vlaneseq
      %v10698 = vshrl.u32 %v10697, 7
      %v10699 = vsub.s32 %v10696, %v10698
      %v10700 = vrot.slane %v10686, %v10699
      %v10701 = vcombine.low %v10693, %v10700
      %v10702 = vcombine.low %v7935, %v7934
      %v10703 = vcombine.low %v7936, %v7944
      %v10705 = vunpack.c.l.s4 1983009808
      %v10706 = vunpack.c.0.s8 %v10705
      %v10707 = vlaneseq
      %v10708 = vshrl.u32 %v10707, 7
      %v10709 = vsub.s32 %v10706, %v10708
      %v10710 = vrot.slane %v10702, %v10709
      %v10712 = vunpack.c.l.s4 1983009808
      %v10713 = vunpack.c.0.s8 %v10712
      %v10714 = vlaneseq
      %v10715 = vshrl.u32 %v10714, 7
      %v10716 = vsub.s32 %v10713, %v10715
      %v10717 = vrot.slane %v10703, %v10716
      %v10718 = vcombine.low %v10710, %v10717
      %10719 = vrot.lane.b32.xlu0 %v9711, 40
      %v10720 = vpop.permute.xlu0 %10719
      %10721 = vrot.lane.b32.xlu0 %v9728, 40
      %v10722 = vpop.permute.xlu0 %10721
      %10723 = vrot.lane.b32.xlu0 %v9745, 40
      %v10724 = vpop.permute.xlu0 %10723
      %10725 = vrot.lane.b32.xlu0 %v9762, 40
      %v10726 = vpop.permute.xlu0 %10725
      %10727 = vrot.lane.b32.xlu0 %v9779, 40
      %v10728 = vpop.permute.xlu0 %10727
      %10729 = vrot.lane.b32.xlu0 %v9796, 40
      %v10730 = vpop.permute.xlu0 %10729
      %10731 = vrot.lane.b32.xlu0 %v9813, 40
      %v10732 = vpop.permute.xlu0 %10731
      %10733 = vrot.lane.b32.xlu0 %v9830, 40
      %v10734 = vpop.permute.xlu0 %10733
      %10735 = vrot.lane.b32.xlu0 %v9847, 40
      %v10736 = vpop.permute.xlu0 %10735
      %10737 = vrot.lane.b32.xlu0 %v9864, 40
      %v10738 = vpop.permute.xlu0 %10737
      %10739 = vrot.lane.b32.xlu0 %v9881, 40
      %v10740 = vpop.permute.xlu0 %10739
      %10741 = vrot.lane.b32.xlu0 %v9898, 40
      %v10742 = vpop.permute.xlu0 %10741
      %10743 = vrot.lane.b32.xlu0 %v9915, 40
      %v10744 = vpop.permute.xlu0 %10743
      %10745 = vrot.lane.b32.xlu0 %v9932, 40
      %v10746 = vpop.permute.xlu0 %10745
      %10747 = vrot.lane.b32.xlu0 %v9949, 40
      %v10748 = vpop.permute.xlu0 %10747
      %10749 = vrot.lane.b32.xlu0 %v9966, 40
      %v10750 = vpop.permute.xlu0 %10749
      %10751 = vrot.lane.b32.xlu0 %v9983, 40
      %v10752 = vpop.permute.xlu0 %10751
      %10753 = vrot.lane.b32.xlu0 %v10000, 40
      %v10754 = vpop.permute.xlu0 %10753
      %10755 = vrot.lane.b32.xlu0 %v10017, 40
      %v10756 = vpop.permute.xlu0 %10755
      %10757 = vrot.lane.b32.xlu0 %v10034, 40
      %v10758 = vpop.permute.xlu0 %10757
      %10759 = vrot.lane.b32.xlu0 %v10051, 40
      %v10760 = vpop.permute.xlu0 %10759
      %10761 = vrot.lane.b32.xlu0 %v10068, 40
      %v10762 = vpop.permute.xlu0 %10761
      %10763 = vrot.lane.b32.xlu0 %v10085, 40
      %v10764 = vpop.permute.xlu0 %10763
      %10765 = vrot.lane.b32.xlu0 %v10102, 40
      %v10766 = vpop.permute.xlu0 %10765
      %10767 = vrot.lane.b32.xlu0 %v10119, 40
      %v10768 = vpop.permute.xlu0 %10767
      %10769 = vrot.lane.b32.xlu0 %v10136, 40
      %v10770 = vpop.permute.xlu0 %10769
      %10771 = vrot.lane.b32.xlu0 %v10153, 40
      %v10772 = vpop.permute.xlu0 %10771
      %10773 = vrot.lane.b32.xlu0 %v10170, 40
      %v10774 = vpop.permute.xlu0 %10773
      %10775 = vrot.lane.b32.xlu0 %v10187, 40
      %v10776 = vpop.permute.xlu0 %10775
      %10777 = vrot.lane.b32.xlu0 %v10204, 40
      %v10778 = vpop.permute.xlu0 %10777
      %10779 = vrot.lane.b32.xlu0 %v10701, 40
      %v10780 = vpop.permute.xlu0 %10779
      %10781 = vrot.lane.b32.xlu0 %v10718, 40
      %v10782 = vpop.permute.xlu0 %10781
      %vm10815 = vcmask 392512
      %10816 = vst.msk [vmem:[#allocation3] sm:$0xff] %vm10815, %v10720
      %10817 = vst.msk [vmem:[#allocation3 + $0x8] sm:$0xff] %vm10815, %v10722
      %10818 = vst.msk [vmem:[#allocation3 + $0x10] sm:$0xff] %vm10815, %v10724
      %10819 = vst.msk [vmem:[#allocation3 + $0x18] sm:$0xff] %vm10815, %v10726
      %10820 = vst.msk [vmem:[#allocation3 + $0x20] sm:$0xff] %vm10815, %v10728
      %10821 = vst.msk [vmem:[#allocation3 + $0x28] sm:$0xff] %vm10815, %v10730
      %10822 = vst.msk [vmem:[#allocation3 + $0x30] sm:$0xff] %vm10815, %v10732
      %10823 = vst.msk [vmem:[#allocation3 + $0x38] sm:$0xff] %vm10815, %v10734
      %10824 = vst.msk [vmem:[#allocation3 + $0x40] sm:$0xff] %vm10815, %v10736
      %10825 = vst.msk [vmem:[#allocation3 + $0x48] sm:$0xff] %vm10815, %v10738
      %10826 = vst.msk [vmem:[#allocation3 + $0x50] sm:$0xff] %vm10815, %v10740
      %10827 = vst.msk [vmem:[#allocation3 + $0x58] sm:$0xff] %vm10815, %v10742
      %10828 = vst.msk [vmem:[#allocation3 + $0x60] sm:$0xff] %vm10815, %v10744
      %10829 = vst.msk [vmem:[#allocation3 + $0x68] sm:$0xff] %vm10815, %v10746
      %10830 = vst.msk [vmem:[#allocation3 + $0x70] sm:$0xff] %vm10815, %v10748
      %10831 = vst.msk [vmem:[#allocation3 + $0x78] sm:$0xff] %vm10815, %v10750
      %10832 = vst.msk [vmem:[#allocation3 + $0x80] sm:$0xff] %vm10815, %v10752
      %10833 = vst.msk [vmem:[#allocation3 + $0x88] sm:$0xff] %vm10815, %v10754
      %10834 = vst.msk [vmem:[#allocation3 + $0x90] sm:$0xff] %vm10815, %v10756
      %10835 = vst.msk [vmem:[#allocation3 + $0x98] sm:$0xff] %vm10815, %v10758
      %10836 = vst.msk [vmem:[#allocation3 + $0xa0] sm:$0xff] %vm10815, %v10760
      %10837 = vst.msk [vmem:[#allocation3 + $0xa8] sm:$0xff] %vm10815, %v10762
      %10838 = vst.msk [vmem:[#allocation3 + $0xb0] sm:$0xff] %vm10815, %v10764
      %10839 = vst.msk [vmem:[#allocation3 + $0xb8] sm:$0xff] %vm10815, %v10766
      %10840 = vst.msk [vmem:[#allocation3 + $0xc0] sm:$0xff] %vm10815, %v10768
      %10841 = vst.msk [vmem:[#allocation3 + $0xc8] sm:$0xff] %vm10815, %v10770
      %10842 = vst.msk [vmem:[#allocation3 + $0xd0] sm:$0xff] %vm10815, %v10772
      %10843 = vst.msk [vmem:[#allocation3 + $0xd8] sm:$0xff] %vm10815, %v10774
      %10844 = vst.msk [vmem:[#allocation3 + $0xe0] sm:$0xff] %vm10815, %v10776
      %10845 = vst.msk [vmem:[#allocation3 + $0xe8] sm:$0xff] %vm10815, %v10778
      %10846 = vst.msk [vmem:[#allocation3 + $0xf0] sm:$0xff] %vm10815, %v10780
      %10847 = vst.msk [vmem:[#allocation3 + $0xf8] sm:$0xff] %vm10815, %v10782
      %v10848 = vcombine.low %v7952, %v7951
      %v10849 = vcombine.low %v7953, %v7961
      %v10851 = vunpack.c.l.s4 1983009808
      %v10852 = vunpack.c.0.s8 %v10851
      %v10853 = vlaneseq
      %v10854 = vshrl.u32 %v10853, 7
      %v10855 = vsub.s32 %v10852, %v10854
      %v10856 = vrot.slane %v10848, %v10855
      %v10858 = vunpack.c.l.s4 1983009808
      %v10859 = vunpack.c.0.s8 %v10858
      %v10860 = vlaneseq
      %v10861 = vshrl.u32 %v10860, 7
      %v10862 = vsub.s32 %v10859, %v10861
      %v10863 = vrot.slane %v10849, %v10862
      %v10864 = vcombine.low %v10856, %v10863
      %v10865 = vcombine.low %v7969, %v7968
      %v10866 = vcombine.low %v7970, %v7977
      %v10868 = vunpack.c.l.s4 1983009808
      %v10869 = vunpack.c.0.s8 %v10868
      %v10870 = vlaneseq
      %v10871 = vshrl.u32 %v10870, 7
      %v10872 = vsub.s32 %v10869, %v10871
      %v10873 = vrot.slane %v10865, %v10872
      %v10875 = vunpack.c.l.s4 1983009808
      %v10876 = vunpack.c.0.s8 %v10875
      %v10877 = vlaneseq
      %v10878 = vshrl.u32 %v10877, 7
      %v10879 = vsub.s32 %v10876, %v10878
      %v10880 = vrot.slane %v10866, %v10879
      %v10881 = vcombine.low %v10873, %v10880
      %10882 = vrot.lane.b32.xlu0 %v8063, 48
      %v10883 = vpop.permute.xlu0 %10882
      %10884 = vrot.lane.b32.xlu0 %v8080, 48
      %v10885 = vpop.permute.xlu0 %10884
      %10886 = vrot.lane.b32.xlu0 %v8097, 48
      %v10887 = vpop.permute.xlu0 %10886
      %10888 = vrot.lane.b32.xlu0 %v8114, 48
      %v10889 = vpop.permute.xlu0 %10888
      %10890 = vrot.lane.b32.xlu0 %v8131, 48
      %v10891 = vpop.permute.xlu0 %10890
      %10892 = vrot.lane.b32.xlu0 %v8148, 48
      %v10893 = vpop.permute.xlu0 %10892
      %10894 = vrot.lane.b32.xlu0 %v8165, 48
      %v10895 = vpop.permute.xlu0 %10894
      %10896 = vrot.lane.b32.xlu0 %v8182, 48
      %v10897 = vpop.permute.xlu0 %10896
      %10898 = vrot.lane.b32.xlu0 %v8199, 48
      %v10899 = vpop.permute.xlu0 %10898
      %10900 = vrot.lane.b32.xlu0 %v8216, 48
      %v10901 = vpop.permute.xlu0 %10900
      %10902 = vrot.lane.b32.xlu0 %v8233, 48
      %v10903 = vpop.permute.xlu0 %10902
      %10904 = vrot.lane.b32.xlu0 %v8250, 48
      %v10905 = vpop.permute.xlu0 %10904
      %10906 = vrot.lane.b32.xlu0 %v8267, 48
      %v10907 = vpop.permute.xlu0 %10906
      %10908 = vrot.lane.b32.xlu0 %v8284, 48
      %v10909 = vpop.permute.xlu0 %10908
      %10910 = vrot.lane.b32.xlu0 %v8301, 48
      %v10911 = vpop.permute.xlu0 %10910
      %10912 = vrot.lane.b32.xlu0 %v8318, 48
      %v10913 = vpop.permute.xlu0 %10912
      %10914 = vrot.lane.b32.xlu0 %v8335, 48
      %v10915 = vpop.permute.xlu0 %10914
      %10916 = vrot.lane.b32.xlu0 %v8352, 48
      %v10917 = vpop.permute.xlu0 %10916
      %10918 = vrot.lane.b32.xlu0 %v8369, 48
      %v10919 = vpop.permute.xlu0 %10918
      %10920 = vrot.lane.b32.xlu0 %v8386, 48
      %v10921 = vpop.permute.xlu0 %10920
      %10922 = vrot.lane.b32.xlu0 %v8403, 48
      %v10923 = vpop.permute.xlu0 %10922
      %10924 = vrot.lane.b32.xlu0 %v8420, 48
      %v10925 = vpop.permute.xlu0 %10924
      %10926 = vrot.lane.b32.xlu0 %v8437, 48
      %v10927 = vpop.permute.xlu0 %10926
      %10928 = vrot.lane.b32.xlu0 %v8454, 48
      %v10929 = vpop.permute.xlu0 %10928
      %10930 = vrot.lane.b32.xlu0 %v8471, 48
      %v10931 = vpop.permute.xlu0 %10930
      %10932 = vrot.lane.b32.xlu0 %v8488, 48
      %v10933 = vpop.permute.xlu0 %10932
      %10934 = vrot.lane.b32.xlu0 %v8505, 48
      %v10935 = vpop.permute.xlu0 %10934
      %10936 = vrot.lane.b32.xlu0 %v8522, 48
      %v10937 = vpop.permute.xlu0 %10936
      %10938 = vrot.lane.b32.xlu0 %v10350, 48
      %v10939 = vpop.permute.xlu0 %10938
      %10940 = vrot.lane.b32.xlu0 %v10367, 48
      %v10941 = vpop.permute.xlu0 %10940
      %10942 = vrot.lane.b32.xlu0 %v10864, 48
      %v10943 = vpop.permute.xlu0 %10942
      %10944 = vrot.lane.b32.xlu0 %v10881, 48
      %v10945 = vpop.permute.xlu0 %10944
      %vm10978 = vcmask 458112
      %10979 = vst.msk [vmem:[#allocation3] sm:$0xff] %vm10978, %v10883
      %10980 = vst.msk [vmem:[#allocation3 + $0x8] sm:$0xff] %vm10978, %v10885
      %10981 = vst.msk [vmem:[#allocation3 + $0x10] sm:$0xff] %vm10978, %v10887
      %10982 = vst.msk [vmem:[#allocation3 + $0x18] sm:$0xff] %vm10978, %v10889
      %10983 = vst.msk [vmem:[#allocation3 + $0x20] sm:$0xff] %vm10978, %v10891
      %10984 = vst.msk [vmem:[#allocation3 + $0x28] sm:$0xff] %vm10978, %v10893
      %10985 = vst.msk [vmem:[#allocation3 + $0x30] sm:$0xff] %vm10978, %v10895
      %10986 = vst.msk [vmem:[#allocation3 + $0x38] sm:$0xff] %vm10978, %v10897
      %10987 = vst.msk [vmem:[#allocation3 + $0x40] sm:$0xff] %vm10978, %v10899
      %10988 = vst.msk [vmem:[#allocation3 + $0x48] sm:$0xff] %vm10978, %v10901
      %10989 = vst.msk [vmem:[#allocation3 + $0x50] sm:$0xff] %vm10978, %v10903
      %10990 = vst.msk [vmem:[#allocation3 + $0x58] sm:$0xff] %vm10978, %v10905
      %10991 = vst.msk [vmem:[#allocation3 + $0x60] sm:$0xff] %vm10978, %v10907
      %10992 = vst.msk [vmem:[#allocation3 + $0x68] sm:$0xff] %vm10978, %v10909
      %10993 = vst.msk [vmem:[#allocation3 + $0x70] sm:$0xff] %vm10978, %v10911
      %10994 = vst.msk [vmem:[#allocation3 + $0x78] sm:$0xff] %vm10978, %v10913
      %10995 = vst.msk [vmem:[#allocation3 + $0x80] sm:$0xff] %vm10978, %v10915
      %10996 = vst.msk [vmem:[#allocation3 + $0x88] sm:$0xff] %vm10978, %v10917
      %10997 = vst.msk [vmem:[#allocation3 + $0x90] sm:$0xff] %vm10978, %v10919
      %10998 = vst.msk [vmem:[#allocation3 + $0x98] sm:$0xff] %vm10978, %v10921
      %10999 = vst.msk [vmem:[#allocation3 + $0xa0] sm:$0xff] %vm10978, %v10923
      %11000 = vst.msk [vmem:[#allocation3 + $0xa8] sm:$0xff] %vm10978, %v10925
      %11001 = vst.msk [vmem:[#allocation3 + $0xb0] sm:$0xff] %vm10978, %v10927
      %11002 = vst.msk [vmem:[#allocation3 + $0xb8] sm:$0xff] %vm10978, %v10929
      %11003 = vst.msk [vmem:[#allocation3 + $0xc0] sm:$0xff] %vm10978, %v10931
      %11004 = vst.msk [vmem:[#allocation3 + $0xc8] sm:$0xff] %vm10978, %v10933
      %11005 = vst.msk [vmem:[#allocation3 + $0xd0] sm:$0xff] %vm10978, %v10935
      %11006 = vst.msk [vmem:[#allocation3 + $0xd8] sm:$0xff] %vm10978, %v10937
      %11007 = vst.msk [vmem:[#allocation3 + $0xe0] sm:$0xff] %vm10978, %v10939
      %11008 = vst.msk [vmem:[#allocation3 + $0xe8] sm:$0xff] %vm10978, %v10941
      %11009 = vst.msk [vmem:[#allocation3 + $0xf0] sm:$0xff] %vm10978, %v10943
      %11010 = vst.msk [vmem:[#allocation3 + $0xf8] sm:$0xff] %vm10978, %v10945
      %v11011 = vrot.slane %v7952, 7
      %v11012 = vrot.slane %v11011, 2
      %v11013 = vrot.slane %v7951, 7
      %v11014 = vsel %vm1971, %v11012, %v11013
      %v11015 = vrot.slane %v11013, 2
      %v11016 = vrot.slane %v7953, 7
      %v11017 = vsel %vm1971, %v11015, %v11016
      %v11018 = vrot.slane %v11016, 2
      %v11019 = vrot.slane %v7961, 7
      %v11020 = vsel %vm1971, %v11018, %v11019
      %v11021 = vrot.slane %v11019, 2
      %v11022 = vrot.slane %v7969, 7
      %v11023 = vsel %vm1971, %v11021, %v11022
      %v11024 = vrot.slane %v11022, 2
      %v11025 = vrot.slane %v7968, 7
      %v11026 = vsel %vm1971, %v11024, %v11025
      %v11027 = vrot.slane %v11025, 2
      %v11028 = vrot.slane %v7970, 7
      %v11029 = vsel %vm1971, %v11027, %v11028
      %v11030 = vrot.slane %v11028, 2
      %v11031 = vrot.slane %v7977, 7
      %v11032 = vsel %vm1971, %v11030, %v11031
      %v11033 = vrot.slane %v11031, 2
      %v11034 = vrot.slane %v7978, 7
      %v11035 = vsel %vm1971, %v11033, %v11034
      %v11036 = vcombine.low %v11014, %v11017
      %v11037 = vcombine.low %v11020, %v11023
      %v11039 = vunpack.c.l.s4 1983009808
      %v11040 = vunpack.c.0.s8 %v11039
      %v11041 = vlaneseq
      %v11042 = vshrl.u32 %v11041, 7
      %v11043 = vsub.s32 %v11040, %v11042
      %v11044 = vrot.slane %v11036, %v11043
      %v11046 = vunpack.c.l.s4 1983009808
      %v11047 = vunpack.c.0.s8 %v11046
      %v11048 = vlaneseq
      %v11049 = vshrl.u32 %v11048, 7
      %v11050 = vsub.s32 %v11047, %v11049
      %v11051 = vrot.slane %v11037, %v11050
      %v11052 = vcombine.low %v11044, %v11051
      %v11053 = vcombine.low %v11026, %v11029
      %v11054 = vcombine.low %v11032, %v11035
      %v11056 = vunpack.c.l.s4 1983009808
      %v11057 = vunpack.c.0.s8 %v11056
      %v11058 = vlaneseq
      %v11059 = vshrl.u32 %v11058, 7
      %v11060 = vsub.s32 %v11057, %v11059
      %v11061 = vrot.slane %v11053, %v11060
      %v11063 = vunpack.c.l.s4 1983009808
      %v11064 = vunpack.c.0.s8 %v11063
      %v11065 = vlaneseq
      %v11066 = vshrl.u32 %v11065, 7
      %v11067 = vsub.s32 %v11064, %v11066
      %v11068 = vrot.slane %v11054, %v11067
      %v11069 = vcombine.low %v11061, %v11068
      %11070 = vrot.lane.b32.xlu0 %v9072, 56
      %v11071 = vpop.permute.xlu0 %11070
      %11072 = vrot.lane.b32.xlu0 %v9089, 56
      %v11073 = vpop.permute.xlu0 %11072
      %11074 = vrot.lane.b32.xlu0 %v9106, 56
      %v11075 = vpop.permute.xlu0 %11074
      %11076 = vrot.lane.b32.xlu0 %v9123, 56
      %v11077 = vpop.permute.xlu0 %11076
      %11078 = vrot.lane.b32.xlu0 %v9140, 56
      %v11079 = vpop.permute.xlu0 %11078
      %11080 = vrot.lane.b32.xlu0 %v9157, 56
      %v11081 = vpop.permute.xlu0 %11080
      %11082 = vrot.lane.b32.xlu0 %v9174, 56
      %v11083 = vpop.permute.xlu0 %11082
      %11084 = vrot.lane.b32.xlu0 %v9191, 56
      %v11085 = vpop.permute.xlu0 %11084
      %11086 = vrot.lane.b32.xlu0 %v9208, 56
      %v11087 = vpop.permute.xlu0 %11086
      %11088 = vrot.lane.b32.xlu0 %v9225, 56
      %v11089 = vpop.permute.xlu0 %11088
      %11090 = vrot.lane.b32.xlu0 %v9242, 56
      %v11091 = vpop.permute.xlu0 %11090
      %11092 = vrot.lane.b32.xlu0 %v9259, 56
      %v11093 = vpop.permute.xlu0 %11092
      %11094 = vrot.lane.b32.xlu0 %v9276, 56
      %v11095 = vpop.permute.xlu0 %11094
      %11096 = vrot.lane.b32.xlu0 %v9293, 56
      %v11097 = vpop.permute.xlu0 %11096
      %11098 = vrot.lane.b32.xlu0 %v9310, 56
      %v11099 = vpop.permute.xlu0 %11098
      %11100 = vrot.lane.b32.xlu0 %v9327, 56
      %v11101 = vpop.permute.xlu0 %11100
      %11102 = vrot.lane.b32.xlu0 %v9344, 56
      %v11103 = vpop.permute.xlu0 %11102
      %11104 = vrot.lane.b32.xlu0 %v9361, 56
      %v11105 = vpop.permute.xlu0 %11104
      %11106 = vrot.lane.b32.xlu0 %v9378, 56
      %v11107 = vpop.permute.xlu0 %11106
      %11108 = vrot.lane.b32.xlu0 %v9395, 56
      %v11109 = vpop.permute.xlu0 %11108
      %11110 = vrot.lane.b32.xlu0 %v9412, 56
      %v11111 = vpop.permute.xlu0 %11110
      %11112 = vrot.lane.b32.xlu0 %v9429, 56
      %v11113 = vpop.permute.xlu0 %11112
      %11114 = vrot.lane.b32.xlu0 %v9446, 56
      %v11115 = vpop.permute.xlu0 %11114
      %11116 = vrot.lane.b32.xlu0 %v9463, 56
      %v11117 = vpop.permute.xlu0 %11116
      %11118 = vrot.lane.b32.xlu0 %v9480, 56
      %v11119 = vpop.permute.xlu0 %11118
      %11120 = vrot.lane.b32.xlu0 %v9497, 56
      %v11121 = vpop.permute.xlu0 %11120
      %11122 = vrot.lane.b32.xlu0 %v9514, 56
      %v11123 = vpop.permute.xlu0 %11122
      %11124 = vrot.lane.b32.xlu0 %v9531, 56
      %v11125 = vpop.permute.xlu0 %11124
      %11126 = vrot.lane.b32.xlu0 %v10538, 56
      %v11127 = vpop.permute.xlu0 %11126
      %11128 = vrot.lane.b32.xlu0 %v10555, 56
      %v11129 = vpop.permute.xlu0 %11128
      %11130 = vrot.lane.b32.xlu0 %v11052, 56
      %v11131 = vpop.permute.xlu0 %11130
      %11132 = vrot.lane.b32.xlu0 %v11069, 56
      %v11133 = vpop.permute.xlu0 %11132
      %vm11166 = vcmask 523712
      %11167 = vst.msk [vmem:[#allocation3] sm:$0xff] %vm11166, %v11071
      %11168 = vst.msk [vmem:[#allocation3 + $0x8] sm:$0xff] %vm11166, %v11073
      %11169 = vst.msk [vmem:[#allocation3 + $0x10] sm:$0xff] %vm11166, %v11075
      %11170 = vst.msk [vmem:[#allocation3 + $0x18] sm:$0xff] %vm11166, %v11077
      %11171 = vst.msk [vmem:[#allocation3 + $0x20] sm:$0xff] %vm11166, %v11079
      %11172 = vst.msk [vmem:[#allocation3 + $0x28] sm:$0xff] %vm11166, %v11081
      %11173 = vst.msk [vmem:[#allocation3 + $0x30] sm:$0xff] %vm11166, %v11083
      %11174 = vst.msk [vmem:[#allocation3 + $0x38] sm:$0xff] %vm11166, %v11085
      %11175 = vst.msk [vmem:[#allocation3 + $0x40] sm:$0xff] %vm11166, %v11087
      %11176 = vst.msk [vmem:[#allocation3 + $0x48] sm:$0xff] %vm11166, %v11089
      %11177 = vst.msk [vmem:[#allocation3 + $0x50] sm:$0xff] %vm11166, %v11091
      %11178 = vst.msk [vmem:[#allocation3 + $0x58] sm:$0xff] %vm11166, %v11093
      %11179 = vst.msk [vmem:[#allocation3 + $0x60] sm:$0xff] %vm11166, %v11095
      %11180 = vst.msk [vmem:[#allocation3 + $0x68] sm:$0xff] %vm11166, %v11097
      %11181 = vst.msk [vmem:[#allocation3 + $0x70] sm:$0xff] %vm11166, %v11099
      %11182 = vst.msk [vmem:[#allocation3 + $0x78] sm:$0xff] %vm11166, %v11101
      %11183 = vst.msk [vmem:[#allocation3 + $0x80] sm:$0xff] %vm11166, %v11103
      %11184 = vst.msk [vmem:[#allocation3 + $0x88] sm:$0xff] %vm11166, %v11105
      %11185 = vst.msk [vmem:[#allocation3 + $0x90] sm:$0xff] %vm11166, %v11107
      %11186 = vst.msk [vmem:[#allocation3 + $0x98] sm:$0xff] %vm11166, %v11109
      %11187 = vst.msk [vmem:[#allocation3 + $0xa0] sm:$0xff] %vm11166, %v11111
      %11188 = vst.msk [vmem:[#allocation3 + $0xa8] sm:$0xff] %vm11166, %v11113
      %11189 = vst.msk [vmem:[#allocation3 + $0xb0] sm:$0xff] %vm11166, %v11115
      %11190 = vst.msk [vmem:[#allocation3 + $0xb8] sm:$0xff] %vm11166, %v11117
      %11191 = vst.msk [vmem:[#allocation3 + $0xc0] sm:$0xff] %vm11166, %v11119
      %11192 = vst.msk [vmem:[#allocation3 + $0xc8] sm:$0xff] %vm11166, %v11121
      %11193 = vst.msk [vmem:[#allocation3 + $0xd0] sm:$0xff] %vm11166, %v11123
      %11194 = vst.msk [vmem:[#allocation3 + $0xd8] sm:$0xff] %vm11166, %v11125
      %11195 = vst.msk [vmem:[#allocation3 + $0xe0] sm:$0xff] %vm11166, %v11127
      %11196 = vst.msk [vmem:[#allocation3 + $0xe8] sm:$0xff] %vm11166, %v11129
      %11197 = vst.msk [vmem:[#allocation3 + $0xf0] sm:$0xff] %vm11166, %v11131
      %11198 = vst.msk [vmem:[#allocation3 + $0xf8] sm:$0xff] %vm11166, %v11133
      %v11199 = vcombine.low %v7951, %v7953
      %v11200 = vcombine.low %v7961, %v7969
      %v11202 = vunpack.c.l.s4 1983009808
      %v11203 = vunpack.c.0.s8 %v11202
      %v11204 = vlaneseq
      %v11205 = vshrl.u32 %v11204, 7
      %v11206 = vsub.s32 %v11203, %v11205
      %v11207 = vrot.slane %v11199, %v11206
      %v11209 = vunpack.c.l.s4 1983009808
      %v11210 = vunpack.c.0.s8 %v11209
      %v11211 = vlaneseq
      %v11212 = vshrl.u32 %v11211, 7
      %v11213 = vsub.s32 %v11210, %v11212
      %v11214 = vrot.slane %v11200, %v11213
      %v11215 = vcombine.low %v11207, %v11214
      %v11216 = vcombine.low %v7968, %v7970
      %v11217 = vcombine.low %v7977, %v7978
      %v11219 = vunpack.c.l.s4 1983009808
      %v11220 = vunpack.c.0.s8 %v11219
      %v11221 = vlaneseq
      %v11222 = vshrl.u32 %v11221, 7
      %v11223 = vsub.s32 %v11220, %v11222
      %v11224 = vrot.slane %v11216, %v11223
      %v11226 = vunpack.c.l.s4 1983009808
      %v11227 = vunpack.c.0.s8 %v11226
      %v11228 = vlaneseq
      %v11229 = vshrl.u32 %v11228, 7
      %v11230 = vsub.s32 %v11227, %v11229
      %v11231 = vrot.slane %v11217, %v11230
      %v11232 = vcombine.low %v11224, %v11231
      %11233 = vrot.lane.b32.xlu0 %v9745, 64
      %v11234 = vpop.permute.xlu0 %11233
      %11235 = vrot.lane.b32.xlu0 %v9762, 64
      %v11236 = vpop.permute.xlu0 %11235
      %11237 = vrot.lane.b32.xlu0 %v9779, 64
      %v11238 = vpop.permute.xlu0 %11237
      %11239 = vrot.lane.b32.xlu0 %v9796, 64
      %v11240 = vpop.permute.xlu0 %11239
      %11241 = vrot.lane.b32.xlu0 %v9813, 64
      %v11242 = vpop.permute.xlu0 %11241
      %11243 = vrot.lane.b32.xlu0 %v9830, 64
      %v11244 = vpop.permute.xlu0 %11243
      %11245 = vrot.lane.b32.xlu0 %v9847, 64
      %v11246 = vpop.permute.xlu0 %11245
      %11247 = vrot.lane.b32.xlu0 %v9864, 64
      %v11248 = vpop.permute.xlu0 %11247
      %11249 = vrot.lane.b32.xlu0 %v9881, 64
      %v11250 = vpop.permute.xlu0 %11249
      %11251 = vrot.lane.b32.xlu0 %v9898, 64
      %v11252 = vpop.permute.xlu0 %11251
      %11253 = vrot.lane.b32.xlu0 %v9915, 64
      %v11254 = vpop.permute.xlu0 %11253
      %11255 = vrot.lane.b32.xlu0 %v9932, 64
      %v11256 = vpop.permute.xlu0 %11255
      %11257 = vrot.lane.b32.xlu0 %v9949, 64
      %v11258 = vpop.permute.xlu0 %11257
      %11259 = vrot.lane.b32.xlu0 %v9966, 64
      %v11260 = vpop.permute.xlu0 %11259
      %11261 = vrot.lane.b32.xlu0 %v9983, 64
      %v11262 = vpop.permute.xlu0 %11261
      %11263 = vrot.lane.b32.xlu0 %v10000, 64
      %v11264 = vpop.permute.xlu0 %11263
      %11265 = vrot.lane.b32.xlu0 %v10017, 64
      %v11266 = vpop.permute.xlu0 %11265
      %11267 = vrot.lane.b32.xlu0 %v10034, 64
      %v11268 = vpop.permute.xlu0 %11267
      %11269 = vrot.lane.b32.xlu0 %v10051, 64
      %v11270 = vpop.permute.xlu0 %11269
      %11271 = vrot.lane.b32.xlu0 %v10068, 64
      %v11272 = vpop.permute.xlu0 %11271
      %11273 = vrot.lane.b32.xlu0 %v10085, 64
      %v11274 = vpop.permute.xlu0 %11273
      %11275 = vrot.lane.b32.xlu0 %v10102, 64
      %v11276 = vpop.permute.xlu0 %11275
      %11277 = vrot.lane.b32.xlu0 %v10119, 64
      %v11278 = vpop.permute.xlu0 %11277
      %11279 = vrot.lane.b32.xlu0 %v10136, 64
      %v11280 = vpop.permute.xlu0 %11279
      %11281 = vrot.lane.b32.xlu0 %v10153, 64
      %v11282 = vpop.permute.xlu0 %11281
      %11283 = vrot.lane.b32.xlu0 %v10170, 64
      %v11284 = vpop.permute.xlu0 %11283
      %11285 = vrot.lane.b32.xlu0 %v10187, 64
      %v11286 = vpop.permute.xlu0 %11285
      %11287 = vrot.lane.b32.xlu0 %v10204, 64
      %v11288 = vpop.permute.xlu0 %11287
      %11289 = vrot.lane.b32.xlu0 %v10701, 64
      %v11290 = vpop.permute.xlu0 %11289
      %11291 = vrot.lane.b32.xlu0 %v10718, 64
      %v11292 = vpop.permute.xlu0 %11291
      %11293 = vrot.lane.b32.xlu0 %v11215, 64
      %v11294 = vpop.permute.xlu0 %11293
      %11295 = vrot.lane.b32.xlu0 %v11232, 64
      %v11296 = vpop.permute.xlu0 %11295
      %vm11329 = vcmask 589312
      %11330 = vst.msk [vmem:[#allocation3] sm:$0xff] %vm11329, %v11234
      %11331 = vst.msk [vmem:[#allocation3 + $0x8] sm:$0xff] %vm11329, %v11236
      %11332 = vst.msk [vmem:[#allocation3 + $0x10] sm:$0xff] %vm11329, %v11238
      %11333 = vst.msk [vmem:[#allocation3 + $0x18] sm:$0xff] %vm11329, %v11240
      %11334 = vst.msk [vmem:[#allocation3 + $0x20] sm:$0xff] %vm11329, %v11242
      %11335 = vst.msk [vmem:[#allocation3 + $0x28] sm:$0xff] %vm11329, %v11244
      %11336 = vst.msk [vmem:[#allocation3 + $0x30] sm:$0xff] %vm11329, %v11246
      %11337 = vst.msk [vmem:[#allocation3 + $0x38] sm:$0xff] %vm11329, %v11248
      %11338 = vst.msk [vmem:[#allocation3 + $0x40] sm:$0xff] %vm11329, %v11250
      %11339 = vst.msk [vmem:[#allocation3 + $0x48] sm:$0xff] %vm11329, %v11252
      %11340 = vst.msk [vmem:[#allocation3 + $0x50] sm:$0xff] %vm11329, %v11254
      %11341 = vst.msk [vmem:[#allocation3 + $0x58] sm:$0xff] %vm11329, %v11256
      %11342 = vst.msk [vmem:[#allocation3 + $0x60] sm:$0xff] %vm11329, %v11258
      %11343 = vst.msk [vmem:[#allocation3 + $0x68] sm:$0xff] %vm11329, %v11260
      %11344 = vst.msk [vmem:[#allocation3 + $0x70] sm:$0xff] %vm11329, %v11262
      %11345 = vst.msk [vmem:[#allocation3 + $0x78] sm:$0xff] %vm11329, %v11264
      %11346 = vst.msk [vmem:[#allocation3 + $0x80] sm:$0xff] %vm11329, %v11266
      %11347 = vst.msk [vmem:[#allocation3 + $0x88] sm:$0xff] %vm11329, %v11268
      %11348 = vst.msk [vmem:[#allocation3 + $0x90] sm:$0xff] %vm11329, %v11270
      %11349 = vst.msk [vmem:[#allocation3 + $0x98] sm:$0xff] %vm11329, %v11272
      %11350 = vst.msk [vmem:[#allocation3 + $0xa0] sm:$0xff] %vm11329, %v11274
      %11351 = vst.msk [vmem:[#allocation3 + $0xa8] sm:$0xff] %vm11329, %v11276
      %11352 = vst.msk [vmem:[#allocation3 + $0xb0] sm:$0xff] %vm11329, %v11278
      %11353 = vst.msk [vmem:[#allocation3 + $0xb8] sm:$0xff] %vm11329, %v11280
      %11354 = vst.msk [vmem:[#allocation3 + $0xc0] sm:$0xff] %vm11329, %v11282
      %11355 = vst.msk [vmem:[#allocation3 + $0xc8] sm:$0xff] %vm11329, %v11284
      %11356 = vst.msk [vmem:[#allocation3 + $0xd0] sm:$0xff] %vm11329, %v11286
      %11357 = vst.msk [vmem:[#allocation3 + $0xd8] sm:$0xff] %vm11329, %v11288
      %11358 = vst.msk [vmem:[#allocation3 + $0xe0] sm:$0xff] %vm11329, %v11290
      %11359 = vst.msk [vmem:[#allocation3 + $0xe8] sm:$0xff] %vm11329, %v11292
      %11360 = vst.msk [vmem:[#allocation3 + $0xf0] sm:$0xff] %vm11329, %v11294
      %11361 = vst.msk [vmem:[#allocation3 + $0xf8] sm:$0xff] %vm11329, %v11296
      %v11362 = vld [vmem:[#allocation3] sm:$0xff]
      %v11363 = vld [vmem:[#allocation3 + $0x8] sm:$0xff]
      %v11364 = vld [vmem:[#allocation3 + $0x10] sm:$0xff]
      %v11365 = vld [vmem:[#allocation3 + $0x18] sm:$0xff]
      %v11366 = vld [vmem:[#allocation3 + $0x20] sm:$0xff]
      %v11367 = vld [vmem:[#allocation3 + $0x28] sm:$0xff]
      %v11368 = vld [vmem:[#allocation3 + $0x30] sm:$0xff]
      %v11369 = vld [vmem:[#allocation3 + $0x38] sm:$0xff]
      %v11370 = vld [vmem:[#allocation3 + $0x40] sm:$0xff]
      %v11371 = vld [vmem:[#allocation3 + $0x48] sm:$0xff]
      %v11372 = vld [vmem:[#allocation3 + $0x50] sm:$0xff]
      %v11373 = vld [vmem:[#allocation3 + $0x58] sm:$0xff]
      %v11374 = vld [vmem:[#allocation3 + $0x60] sm:$0xff]
      %v11375 = vld [vmem:[#allocation3 + $0x68] sm:$0xff]
      %v11376 = vld [vmem:[#allocation3 + $0x70] sm:$0xff]
      %v11377 = vld [vmem:[#allocation3 + $0x78] sm:$0xff]
      %v11378 = vld [vmem:[#allocation3 + $0x80] sm:$0xff]
      %v11379 = vld [vmem:[#allocation3 + $0x88] sm:$0xff]
      %v11380 = vld [vmem:[#allocation3 + $0x90] sm:$0xff]
      %v11381 = vld [vmem:[#allocation3 + $0x98] sm:$0xff]
      %v11382 = vld [vmem:[#allocation3 + $0xa0] sm:$0xff]
      %v11383 = vld [vmem:[#allocation3 + $0xa8] sm:$0xff]
      %v11384 = vld [vmem:[#allocation3 + $0xb0] sm:$0xff]
      %v11385 = vld [vmem:[#allocation3 + $0xb8] sm:$0xff]
      %v11386 = vld [vmem:[#allocation3 + $0xc0] sm:$0xff]
      %v11387 = vld [vmem:[#allocation3 + $0xc8] sm:$0xff]
      %v11388 = vld [vmem:[#allocation3 + $0xd0] sm:$0xff]
      %v11389 = vld [vmem:[#allocation3 + $0xd8] sm:$0xff]
      %v11390 = vld [vmem:[#allocation3 + $0xe0] sm:$0xff]
      %v11391 = vld [vmem:[#allocation3 + $0xe8] sm:$0xff]
      %v11392 = vld [vmem:[#allocation3 + $0xf0] sm:$0xff]
      %v11393 = vld [vmem:[#allocation3 + $0xf8] sm:$0xff]
      %v11394 = vld [vmem:[%s4] sm:$0xff]
      %v11395 = vld [vmem:[%s4 + $0x8] sm:$0xff]
      %v11396 = vld [vmem:[%s4 + $0x10] sm:$0xff]
      %v11397 = vld [vmem:[%s4 + $0x18] sm:$0xff]
      %v11398 = vld [vmem:[%s4 + $0x20] sm:$0xff]
      %v11399 = vld [vmem:[%s4 + $0x28] sm:$0xff]
      %v11400 = vld [vmem:[%s4 + $0x30] sm:$0xff]
      %v11401 = vld [vmem:[%s4 + $0x38] sm:$0xff]
      %v11402 = vld [vmem:[%s4 + $0x40] sm:$0xff]
      %v11403 = vld [vmem:[%s5] sm:$0x1]
      %v11405 = vlaneseq
      %v11406 = vshrl.u32 %v11405, 7
      %v11407 = vsub.s32 0, %v11406
      %v11408 = vrot.slane %v11403, %v11407
      %vm11410 = vcmask 588800
      %v11412 = vsel %vm11410, %v11362, 0
      %v11415 = vsel %vm11410, %v11363, 0
      %v11418 = vsel %vm11410, %v11364, 0
      %v11421 = vsel %vm11410, %v11365, 0
      %v11424 = vsel %vm11410, %v11366, 0
      %v11427 = vsel %vm11410, %v11367, 0
      %v11430 = vsel %vm11410, %v11368, 0
      %v11433 = vsel %vm11410, %v11369, 0
      %v11436 = vsel %vm11410, %v11370, 0
      %v11439 = vsel %vm11410, %v11371, 0
      %v11442 = vsel %vm11410, %v11372, 0
      %v11445 = vsel %vm11410, %v11373, 0
      %v11448 = vsel %vm11410, %v11374, 0
      %v11451 = vsel %vm11410, %v11375, 0
      %v11454 = vsel %vm11410, %v11376, 0
      %v11457 = vsel %vm11410, %v11377, 0
      %v11460 = vsel %vm11410, %v11378, 0
      %v11463 = vsel %vm11410, %v11379, 0
      %v11466 = vsel %vm11410, %v11380, 0
      %v11469 = vsel %vm11410, %v11381, 0
      %v11472 = vsel %vm11410, %v11382, 0
      %v11475 = vsel %vm11410, %v11383, 0
      %v11478 = vsel %vm11410, %v11384, 0
      %v11481 = vsel %vm11410, %v11385, 0
      %v11484 = vsel %vm11410, %v11386, 0
      %v11487 = vsel %vm11410, %v11387, 0
      %v11490 = vsel %vm11410, %v11388, 0
      %v11493 = vsel %vm11410, %v11389, 0
      %v11496 = vsel %vm11410, %v11390, 0
      %v11499 = vsel %vm11410, %v11391, 0
      %v11502 = vsel %vm11410, %v11392, 0
      %v11505 = vsel %vm11410, %v11393, 0
      %11507 = vmatprep.subr.mxu0 0.0
      %11508 = vmatpush1.msra.mxu0 %v11394
      %11509 = vmatprep.subr.mxu0 0.0
      %11510 = vmatpush1.msra.mxu0 %v11395
      %11511 = vmatprep.subr.mxu0 0.0
      %11512 = vmatpush1.msra.mxu0 %v11396
      %11513 = vmatprep.subr.mxu0 0.0
      %11514 = vmatpush1.msra.mxu0 %v11397
      %11515 = vmatprep.subr.mxu0 0.0
      %11516 = vmatpush1.msra.mxu0 %v11398
      %11517 = vmatprep.subr.mxu0 0.0
      %11518 = vmatpush1.msra.mxu0 %v11399
      %11519 = vmatprep.subr.mxu0 0.0
      %11520 = vmatpush1.msra.mxu0 %v11400
      %11521 = vmatprep.subr.mxu0 0.0
      %11522 = vmatpush1.msra.mxu0 %v11401
      %11523 = vmatprep.subr.mxu0 0.0
      %11524 = vmatpush1.msra.mxu0 %v11402
      %11525 = vmatprep.subr.mxu0 0.0
      %11526 = vmatpush1.msra.mxu0 0.0
      %11527 = vmatprep.subr.mxu0 0.0
      %11528 = vmatpush1.msra.mxu0 0.0
      %11529 = vmatprep.subr.mxu0 0.0
      %11530 = vmatpush1.msra.mxu0 0.0
      %11531 = vmatprep.subr.mxu0 0.0
      %11532 = vmatpush1.msra.mxu0 0.0
      %11533 = vmatprep.subr.mxu0 0.0
      %11534 = vmatpush1.msra.mxu0 0.0
      %11535 = vmatprep.subr.mxu0 0.0
      %11536 = vmatpush1.msra.mxu0 0.0
      %11537 = vmatprep.subr.mxu0 0.0
      %11538 = vmatpush1.msra.mxu0 0.0
      %11539 = vmatprep.subr.mxu0 0.0
      %11540 = vmatpush1.msra.mxu0 0.0
      %11541 = vmatprep.subr.mxu0 0.0
      %11542 = vmatpush1.msra.mxu0 0.0
      %11543 = vmatprep.subr.mxu0 0.0
      %11544 = vmatpush1.msra.mxu0 0.0
      %11545 = vmatprep.subr.mxu0 0.0
      %11546 = vmatpush1.msra.mxu0 0.0
      %11547 = vmatprep.subr.mxu0 0.0
      %11548 = vmatpush1.msra.mxu0 0.0
      %11549 = vmatprep.subr.mxu0 0.0
      %11550 = vmatpush1.msra.mxu0 0.0
      %11551 = vmatprep.subr.mxu0 0.0
      %11552 = vmatpush1.msra.mxu0 0.0
      %11553 = vmatprep.subr.mxu0 0.0
      %11554 = vmatpush1.msra.mxu0 0.0
      %11555 = vmatprep.subr.mxu0 0.0
      %11556 = vmatpush1.msra.mxu0 0.0
      %11557 = vmatprep.subr.mxu0 0.0
      %11558 = vmatpush1.msra.mxu0 0.0
      %11559 = vmatprep.subr.mxu0 0.0
      %11560 = vmatpush1.msra.mxu0 0.0
      %11561 = vmatprep.subr.mxu0 0.0
      %11562 = vmatpush1.msra.mxu0 0.0
      %11563 = vmatprep.subr.mxu0 0.0
      %11564 = vmatpush1.msra.mxu0 0.0
      %11565 = vmatprep.subr.mxu0 0.0
      %11566 = vmatpush1.msra.mxu0 0.0
      %11567 = vmatprep.subr.mxu0 0.0
      %11568 = vmatpush1.msra.mxu0 0.0
      %11569 = vmatprep.subr.mxu0 0.0
      %11570 = vmatpush1.msra.mxu0 0.0
      %11571 = vmatprep.mubr.f32.mxu0 0.0
      %11572 = vmatmul.mubr.f32.gmra.mrb[0].mxu0 %v11412
      %v11573 = vpop.f32.mrb[0].mxu0
      %v11574 = vadd.f32 %v11408, %v11573
      %v11575 = vpop.f32.mrb[0].mxu0
      %11576 = vmatprep.mubr.f32.mxu0 0.0
      %11577 = vmatmul.mubr.f32.gmra.mrb[0].mxu0 %v11415
      %v11578 = vpop.f32.mrb[0].mxu0
      %v11579 = vadd.f32 %v11408, %v11578
      %v11580 = vpop.f32.mrb[0].mxu0
      %11581 = vmatprep.mubr.f32.mxu0 0.0
      %11582 = vmatmul.mubr.f32.gmra.mrb[0].mxu0 %v11418
      %v11583 = vpop.f32.mrb[0].mxu0
      %v11584 = vadd.f32 %v11408, %v11583
      %v11585 = vpop.f32.mrb[0].mxu0
      %11586 = vmatprep.mubr.f32.mxu0 0.0
      %11587 = vmatmul.mubr.f32.gmra.mrb[0].mxu0 %v11421
      %v11588 = vpop.f32.mrb[0].mxu0
      %v11589 = vadd.f32 %v11408, %v11588
      %v11590 = vpop.f32.mrb[0].mxu0
      %11591 = vmatprep.mubr.f32.mxu0 0.0
      %11592 = vmatmul.mubr.f32.gmra.mrb[0].mxu0 %v11424
      %v11593 = vpop.f32.mrb[0].mxu0
      %v11594 = vadd.f32 %v11408, %v11593
      %v11595 = vpop.f32.mrb[0].mxu0
      %11596 = vmatprep.mubr.f32.mxu0 0.0
      %11597 = vmatmul.mubr.f32.gmra.mrb[0].mxu0 %v11427
      %v11598 = vpop.f32.mrb[0].mxu0
      %v11599 = vadd.f32 %v11408, %v11598
      %v11600 = vpop.f32.mrb[0].mxu0
      %11601 = vmatprep.mubr.f32.mxu0 0.0
      %11602 = vmatmul.mubr.f32.gmra.mrb[0].mxu0 %v11430
      %v11603 = vpop.f32.mrb[0].mxu0
      %v11604 = vadd.f32 %v11408, %v11603
      %v11605 = vpop.f32.mrb[0].mxu0
      %11606 = vmatprep.mubr.f32.mxu0 0.0
      %11607 = vmatmul.mubr.f32.gmra.mrb[0].mxu0 %v11433
      %v11608 = vpop.f32.mrb[0].mxu0
      %v11609 = vadd.f32 %v11408, %v11608
      %v11610 = vpop.f32.mrb[0].mxu0
      %11611 = vmatprep.mubr.f32.mxu0 0.0
      %11612 = vmatmul.mubr.f32.gmra.mrb[0].mxu0 %v11436
      %v11613 = vpop.f32.mrb[0].mxu0
      %v11614 = vadd.f32 %v11408, %v11613
      %v11615 = vpop.f32.mrb[0].mxu0
      %11616 = vmatprep.mubr.f32.mxu0 0.0
      %11617 = vmatmul.mubr.f32.gmra.mrb[0].mxu0 %v11439
      %v11618 = vpop.f32.mrb[0].mxu0
      %v11619 = vadd.f32 %v11408, %v11618
      %v11620 = vpop.f32.mrb[0].mxu0
      %11621 = vmatprep.mubr.f32.mxu0 0.0
      %11622 = vmatmul.mubr.f32.gmra.mrb[0].mxu0 %v11442
      %v11623 = vpop.f32.mrb[0].mxu0
      %v11624 = vadd.f32 %v11408, %v11623
      %v11625 = vpop.f32.mrb[0].mxu0
      %11626 = vmatprep.mubr.f32.mxu0 0.0
      %11627 = vmatmul.mubr.f32.gmra.mrb[0].mxu0 %v11445
      %v11628 = vpop.f32.mrb[0].mxu0
      %v11629 = vadd.f32 %v11408, %v11628
      %v11630 = vpop.f32.mrb[0].mxu0
      %11631 = vmatprep.mubr.f32.mxu0 0.0
      %11632 = vmatmul.mubr.f32.gmra.mrb[0].mxu0 %v11448
      %v11633 = vpop.f32.mrb[0].mxu0
      %v11634 = vadd.f32 %v11408, %v11633
      %v11635 = vpop.f32.mrb[0].mxu0
      %11636 = vmatprep.mubr.f32.mxu0 0.0
      %11637 = vmatmul.mubr.f32.gmra.mrb[0].mxu0 %v11451
      %v11638 = vpop.f32.mrb[0].mxu0
      %v11639 = vadd.f32 %v11408, %v11638
      %v11640 = vpop.f32.mrb[0].mxu0
      %11641 = vmatprep.mubr.f32.mxu0 0.0
      %11642 = vmatmul.mubr.f32.gmra.mrb[0].mxu0 %v11454
      %v11643 = vpop.f32.mrb[0].mxu0
      %v11644 = vadd.f32 %v11408, %v11643
      %v11645 = vpop.f32.mrb[0].mxu0
      %11646 = vmatprep.mubr.f32.mxu0 0.0
      %11647 = vmatmul.mubr.f32.gmra.mrb[0].mxu0 %v11457
      %v11648 = vpop.f32.mrb[0].mxu0
      %v11649 = vadd.f32 %v11408, %v11648
      %v11650 = vpop.f32.mrb[0].mxu0
      %11651 = vmatprep.mubr.f32.mxu0 0.0
      %11652 = vmatmul.mubr.f32.gmra.mrb[0].mxu0 %v11460
      %v11653 = vpop.f32.mrb[0].mxu0
      %v11654 = vadd.f32 %v11408, %v11653
      %v11655 = vpop.f32.mrb[0].mxu0
      %11656 = vmatprep.mubr.f32.mxu0 0.0
      %11657 = vmatmul.mubr.f32.gmra.mrb[0].mxu0 %v11463
      %v11658 = vpop.f32.mrb[0].mxu0
      %v11659 = vadd.f32 %v11408, %v11658
      %v11660 = vpop.f32.mrb[0].mxu0
      %11661 = vmatprep.mubr.f32.mxu0 0.0
      %11662 = vmatmul.mubr.f32.gmra.mrb[0].mxu0 %v11466
      %v11663 = vpop.f32.mrb[0].mxu0
      %v11664 = vadd.f32 %v11408, %v11663
      %v11665 = vpop.f32.mrb[0].mxu0
      %11666 = vmatprep.mubr.f32.mxu0 0.0
      %11667 = vmatmul.mubr.f32.gmra.mrb[0].mxu0 %v11469
      %v11668 = vpop.f32.mrb[0].mxu0
      %v11669 = vadd.f32 %v11408, %v11668
      %v11670 = vpop.f32.mrb[0].mxu0
      %11671 = vmatprep.mubr.f32.mxu0 0.0
      %11672 = vmatmul.mubr.f32.gmra.mrb[0].mxu0 %v11472
      %v11673 = vpop.f32.mrb[0].mxu0
      %v11674 = vadd.f32 %v11408, %v11673
      %v11675 = vpop.f32.mrb[0].mxu0
      %11676 = vmatprep.mubr.f32.mxu0 0.0
      %11677 = vmatmul.mubr.f32.gmra.mrb[0].mxu0 %v11475
      %v11678 = vpop.f32.mrb[0].mxu0
      %v11679 = vadd.f32 %v11408, %v11678
      %v11680 = vpop.f32.mrb[0].mxu0
      %11681 = vmatprep.mubr.f32.mxu0 0.0
      %11682 = vmatmul.mubr.f32.gmra.mrb[0].mxu0 %v11478
      %v11683 = vpop.f32.mrb[0].mxu0
      %v11684 = vadd.f32 %v11408, %v11683
      %v11685 = vpop.f32.mrb[0].mxu0
      %11686 = vmatprep.mubr.f32.mxu0 0.0
      %11687 = vmatmul.mubr.f32.gmra.mrb[0].mxu0 %v11481
      %v11688 = vpop.f32.mrb[0].mxu0
      %v11689 = vadd.f32 %v11408, %v11688
      %v11690 = vpop.f32.mrb[0].mxu0
      %11691 = vmatprep.mubr.f32.mxu0 0.0
      %11692 = vmatmul.mubr.f32.gmra.mrb[0].mxu0 %v11484
      %v11693 = vpop.f32.mrb[0].mxu0
      %v11694 = vadd.f32 %v11408, %v11693
      %v11695 = vpop.f32.mrb[0].mxu0
      %11696 = vmatprep.mubr.f32.mxu0 0.0
      %11697 = vmatmul.mubr.f32.gmra.mrb[0].mxu0 %v11487
      %v11698 = vpop.f32.mrb[0].mxu0
      %v11699 = vadd.f32 %v11408, %v11698
      %v11700 = vpop.f32.mrb[0].mxu0
      %11701 = vmatprep.mubr.f32.mxu0 0.0
      %11702 = vmatmul.mubr.f32.gmra.mrb[0].mxu0 %v11490
      %v11703 = vpop.f32.mrb[0].mxu0
      %v11704 = vadd.f32 %v11408, %v11703
      %v11705 = vpop.f32.mrb[0].mxu0
      %11706 = vmatprep.mubr.f32.mxu0 0.0
      %11707 = vmatmul.mubr.f32.gmra.mrb[0].mxu0 %v11493
      %v11708 = vpop.f32.mrb[0].mxu0
      %v11709 = vadd.f32 %v11408, %v11708
      %v11710 = vpop.f32.mrb[0].mxu0
      %11711 = vmatprep.mubr.f32.mxu0 0.0
      %11712 = vmatmul.mubr.f32.gmra.mrb[0].mxu0 %v11496
      %v11713 = vpop.f32.mrb[0].mxu0
      %v11714 = vadd.f32 %v11408, %v11713
      %v11715 = vpop.f32.mrb[0].mxu0
      %11716 = vmatprep.mubr.f32.mxu0 0.0
      %11717 = vmatmul.mubr.f32.gmra.mrb[0].mxu0 %v11499
      %v11718 = vpop.f32.mrb[0].mxu0
      %v11719 = vadd.f32 %v11408, %v11718
      %v11720 = vpop.f32.mrb[0].mxu0
      %11721 = vmatprep.mubr.f32.mxu0 0.0
      %11722 = vmatmul.mubr.f32.gmra.mrb[0].mxu0 %v11502
      %v11723 = vpop.f32.mrb[0].mxu0
      %v11724 = vadd.f32 %v11408, %v11723
      %v11725 = vpop.f32.mrb[0].mxu0
      %11726 = vmatprep.mubr.f32.mxu0 0.0
      %11727 = vmatmul.mubr.f32.gmra.mrb[0].mxu0 %v11505
      %v11728 = vpop.f32.mrb[0].mxu0
      %v11729 = vadd.f32 %v11408, %v11728
      %v11730 = vpop.f32.mrb[0].mxu0
      %11731 = vdwg.mxu0
      %v11732 = vmax.f32 %v11574, 0.0
      %v11733 = vmax.f32 %v11579, 0.0
      %v11734 = vmax.f32 %v11584, 0.0
      %v11735 = vmax.f32 %v11589, 0.0
      %v11736 = vmax.f32 %v11594, 0.0
      %v11737 = vmax.f32 %v11599, 0.0
      %v11738 = vmax.f32 %v11604, 0.0
      %v11739 = vmax.f32 %v11609, 0.0
      %v11740 = vmax.f32 %v11614, 0.0
      %v11741 = vmax.f32 %v11619, 0.0
      %v11742 = vmax.f32 %v11624, 0.0
      %v11743 = vmax.f32 %v11629, 0.0
      %v11744 = vmax.f32 %v11634, 0.0
      %v11745 = vmax.f32 %v11639, 0.0
      %v11746 = vmax.f32 %v11644, 0.0
      %v11747 = vmax.f32 %v11649, 0.0
      %v11748 = vmax.f32 %v11654, 0.0
      %v11749 = vmax.f32 %v11659, 0.0
      %v11750 = vmax.f32 %v11664, 0.0
      %v11751 = vmax.f32 %v11669, 0.0
      %v11752 = vmax.f32 %v11674, 0.0
      %v11753 = vmax.f32 %v11679, 0.0
      %v11754 = vmax.f32 %v11684, 0.0
      %v11755 = vmax.f32 %v11689, 0.0
      %v11756 = vmax.f32 %v11694, 0.0
      %v11757 = vmax.f32 %v11699, 0.0
      %v11758 = vmax.f32 %v11704, 0.0
      %v11759 = vmax.f32 %v11709, 0.0
      %v11760 = vmax.f32 %v11714, 0.0
      %v11761 = vmax.f32 %v11719, 0.0
      %v11762 = vmax.f32 %v11724, 0.0
      %v11763 = vmax.f32 %v11729, 0.0
      %11764 = vst.msk [vmem:[%s316] sm:$0xff] %vm8555, %v11732
      %11765 = vst.msk [vmem:[%s316 + $0x8] sm:$0xff] %vm8555, %v11733
      %11766 = vst.msk [vmem:[%s316 + $0x10] sm:$0xff] %vm8555, %v11734
      %11767 = vst.msk [vmem:[%s316 + $0x18] sm:$0xff] %vm8555, %v11735
      %11768 = vst.msk [vmem:[%s316 + $0x20] sm:$0xff] %vm8555, %v11736
      %11769 = vst.msk [vmem:[%s316 + $0x28] sm:$0xff] %vm8555, %v11737
      %11770 = vst.msk [vmem:[%s316 + $0x30] sm:$0xff] %vm8555, %v11738
      %11771 = vst.msk [vmem:[%s316 + $0x38] sm:$0xff] %vm8555, %v11739
      %11772 = vst.msk [vmem:[%s316 + $0x40] sm:$0xff] %vm8555, %v11740
      %11773 = vst.msk [vmem:[%s316 + $0x48] sm:$0xff] %vm8555, %v11741
      %11774 = vst.msk [vmem:[%s316 + $0x50] sm:$0xff] %vm8555, %v11742
      %11775 = vst.msk [vmem:[%s316 + $0x58] sm:$0xff] %vm8555, %v11743
      %11776 = vst.msk [vmem:[%s316 + $0x60] sm:$0xff] %vm8555, %v11744
      %11777 = vst.msk [vmem:[%s316 + $0x68] sm:$0xff] %vm8555, %v11745
      %11778 = vst.msk [vmem:[%s316 + $0x70] sm:$0xff] %vm8555, %v11746
      %11779 = vst.msk [vmem:[%s316 + $0x78] sm:$0xff] %vm8555, %v11747
      %11780 = vst.msk [vmem:[%s316 + $0x80] sm:$0xff] %vm8555, %v11748
      %11781 = vst.msk [vmem:[%s316 + $0x88] sm:$0xff] %vm8555, %v11749
      %11782 = vst.msk [vmem:[%s316 + $0x90] sm:$0xff] %vm8555, %v11750
      %11783 = vst.msk [vmem:[%s316 + $0x98] sm:$0xff] %vm8555, %v11751
      %11784 = vst.msk [vmem:[%s316 + $0xa0] sm:$0xff] %vm8555, %v11752
      %11785 = vst.msk [vmem:[%s316 + $0xa8] sm:$0xff] %vm8555, %v11753
      %11786 = vst.msk [vmem:[%s316 + $0xb0] sm:$0xff] %vm8555, %v11754
      %11787 = vst.msk [vmem:[%s316 + $0xb8] sm:$0xff] %vm8555, %v11755
      %11788 = vst.msk [vmem:[%s316 + $0xc0] sm:$0xff] %vm8555, %v11756
      %11789 = vst.msk [vmem:[%s316 + $0xc8] sm:$0xff] %vm8555, %v11757
      %11790 = vst.msk [vmem:[%s316 + $0xd0] sm:$0xff] %vm8555, %v11758
      %11791 = vst.msk [vmem:[%s316 + $0xd8] sm:$0xff] %vm8555, %v11759
      %11792 = vst.msk [vmem:[%s316 + $0xe0] sm:$0xff] %vm8555, %v11760
      %11793 = vst.msk [vmem:[%s316 + $0xe8] sm:$0xff] %vm8555, %v11761
      %11794 = vst.msk [vmem:[%s316 + $0xf0] sm:$0xff] %vm8555, %v11762
      %11795 = vst.msk [vmem:[%s316 + $0xf8] sm:$0xff] %vm8555, %v11763
      %v11796 = vsel %vm8555, %v11732, 0.0
      %v11797 = vsel %vm8555, %v11733, 0.0
      %v11798 = vadd.f32 %v11796, %v11797
      %v11799 = vsel %vm8555, %v11734, 0.0
      %v11800 = vadd.f32 %v11798, %v11799
      %v11801 = vsel %vm8555, %v11735, 0.0
      %v11802 = vadd.f32 %v11800, %v11801
      %v11803 = vsel %vm8555, %v11736, 0.0
      %v11804 = vadd.f32 %v11802, %v11803
      %v11805 = vsel %vm8555, %v11737, 0.0
      %v11806 = vadd.f32 %v11804, %v11805
      %v11807 = vsel %vm8555, %v11738, 0.0
      %v11808 = vadd.f32 %v11806, %v11807
      %v11809 = vsel %vm8555, %v11739, 0.0
      %v11810 = vadd.f32 %v11808, %v11809
      %v11811 = vsel %vm8555, %v11740, 0.0
      %v11812 = vadd.f32 %v11810, %v11811
      %v11813 = vsel %vm8555, %v11741, 0.0
      %v11814 = vadd.f32 %v11812, %v11813
      %v11815 = vsel %vm8555, %v11742, 0.0
      %v11816 = vadd.f32 %v11814, %v11815
      %v11817 = vsel %vm8555, %v11743, 0.0
      %v11818 = vadd.f32 %v11816, %v11817
      %v11819 = vsel %vm8555, %v11744, 0.0
      %v11820 = vadd.f32 %v11818, %v11819
      %v11821 = vsel %vm8555, %v11745, 0.0
      %v11822 = vadd.f32 %v11820, %v11821
      %v11823 = vsel %vm8555, %v11746, 0.0
      %v11824 = vadd.f32 %v11822, %v11823
      %v11825 = vsel %vm8555, %v11747, 0.0
      %v11826 = vadd.f32 %v11824, %v11825
      %v11827 = vsel %vm8555, %v11748, 0.0
      %v11828 = vadd.f32 %v11826, %v11827
      %v11829 = vsel %vm8555, %v11749, 0.0
      %v11830 = vadd.f32 %v11828, %v11829
      %v11831 = vsel %vm8555, %v11750, 0.0
      %v11832 = vadd.f32 %v11830, %v11831
      %v11833 = vsel %vm8555, %v11751, 0.0
      %v11834 = vadd.f32 %v11832, %v11833
      %v11835 = vsel %vm8555, %v11752, 0.0
      %v11836 = vadd.f32 %v11834, %v11835
      %v11837 = vsel %vm8555, %v11753, 0.0
      %v11838 = vadd.f32 %v11836, %v11837
      %v11839 = vsel %vm8555, %v11754, 0.0
      %v11840 = vadd.f32 %v11838, %v11839
      %v11841 = vsel %vm8555, %v11755, 0.0
      %v11842 = vadd.f32 %v11840, %v11841
      %v11843 = vsel %vm8555, %v11756, 0.0
      %v11844 = vadd.f32 %v11842, %v11843
      %v11845 = vsel %vm8555, %v11757, 0.0
      %v11846 = vadd.f32 %v11844, %v11845
      %v11847 = vsel %vm8555, %v11758, 0.0
      %v11848 = vadd.f32 %v11846, %v11847
      %v11849 = vsel %vm8555, %v11759, 0.0
      %v11850 = vadd.f32 %v11848, %v11849
      %v11851 = vsel %vm8555, %v11760, 0.0
      %v11852 = vadd.f32 %v11850, %v11851
      %v11853 = vsel %vm8555, %v11761, 0.0
      %v11854 = vadd.f32 %v11852, %v11853
      %v11855 = vsel %vm8555, %v11762, 0.0
      %v11856 = vadd.f32 %v11854, %v11855
      %v11857 = vsel %vm8555, %v11763, 0.0
      %v11858 = vadd.f32 %v11856, %v11857
      %v11859 = vrot.slane %v11858, 4
      %v11860 = vadd.f32 %v11858, %v11859
      %v11861 = vrot.slane %v11860, 2
      %v11862 = vadd.f32 %v11860, %v11861
      %v11863 = vrot.slane %v11862, 1
      %v11864 = vadd.f32 %v11862, %v11863
      %vm11865 = vcmask 57344
      %11866 = vst.msk [vmem:[%s319] sm:$0x1] %vm11865, %v11864
      %v11867 = vmul.f32 %v11732, %v11732
      %v11868 = vmul.f32 %v11733, %v11733
      %v11869 = vmul.f32 %v11734, %v11734
      %v11870 = vmul.f32 %v11735, %v11735
      %v11871 = vmul.f32 %v11736, %v11736
      %v11872 = vmul.f32 %v11737, %v11737
      %v11873 = vmul.f32 %v11738, %v11738
      %v11874 = vmul.f32 %v11739, %v11739
      %v11875 = vmul.f32 %v11740, %v11740
      %v11876 = vmul.f32 %v11741, %v11741
      %v11877 = vmul.f32 %v11742, %v11742
      %v11878 = vmul.f32 %v11743, %v11743
      %v11879 = vmul.f32 %v11744, %v11744
      %v11880 = vmul.f32 %v11745, %v11745
      %v11881 = vmul.f32 %v11746, %v11746
      %v11882 = vmul.f32 %v11747, %v11747
      %v11883 = vmul.f32 %v11748, %v11748
      %v11884 = vmul.f32 %v11749, %v11749
      %v11885 = vmul.f32 %v11750, %v11750
      %v11886 = vmul.f32 %v11751, %v11751
      %v11887 = vmul.f32 %v11752, %v11752
      %v11888 = vmul.f32 %v11753, %v11753
      %v11889 = vmul.f32 %v11754, %v11754
      %v11890 = vmul.f32 %v11755, %v11755
      %v11891 = vmul.f32 %v11756, %v11756
      %v11892 = vmul.f32 %v11757, %v11757
      %v11893 = vmul.f32 %v11758, %v11758
      %v11894 = vmul.f32 %v11759, %v11759
      %v11895 = vmul.f32 %v11760, %v11760
      %v11896 = vmul.f32 %v11761, %v11761
      %v11897 = vmul.f32 %v11762, %v11762
      %v11898 = vmul.f32 %v11763, %v11763
      %v11899 = vsel %vm8555, %v11867, 0.0
      %v11900 = vsel %vm8555, %v11868, 0.0
      %v11901 = vadd.f32 %v11899, %v11900
      %v11902 = vsel %vm8555, %v11869, 0.0
      %v11903 = vadd.f32 %v11901, %v11902
      %v11904 = vsel %vm8555, %v11870, 0.0
      %v11905 = vadd.f32 %v11903, %v11904
      %v11906 = vsel %vm8555, %v11871, 0.0
      %v11907 = vadd.f32 %v11905, %v11906
      %v11908 = vsel %vm8555, %v11872, 0.0
      %v11909 = vadd.f32 %v11907, %v11908
      %v11910 = vsel %vm8555, %v11873, 0.0
      %v11911 = vadd.f32 %v11909, %v11910
      %v11912 = vsel %vm8555, %v11874, 0.0
      %v11913 = vadd.f32 %v11911, %v11912
      %v11914 = vsel %vm8555, %v11875, 0.0
      %v11915 = vadd.f32 %v11913, %v11914
      %v11916 = vsel %vm8555, %v11876, 0.0
      %v11917 = vadd.f32 %v11915, %v11916
      %v11918 = vsel %vm8555, %v11877, 0.0
      %v11919 = vadd.f32 %v11917, %v11918
      %v11920 = vsel %vm8555, %v11878, 0.0
      %v11921 = vadd.f32 %v11919, %v11920
      %v11922 = vsel %vm8555, %v11879, 0.0
      %v11923 = vadd.f32 %v11921, %v11922
      %v11924 = vsel %vm8555, %v11880, 0.0
      %v11925 = vadd.f32 %v11923, %v11924
      %v11926 = vsel %vm8555, %v11881, 0.0
      %v11927 = vadd.f32 %v11925, %v11926
      %v11928 = vsel %vm8555, %v11882, 0.0
      %v11929 = vadd.f32 %v11927, %v11928
      %v11930 = vsel %vm8555, %v11883, 0.0
      %v11931 = vadd.f32 %v11929, %v11930
      %v11932 = vsel %vm8555, %v11884, 0.0
      %v11933 = vadd.f32 %v11931, %v11932
      %v11934 = vsel %vm8555, %v11885, 0.0
      %v11935 = vadd.f32 %v11933, %v11934
      %v11936 = vsel %vm8555, %v11886, 0.0
      %v11937 = vadd.f32 %v11935, %v11936
      %v11938 = vsel %vm8555, %v11887, 0.0
      %v11939 = vadd.f32 %v11937, %v11938
      %v11940 = vsel %vm8555, %v11888, 0.0
      %v11941 = vadd.f32 %v11939, %v11940
      %v11942 = vsel %vm8555, %v11889, 0.0
      %v11943 = vadd.f32 %v11941, %v11942
      %v11944 = vsel %vm8555, %v11890, 0.0
      %v11945 = vadd.f32 %v11943, %v11944
      %v11946 = vsel %vm8555, %v11891, 0.0
      %v11947 = vadd.f32 %v11945, %v11946
      %v11948 = vsel %vm8555, %v11892, 0.0
      %v11949 = vadd.f32 %v11947, %v11948
      %v11950 = vsel %vm8555, %v11893, 0.0
      %v11951 = vadd.f32 %v11949, %v11950
      %v11952 = vsel %vm8555, %v11894, 0.0
      %v11953 = vadd.f32 %v11951, %v11952
      %v11954 = vsel %vm8555, %v11895, 0.0
      %v11955 = vadd.f32 %v11953, %v11954
      %v11956 = vsel %vm8555, %v11896, 0.0
      %v11957 = vadd.f32 %v11955, %v11956
      %v11958 = vsel %vm8555, %v11897, 0.0
      %v11959 = vadd.f32 %v11957, %v11958
      %v11960 = vsel %vm8555, %v11898, 0.0
      %v11961 = vadd.f32 %v11959, %v11960
      %v11962 = vrot.slane %v11961, 4
      %v11963 = vadd.f32 %v11961, %v11962
      %v11964 = vrot.slane %v11963, 2
      %v11965 = vadd.f32 %v11963, %v11964
      %v11966 = vrot.slane %v11965, 1
      %v11967 = vadd.f32 %v11965, %v11966
      %11968 = vst.msk [vmem:[%s322] sm:$0x1] %vm11865, %v11967
      %p11969 = scmp.lt.s32.totalorder %s20, 1
      %s11970 = scalar_select %p11969, %s20, 1
      %s11971 = smul.addr %s11970, 32
      %s11972 = smul.addr %s11971, 8
      %s11973 = scalar_lea.vmem %s6, %s11972
      %p11974 = scmp.lt.s32.totalorder %s20, 1
      %s11975 = scalar_select %p11974, %s20, 1
      %s11976 = scalar_lea.vmem %s7, %s11975
      %p11977 = scmp.lt.s32.totalorder %s20, 1
      %s11978 = scalar_select %p11977, %s20, 1
      %s11979 = scalar_lea.vmem %s8, %s11978
      // Predicated region
      $region45: #{conv_block_forward.2} parent=43 // pred_check
        %p11980 = pneg %p169
      $region46: #{conv_block_forward.2} parent=43 // pred_check_branch
        %11982 = sbr.rel (%p11980) target = $region48
      $region47: #{conv_block_forward.2} parent=43 // pred_region
        _
      $region48: #{conv_block_forward.2} parent=43 // pred_fallthru
        _
      // Predicated region
      $region49: #{conv_block_forward.2} parent=43 // pred_check
        %p11983 = pneg %p195
      $region50: #{conv_block_forward.2} parent=43 // pred_check_branch
        %11985 = sbr.rel (%p11983) target = $region52
      $region51: #{conv_block_forward.2} parent=43 // pred_region
        _
      $region52: #{conv_block_forward.2} parent=43 // pred_fallthru
        _
      // Predicated region
      $region53: #{conv_block_forward.2} parent=43 // pred_check
        %p11986 = pneg %p221
      $region54: #{conv_block_forward.2} parent=43 // pred_check_branch
        %11988 = sbr.rel (%p11986) target = $region56
      $region55: #{conv_block_forward.2} parent=43 // pred_region
        _
      $region56: #{conv_block_forward.2} parent=43 // pred_fallthru
        _
    $region44: #{conv_block_forward.2} parent=5 // pred_fallthru
      _
    %p11989 = scmp.le.s32.totalorder 2, %s15
    // Predicated region
    $region57: #{conv_block_forward.2} parent=5 // pred_check
      %p11990 = pneg %p11989
    $region58: #{conv_block_forward.2} parent=5 // pred_check_branch
      %11992 = sbr.rel (%p11990) target = $region60
    $region59: #{conv_block_forward.2} parent=5 // pred_region
      %s11993 = ssub.s32 %s15, 2
      // Predicated region
      $region61: #{conv_block_forward.2} parent=59 // pred_check
        %p11994 = pneg %p175
      $region62: #{conv_block_forward.2} parent=59 // pred_check_branch
        %11996 = sbr.rel (%p11994) target = $region64
      $region63: #{conv_block_forward.2} parent=59 // pred_region
        %p11997 = scmp.lt.s32.totalorder %s21, 1
        %s11998 = scalar_select %p11997, %s21, 1
        %s11999 = smul.addr %s11998, 32
        %s12000 = smul.addr %s11999, 8
        %s12001 = scalar_lea.vmem %s6, %s12000
      $region64: #{conv_block_forward.2} parent=59 // pred_fallthru
        _
      // Predicated region
      $region65: #{conv_block_forward.2} parent=59 // pred_check
        %p12002 = pneg %p201
      $region66: #{conv_block_forward.2} parent=59 // pred_check_branch
        %12004 = sbr.rel (%p12002) target = $region68
      $region67: #{conv_block_forward.2} parent=59 // pred_region
        %p12005 = scmp.lt.s32.totalorder %s21, 1
        %s12006 = scalar_select %p12005, %s21, 1
        %s12007 = scalar_lea.vmem %s7, %s12006
      $region68: #{conv_block_forward.2} parent=59 // pred_fallthru
        _
      // Predicated region
      $region69: #{conv_block_forward.2} parent=59 // pred_check
        %p12008 = pneg %p227
      $region70: #{conv_block_forward.2} parent=59 // pred_check_branch
        %12010 = sbr.rel (%p12008) target = $region72
      $region71: #{conv_block_forward.2} parent=59 // pred_region
        %p12011 = scmp.lt.s32.totalorder %s21, 1
        %s12012 = scalar_select %p12011, %s21, 1
        %s12013 = scalar_lea.vmem %s8, %s12012
      $region72: #{conv_block_forward.2} parent=59 // pred_fallthru
        _
    $region60: #{conv_block_forward.2} parent=5 // pred_fallthru
      _
  $region6: #{conv_block_forward.2} parent=0 // loop_footer
    %s19 = sadd.s32 1, %s15
  $region7: #{conv_block_forward.2} parent=0 // loop_footer_branch
    %14 = sbr.rel target = $region3
  $region8: #{conv_block_forward.2} parent=0 // loop_exit
    _

</llo_original>
